<compile_context>
chip_gen: v5e
topology: v5e:2x2
jax: 0.10.0
libtpu: 0.0.40
codegen_flags: <defaults>
</compile_context>

<pallas_src>
import functools
import math

import jax
import jax.numpy as jnp
from jax import lax
from jax.experimental import pallas as pl
from jax.experimental.pallas import tpu as pltpu

# ---- hyper-parameters implied by the PyTorch module -------------------------
FEATURE_SIZE = 6                          # d_model
NUM_HEADS = 3
HEAD_DIM = FEATURE_SIZE // NUM_HEADS      # 2
HEAD_PAD = 128                            # per-head lane-aligned block width
NUM_LAYERS = 3
DIM_FF = 2048                             # nn.TransformerEncoderLayer default
LN_EPS = 1e-5
OUT_DIM = 6                               # decoder = nn.Linear(feature_size, 6)


def _layer_norm(x, w, b):
    mean = jnp.mean(x, axis=-1, keepdims=True)
    var = jnp.mean((x - mean) ** 2, axis=-1, keepdims=True)   # biased var (PyTorch LN)
    return (x - mean) * lax.rsqrt(var + LN_EPS) * w + b


def transformer_kernel(src_ref,
                       qkv_w_ref, qkv_b_ref, outp_w_ref, outp_b_ref,
                       ln1_w_ref, ln1_b_ref, ln2_w_ref, ln2_b_ref,
                       ff1_w_ref, ff1_b_ref, ff2_w_ref, ff2_b_ref,
                       dec_w_ref, dec_b_ref,
                       out_ref, *, seq_len):
    S = seq_len
    rows = src_ref.shape[0]
    BB = rows // S                       # batch rows folded into this block
    H, P, hd = NUM_HEADS, HEAD_PAD, HEAD_DIM
    scale = 1.0 / math.sqrt(hd)

    x = src_ref[...].astype(jnp.float32)               # (BB*S, D)

    # Causal (square subsequent) additive mask, generated in-kernel.
    row_id = lax.broadcasted_iota(jnp.int32, (S, S), 0)
    col_id = lax.broadcasted_iota(jnp.int32, (S, S), 1)
    mask = jnp.where(col_id <= row_id, 0.0, -1e30).astype(jnp.float32)

    def mm(a, w):
        # a (M, K) @ w (K, N) -> (M, N), f32 accumulation on the MXU.
        return jnp.dot(a.astype(w.dtype), w, preferred_element_type=jnp.float32)

    def mm_rt(a, w):
        # a (M, K) contracted with w (N, K) over K -> (M, N).  Keeps the large
        # K dim on lanes of the weight (no transpose / no lane padding blowup).
        return lax.dot_general(a.astype(w.dtype), w,
                               (((1,), (1,)), ((), ())),
                               preferred_element_type=jnp.float32)

    for l in range(NUM_LAYERS):
        # -------- multi-head self attention --------
        # qkv columns are laid out as [q_h0 | q_h1 | q_h2 | k_h0 | ... | v_h2],
        # each head block padded to 128 lanes (zeros beyond head_dim).
        qkv = mm(x, qkv_w_ref[l]) + qkv_b_ref[l]       # (BB*S, 3*H*P) f32

        batch_outs = []
        for b in range(BB):
            r0 = b * S
            head_outs = []
            for h in range(H):
                q = qkv[r0:r0 + S, h * P:(h + 1) * P]                    # (S, P)
                k = qkv[r0:r0 + S, (H + h) * P:(H + h + 1) * P]          # (S, P)
                v = qkv[r0:r0 + S, (2 * H + h) * P:(2 * H + h + 1) * P]  # (S, P)
                # q @ k^T without materializing k.T (contraction on dim 1).
                s = lax.dot_general(q, k, (((1,), (1,)), ((), ())),
                                    preferred_element_type=jnp.float32)
                s = s * scale + mask
                s = s - jnp.max(s, axis=-1, keepdims=True)
                p = jnp.exp(s)
                p = p / jnp.sum(p, axis=-1, keepdims=True)
                head_outs.append(
                    jnp.dot(p, v, preferred_element_type=jnp.float32))   # (S, P)
            batch_outs.append(jnp.concatenate(head_outs, axis=-1))        # (S, H*P)
        attn = jnp.concatenate(batch_outs, axis=0)                        # (BB*S, H*P)

        # out-projection: contract the padded H*P axis against (D, H*P).
        attn = mm_rt(attn, outp_w_ref[l]) + outp_b_ref[l]                 # (BB*S, D)

        # TODO(synk): dropout layers are identity here (eval-mode semantics).
        x = _layer_norm(x + attn, ln1_w_ref[l], ln1_b_ref[l])

        # -------- feed-forward block --------
        h1 = jnp.maximum(mm(x, ff1_w_ref[l]) + ff1_b_ref[l], 0.0)         # (BB*S, FF)
        ffn = mm_rt(h1, ff2_w_ref[l]) + ff2_b_ref[l]                      # (BB*S, D)
        x = _layer_norm(x + ffn, ln2_w_ref[l], ln2_b_ref[l])

    # -------- final decoder linear --------
    y = mm(x, dec_w_ref[...]) + dec_b_ref[...]                            # (BB*S, OUT)
    out_ref[...] = y.astype(out_ref.dtype)


# -----------------------------------------------------------------------------
# Parameter construction (PyTorch-native shapes) and one-time kernel layout prep
# -----------------------------------------------------------------------------
def make_params(key):
    """Deterministic synthetic parameters with the same shapes as the PyTorch module."""
    D, FF, L = FEATURE_SIZE, DIM_FF, NUM_LAYERS
    ks = jax.random.split(key, 8)

    def u(k, shape, scale):
        return jax.random.uniform(k, shape, jnp.float32, -scale, scale)

    return dict(
        in_w=u(ks[0], (L, 3 * D, D), 1.0 / math.sqrt(D)),   # MHA in_proj_weight
        in_b=jnp.zeros((L, 3 * D), jnp.float32),            # in_proj_bias (zeros)
        out_w=u(ks[1], (L, D, D), 1.0 / math.sqrt(D)),       # out_proj.weight
        out_b=jnp.zeros((L, D), jnp.float32),
        ln1_w=jnp.ones((L, D), jnp.float32), ln1_b=jnp.zeros((L, D), jnp.float32),
        ln2_w=jnp.ones((L, D), jnp.float32), ln2_b=jnp.zeros((L, D), jnp.float32),
        ff1_w=u(ks[2], (L, FF, D), 1.0 / math.sqrt(D)),      # linear1.weight
        ff1_b=u(ks[3], (L, FF), 1.0 / math.sqrt(D)),
        ff2_w=u(ks[4], (L, D, FF), 1.0 / math.sqrt(FF)),     # linear2.weight
        ff2_b=u(ks[5], (L, D), 1.0 / math.sqrt(FF)),
        dec_w=u(ks[6], (OUT_DIM, D), 0.1),                   # decoder init_weights()
        dec_b=jnp.zeros((OUT_DIM,), jnp.float32),
    )


def prepare_params(params, ffn_weight_dtype=jnp.float32):
    """One-time re-layout of weights into the form the kernel wants.

    Call once and keep the result as persistent device arrays; transformer_forward
    then does no per-call transposes.
    """
    D, FF, L = FEATURE_SIZE, DIM_FF, NUM_LAYERS
    H, hd, P = NUM_HEADS, HEAD_DIM, HEAD_PAD

    in_w, in_b = params['in_w'], params['in_b']          # (L, 3D, D), (L, 3D)
    out_w, out_b = params['out_w'], params['out_b']      # (L, D, D), (L, D)

    # Padded, head-reordered QKV projection: columns [(s*H + h)*P : ... + hd]
    # hold (W_{q/k/v} head h)^T; remaining lanes are zero.
    qkv_w = jnp.zeros((L, D, 3 * H * P), jnp.float32)
    qkv_b = jnp.zeros((L, 1, 3 * H * P), jnp.float32)
    for s in range(3):                                    # 0=q, 1=k, 2=v
        for h in range(H):
            col = (s * H + h) * P
            w_slice = in_w[:, s * D + h * hd:s * D + (h + 1) * hd, :]   # (L, hd, D)
            qkv_w = qkv_w.at[:, :, col:col + hd].set(jnp.transpose(w_slice, (0, 2, 1)))
            qkv_b = qkv_b.at[:, 0, col:col + hd].set(
                in_b[:, s * D + h * hd:s * D + (h + 1) * hd])

    # Out-projection, padded to the same per-head 128-lane layout.  Kept as
    # (L, D, H*P) so the large padded axis stays on lanes (contracted via
    # dot_general), avoiding a (H*P, D) lane-padding blowup.
    outp_w = jnp.zeros((L, D, H * P), jnp.float32)
    for h in range(H):
        outp_w = outp_w.at[:, :, h * P:h * P + hd].set(out_w[:, :, h * hd:(h + 1) * hd])
    outp_b = out_b.reshape(L, 1, D)

    return dict(
        qkv_w=qkv_w, qkv_b=qkv_b, outp_w=outp_w, outp_b=outp_b,
        ln1_w=params['ln1_w'].reshape(L, 1, D), ln1_b=params['ln1_b'].reshape(L, 1, D),
        ln2_w=params['ln2_w'].reshape(L, 1, D), ln2_b=params['ln2_b'].reshape(L, 1, D),
        # linear1: transpose so FF lands on lanes; linear2: keep PyTorch (D, FF)
        # so FF stays on lanes and is contracted with dot_general.
        ff1_w=jnp.transpose(params['ff1_w'], (0, 2, 1)).astype(ffn_weight_dtype),  # (L, D, FF)
        ff1_b=params['ff1_b'].reshape(L, 1, FF),
        ff2_w=params['ff2_w'].astype(ffn_weight_dtype),                            # (L, D, FF)
        ff2_b=params['ff2_b'].reshape(L, 1, D),
        dec_w=params['dec_w'].T,                                                   # (D, OUT)
        dec_b=params['dec_b'].reshape(1, OUT_DIM),
    )


def transformer_forward(src, prepared, *, batch_block=None):
    B, S, D = src.shape
    if batch_block is None:
        # Fold the whole batch into one grid step (best on v5e/v6e: one launch,
        # M = B*S sublanes for every matmul).
        # TODO(synk): on v7x pass batch_block=B//2 to shard the 2-step parallel
        # grid across both TensorCores.
        batch_block = B
    assert B % batch_block == 0
    n_blk = B // batch_block
    rows_per_blk = batch_block * S

    src2d = src.reshape(B * S, D)

    def const_spec(arr):
        nd = arr.ndim
        return pl.BlockSpec(arr.shape, lambda i, _n=nd: (0,) * _n)

    p = prepared
    kernel = functools.partial(transformer_kernel, seq_len=S)
    out2d = pl.pallas_call(
        kernel,
        out_shape=jax.ShapeDtypeStruct((B * S, OUT_DIM), src.dtype),
        grid=(n_blk,),
        in_specs=[
            pl.BlockSpec((rows_per_blk, D), lambda i: (i, 0)),      # src rows
            const_spec(p['qkv_w']), const_spec(p['qkv_b']),
            const_spec(p['outp_w']), const_spec(p['outp_b']),
            const_spec(p['ln1_w']), const_spec(p['ln1_b']),
            const_spec(p['ln2_w']), const_spec(p['ln2_b']),
            const_spec(p['ff1_w']), const_spec(p['ff1_b']),
            const_spec(p['ff2_w']), const_spec(p['ff2_b']),
            const_spec(p['dec_w']), const_spec(p['dec_b']),
        ],
        out_specs=pl.BlockSpec((rows_per_blk, OUT_DIM), lambda i: (i, 0)),
        compiler_params=pltpu.CompilerParams(dimension_semantics=("parallel",)),
    )(src2d,
      p['qkv_w'], p['qkv_b'], p['outp_w'], p['outp_b'],
      p['ln1_w'], p['ln1_b'], p['ln2_w'], p['ln2_b'],
      p['ff1_w'], p['ff1_b'], p['ff2_w'], p['ff2_b'],
      p['dec_w'], p['dec_b'])

    return out2d.reshape(B, S, OUT_DIM)


if __name__ == "__main__":
    key = jax.random.PRNGKey(0)
    k_src, k_par = jax.random.split(key)

    B, S = 2, 8
    src = jax.random.normal(k_src, (B, S, FEATURE_SIZE), jnp.float32)
    params = make_params(k_par)
    prepared = prepare_params(params)          # one-time layout prep (persist across calls)

    out = transformer_forward(src, prepared)
    jax.block_until_ready(out)
    assert out.shape == (B, S, OUT_DIM) and out.dtype == jnp.float32
    assert bool(jnp.isfinite(out).all())
    print("KERNEL_OK")
</pallas_src>

<mosaic_0001>
module attributes {stable_mosaic.version = 11 : i64} {
  func.func @transformer_kernel(%arg0: i32, %arg1: memref<16x6xf32, #tpu.memory_space<vmem>>, %arg2: memref<3x6x1152xf32, #tpu.memory_space<vmem>>, %arg3: memref<3x1x1152xf32, #tpu.memory_space<vmem>>, %arg4: memref<3x6x384xf32, #tpu.memory_space<vmem>>, %arg5: memref<3x1x6xf32, #tpu.memory_space<vmem>>, %arg6: memref<3x1x6xf32, #tpu.memory_space<vmem>>, %arg7: memref<3x1x6xf32, #tpu.memory_space<vmem>>, %arg8: memref<3x1x6xf32, #tpu.memory_space<vmem>>, %arg9: memref<3x1x6xf32, #tpu.memory_space<vmem>>, %arg10: memref<3x6x2048xf32, #tpu.memory_space<vmem>>, %arg11: memref<3x1x2048xf32, #tpu.memory_space<vmem>>, %arg12: memref<3x6x2048xf32, #tpu.memory_space<vmem>>, %arg13: memref<3x1x6xf32, #tpu.memory_space<vmem>>, %arg14: memref<6x6xf32, #tpu.memory_space<vmem>>, %arg15: memref<1x6xf32, #tpu.memory_space<vmem>>, %arg16: memref<16x6xf32, #tpu.memory_space<vmem>>) attributes {dimension_semantics = [#tpu.dimension_semantics<parallel>], iteration_bounds = array<i64: 1>, scalar_prefetch = 0 : i64, scratch_operands = 0 : i64, tpu.core_type = #tpu.core_type<tc>, window_params = [{transform_indices = @transform_0, window_bounds = array<i64: 16, 6>}, {pipeline_mode = #tpu.pipeline_mode<synchronous>, transform_indices = @transform_1, window_bounds = array<i64: 3, 6, 1152>}, {pipeline_mode = #tpu.pipeline_mode<synchronous>, transform_indices = @transform_2, window_bounds = array<i64: 3, 1, 1152>}, {pipeline_mode = #tpu.pipeline_mode<synchronous>, transform_indices = @transform_3, window_bounds = array<i64: 3, 6, 384>}, {pipeline_mode = #tpu.pipeline_mode<synchronous>, transform_indices = @transform_4, window_bounds = array<i64: 3, 1, 6>}, {pipeline_mode = #tpu.pipeline_mode<synchronous>, transform_indices = @transform_5, window_bounds = array<i64: 3, 1, 6>}, {pipeline_mode = #tpu.pipeline_mode<synchronous>, transform_indices = @transform_6, window_bounds = array<i64: 3, 1, 6>}, {pipeline_mode = #tpu.pipeline_mode<synchronous>, transform_indices = @transform_7, window_bounds = array<i64: 3, 1, 6>}, {pipeline_mode = #tpu.pipeline_mode<synchronous>, transform_indices = @transform_8, window_bounds = array<i64: 3, 1, 6>}, {pipeline_mode = #tpu.pipeline_mode<synchronous>, transform_indices = @transform_9, window_bounds = array<i64: 3, 6, 2048>}, {pipeline_mode = #tpu.pipeline_mode<synchronous>, transform_indices = @transform_10, window_bounds = array<i64: 3, 1, 2048>}, {pipeline_mode = #tpu.pipeline_mode<synchronous>, transform_indices = @transform_11, window_bounds = array<i64: 3, 6, 2048>}, {pipeline_mode = #tpu.pipeline_mode<synchronous>, transform_indices = @transform_12, window_bounds = array<i64: 3, 1, 6>}, {pipeline_mode = #tpu.pipeline_mode<synchronous>, transform_indices = @transform_13, window_bounds = array<i64: 6, 6>}, {pipeline_mode = #tpu.pipeline_mode<synchronous>, transform_indices = @transform_14, window_bounds = array<i64: 1, 6>}, {transform_indices = @transform_15, window_bounds = array<i64: 16, 6>}]} {
    %c0 = arith.constant 0 : index
    %c0_0 = arith.constant 0 : index
    %0 = vector.load %arg1[%c0, %c0_0] : memref<16x6xf32, #tpu.memory_space<vmem>>, vector<16x6xf32>
    %1 = tpu.iota {dimensions = array<i32: 0>} : vector<8x8xi32>
    %2 = tpu.iota {dimensions = array<i32: 1>} : vector<8x8xi32>
    %3 = arith.cmpi sle, %2, %1 : vector<8x8xi32>
    %cst = arith.constant 0.000000e+00 : f32
    %cst_1 = arith.constant -1.000000e+30 : f32
    %4 = vector.broadcast %cst : f32 to vector<8x8xf32>
    %5 = vector.broadcast %cst_1 : f32 to vector<8x8xf32>
    %6 = arith.select %3, %4, %5 : vector<8x8xi1>, vector<8x8xf32>
    %c0_2 = arith.constant 0 : index
    %c0_3 = arith.constant 0 : index
    %c0_4 = arith.constant 0 : index
    %7 = vector.load %arg2[%c0_2, %c0_3, %c0_4] : memref<3x6x1152xf32, #tpu.memory_space<vmem>>, vector<1x6x1152xf32>
    %8 = vector.shape_cast %7 : vector<1x6x1152xf32> to vector<6x1152xf32>
    %cst_5 = arith.constant dense<0.000000e+00> : vector<16x1152xf32>
    %9 = tpu.matmul %0, %8, %cst_5 {dimension_numbers = #tpu.dot_dimension_numbers<[1], [0], [0], [1], [0, 0, 1, 1], [], []>} : vector<16x6xf32>, vector<6x1152xf32>, vector<16x1152xf32> -> vector<16x1152xf32>
    %c0_6 = arith.constant 0 : index
    %c0_7 = arith.constant 0 : index
    %c0_8 = arith.constant 0 : index
    %10 = vector.load %arg3[%c0_6, %c0_7, %c0_8] : memref<3x1x1152xf32, #tpu.memory_space<vmem>>, vector<1x1x1152xf32>
    %11 = vector.shape_cast %10 : vector<1x1x1152xf32> to vector<1x1152xf32>
    %12 = vector.broadcast %11 : vector<1x1152xf32> to vector<16x1152xf32>
    %13 = arith.addf %9, %12 : vector<16x1152xf32>
    %14 = vector.extract_strided_slice %13 {offsets = [0, 0], sizes = [8, 128], strides = [1, 1]} : vector<16x1152xf32> to vector<8x128xf32>
    %15 = vector.extract_strided_slice %13 {offsets = [0, 384], sizes = [8, 128], strides = [1, 1]} : vector<16x1152xf32> to vector<8x128xf32>
    %16 = vector.extract_strided_slice %13 {offsets = [0, 768], sizes = [8, 128], strides = [1, 1]} : vector<16x1152xf32> to vector<8x128xf32>
    %cst_9 = arith.constant dense<0.000000e+00> : vector<8x8xf32>
    %17 = tpu.matmul %14, %15, %cst_9 {dimension_numbers = #tpu.dot_dimension_numbers<[1], [1], [0], [0], [0, 0, 1, 0], [], []>} : vector<8x128xf32>, vector<8x128xf32>, vector<8x8xf32> -> vector<8x8xf32>
    %cst_10 = arith.constant 0.707106769 : f32
    %18 = vector.broadcast %cst_10 : f32 to vector<8x8xf32>
    %19 = arith.mulf %17, %18 : vector<8x8xf32>
    %20 = arith.addf %19, %6 : vector<8x8xf32>
    %cst_11 = arith.constant dense<0xFF800000> : vector<8xf32>
    %21 = vector.multi_reduction <maximumf>, %20, %cst_11 [1] : vector<8x8xf32> to vector<8xf32>
    %22 = vector.shape_cast %21 : vector<8xf32> to vector<8x1xf32>
    %23 = vector.broadcast %22 : vector<8x1xf32> to vector<8x8xf32>
    %24 = arith.subf %20, %23 : vector<8x8xf32>
    %25 = math.exp %24 : vector<8x8xf32>
    %cst_12 = arith.constant dense<0.000000e+00> : vector<8xf32>
    %26 = vector.multi_reduction <add>, %25, %cst_12 [1] : vector<8x8xf32> to vector<8xf32>
    %27 = vector.shape_cast %26 : vector<8xf32> to vector<8x1xf32>
    %28 = vector.broadcast %27 : vector<8x1xf32> to vector<8x8xf32>
    %29 = arith.divf %25, %28 : vector<8x8xf32>
    %cst_13 = arith.constant dense<0.000000e+00> : vector<8x128xf32>
    %30 = tpu.matmul %29, %16, %cst_13 {dimension_numbers = #tpu.dot_dimension_numbers<[1], [0], [0], [1], [0, 0, 1, 1], [], []>} : vector<8x8xf32>, vector<8x128xf32>, vector<8x128xf32> -> vector<8x128xf32>
    %31 = vector.extract_strided_slice %13 {offsets = [0, 128], sizes = [8, 128], strides = [1, 1]} : vector<16x1152xf32> to vector<8x128xf32>
    %32 = vector.extract_strided_slice %13 {offsets = [0, 512], sizes = [8, 128], strides = [1, 1]} : vector<16x1152xf32> to vector<8x128xf32>
    %33 = vector.extract_strided_slice %13 {offsets = [0, 896], sizes = [8, 128], strides = [1, 1]} : vector<16x1152xf32> to vector<8x128xf32>
    %cst_14 = arith.constant dense<0.000000e+00> : vector<8x8xf32>
    %34 = tpu.matmul %31, %32, %cst_14 {dimension_numbers = #tpu.dot_dimension_numbers<[1], [1], [0], [0], [0, 0, 1, 0], [], []>} : vector<8x128xf32>, vector<8x128xf32>, vector<8x8xf32> -> vector<8x8xf32>
    %cst_15 = arith.constant 0.707106769 : f32
    %35 = vector.broadcast %cst_15 : f32 to vector<8x8xf32>
    %36 = arith.mulf %34, %35 : vector<8x8xf32>
    %37 = arith.addf %36, %6 : vector<8x8xf32>
    %cst_16 = arith.constant dense<0xFF800000> : vector<8xf32>
    %38 = vector.multi_reduction <maximumf>, %37, %cst_16 [1] : vector<8x8xf32> to vector<8xf32>
    %39 = vector.shape_cast %38 : vector<8xf32> to vector<8x1xf32>
    %40 = vector.broadcast %39 : vector<8x1xf32> to vector<8x8xf32>
    %41 = arith.subf %37, %40 : vector<8x8xf32>
    %42 = math.exp %41 : vector<8x8xf32>
    %cst_17 = arith.constant dense<0.000000e+00> : vector<8xf32>
    %43 = vector.multi_reduction <add>, %42, %cst_17 [1] : vector<8x8xf32> to vector<8xf32>
    %44 = vector.shape_cast %43 : vector<8xf32> to vector<8x1xf32>
    %45 = vector.broadcast %44 : vector<8x1xf32> to vector<8x8xf32>
    %46 = arith.divf %42, %45 : vector<8x8xf32>
    %cst_18 = arith.constant dense<0.000000e+00> : vector<8x128xf32>
    %47 = tpu.matmul %46, %33, %cst_18 {dimension_numbers = #tpu.dot_dimension_numbers<[1], [0], [0], [1], [0, 0, 1, 1], [], []>} : vector<8x8xf32>, vector<8x128xf32>, vector<8x128xf32> -> vector<8x128xf32>
    %48 = vector.extract_strided_slice %13 {offsets = [0, 256], sizes = [8, 128], strides = [1, 1]} : vector<16x1152xf32> to vector<8x128xf32>
    %49 = vector.extract_strided_slice %13 {offsets = [0, 640], sizes = [8, 128], strides = [1, 1]} : vector<16x1152xf32> to vector<8x128xf32>
    %50 = vector.extract_strided_slice %13 {offsets = [0, 1024], sizes = [8, 128], strides = [1, 1]} : vector<16x1152xf32> to vector<8x128xf32>
    %cst_19 = arith.constant dense<0.000000e+00> : vector<8x8xf32>
    %51 = tpu.matmul %48, %49, %cst_19 {dimension_numbers = #tpu.dot_dimension_numbers<[1], [1], [0], [0], [0, 0, 1, 0], [], []>} : vector<8x128xf32>, vector<8x128xf32>, vector<8x8xf32> -> vector<8x8xf32>
    %cst_20 = arith.constant 0.707106769 : f32
    %52 = vector.broadcast %cst_20 : f32 to vector<8x8xf32>
    %53 = arith.mulf %51, %52 : vector<8x8xf32>
    %54 = arith.addf %53, %6 : vector<8x8xf32>
    %cst_21 = arith.constant dense<0xFF800000> : vector<8xf32>
    %55 = vector.multi_reduction <maximumf>, %54, %cst_21 [1] : vector<8x8xf32> to vector<8xf32>
    %56 = vector.shape_cast %55 : vector<8xf32> to vector<8x1xf32>
    %57 = vector.broadcast %56 : vector<8x1xf32> to vector<8x8xf32>
    %58 = arith.subf %54, %57 : vector<8x8xf32>
    %59 = math.exp %58 : vector<8x8xf32>
    %cst_22 = arith.constant dense<0.000000e+00> : vector<8xf32>
    %60 = vector.multi_reduction <add>, %59, %cst_22 [1] : vector<8x8xf32> to vector<8xf32>
    %61 = vector.shape_cast %60 : vector<8xf32> to vector<8x1xf32>
    %62 = vector.broadcast %61 : vector<8x1xf32> to vector<8x8xf32>
    %63 = arith.divf %59, %62 : vector<8x8xf32>
    %cst_23 = arith.constant dense<0.000000e+00> : vector<8x128xf32>
    %64 = tpu.matmul %63, %50, %cst_23 {dimension_numbers = #tpu.dot_dimension_numbers<[1], [0], [0], [1], [0, 0, 1, 1], [], []>} : vector<8x8xf32>, vector<8x128xf32>, vector<8x128xf32> -> vector<8x128xf32>
    %65 = tpu.concatenate %30, %47, %64 in 1 : vector<8x128xf32>, vector<8x128xf32>, vector<8x128xf32> -> vector<8x384xf32>
    %66 = vector.extract_strided_slice %13 {offsets = [8, 0], sizes = [8, 128], strides = [1, 1]} : vector<16x1152xf32> to vector<8x128xf32>
    %67 = vector.extract_strided_slice %13 {offsets = [8, 384], sizes = [8, 128], strides = [1, 1]} : vector<16x1152xf32> to vector<8x128xf32>
    %68 = vector.extract_strided_slice %13 {offsets = [8, 768], sizes = [8, 128], strides = [1, 1]} : vector<16x1152xf32> to vector<8x128xf32>
    %cst_24 = arith.constant dense<0.000000e+00> : vector<8x8xf32>
    %69 = tpu.matmul %66, %67, %cst_24 {dimension_numbers = #tpu.dot_dimension_numbers<[1], [1], [0], [0], [0, 0, 1, 0], [], []>} : vector<8x128xf32>, vector<8x128xf32>, vector<8x8xf32> -> vector<8x8xf32>
    %cst_25 = arith.constant 0.707106769 : f32
    %70 = vector.broadcast %cst_25 : f32 to vector<8x8xf32>
    %71 = arith.mulf %69, %70 : vector<8x8xf32>
    %72 = arith.addf %71, %6 : vector<8x8xf32>
    %cst_26 = arith.constant dense<0xFF800000> : vector<8xf32>
    %73 = vector.multi_reduction <maximumf>, %72, %cst_26 [1] : vector<8x8xf32> to vector<8xf32>
    %74 = vector.shape_cast %73 : vector<8xf32> to vector<8x1xf32>
    %75 = vector.broadcast %74 : vector<8x1xf32> to vector<8x8xf32>
    %76 = arith.subf %72, %75 : vector<8x8xf32>
    %77 = math.exp %76 : vector<8x8xf32>
    %cst_27 = arith.constant dense<0.000000e+00> : vector<8xf32>
    %78 = vector.multi_reduction <add>, %77, %cst_27 [1] : vector<8x8xf32> to vector<8xf32>
    %79 = vector.shape_cast %78 : vector<8xf32> to vector<8x1xf32>
    %80 = vector.broadcast %79 : vector<8x1xf32> to vector<8x8xf32>
    %81 = arith.divf %77, %80 : vector<8x8xf32>
    %cst_28 = arith.constant dense<0.000000e+00> : vector<8x128xf32>
    %82 = tpu.matmul %81, %68, %cst_28 {dimension_numbers = #tpu.dot_dimension_numbers<[1], [0], [0], [1], [0, 0, 1, 1], [], []>} : vector<8x8xf32>, vector<8x128xf32>, vector<8x128xf32> -> vector<8x128xf32>
    %83 = vector.extract_strided_slice %13 {offsets = [8, 128], sizes = [8, 128], strides = [1, 1]} : vector<16x1152xf32> to vector<8x128xf32>
    %84 = vector.extract_strided_slice %13 {offsets = [8, 512], sizes = [8, 128], strides = [1, 1]} : vector<16x1152xf32> to vector<8x128xf32>
    %85 = vector.extract_strided_slice %13 {offsets = [8, 896], sizes = [8, 128], strides = [1, 1]} : vector<16x1152xf32> to vector<8x128xf32>
    %cst_29 = arith.constant dense<0.000000e+00> : vector<8x8xf32>
    %86 = tpu.matmul %83, %84, %cst_29 {dimension_numbers = #tpu.dot_dimension_numbers<[1], [1], [0], [0], [0, 0, 1, 0], [], []>} : vector<8x128xf32>, vector<8x128xf32>, vector<8x8xf32> -> vector<8x8xf32>
    %cst_30 = arith.constant 0.707106769 : f32
    %87 = vector.broadcast %cst_30 : f32 to vector<8x8xf32>
    %88 = arith.mulf %86, %87 : vector<8x8xf32>
    %89 = arith.addf %88, %6 : vector<8x8xf32>
    %cst_31 = arith.constant dense<0xFF800000> : vector<8xf32>
    %90 = vector.multi_reduction <maximumf>, %89, %cst_31 [1] : vector<8x8xf32> to vector<8xf32>
    %91 = vector.shape_cast %90 : vector<8xf32> to vector<8x1xf32>
    %92 = vector.broadcast %91 : vector<8x1xf32> to vector<8x8xf32>
    %93 = arith.subf %89, %92 : vector<8x8xf32>
    %94 = math.exp %93 : vector<8x8xf32>
    %cst_32 = arith.constant dense<0.000000e+00> : vector<8xf32>
    %95 = vector.multi_reduction <add>, %94, %cst_32 [1] : vector<8x8xf32> to vector<8xf32>
    %96 = vector.shape_cast %95 : vector<8xf32> to vector<8x1xf32>
    %97 = vector.broadcast %96 : vector<8x1xf32> to vector<8x8xf32>
    %98 = arith.divf %94, %97 : vector<8x8xf32>
    %cst_33 = arith.constant dense<0.000000e+00> : vector<8x128xf32>
    %99 = tpu.matmul %98, %85, %cst_33 {dimension_numbers = #tpu.dot_dimension_numbers<[1], [0], [0], [1], [0, 0, 1, 1], [], []>} : vector<8x8xf32>, vector<8x128xf32>, vector<8x128xf32> -> vector<8x128xf32>
    %100 = vector.extract_strided_slice %13 {offsets = [8, 256], sizes = [8, 128], strides = [1, 1]} : vector<16x1152xf32> to vector<8x128xf32>
    %101 = vector.extract_strided_slice %13 {offsets = [8, 640], sizes = [8, 128], strides = [1, 1]} : vector<16x1152xf32> to vector<8x128xf32>
    %102 = vector.extract_strided_slice %13 {offsets = [8, 1024], sizes = [8, 128], strides = [1, 1]} : vector<16x1152xf32> to vector<8x128xf32>
    %cst_34 = arith.constant dense<0.000000e+00> : vector<8x8xf32>
    %103 = tpu.matmul %100, %101, %cst_34 {dimension_numbers = #tpu.dot_dimension_numbers<[1], [1], [0], [0], [0, 0, 1, 0], [], []>} : vector<8x128xf32>, vector<8x128xf32>, vector<8x8xf32> -> vector<8x8xf32>
    %cst_35 = arith.constant 0.707106769 : f32
    %104 = vector.broadcast %cst_35 : f32 to vector<8x8xf32>
    %105 = arith.mulf %103, %104 : vector<8x8xf32>
    %106 = arith.addf %105, %6 : vector<8x8xf32>
    %cst_36 = arith.constant dense<0xFF800000> : vector<8xf32>
    %107 = vector.multi_reduction <maximumf>, %106, %cst_36 [1] : vector<8x8xf32> to vector<8xf32>
    %108 = vector.shape_cast %107 : vector<8xf32> to vector<8x1xf32>
    %109 = vector.broadcast %108 : vector<8x1xf32> to vector<8x8xf32>
    %110 = arith.subf %106, %109 : vector<8x8xf32>
    %111 = math.exp %110 : vector<8x8xf32>
    %cst_37 = arith.constant dense<0.000000e+00> : vector<8xf32>
    %112 = vector.multi_reduction <add>, %111, %cst_37 [1] : vector<8x8xf32> to vector<8xf32>
    %113 = vector.shape_cast %112 : vector<8xf32> to vector<8x1xf32>
    %114 = vector.broadcast %113 : vector<8x1xf32> to vector<8x8xf32>
    %115 = arith.divf %111, %114 : vector<8x8xf32>
    %cst_38 = arith.constant dense<0.000000e+00> : vector<8x128xf32>
    %116 = tpu.matmul %115, %102, %cst_38 {dimension_numbers = #tpu.dot_dimension_numbers<[1], [0], [0], [1], [0, 0, 1, 1], [], []>} : vector<8x8xf32>, vector<8x128xf32>, vector<8x128xf32> -> vector<8x128xf32>
    %117 = tpu.concatenate %82, %99, %116 in 1 : vector<8x128xf32>, vector<8x128xf32>, vector<8x128xf32> -> vector<8x384xf32>
    %118 = tpu.concatenate %65, %117 in 0 : vector<8x384xf32>, vector<8x384xf32> -> vector<16x384xf32>
    %c0_39 = arith.constant 0 : index
    %c0_40 = arith.constant 0 : index
    %c0_41 = arith.constant 0 : index
    %119 = vector.load %arg4[%c0_39, %c0_40, %c0_41] : memref<3x6x384xf32, #tpu.memory_space<vmem>>, vector<1x6x384xf32>
    %120 = vector.shape_cast %119 : vector<1x6x384xf32> to vector<6x384xf32>
    %cst_42 = arith.constant dense<0.000000e+00> : vector<16x6xf32>
    %121 = tpu.matmul %118, %120, %cst_42 {dimension_numbers = #tpu.dot_dimension_numbers<[1], [1], [0], [0], [0, 0, 1, 0], [], []>} : vector<16x384xf32>, vector<6x384xf32>, vector<16x6xf32> -> vector<16x6xf32>
    %c0_43 = arith.constant 0 : index
    %c0_44 = arith.constant 0 : index
    %c0_45 = arith.constant 0 : index
    %122 = vector.load %arg5[%c0_43, %c0_44, %c0_45] : memref<3x1x6xf32, #tpu.memory_space<vmem>>, vector<1x1x6xf32>
    %123 = vector.shape_cast %122 : vector<1x1x6xf32> to vector<1x6xf32>
    %124 = vector.broadcast %123 : vector<1x6xf32> to vector<16x6xf32>
    %125 = arith.addf %121, %124 : vector<16x6xf32>
    %126 = arith.addf %0, %125 : vector<16x6xf32>
    %c0_46 = arith.constant 0 : index
    %c0_47 = arith.constant 0 : index
    %c0_48 = arith.constant 0 : index
    %127 = vector.load %arg6[%c0_46, %c0_47, %c0_48] : memref<3x1x6xf32, #tpu.memory_space<vmem>>, vector<1x1x6xf32>
    %128 = vector.shape_cast %127 : vector<1x1x6xf32> to vector<1x6xf32>
    %c0_49 = arith.constant 0 : index
    %c0_50 = arith.constant 0 : index
    %c0_51 = arith.constant 0 : index
    %129 = vector.load %arg7[%c0_49, %c0_50, %c0_51] : memref<3x1x6xf32, #tpu.memory_space<vmem>>, vector<1x1x6xf32>
    %130 = vector.shape_cast %129 : vector<1x1x6xf32> to vector<1x6xf32>
    %cst_52 = arith.constant dense<0.000000e+00> : vector<16xf32>
    %131 = vector.multi_reduction <add>, %126, %cst_52 [1] : vector<16x6xf32> to vector<16xf32>
    %132 = vector.shape_cast %131 : vector<16xf32> to vector<16x1xf32>
    %cst_53 = arith.constant 6.000000e+00 : f32
    %133 = vector.broadcast %cst_53 : f32 to vector<16x1xf32>
    %134 = arith.divf %132, %133 : vector<16x1xf32>
    %135 = vector.broadcast %134 : vector<16x1xf32> to vector<16x6xf32>
    %136 = arith.subf %126, %135 : vector<16x6xf32>
    %137 = arith.mulf %136, %136 : vector<16x6xf32>
    %cst_54 = arith.constant dense<0.000000e+00> : vector<16xf32>
    %138 = vector.multi_reduction <add>, %137, %cst_54 [1] : vector<16x6xf32> to vector<16xf32>
    %139 = vector.shape_cast %138 : vector<16xf32> to vector<16x1xf32>
    %cst_55 = arith.constant 6.000000e+00 : f32
    %140 = vector.broadcast %cst_55 : f32 to vector<16x1xf32>
    %141 = arith.divf %139, %140 : vector<16x1xf32>
    %142 = vector.broadcast %134 : vector<16x1xf32> to vector<16x6xf32>
    %143 = arith.subf %126, %142 : vector<16x6xf32>
    %cst_56 = arith.constant 9.99999974E-6 : f32
    %144 = vector.broadcast %cst_56 : f32 to vector<16x1xf32>
    %145 = arith.addf %141, %144 : vector<16x1xf32>
    %146 = math.rsqrt %145 : vector<16x1xf32>
    %147 = vector.broadcast %146 : vector<16x1xf32> to vector<16x6xf32>
    %148 = arith.mulf %143, %147 : vector<16x6xf32>
    %149 = vector.broadcast %128 : vector<1x6xf32> to vector<16x6xf32>
    %150 = arith.mulf %148, %149 : vector<16x6xf32>
    %151 = vector.broadcast %130 : vector<1x6xf32> to vector<16x6xf32>
    %152 = arith.addf %150, %151 : vector<16x6xf32>
    %c0_57 = arith.constant 0 : index
    %c0_58 = arith.constant 0 : index
    %c0_59 = arith.constant 0 : index
    %153 = vector.load %arg10[%c0_57, %c0_58, %c0_59] : memref<3x6x2048xf32, #tpu.memory_space<vmem>>, vector<1x6x2048xf32>
    %154 = vector.shape_cast %153 : vector<1x6x2048xf32> to vector<6x2048xf32>
    %cst_60 = arith.constant dense<0.000000e+00> : vector<16x2048xf32>
    %155 = tpu.matmul %152, %154, %cst_60 {dimension_numbers = #tpu.dot_dimension_numbers<[1], [0], [0], [1], [0, 0, 1, 1], [], []>} : vector<16x6xf32>, vector<6x2048xf32>, vector<16x2048xf32> -> vector<16x2048xf32>
    %c0_61 = arith.constant 0 : index
    %c0_62 = arith.constant 0 : index
    %c0_63 = arith.constant 0 : index
    %156 = vector.load %arg11[%c0_61, %c0_62, %c0_63] : memref<3x1x2048xf32, #tpu.memory_space<vmem>>, vector<1x1x2048xf32>
    %157 = vector.shape_cast %156 : vector<1x1x2048xf32> to vector<1x2048xf32>
    %158 = vector.broadcast %157 : vector<1x2048xf32> to vector<16x2048xf32>
    %159 = arith.addf %155, %158 : vector<16x2048xf32>
    %cst_64 = arith.constant 0.000000e+00 : f32
    %160 = vector.broadcast %cst_64 : f32 to vector<16x2048xf32>
    %161 = arith.maximumf %159, %160 : vector<16x2048xf32>
    %c0_65 = arith.constant 0 : index
    %c0_66 = arith.constant 0 : index
    %c0_67 = arith.constant 0 : index
    %162 = vector.load %arg12[%c0_65, %c0_66, %c0_67] : memref<3x6x2048xf32, #tpu.memory_space<vmem>>, vector<1x6x2048xf32>
    %163 = vector.shape_cast %162 : vector<1x6x2048xf32> to vector<6x2048xf32>
    %cst_68 = arith.constant dense<0.000000e+00> : vector<16x6xf32>
    %164 = tpu.matmul %161, %163, %cst_68 {dimension_numbers = #tpu.dot_dimension_numbers<[1], [1], [0], [0], [0, 0, 1, 0], [], []>} : vector<16x2048xf32>, vector<6x2048xf32>, vector<16x6xf32> -> vector<16x6xf32>
    %c0_69 = arith.constant 0 : index
    %c0_70 = arith.constant 0 : index
    %c0_71 = arith.constant 0 : index
    %165 = vector.load %arg13[%c0_69, %c0_70, %c0_71] : memref<3x1x6xf32, #tpu.memory_space<vmem>>, vector<1x1x6xf32>
    %166 = vector.shape_cast %165 : vector<1x1x6xf32> to vector<1x6xf32>
    %167 = vector.broadcast %166 : vector<1x6xf32> to vector<16x6xf32>
    %168 = arith.addf %164, %167 : vector<16x6xf32>
    %169 = arith.addf %152, %168 : vector<16x6xf32>
    %c0_72 = arith.constant 0 : index
    %c0_73 = arith.constant 0 : index
    %c0_74 = arith.constant 0 : index
    %170 = vector.load %arg8[%c0_72, %c0_73, %c0_74] : memref<3x1x6xf32, #tpu.memory_space<vmem>>, vector<1x1x6xf32>
    %171 = vector.shape_cast %170 : vector<1x1x6xf32> to vector<1x6xf32>
    %c0_75 = arith.constant 0 : index
    %c0_76 = arith.constant 0 : index
    %c0_77 = arith.constant 0 : index
    %172 = vector.load %arg9[%c0_75, %c0_76, %c0_77] : memref<3x1x6xf32, #tpu.memory_space<vmem>>, vector<1x1x6xf32>
    %173 = vector.shape_cast %172 : vector<1x1x6xf32> to vector<1x6xf32>
    %cst_78 = arith.constant dense<0.000000e+00> : vector<16xf32>
    %174 = vector.multi_reduction <add>, %169, %cst_78 [1] : vector<16x6xf32> to vector<16xf32>
    %175 = vector.shape_cast %174 : vector<16xf32> to vector<16x1xf32>
    %cst_79 = arith.constant 6.000000e+00 : f32
    %176 = vector.broadcast %cst_79 : f32 to vector<16x1xf32>
    %177 = arith.divf %175, %176 : vector<16x1xf32>
    %178 = vector.broadcast %177 : vector<16x1xf32> to vector<16x6xf32>
    %179 = arith.subf %169, %178 : vector<16x6xf32>
    %180 = arith.mulf %179, %179 : vector<16x6xf32>
    %cst_80 = arith.constant dense<0.000000e+00> : vector<16xf32>
    %181 = vector.multi_reduction <add>, %180, %cst_80 [1] : vector<16x6xf32> to vector<16xf32>
    %182 = vector.shape_cast %181 : vector<16xf32> to vector<16x1xf32>
    %cst_81 = arith.constant 6.000000e+00 : f32
    %183 = vector.broadcast %cst_81 : f32 to vector<16x1xf32>
    %184 = arith.divf %182, %183 : vector<16x1xf32>
    %185 = vector.broadcast %177 : vector<16x1xf32> to vector<16x6xf32>
    %186 = arith.subf %169, %185 : vector<16x6xf32>
    %cst_82 = arith.constant 9.99999974E-6 : f32
    %187 = vector.broadcast %cst_82 : f32 to vector<16x1xf32>
    %188 = arith.addf %184, %187 : vector<16x1xf32>
    %189 = math.rsqrt %188 : vector<16x1xf32>
    %190 = vector.broadcast %189 : vector<16x1xf32> to vector<16x6xf32>
    %191 = arith.mulf %186, %190 : vector<16x6xf32>
    %192 = vector.broadcast %171 : vector<1x6xf32> to vector<16x6xf32>
    %193 = arith.mulf %191, %192 : vector<16x6xf32>
    %194 = vector.broadcast %173 : vector<1x6xf32> to vector<16x6xf32>
    %195 = arith.addf %193, %194 : vector<16x6xf32>
    %c1 = arith.constant 1 : index
    %c0_83 = arith.constant 0 : index
    %c0_84 = arith.constant 0 : index
    %196 = vector.load %arg2[%c1, %c0_83, %c0_84] : memref<3x6x1152xf32, #tpu.memory_space<vmem>>, vector<1x6x1152xf32>
    %197 = vector.shape_cast %196 : vector<1x6x1152xf32> to vector<6x1152xf32>
    %cst_85 = arith.constant dense<0.000000e+00> : vector<16x1152xf32>
    %198 = tpu.matmul %195, %197, %cst_85 {dimension_numbers = #tpu.dot_dimension_numbers<[1], [0], [0], [1], [0, 0, 1, 1], [], []>} : vector<16x6xf32>, vector<6x1152xf32>, vector<16x1152xf32> -> vector<16x1152xf32>
    %c1_86 = arith.constant 1 : index
    %c0_87 = arith.constant 0 : index
    %c0_88 = arith.constant 0 : index
    %199 = vector.load %arg3[%c1_86, %c0_87, %c0_88] : memref<3x1x1152xf32, #tpu.memory_space<vmem>>, vector<1x1x1152xf32>
    %200 = vector.shape_cast %199 : vector<1x1x1152xf32> to vector<1x1152xf32>
    %201 = vector.broadcast %200 : vector<1x1152xf32> to vector<16x1152xf32>
    %202 = arith.addf %198, %201 : vector<16x1152xf32>
    %203 = vector.extract_strided_slice %202 {offsets = [0, 0], sizes = [8, 128], strides = [1, 1]} : vector<16x1152xf32> to vector<8x128xf32>
    %204 = vector.extract_strided_slice %202 {offsets = [0, 384], sizes = [8, 128], strides = [1, 1]} : vector<16x1152xf32> to vector<8x128xf32>
    %205 = vector.extract_strided_slice %202 {offsets = [0, 768], sizes = [8, 128], strides = [1, 1]} : vector<16x1152xf32> to vector<8x128xf32>
    %cst_89 = arith.constant dense<0.000000e+00> : vector<8x8xf32>
    %206 = tpu.matmul %203, %204, %cst_89 {dimension_numbers = #tpu.dot_dimension_numbers<[1], [1], [0], [0], [0, 0, 1, 0], [], []>} : vector<8x128xf32>, vector<8x128xf32>, vector<8x8xf32> -> vector<8x8xf32>
    %cst_90 = arith.constant 0.707106769 : f32
    %207 = vector.broadcast %cst_90 : f32 to vector<8x8xf32>
    %208 = arith.mulf %206, %207 : vector<8x8xf32>
    %209 = arith.addf %208, %6 : vector<8x8xf32>
    %cst_91 = arith.constant dense<0xFF800000> : vector<8xf32>
    %210 = vector.multi_reduction <maximumf>, %209, %cst_91 [1] : vector<8x8xf32> to vector<8xf32>
    %211 = vector.shape_cast %210 : vector<8xf32> to vector<8x1xf32>
    %212 = vector.broadcast %211 : vector<8x1xf32> to vector<8x8xf32>
    %213 = arith.subf %209, %212 : vector<8x8xf32>
    %214 = math.exp %213 : vector<8x8xf32>
    %cst_92 = arith.constant dense<0.000000e+00> : vector<8xf32>
    %215 = vector.multi_reduction <add>, %214, %cst_92 [1] : vector<8x8xf32> to vector<8xf32>
    %216 = vector.shape_cast %215 : vector<8xf32> to vector<8x1xf32>
    %217 = vector.broadcast %216 : vector<8x1xf32> to vector<8x8xf32>
    %218 = arith.divf %214, %217 : vector<8x8xf32>
    %cst_93 = arith.constant dense<0.000000e+00> : vector<8x128xf32>
    %219 = tpu.matmul %218, %205, %cst_93 {dimension_numbers = #tpu.dot_dimension_numbers<[1], [0], [0], [1], [0, 0, 1, 1], [], []>} : vector<8x8xf32>, vector<8x128xf32>, vector<8x128xf32> -> vector<8x128xf32>
    %220 = vector.extract_strided_slice %202 {offsets = [0, 128], sizes = [8, 128], strides = [1, 1]} : vector<16x1152xf32> to vector<8x128xf32>
    %221 = vector.extract_strided_slice %202 {offsets = [0, 512], sizes = [8, 128], strides = [1, 1]} : vector<16x1152xf32> to vector<8x128xf32>
    %222 = vector.extract_strided_slice %202 {offsets = [0, 896], sizes = [8, 128], strides = [1, 1]} : vector<16x1152xf32> to vector<8x128xf32>
    %cst_94 = arith.constant dense<0.000000e+00> : vector<8x8xf32>
    %223 = tpu.matmul %220, %221, %cst_94 {dimension_numbers = #tpu.dot_dimension_numbers<[1], [1], [0], [0], [0, 0, 1, 0], [], []>} : vector<8x128xf32>, vector<8x128xf32>, vector<8x8xf32> -> vector<8x8xf32>
    %cst_95 = arith.constant 0.707106769 : f32
    %224 = vector.broadcast %cst_95 : f32 to vector<8x8xf32>
    %225 = arith.mulf %223, %224 : vector<8x8xf32>
    %226 = arith.addf %225, %6 : vector<8x8xf32>
    %cst_96 = arith.constant dense<0xFF800000> : vector<8xf32>
    %227 = vector.multi_reduction <maximumf>, %226, %cst_96 [1] : vector<8x8xf32> to vector<8xf32>
    %228 = vector.shape_cast %227 : vector<8xf32> to vector<8x1xf32>
    %229 = vector.broadcast %228 : vector<8x1xf32> to vector<8x8xf32>
    %230 = arith.subf %226, %229 : vector<8x8xf32>
    %231 = math.exp %230 : vector<8x8xf32>
    %cst_97 = arith.constant dense<0.000000e+00> : vector<8xf32>
    %232 = vector.multi_reduction <add>, %231, %cst_97 [1] : vector<8x8xf32> to vector<8xf32>
    %233 = vector.shape_cast %232 : vector<8xf32> to vector<8x1xf32>
    %234 = vector.broadcast %233 : vector<8x1xf32> to vector<8x8xf32>
    %235 = arith.divf %231, %234 : vector<8x8xf32>
    %cst_98 = arith.constant dense<0.000000e+00> : vector<8x128xf32>
    %236 = tpu.matmul %235, %222, %cst_98 {dimension_numbers = #tpu.dot_dimension_numbers<[1], [0], [0], [1], [0, 0, 1, 1], [], []>} : vector<8x8xf32>, vector<8x128xf32>, vector<8x128xf32> -> vector<8x128xf32>
    %237 = vector.extract_strided_slice %202 {offsets = [0, 256], sizes = [8, 128], strides = [1, 1]} : vector<16x1152xf32> to vector<8x128xf32>
    %238 = vector.extract_strided_slice %202 {offsets = [0, 640], sizes = [8, 128], strides = [1, 1]} : vector<16x1152xf32> to vector<8x128xf32>
    %239 = vector.extract_strided_slice %202 {offsets = [0, 1024], sizes = [8, 128], strides = [1, 1]} : vector<16x1152xf32> to vector<8x128xf32>
    %cst_99 = arith.constant dense<0.000000e+00> : vector<8x8xf32>
    %240 = tpu.matmul %237, %238, %cst_99 {dimension_numbers = #tpu.dot_dimension_numbers<[1], [1], [0], [0], [0, 0, 1, 0], [], []>} : vector<8x128xf32>, vector<8x128xf32>, vector<8x8xf32> -> vector<8x8xf32>
    %cst_100 = arith.constant 0.707106769 : f32
    %241 = vector.broadcast %cst_100 : f32 to vector<8x8xf32>
    %242 = arith.mulf %240, %241 : vector<8x8xf32>
    %243 = arith.addf %242, %6 : vector<8x8xf32>
    %cst_101 = arith.constant dense<0xFF800000> : vector<8xf32>
    %244 = vector.multi_reduction <maximumf>, %243, %cst_101 [1] : vector<8x8xf32> to vector<8xf32>
    %245 = vector.shape_cast %244 : vector<8xf32> to vector<8x1xf32>
    %246 = vector.broadcast %245 : vector<8x1xf32> to vector<8x8xf32>
    %247 = arith.subf %243, %246 : vector<8x8xf32>
    %248 = math.exp %247 : vector<8x8xf32>
    %cst_102 = arith.constant dense<0.000000e+00> : vector<8xf32>
    %249 = vector.multi_reduction <add>, %248, %cst_102 [1] : vector<8x8xf32> to vector<8xf32>
    %250 = vector.shape_cast %249 : vector<8xf32> to vector<8x1xf32>
    %251 = vector.broadcast %250 : vector<8x1xf32> to vector<8x8xf32>
    %252 = arith.divf %248, %251 : vector<8x8xf32>
    %cst_103 = arith.constant dense<0.000000e+00> : vector<8x128xf32>
    %253 = tpu.matmul %252, %239, %cst_103 {dimension_numbers = #tpu.dot_dimension_numbers<[1], [0], [0], [1], [0, 0, 1, 1], [], []>} : vector<8x8xf32>, vector<8x128xf32>, vector<8x128xf32> -> vector<8x128xf32>
    %254 = tpu.concatenate %219, %236, %253 in 1 : vector<8x128xf32>, vector<8x128xf32>, vector<8x128xf32> -> vector<8x384xf32>
    %255 = vector.extract_strided_slice %202 {offsets = [8, 0], sizes = [8, 128], strides = [1, 1]} : vector<16x1152xf32> to vector<8x128xf32>
    %256 = vector.extract_strided_slice %202 {offsets = [8, 384], sizes = [8, 128], strides = [1, 1]} : vector<16x1152xf32> to vector<8x128xf32>
    %257 = vector.extract_strided_slice %202 {offsets = [8, 768], sizes = [8, 128], strides = [1, 1]} : vector<16x1152xf32> to vector<8x128xf32>
    %cst_104 = arith.constant dense<0.000000e+00> : vector<8x8xf32>
    %258 = tpu.matmul %255, %256, %cst_104 {dimension_numbers = #tpu.dot_dimension_numbers<[1], [1], [0], [0], [0, 0, 1, 0], [], []>} : vector<8x128xf32>, vector<8x128xf32>, vector<8x8xf32> -> vector<8x8xf32>
    %cst_105 = arith.constant 0.707106769 : f32
    %259 = vector.broadcast %cst_105 : f32 to vector<8x8xf32>
    %260 = arith.mulf %258, %259 : vector<8x8xf32>
    %261 = arith.addf %260, %6 : vector<8x8xf32>
    %cst_106 = arith.constant dense<0xFF800000> : vector<8xf32>
    %262 = vector.multi_reduction <maximumf>, %261, %cst_106 [1] : vector<8x8xf32> to vector<8xf32>
    %263 = vector.shape_cast %262 : vector<8xf32> to vector<8x1xf32>
    %264 = vector.broadcast %263 : vector<8x1xf32> to vector<8x8xf32>
    %265 = arith.subf %261, %264 : vector<8x8xf32>
    %266 = math.exp %265 : vector<8x8xf32>
    %cst_107 = arith.constant dense<0.000000e+00> : vector<8xf32>
    %267 = vector.multi_reduction <add>, %266, %cst_107 [1] : vector<8x8xf32> to vector<8xf32>
    %268 = vector.shape_cast %267 : vector<8xf32> to vector<8x1xf32>
    %269 = vector.broadcast %268 : vector<8x1xf32> to vector<8x8xf32>
    %270 = arith.divf %266, %269 : vector<8x8xf32>
    %cst_108 = arith.constant dense<0.000000e+00> : vector<8x128xf32>
    %271 = tpu.matmul %270, %257, %cst_108 {dimension_numbers = #tpu.dot_dimension_numbers<[1], [0], [0], [1], [0, 0, 1, 1], [], []>} : vector<8x8xf32>, vector<8x128xf32>, vector<8x128xf32> -> vector<8x128xf32>
    %272 = vector.extract_strided_slice %202 {offsets = [8, 128], sizes = [8, 128], strides = [1, 1]} : vector<16x1152xf32> to vector<8x128xf32>
    %273 = vector.extract_strided_slice %202 {offsets = [8, 512], sizes = [8, 128], strides = [1, 1]} : vector<16x1152xf32> to vector<8x128xf32>
    %274 = vector.extract_strided_slice %202 {offsets = [8, 896], sizes = [8, 128], strides = [1, 1]} : vector<16x1152xf32> to vector<8x128xf32>
    %cst_109 = arith.constant dense<0.000000e+00> : vector<8x8xf32>
    %275 = tpu.matmul %272, %273, %cst_109 {dimension_numbers = #tpu.dot_dimension_numbers<[1], [1], [0], [0], [0, 0, 1, 0], [], []>} : vector<8x128xf32>, vector<8x128xf32>, vector<8x8xf32> -> vector<8x8xf32>
    %cst_110 = arith.constant 0.707106769 : f32
    %276 = vector.broadcast %cst_110 : f32 to vector<8x8xf32>
    %277 = arith.mulf %275, %276 : vector<8x8xf32>
    %278 = arith.addf %277, %6 : vector<8x8xf32>
    %cst_111 = arith.constant dense<0xFF800000> : vector<8xf32>
    %279 = vector.multi_reduction <maximumf>, %278, %cst_111 [1] : vector<8x8xf32> to vector<8xf32>
    %280 = vector.shape_cast %279 : vector<8xf32> to vector<8x1xf32>
    %281 = vector.broadcast %280 : vector<8x1xf32> to vector<8x8xf32>
    %282 = arith.subf %278, %281 : vector<8x8xf32>
    %283 = math.exp %282 : vector<8x8xf32>
    %cst_112 = arith.constant dense<0.000000e+00> : vector<8xf32>
    %284 = vector.multi_reduction <add>, %283, %cst_112 [1] : vector<8x8xf32> to vector<8xf32>
    %285 = vector.shape_cast %284 : vector<8xf32> to vector<8x1xf32>
    %286 = vector.broadcast %285 : vector<8x1xf32> to vector<8x8xf32>
    %287 = arith.divf %283, %286 : vector<8x8xf32>
    %cst_113 = arith.constant dense<0.000000e+00> : vector<8x128xf32>
    %288 = tpu.matmul %287, %274, %cst_113 {dimension_numbers = #tpu.dot_dimension_numbers<[1], [0], [0], [1], [0, 0, 1, 1], [], []>} : vector<8x8xf32>, vector<8x128xf32>, vector<8x128xf32> -> vector<8x128xf32>
    %289 = vector.extract_strided_slice %202 {offsets = [8, 256], sizes = [8, 128], strides = [1, 1]} : vector<16x1152xf32> to vector<8x128xf32>
    %290 = vector.extract_strided_slice %202 {offsets = [8, 640], sizes = [8, 128], strides = [1, 1]} : vector<16x1152xf32> to vector<8x128xf32>
    %291 = vector.extract_strided_slice %202 {offsets = [8, 1024], sizes = [8, 128], strides = [1, 1]} : vector<16x1152xf32> to vector<8x128xf32>
    %cst_114 = arith.constant dense<0.000000e+00> : vector<8x8xf32>
    %292 = tpu.matmul %289, %290, %cst_114 {dimension_numbers = #tpu.dot_dimension_numbers<[1], [1], [0], [0], [0, 0, 1, 0], [], []>} : vector<8x128xf32>, vector<8x128xf32>, vector<8x8xf32> -> vector<8x8xf32>
    %cst_115 = arith.constant 0.707106769 : f32
    %293 = vector.broadcast %cst_115 : f32 to vector<8x8xf32>
    %294 = arith.mulf %292, %293 : vector<8x8xf32>
    %295 = arith.addf %294, %6 : vector<8x8xf32>
    %cst_116 = arith.constant dense<0xFF800000> : vector<8xf32>
    %296 = vector.multi_reduction <maximumf>, %295, %cst_116 [1] : vector<8x8xf32> to vector<8xf32>
    %297 = vector.shape_cast %296 : vector<8xf32> to vector<8x1xf32>
    %298 = vector.broadcast %297 : vector<8x1xf32> to vector<8x8xf32>
    %299 = arith.subf %295, %298 : vector<8x8xf32>
    %300 = math.exp %299 : vector<8x8xf32>
    %cst_117 = arith.constant dense<0.000000e+00> : vector<8xf32>
    %301 = vector.multi_reduction <add>, %300, %cst_117 [1] : vector<8x8xf32> to vector<8xf32>
    %302 = vector.shape_cast %301 : vector<8xf32> to vector<8x1xf32>
    %303 = vector.broadcast %302 : vector<8x1xf32> to vector<8x8xf32>
    %304 = arith.divf %300, %303 : vector<8x8xf32>
    %cst_118 = arith.constant dense<0.000000e+00> : vector<8x128xf32>
    %305 = tpu.matmul %304, %291, %cst_118 {dimension_numbers = #tpu.dot_dimension_numbers<[1], [0], [0], [1], [0, 0, 1, 1], [], []>} : vector<8x8xf32>, vector<8x128xf32>, vector<8x128xf32> -> vector<8x128xf32>
    %306 = tpu.concatenate %271, %288, %305 in 1 : vector<8x128xf32>, vector<8x128xf32>, vector<8x128xf32> -> vector<8x384xf32>
    %307 = tpu.concatenate %254, %306 in 0 : vector<8x384xf32>, vector<8x384xf32> -> vector<16x384xf32>
    %c1_119 = arith.constant 1 : index
    %c0_120 = arith.constant 0 : index
    %c0_121 = arith.constant 0 : index
    %308 = vector.load %arg4[%c1_119, %c0_120, %c0_121] : memref<3x6x384xf32, #tpu.memory_space<vmem>>, vector<1x6x384xf32>
    %309 = vector.shape_cast %308 : vector<1x6x384xf32> to vector<6x384xf32>
    %cst_122 = arith.constant dense<0.000000e+00> : vector<16x6xf32>
    %310 = tpu.matmul %307, %309, %cst_122 {dimension_numbers = #tpu.dot_dimension_numbers<[1], [1], [0], [0], [0, 0, 1, 0], [], []>} : vector<16x384xf32>, vector<6x384xf32>, vector<16x6xf32> -> vector<16x6xf32>
    %c1_123 = arith.constant 1 : index
    %c0_124 = arith.constant 0 : index
    %c0_125 = arith.constant 0 : index
    %311 = vector.load %arg5[%c1_123, %c0_124, %c0_125] : memref<3x1x6xf32, #tpu.memory_space<vmem>>, vector<1x1x6xf32>
    %312 = vector.shape_cast %311 : vector<1x1x6xf32> to vector<1x6xf32>
    %313 = vector.broadcast %312 : vector<1x6xf32> to vector<16x6xf32>
    %314 = arith.addf %310, %313 : vector<16x6xf32>
    %315 = arith.addf %195, %314 : vector<16x6xf32>
    %c1_126 = arith.constant 1 : index
    %c0_127 = arith.constant 0 : index
    %c0_128 = arith.constant 0 : index
    %316 = vector.load %arg6[%c1_126, %c0_127, %c0_128] : memref<3x1x6xf32, #tpu.memory_space<vmem>>, vector<1x1x6xf32>
    %317 = vector.shape_cast %316 : vector<1x1x6xf32> to vector<1x6xf32>
    %c1_129 = arith.constant 1 : index
    %c0_130 = arith.constant 0 : index
    %c0_131 = arith.constant 0 : index
    %318 = vector.load %arg7[%c1_129, %c0_130, %c0_131] : memref<3x1x6xf32, #tpu.memory_space<vmem>>, vector<1x1x6xf32>
    %319 = vector.shape_cast %318 : vector<1x1x6xf32> to vector<1x6xf32>
    %cst_132 = arith.constant dense<0.000000e+00> : vector<16xf32>
    %320 = vector.multi_reduction <add>, %315, %cst_132 [1] : vector<16x6xf32> to vector<16xf32>
    %321 = vector.shape_cast %320 : vector<16xf32> to vector<16x1xf32>
    %cst_133 = arith.constant 6.000000e+00 : f32
    %322 = vector.broadcast %cst_133 : f32 to vector<16x1xf32>
    %323 = arith.divf %321, %322 : vector<16x1xf32>
    %324 = vector.broadcast %323 : vector<16x1xf32> to vector<16x6xf32>
    %325 = arith.subf %315, %324 : vector<16x6xf32>
    %326 = arith.mulf %325, %325 : vector<16x6xf32>
    %cst_134 = arith.constant dense<0.000000e+00> : vector<16xf32>
    %327 = vector.multi_reduction <add>, %326, %cst_134 [1] : vector<16x6xf32> to vector<16xf32>
    %328 = vector.shape_cast %327 : vector<16xf32> to vector<16x1xf32>
    %cst_135 = arith.constant 6.000000e+00 : f32
    %329 = vector.broadcast %cst_135 : f32 to vector<16x1xf32>
    %330 = arith.divf %328, %329 : vector<16x1xf32>
    %331 = vector.broadcast %323 : vector<16x1xf32> to vector<16x6xf32>
    %332 = arith.subf %315, %331 : vector<16x6xf32>
    %cst_136 = arith.constant 9.99999974E-6 : f32
    %333 = vector.broadcast %cst_136 : f32 to vector<16x1xf32>
    %334 = arith.addf %330, %333 : vector<16x1xf32>
    %335 = math.rsqrt %334 : vector<16x1xf32>
    %336 = vector.broadcast %335 : vector<16x1xf32> to vector<16x6xf32>
    %337 = arith.mulf %332, %336 : vector<16x6xf32>
    %338 = vector.broadcast %317 : vector<1x6xf32> to vector<16x6xf32>
    %339 = arith.mulf %337, %338 : vector<16x6xf32>
    %340 = vector.broadcast %319 : vector<1x6xf32> to vector<16x6xf32>
    %341 = arith.addf %339, %340 : vector<16x6xf32>
    %c1_137 = arith.constant 1 : index
    %c0_138 = arith.constant 0 : index
    %c0_139 = arith.constant 0 : index
    %342 = vector.load %arg10[%c1_137, %c0_138, %c0_139] : memref<3x6x2048xf32, #tpu.memory_space<vmem>>, vector<1x6x2048xf32>
    %343 = vector.shape_cast %342 : vector<1x6x2048xf32> to vector<6x2048xf32>
    %cst_140 = arith.constant dense<0.000000e+00> : vector<16x2048xf32>
    %344 = tpu.matmul %341, %343, %cst_140 {dimension_numbers = #tpu.dot_dimension_numbers<[1], [0], [0], [1], [0, 0, 1, 1], [], []>} : vector<16x6xf32>, vector<6x2048xf32>, vector<16x2048xf32> -> vector<16x2048xf32>
    %c1_141 = arith.constant 1 : index
    %c0_142 = arith.constant 0 : index
    %c0_143 = arith.constant 0 : index
    %345 = vector.load %arg11[%c1_141, %c0_142, %c0_143] : memref<3x1x2048xf32, #tpu.memory_space<vmem>>, vector<1x1x2048xf32>
    %346 = vector.shape_cast %345 : vector<1x1x2048xf32> to vector<1x2048xf32>
    %347 = vector.broadcast %346 : vector<1x2048xf32> to vector<16x2048xf32>
    %348 = arith.addf %344, %347 : vector<16x2048xf32>
    %cst_144 = arith.constant 0.000000e+00 : f32
    %349 = vector.broadcast %cst_144 : f32 to vector<16x2048xf32>
    %350 = arith.maximumf %348, %349 : vector<16x2048xf32>
    %c1_145 = arith.constant 1 : index
    %c0_146 = arith.constant 0 : index
    %c0_147 = arith.constant 0 : index
    %351 = vector.load %arg12[%c1_145, %c0_146, %c0_147] : memref<3x6x2048xf32, #tpu.memory_space<vmem>>, vector<1x6x2048xf32>
    %352 = vector.shape_cast %351 : vector<1x6x2048xf32> to vector<6x2048xf32>
    %cst_148 = arith.constant dense<0.000000e+00> : vector<16x6xf32>
    %353 = tpu.matmul %350, %352, %cst_148 {dimension_numbers = #tpu.dot_dimension_numbers<[1], [1], [0], [0], [0, 0, 1, 0], [], []>} : vector<16x2048xf32>, vector<6x2048xf32>, vector<16x6xf32> -> vector<16x6xf32>
    %c1_149 = arith.constant 1 : index
    %c0_150 = arith.constant 0 : index
    %c0_151 = arith.constant 0 : index
    %354 = vector.load %arg13[%c1_149, %c0_150, %c0_151] : memref<3x1x6xf32, #tpu.memory_space<vmem>>, vector<1x1x6xf32>
    %355 = vector.shape_cast %354 : vector<1x1x6xf32> to vector<1x6xf32>
    %356 = vector.broadcast %355 : vector<1x6xf32> to vector<16x6xf32>
    %357 = arith.addf %353, %356 : vector<16x6xf32>
    %358 = arith.addf %341, %357 : vector<16x6xf32>
    %c1_152 = arith.constant 1 : index
    %c0_153 = arith.constant 0 : index
    %c0_154 = arith.constant 0 : index
    %359 = vector.load %arg8[%c1_152, %c0_153, %c0_154] : memref<3x1x6xf32, #tpu.memory_space<vmem>>, vector<1x1x6xf32>
    %360 = vector.shape_cast %359 : vector<1x1x6xf32> to vector<1x6xf32>
    %c1_155 = arith.constant 1 : index
    %c0_156 = arith.constant 0 : index
    %c0_157 = arith.constant 0 : index
    %361 = vector.load %arg9[%c1_155, %c0_156, %c0_157] : memref<3x1x6xf32, #tpu.memory_space<vmem>>, vector<1x1x6xf32>
    %362 = vector.shape_cast %361 : vector<1x1x6xf32> to vector<1x6xf32>
    %cst_158 = arith.constant dense<0.000000e+00> : vector<16xf32>
    %363 = vector.multi_reduction <add>, %358, %cst_158 [1] : vector<16x6xf32> to vector<16xf32>
    %364 = vector.shape_cast %363 : vector<16xf32> to vector<16x1xf32>
    %cst_159 = arith.constant 6.000000e+00 : f32
    %365 = vector.broadcast %cst_159 : f32 to vector<16x1xf32>
    %366 = arith.divf %364, %365 : vector<16x1xf32>
    %367 = vector.broadcast %366 : vector<16x1xf32> to vector<16x6xf32>
    %368 = arith.subf %358, %367 : vector<16x6xf32>
    %369 = arith.mulf %368, %368 : vector<16x6xf32>
    %cst_160 = arith.constant dense<0.000000e+00> : vector<16xf32>
    %370 = vector.multi_reduction <add>, %369, %cst_160 [1] : vector<16x6xf32> to vector<16xf32>
    %371 = vector.shape_cast %370 : vector<16xf32> to vector<16x1xf32>
    %cst_161 = arith.constant 6.000000e+00 : f32
    %372 = vector.broadcast %cst_161 : f32 to vector<16x1xf32>
    %373 = arith.divf %371, %372 : vector<16x1xf32>
    %374 = vector.broadcast %366 : vector<16x1xf32> to vector<16x6xf32>
    %375 = arith.subf %358, %374 : vector<16x6xf32>
    %cst_162 = arith.constant 9.99999974E-6 : f32
    %376 = vector.broadcast %cst_162 : f32 to vector<16x1xf32>
    %377 = arith.addf %373, %376 : vector<16x1xf32>
    %378 = math.rsqrt %377 : vector<16x1xf32>
    %379 = vector.broadcast %378 : vector<16x1xf32> to vector<16x6xf32>
    %380 = arith.mulf %375, %379 : vector<16x6xf32>
    %381 = vector.broadcast %360 : vector<1x6xf32> to vector<16x6xf32>
    %382 = arith.mulf %380, %381 : vector<16x6xf32>
    %383 = vector.broadcast %362 : vector<1x6xf32> to vector<16x6xf32>
    %384 = arith.addf %382, %383 : vector<16x6xf32>
    %c2 = arith.constant 2 : index
    %c0_163 = arith.constant 0 : index
    %c0_164 = arith.constant 0 : index
    %385 = vector.load %arg2[%c2, %c0_163, %c0_164] : memref<3x6x1152xf32, #tpu.memory_space<vmem>>, vector<1x6x1152xf32>
    %386 = vector.shape_cast %385 : vector<1x6x1152xf32> to vector<6x1152xf32>
    %cst_165 = arith.constant dense<0.000000e+00> : vector<16x1152xf32>
    %387 = tpu.matmul %384, %386, %cst_165 {dimension_numbers = #tpu.dot_dimension_numbers<[1], [0], [0], [1], [0, 0, 1, 1], [], []>} : vector<16x6xf32>, vector<6x1152xf32>, vector<16x1152xf32> -> vector<16x1152xf32>
    %c2_166 = arith.constant 2 : index
    %c0_167 = arith.constant 0 : index
    %c0_168 = arith.constant 0 : index
    %388 = vector.load %arg3[%c2_166, %c0_167, %c0_168] : memref<3x1x1152xf32, #tpu.memory_space<vmem>>, vector<1x1x1152xf32>
    %389 = vector.shape_cast %388 : vector<1x1x1152xf32> to vector<1x1152xf32>
    %390 = vector.broadcast %389 : vector<1x1152xf32> to vector<16x1152xf32>
    %391 = arith.addf %387, %390 : vector<16x1152xf32>
    %392 = vector.extract_strided_slice %391 {offsets = [0, 0], sizes = [8, 128], strides = [1, 1]} : vector<16x1152xf32> to vector<8x128xf32>
    %393 = vector.extract_strided_slice %391 {offsets = [0, 384], sizes = [8, 128], strides = [1, 1]} : vector<16x1152xf32> to vector<8x128xf32>
    %394 = vector.extract_strided_slice %391 {offsets = [0, 768], sizes = [8, 128], strides = [1, 1]} : vector<16x1152xf32> to vector<8x128xf32>
    %cst_169 = arith.constant dense<0.000000e+00> : vector<8x8xf32>
    %395 = tpu.matmul %392, %393, %cst_169 {dimension_numbers = #tpu.dot_dimension_numbers<[1], [1], [0], [0], [0, 0, 1, 0], [], []>} : vector<8x128xf32>, vector<8x128xf32>, vector<8x8xf32> -> vector<8x8xf32>
    %cst_170 = arith.constant 0.707106769 : f32
    %396 = vector.broadcast %cst_170 : f32 to vector<8x8xf32>
    %397 = arith.mulf %395, %396 : vector<8x8xf32>
    %398 = arith.addf %397, %6 : vector<8x8xf32>
    %cst_171 = arith.constant dense<0xFF800000> : vector<8xf32>
    %399 = vector.multi_reduction <maximumf>, %398, %cst_171 [1] : vector<8x8xf32> to vector<8xf32>
    %400 = vector.shape_cast %399 : vector<8xf32> to vector<8x1xf32>
    %401 = vector.broadcast %400 : vector<8x1xf32> to vector<8x8xf32>
    %402 = arith.subf %398, %401 : vector<8x8xf32>
    %403 = math.exp %402 : vector<8x8xf32>
    %cst_172 = arith.constant dense<0.000000e+00> : vector<8xf32>
    %404 = vector.multi_reduction <add>, %403, %cst_172 [1] : vector<8x8xf32> to vector<8xf32>
    %405 = vector.shape_cast %404 : vector<8xf32> to vector<8x1xf32>
    %406 = vector.broadcast %405 : vector<8x1xf32> to vector<8x8xf32>
    %407 = arith.divf %403, %406 : vector<8x8xf32>
    %cst_173 = arith.constant dense<0.000000e+00> : vector<8x128xf32>
    %408 = tpu.matmul %407, %394, %cst_173 {dimension_numbers = #tpu.dot_dimension_numbers<[1], [0], [0], [1], [0, 0, 1, 1], [], []>} : vector<8x8xf32>, vector<8x128xf32>, vector<8x128xf32> -> vector<8x128xf32>
    %409 = vector.extract_strided_slice %391 {offsets = [0, 128], sizes = [8, 128], strides = [1, 1]} : vector<16x1152xf32> to vector<8x128xf32>
    %410 = vector.extract_strided_slice %391 {offsets = [0, 512], sizes = [8, 128], strides = [1, 1]} : vector<16x1152xf32> to vector<8x128xf32>
    %411 = vector.extract_strided_slice %391 {offsets = [0, 896], sizes = [8, 128], strides = [1, 1]} : vector<16x1152xf32> to vector<8x128xf32>
    %cst_174 = arith.constant dense<0.000000e+00> : vector<8x8xf32>
    %412 = tpu.matmul %409, %410, %cst_174 {dimension_numbers = #tpu.dot_dimension_numbers<[1], [1], [0], [0], [0, 0, 1, 0], [], []>} : vector<8x128xf32>, vector<8x128xf32>, vector<8x8xf32> -> vector<8x8xf32>
    %cst_175 = arith.constant 0.707106769 : f32
    %413 = vector.broadcast %cst_175 : f32 to vector<8x8xf32>
    %414 = arith.mulf %412, %413 : vector<8x8xf32>
    %415 = arith.addf %414, %6 : vector<8x8xf32>
    %cst_176 = arith.constant dense<0xFF800000> : vector<8xf32>
    %416 = vector.multi_reduction <maximumf>, %415, %cst_176 [1] : vector<8x8xf32> to vector<8xf32>
    %417 = vector.shape_cast %416 : vector<8xf32> to vector<8x1xf32>
    %418 = vector.broadcast %417 : vector<8x1xf32> to vector<8x8xf32>
    %419 = arith.subf %415, %418 : vector<8x8xf32>
    %420 = math.exp %419 : vector<8x8xf32>
    %cst_177 = arith.constant dense<0.000000e+00> : vector<8xf32>
    %421 = vector.multi_reduction <add>, %420, %cst_177 [1] : vector<8x8xf32> to vector<8xf32>
    %422 = vector.shape_cast %421 : vector<8xf32> to vector<8x1xf32>
    %423 = vector.broadcast %422 : vector<8x1xf32> to vector<8x8xf32>
    %424 = arith.divf %420, %423 : vector<8x8xf32>
    %cst_178 = arith.constant dense<0.000000e+00> : vector<8x128xf32>
    %425 = tpu.matmul %424, %411, %cst_178 {dimension_numbers = #tpu.dot_dimension_numbers<[1], [0], [0], [1], [0, 0, 1, 1], [], []>} : vector<8x8xf32>, vector<8x128xf32>, vector<8x128xf32> -> vector<8x128xf32>
    %426 = vector.extract_strided_slice %391 {offsets = [0, 256], sizes = [8, 128], strides = [1, 1]} : vector<16x1152xf32> to vector<8x128xf32>
    %427 = vector.extract_strided_slice %391 {offsets = [0, 640], sizes = [8, 128], strides = [1, 1]} : vector<16x1152xf32> to vector<8x128xf32>
    %428 = vector.extract_strided_slice %391 {offsets = [0, 1024], sizes = [8, 128], strides = [1, 1]} : vector<16x1152xf32> to vector<8x128xf32>
    %cst_179 = arith.constant dense<0.000000e+00> : vector<8x8xf32>
    %429 = tpu.matmul %426, %427, %cst_179 {dimension_numbers = #tpu.dot_dimension_numbers<[1], [1], [0], [0], [0, 0, 1, 0], [], []>} : vector<8x128xf32>, vector<8x128xf32>, vector<8x8xf32> -> vector<8x8xf32>
    %cst_180 = arith.constant 0.707106769 : f32
    %430 = vector.broadcast %cst_180 : f32 to vector<8x8xf32>
    %431 = arith.mulf %429, %430 : vector<8x8xf32>
    %432 = arith.addf %431, %6 : vector<8x8xf32>
    %cst_181 = arith.constant dense<0xFF800000> : vector<8xf32>
    %433 = vector.multi_reduction <maximumf>, %432, %cst_181 [1] : vector<8x8xf32> to vector<8xf32>
    %434 = vector.shape_cast %433 : vector<8xf32> to vector<8x1xf32>
    %435 = vector.broadcast %434 : vector<8x1xf32> to vector<8x8xf32>
    %436 = arith.subf %432, %435 : vector<8x8xf32>
    %437 = math.exp %436 : vector<8x8xf32>
    %cst_182 = arith.constant dense<0.000000e+00> : vector<8xf32>
    %438 = vector.multi_reduction <add>, %437, %cst_182 [1] : vector<8x8xf32> to vector<8xf32>
    %439 = vector.shape_cast %438 : vector<8xf32> to vector<8x1xf32>
    %440 = vector.broadcast %439 : vector<8x1xf32> to vector<8x8xf32>
    %441 = arith.divf %437, %440 : vector<8x8xf32>
    %cst_183 = arith.constant dense<0.000000e+00> : vector<8x128xf32>
    %442 = tpu.matmul %441, %428, %cst_183 {dimension_numbers = #tpu.dot_dimension_numbers<[1], [0], [0], [1], [0, 0, 1, 1], [], []>} : vector<8x8xf32>, vector<8x128xf32>, vector<8x128xf32> -> vector<8x128xf32>
    %443 = tpu.concatenate %408, %425, %442 in 1 : vector<8x128xf32>, vector<8x128xf32>, vector<8x128xf32> -> vector<8x384xf32>
    %444 = vector.extract_strided_slice %391 {offsets = [8, 0], sizes = [8, 128], strides = [1, 1]} : vector<16x1152xf32> to vector<8x128xf32>
    %445 = vector.extract_strided_slice %391 {offsets = [8, 384], sizes = [8, 128], strides = [1, 1]} : vector<16x1152xf32> to vector<8x128xf32>
    %446 = vector.extract_strided_slice %391 {offsets = [8, 768], sizes = [8, 128], strides = [1, 1]} : vector<16x1152xf32> to vector<8x128xf32>
    %cst_184 = arith.constant dense<0.000000e+00> : vector<8x8xf32>
    %447 = tpu.matmul %444, %445, %cst_184 {dimension_numbers = #tpu.dot_dimension_numbers<[1], [1], [0], [0], [0, 0, 1, 0], [], []>} : vector<8x128xf32>, vector<8x128xf32>, vector<8x8xf32> -> vector<8x8xf32>
    %cst_185 = arith.constant 0.707106769 : f32
    %448 = vector.broadcast %cst_185 : f32 to vector<8x8xf32>
    %449 = arith.mulf %447, %448 : vector<8x8xf32>
    %450 = arith.addf %449, %6 : vector<8x8xf32>
    %cst_186 = arith.constant dense<0xFF800000> : vector<8xf32>
    %451 = vector.multi_reduction <maximumf>, %450, %cst_186 [1] : vector<8x8xf32> to vector<8xf32>
    %452 = vector.shape_cast %451 : vector<8xf32> to vector<8x1xf32>
    %453 = vector.broadcast %452 : vector<8x1xf32> to vector<8x8xf32>
    %454 = arith.subf %450, %453 : vector<8x8xf32>
    %455 = math.exp %454 : vector<8x8xf32>
    %cst_187 = arith.constant dense<0.000000e+00> : vector<8xf32>
    %456 = vector.multi_reduction <add>, %455, %cst_187 [1] : vector<8x8xf32> to vector<8xf32>
    %457 = vector.shape_cast %456 : vector<8xf32> to vector<8x1xf32>
    %458 = vector.broadcast %457 : vector<8x1xf32> to vector<8x8xf32>
    %459 = arith.divf %455, %458 : vector<8x8xf32>
    %cst_188 = arith.constant dense<0.000000e+00> : vector<8x128xf32>
    %460 = tpu.matmul %459, %446, %cst_188 {dimension_numbers = #tpu.dot_dimension_numbers<[1], [0], [0], [1], [0, 0, 1, 1], [], []>} : vector<8x8xf32>, vector<8x128xf32>, vector<8x128xf32> -> vector<8x128xf32>
    %461 = vector.extract_strided_slice %391 {offsets = [8, 128], sizes = [8, 128], strides = [1, 1]} : vector<16x1152xf32> to vector<8x128xf32>
    %462 = vector.extract_strided_slice %391 {offsets = [8, 512], sizes = [8, 128], strides = [1, 1]} : vector<16x1152xf32> to vector<8x128xf32>
    %463 = vector.extract_strided_slice %391 {offsets = [8, 896], sizes = [8, 128], strides = [1, 1]} : vector<16x1152xf32> to vector<8x128xf32>
    %cst_189 = arith.constant dense<0.000000e+00> : vector<8x8xf32>
    %464 = tpu.matmul %461, %462, %cst_189 {dimension_numbers = #tpu.dot_dimension_numbers<[1], [1], [0], [0], [0, 0, 1, 0], [], []>} : vector<8x128xf32>, vector<8x128xf32>, vector<8x8xf32> -> vector<8x8xf32>
    %cst_190 = arith.constant 0.707106769 : f32
    %465 = vector.broadcast %cst_190 : f32 to vector<8x8xf32>
    %466 = arith.mulf %464, %465 : vector<8x8xf32>
    %467 = arith.addf %466, %6 : vector<8x8xf32>
    %cst_191 = arith.constant dense<0xFF800000> : vector<8xf32>
    %468 = vector.multi_reduction <maximumf>, %467, %cst_191 [1] : vector<8x8xf32> to vector<8xf32>
    %469 = vector.shape_cast %468 : vector<8xf32> to vector<8x1xf32>
    %470 = vector.broadcast %469 : vector<8x1xf32> to vector<8x8xf32>
    %471 = arith.subf %467, %470 : vector<8x8xf32>
    %472 = math.exp %471 : vector<8x8xf32>
    %cst_192 = arith.constant dense<0.000000e+00> : vector<8xf32>
    %473 = vector.multi_reduction <add>, %472, %cst_192 [1] : vector<8x8xf32> to vector<8xf32>
    %474 = vector.shape_cast %473 : vector<8xf32> to vector<8x1xf32>
    %475 = vector.broadcast %474 : vector<8x1xf32> to vector<8x8xf32>
    %476 = arith.divf %472, %475 : vector<8x8xf32>
    %cst_193 = arith.constant dense<0.000000e+00> : vector<8x128xf32>
    %477 = tpu.matmul %476, %463, %cst_193 {dimension_numbers = #tpu.dot_dimension_numbers<[1], [0], [0], [1], [0, 0, 1, 1], [], []>} : vector<8x8xf32>, vector<8x128xf32>, vector<8x128xf32> -> vector<8x128xf32>
    %478 = vector.extract_strided_slice %391 {offsets = [8, 256], sizes = [8, 128], strides = [1, 1]} : vector<16x1152xf32> to vector<8x128xf32>
    %479 = vector.extract_strided_slice %391 {offsets = [8, 640], sizes = [8, 128], strides = [1, 1]} : vector<16x1152xf32> to vector<8x128xf32>
    %480 = vector.extract_strided_slice %391 {offsets = [8, 1024], sizes = [8, 128], strides = [1, 1]} : vector<16x1152xf32> to vector<8x128xf32>
    %cst_194 = arith.constant dense<0.000000e+00> : vector<8x8xf32>
    %481 = tpu.matmul %478, %479, %cst_194 {dimension_numbers = #tpu.dot_dimension_numbers<[1], [1], [0], [0], [0, 0, 1, 0], [], []>} : vector<8x128xf32>, vector<8x128xf32>, vector<8x8xf32> -> vector<8x8xf32>
    %cst_195 = arith.constant 0.707106769 : f32
    %482 = vector.broadcast %cst_195 : f32 to vector<8x8xf32>
    %483 = arith.mulf %481, %482 : vector<8x8xf32>
    %484 = arith.addf %483, %6 : vector<8x8xf32>
    %cst_196 = arith.constant dense<0xFF800000> : vector<8xf32>
    %485 = vector.multi_reduction <maximumf>, %484, %cst_196 [1] : vector<8x8xf32> to vector<8xf32>
    %486 = vector.shape_cast %485 : vector<8xf32> to vector<8x1xf32>
    %487 = vector.broadcast %486 : vector<8x1xf32> to vector<8x8xf32>
    %488 = arith.subf %484, %487 : vector<8x8xf32>
    %489 = math.exp %488 : vector<8x8xf32>
    %cst_197 = arith.constant dense<0.000000e+00> : vector<8xf32>
    %490 = vector.multi_reduction <add>, %489, %cst_197 [1] : vector<8x8xf32> to vector<8xf32>
    %491 = vector.shape_cast %490 : vector<8xf32> to vector<8x1xf32>
    %492 = vector.broadcast %491 : vector<8x1xf32> to vector<8x8xf32>
    %493 = arith.divf %489, %492 : vector<8x8xf32>
    %cst_198 = arith.constant dense<0.000000e+00> : vector<8x128xf32>
    %494 = tpu.matmul %493, %480, %cst_198 {dimension_numbers = #tpu.dot_dimension_numbers<[1], [0], [0], [1], [0, 0, 1, 1], [], []>} : vector<8x8xf32>, vector<8x128xf32>, vector<8x128xf32> -> vector<8x128xf32>
    %495 = tpu.concatenate %460, %477, %494 in 1 : vector<8x128xf32>, vector<8x128xf32>, vector<8x128xf32> -> vector<8x384xf32>
    %496 = tpu.concatenate %443, %495 in 0 : vector<8x384xf32>, vector<8x384xf32> -> vector<16x384xf32>
    %c2_199 = arith.constant 2 : index
    %c0_200 = arith.constant 0 : index
    %c0_201 = arith.constant 0 : index
    %497 = vector.load %arg4[%c2_199, %c0_200, %c0_201] : memref<3x6x384xf32, #tpu.memory_space<vmem>>, vector<1x6x384xf32>
    %498 = vector.shape_cast %497 : vector<1x6x384xf32> to vector<6x384xf32>
    %cst_202 = arith.constant dense<0.000000e+00> : vector<16x6xf32>
    %499 = tpu.matmul %496, %498, %cst_202 {dimension_numbers = #tpu.dot_dimension_numbers<[1], [1], [0], [0], [0, 0, 1, 0], [], []>} : vector<16x384xf32>, vector<6x384xf32>, vector<16x6xf32> -> vector<16x6xf32>
    %c2_203 = arith.constant 2 : index
    %c0_204 = arith.constant 0 : index
    %c0_205 = arith.constant 0 : index
    %500 = vector.load %arg5[%c2_203, %c0_204, %c0_205] : memref<3x1x6xf32, #tpu.memory_space<vmem>>, vector<1x1x6xf32>
    %501 = vector.shape_cast %500 : vector<1x1x6xf32> to vector<1x6xf32>
    %502 = vector.broadcast %501 : vector<1x6xf32> to vector<16x6xf32>
    %503 = arith.addf %499, %502 : vector<16x6xf32>
    %504 = arith.addf %384, %503 : vector<16x6xf32>
    %c2_206 = arith.constant 2 : index
    %c0_207 = arith.constant 0 : index
    %c0_208 = arith.constant 0 : index
    %505 = vector.load %arg6[%c2_206, %c0_207, %c0_208] : memref<3x1x6xf32, #tpu.memory_space<vmem>>, vector<1x1x6xf32>
    %506 = vector.shape_cast %505 : vector<1x1x6xf32> to vector<1x6xf32>
    %c2_209 = arith.constant 2 : index
    %c0_210 = arith.constant 0 : index
    %c0_211 = arith.constant 0 : index
    %507 = vector.load %arg7[%c2_209, %c0_210, %c0_211] : memref<3x1x6xf32, #tpu.memory_space<vmem>>, vector<1x1x6xf32>
    %508 = vector.shape_cast %507 : vector<1x1x6xf32> to vector<1x6xf32>
    %cst_212 = arith.constant dense<0.000000e+00> : vector<16xf32>
    %509 = vector.multi_reduction <add>, %504, %cst_212 [1] : vector<16x6xf32> to vector<16xf32>
    %510 = vector.shape_cast %509 : vector<16xf32> to vector<16x1xf32>
    %cst_213 = arith.constant 6.000000e+00 : f32
    %511 = vector.broadcast %cst_213 : f32 to vector<16x1xf32>
    %512 = arith.divf %510, %511 : vector<16x1xf32>
    %513 = vector.broadcast %512 : vector<16x1xf32> to vector<16x6xf32>
    %514 = arith.subf %504, %513 : vector<16x6xf32>
    %515 = arith.mulf %514, %514 : vector<16x6xf32>
    %cst_214 = arith.constant dense<0.000000e+00> : vector<16xf32>
    %516 = vector.multi_reduction <add>, %515, %cst_214 [1] : vector<16x6xf32> to vector<16xf32>
    %517 = vector.shape_cast %516 : vector<16xf32> to vector<16x1xf32>
    %cst_215 = arith.constant 6.000000e+00 : f32
    %518 = vector.broadcast %cst_215 : f32 to vector<16x1xf32>
    %519 = arith.divf %517, %518 : vector<16x1xf32>
    %520 = vector.broadcast %512 : vector<16x1xf32> to vector<16x6xf32>
    %521 = arith.subf %504, %520 : vector<16x6xf32>
    %cst_216 = arith.constant 9.99999974E-6 : f32
    %522 = vector.broadcast %cst_216 : f32 to vector<16x1xf32>
    %523 = arith.addf %519, %522 : vector<16x1xf32>
    %524 = math.rsqrt %523 : vector<16x1xf32>
    %525 = vector.broadcast %524 : vector<16x1xf32> to vector<16x6xf32>
    %526 = arith.mulf %521, %525 : vector<16x6xf32>
    %527 = vector.broadcast %506 : vector<1x6xf32> to vector<16x6xf32>
    %528 = arith.mulf %526, %527 : vector<16x6xf32>
    %529 = vector.broadcast %508 : vector<1x6xf32> to vector<16x6xf32>
    %530 = arith.addf %528, %529 : vector<16x6xf32>
    %c2_217 = arith.constant 2 : index
    %c0_218 = arith.constant 0 : index
    %c0_219 = arith.constant 0 : index
    %531 = vector.load %arg10[%c2_217, %c0_218, %c0_219] : memref<3x6x2048xf32, #tpu.memory_space<vmem>>, vector<1x6x2048xf32>
    %532 = vector.shape_cast %531 : vector<1x6x2048xf32> to vector<6x2048xf32>
    %cst_220 = arith.constant dense<0.000000e+00> : vector<16x2048xf32>
    %533 = tpu.matmul %530, %532, %cst_220 {dimension_numbers = #tpu.dot_dimension_numbers<[1], [0], [0], [1], [0, 0, 1, 1], [], []>} : vector<16x6xf32>, vector<6x2048xf32>, vector<16x2048xf32> -> vector<16x2048xf32>
    %c2_221 = arith.constant 2 : index
    %c0_222 = arith.constant 0 : index
    %c0_223 = arith.constant 0 : index
    %534 = vector.load %arg11[%c2_221, %c0_222, %c0_223] : memref<3x1x2048xf32, #tpu.memory_space<vmem>>, vector<1x1x2048xf32>
    %535 = vector.shape_cast %534 : vector<1x1x2048xf32> to vector<1x2048xf32>
    %536 = vector.broadcast %535 : vector<1x2048xf32> to vector<16x2048xf32>
    %537 = arith.addf %533, %536 : vector<16x2048xf32>
    %cst_224 = arith.constant 0.000000e+00 : f32
    %538 = vector.broadcast %cst_224 : f32 to vector<16x2048xf32>
    %539 = arith.maximumf %537, %538 : vector<16x2048xf32>
    %c2_225 = arith.constant 2 : index
    %c0_226 = arith.constant 0 : index
    %c0_227 = arith.constant 0 : index
    %540 = vector.load %arg12[%c2_225, %c0_226, %c0_227] : memref<3x6x2048xf32, #tpu.memory_space<vmem>>, vector<1x6x2048xf32>
    %541 = vector.shape_cast %540 : vector<1x6x2048xf32> to vector<6x2048xf32>
    %cst_228 = arith.constant dense<0.000000e+00> : vector<16x6xf32>
    %542 = tpu.matmul %539, %541, %cst_228 {dimension_numbers = #tpu.dot_dimension_numbers<[1], [1], [0], [0], [0, 0, 1, 0], [], []>} : vector<16x2048xf32>, vector<6x2048xf32>, vector<16x6xf32> -> vector<16x6xf32>
    %c2_229 = arith.constant 2 : index
    %c0_230 = arith.constant 0 : index
    %c0_231 = arith.constant 0 : index
    %543 = vector.load %arg13[%c2_229, %c0_230, %c0_231] : memref<3x1x6xf32, #tpu.memory_space<vmem>>, vector<1x1x6xf32>
    %544 = vector.shape_cast %543 : vector<1x1x6xf32> to vector<1x6xf32>
    %545 = vector.broadcast %544 : vector<1x6xf32> to vector<16x6xf32>
    %546 = arith.addf %542, %545 : vector<16x6xf32>
    %547 = arith.addf %530, %546 : vector<16x6xf32>
    %c2_232 = arith.constant 2 : index
    %c0_233 = arith.constant 0 : index
    %c0_234 = arith.constant 0 : index
    %548 = vector.load %arg8[%c2_232, %c0_233, %c0_234] : memref<3x1x6xf32, #tpu.memory_space<vmem>>, vector<1x1x6xf32>
    %549 = vector.shape_cast %548 : vector<1x1x6xf32> to vector<1x6xf32>
    %c2_235 = arith.constant 2 : index
    %c0_236 = arith.constant 0 : index
    %c0_237 = arith.constant 0 : index
    %550 = vector.load %arg9[%c2_235, %c0_236, %c0_237] : memref<3x1x6xf32, #tpu.memory_space<vmem>>, vector<1x1x6xf32>
    %551 = vector.shape_cast %550 : vector<1x1x6xf32> to vector<1x6xf32>
    %cst_238 = arith.constant dense<0.000000e+00> : vector<16xf32>
    %552 = vector.multi_reduction <add>, %547, %cst_238 [1] : vector<16x6xf32> to vector<16xf32>
    %553 = vector.shape_cast %552 : vector<16xf32> to vector<16x1xf32>
    %cst_239 = arith.constant 6.000000e+00 : f32
    %554 = vector.broadcast %cst_239 : f32 to vector<16x1xf32>
    %555 = arith.divf %553, %554 : vector<16x1xf32>
    %556 = vector.broadcast %555 : vector<16x1xf32> to vector<16x6xf32>
    %557 = arith.subf %547, %556 : vector<16x6xf32>
    %558 = arith.mulf %557, %557 : vector<16x6xf32>
    %cst_240 = arith.constant dense<0.000000e+00> : vector<16xf32>
    %559 = vector.multi_reduction <add>, %558, %cst_240 [1] : vector<16x6xf32> to vector<16xf32>
    %560 = vector.shape_cast %559 : vector<16xf32> to vector<16x1xf32>
    %cst_241 = arith.constant 6.000000e+00 : f32
    %561 = vector.broadcast %cst_241 : f32 to vector<16x1xf32>
    %562 = arith.divf %560, %561 : vector<16x1xf32>
    %563 = vector.broadcast %555 : vector<16x1xf32> to vector<16x6xf32>
    %564 = arith.subf %547, %563 : vector<16x6xf32>
    %cst_242 = arith.constant 9.99999974E-6 : f32
    %565 = vector.broadcast %cst_242 : f32 to vector<16x1xf32>
    %566 = arith.addf %562, %565 : vector<16x1xf32>
    %567 = math.rsqrt %566 : vector<16x1xf32>
    %568 = vector.broadcast %567 : vector<16x1xf32> to vector<16x6xf32>
    %569 = arith.mulf %564, %568 : vector<16x6xf32>
    %570 = vector.broadcast %549 : vector<1x6xf32> to vector<16x6xf32>
    %571 = arith.mulf %569, %570 : vector<16x6xf32>
    %572 = vector.broadcast %551 : vector<1x6xf32> to vector<16x6xf32>
    %573 = arith.addf %571, %572 : vector<16x6xf32>
    %c0_243 = arith.constant 0 : index
    %c0_244 = arith.constant 0 : index
    %574 = vector.load %arg14[%c0_243, %c0_244] : memref<6x6xf32, #tpu.memory_space<vmem>>, vector<6x6xf32>
    %cst_245 = arith.constant dense<0.000000e+00> : vector<16x6xf32>
    %575 = tpu.matmul %573, %574, %cst_245 {dimension_numbers = #tpu.dot_dimension_numbers<[1], [0], [0], [1], [0, 0, 1, 1], [], []>} : vector<16x6xf32>, vector<6x6xf32>, vector<16x6xf32> -> vector<16x6xf32>
    %c0_246 = arith.constant 0 : index
    %c0_247 = arith.constant 0 : index
    %576 = vector.load %arg15[%c0_246, %c0_247] : memref<1x6xf32, #tpu.memory_space<vmem>>, vector<1x6xf32>
    %577 = vector.broadcast %576 : vector<1x6xf32> to vector<16x6xf32>
    %578 = arith.addf %575, %577 : vector<16x6xf32>
    %c0_248 = arith.constant 0 : index
    %c0_249 = arith.constant 0 : index
    %579 = vector.load %arg16[%c0_248, %c0_249] : memref<16x6xf32, #tpu.memory_space<vmem>>, vector<16x6xf32>
    tpu.vector_store %arg16[%c0_248, %c0_249], %578 {strides = array<i32>} : memref<16x6xf32, #tpu.memory_space<vmem>>, vector<16x6xf32>,
    return
  }
  func.func @transform_0(%arg0: i32) -> (i32, i32) {
    %c0_i32 = arith.constant 0 : i32
    %c0_i32_0 = arith.constant 0 : i32
    return %arg0, %c0_i32 : i32, i32
  }
  func.func @transform_1(%arg0: i32) -> (i32, i32, i32) {
    %c0_i32 = arith.constant 0 : i32
    %c0_i32_0 = arith.constant 0 : i32
    %c0_i32_1 = arith.constant 0 : i32
    %c0_i32_2 = arith.constant 0 : i32
    return %c0_i32, %c0_i32_0, %c0_i32_1 : i32, i32, i32
  }
  func.func @transform_2(%arg0: i32) -> (i32, i32, i32) {
    %c0_i32 = arith.constant 0 : i32
    %c0_i32_0 = arith.constant 0 : i32
    %c0_i32_1 = arith.constant 0 : i32
    %c0_i32_2 = arith.constant 0 : i32
    return %c0_i32, %c0_i32_0, %c0_i32_1 : i32, i32, i32
  }
  func.func @transform_3(%arg0: i32) -> (i32, i32, i32) {
    %c0_i32 = arith.constant 0 : i32
    %c0_i32_0 = arith.constant 0 : i32
    %c0_i32_1 = arith.constant 0 : i32
    %c0_i32_2 = arith.constant 0 : i32
    return %c0_i32, %c0_i32_0, %c0_i32_1 : i32, i32, i32
  }
  func.func @transform_4(%arg0: i32) -> (i32, i32, i32) {
    %c0_i32 = arith.constant 0 : i32
    %c0_i32_0 = arith.constant 0 : i32
    %c0_i32_1 = arith.constant 0 : i32
    %c0_i32_2 = arith.constant 0 : i32
    return %c0_i32, %c0_i32_0, %c0_i32_1 : i32, i32, i32
  }
  func.func @transform_5(%arg0: i32) -> (i32, i32, i32) {
    %c0_i32 = arith.constant 0 : i32
    %c0_i32_0 = arith.constant 0 : i32
    %c0_i32_1 = arith.constant 0 : i32
    %c0_i32_2 = arith.constant 0 : i32
    return %c0_i32, %c0_i32_0, %c0_i32_1 : i32, i32, i32
  }
  func.func @transform_6(%arg0: i32) -> (i32, i32, i32) {
    %c0_i32 = arith.constant 0 : i32
    %c0_i32_0 = arith.constant 0 : i32
    %c0_i32_1 = arith.constant 0 : i32
    %c0_i32_2 = arith.constant 0 : i32
    return %c0_i32, %c0_i32_0, %c0_i32_1 : i32, i32, i32
  }
  func.func @transform_7(%arg0: i32) -> (i32, i32, i32) {
    %c0_i32 = arith.constant 0 : i32
    %c0_i32_0 = arith.constant 0 : i32
    %c0_i32_1 = arith.constant 0 : i32
    %c0_i32_2 = arith.constant 0 : i32
    return %c0_i32, %c0_i32_0, %c0_i32_1 : i32, i32, i32
  }
  func.func @transform_8(%arg0: i32) -> (i32, i32, i32) {
    %c0_i32 = arith.constant 0 : i32
    %c0_i32_0 = arith.constant 0 : i32
    %c0_i32_1 = arith.constant 0 : i32
    %c0_i32_2 = arith.constant 0 : i32
    return %c0_i32, %c0_i32_0, %c0_i32_1 : i32, i32, i32
  }
  func.func @transform_9(%arg0: i32) -> (i32, i32, i32) {
    %c0_i32 = arith.constant 0 : i32
    %c0_i32_0 = arith.constant 0 : i32
    %c0_i32_1 = arith.constant 0 : i32
    %c0_i32_2 = arith.constant 0 : i32
    return %c0_i32, %c0_i32_0, %c0_i32_1 : i32, i32, i32
  }
  func.func @transform_10(%arg0: i32) -> (i32, i32, i32) {
    %c0_i32 = arith.constant 0 : i32
    %c0_i32_0 = arith.constant 0 : i32
    %c0_i32_1 = arith.constant 0 : i32
    %c0_i32_2 = arith.constant 0 : i32
    return %c0_i32, %c0_i32_0, %c0_i32_1 : i32, i32, i32
  }
  func.func @transform_11(%arg0: i32) -> (i32, i32, i32) {
    %c0_i32 = arith.constant 0 : i32
    %c0_i32_0 = arith.constant 0 : i32
    %c0_i32_1 = arith.constant 0 : i32
    %c0_i32_2 = arith.constant 0 : i32
    return %c0_i32, %c0_i32_0, %c0_i32_1 : i32, i32, i32
  }
  func.func @transform_12(%arg0: i32) -> (i32, i32, i32) {
    %c0_i32 = arith.constant 0 : i32
    %c0_i32_0 = arith.constant 0 : i32
    %c0_i32_1 = arith.constant 0 : i32
    %c0_i32_2 = arith.constant 0 : i32
    return %c0_i32, %c0_i32_0, %c0_i32_1 : i32, i32, i32
  }
  func.func @transform_13(%arg0: i32) -> (i32, i32) {
    %c0_i32 = arith.constant 0 : i32
    %c0_i32_0 = arith.constant 0 : i32
    %c0_i32_1 = arith.constant 0 : i32
    return %c0_i32, %c0_i32_0 : i32, i32
  }
  func.func @transform_14(%arg0: i32) -> (i32, i32) {
    %c0_i32 = arith.constant 0 : i32
    %c0_i32_0 = arith.constant 0 : i32
    %c0_i32_1 = arith.constant 0 : i32
    return %c0_i32, %c0_i32_0 : i32, i32
  }
  func.func @transform_15(%arg0: i32) -> (i32, i32) {
    %c0_i32 = arith.constant 0 : i32
    %c0_i32_0 = arith.constant 0 : i32
    return %arg0, %c0_i32 : i32, i32
  }
}

</mosaic_0001>

<llo_original>
// kernel: tpu_custom_call.1
$region0: #{tpu_custom_call.1}
  #allocation0 [shape = 'u32[]', space=smem, size = 0x4, offset = 0x4, fixed_abs, tag = 'smem constant byte address 0x4 - core index']
  #allocation1 [shape = 'u32[72,128]{1,0:T(1,128)}', space=vmem, size = 0x9000, scoped, tag = 'internal scratch']
  %s0 = inlined_call_operand.vmem [shape: f32[16,6], index: 0, kind: input, shape index: {}]
  %s1 = inlined_call_operand.hbm [shape: f32[3,6,1152], index: 1, kind: input, shape index: {}]
  %s2 = inlined_call_operand.hbm [shape: f32[3,1,1152], index: 2, kind: input, shape index: {}]
  %s3 = inlined_call_operand.hbm [shape: f32[3,6,384], index: 3, kind: input, shape index: {}]
  %s4 = inlined_call_operand.vmem [shape: f32[3,1,6], index: 4, kind: input, shape index: {}]
  %s5 = inlined_call_operand.vmem [shape: f32[3,1,6], index: 5, kind: input, shape index: {}]
  %s6 = inlined_call_operand.vmem [shape: f32[3,1,6], index: 6, kind: input, shape index: {}]
  %s7 = inlined_call_operand.vmem [shape: f32[3,1,6], index: 7, kind: input, shape index: {}]
  %s8 = inlined_call_operand.vmem [shape: f32[3,1,6], index: 8, kind: input, shape index: {}]
  %s9 = inlined_call_operand.hbm [shape: f32[3,6,2048], index: 9, kind: input, shape index: {}]
  %s10 = inlined_call_operand.hbm [shape: f32[3,1,2048], index: 10, kind: input, shape index: {}]
  %s11 = inlined_call_operand.hbm [shape: f32[3,6,2048], index: 11, kind: input, shape index: {}]
  %s12 = inlined_call_operand.vmem [shape: f32[3,1,6], index: 12, kind: input, shape index: {}]
  %s13 = inlined_call_operand.vmem [shape: f32[6,6], index: 13, kind: input, shape index: {}]
  %s14 = inlined_call_operand.vmem [shape: f32[1,6], index: 14, kind: input, shape index: {}]
  %s15 = inlined_call_operand.vmem [shape: f32[16,6], index: 15, kind: output, shape index: {}]
  %s16 = sld [smem:[#allocation0]]
  $region94: #{tpu_custom_call.1} parent=0
    _
  %s18 = ssub.s32 1, %s16
  %s19 = scalar_select 0, %s18, %s16
  $region1: #{tpu_custom_call.1} parent=0
    #allocation2 [shape = 'u8[110592]{0}', space=vmem, size = 0x1b000, scoped, tag = 'input window, operand 1, single buffered']
    #allocation3 [shape = 's32[1]{0}', space=sflag, size = 0x4, scoped, tag = 'scoped memory for tpu_custom_call.1']
    #allocation4 [shape = 'u8[13824]{0}', space=vmem, size = 0x3800, scoped, tag = 'input window, operand 2, single buffered']
    #allocation5 [shape = 's32[1]{0}', space=sflag, size = 0x4, scoped, tag = 'scoped memory for tpu_custom_call.1']
    #allocation6 [shape = 'u8[36864]{0}', space=vmem, size = 0x9000, scoped, tag = 'input window, operand 3, single buffered']
    #allocation7 [shape = 'u8[196608]{0}', space=vmem, size = 0x30000, scoped, tag = 'input window, operand 9, single buffered']
    #allocation8 [shape = 's32[1]{0}', space=sflag, size = 0x4, scoped, tag = 'scoped memory for tpu_custom_call.1']
    #allocation9 [shape = 'u8[24576]{0}', space=vmem, size = 0x6000, scoped, tag = 'input window, operand 10, single buffered']
    #allocation10 [shape = 'u8[196608]{0}', space=vmem, size = 0x30000, scoped, tag = 'input window, operand 11, single buffered']
    #allocation11 [shape = 's32[1]{0}', space=sflag, size = 0x4, scoped, tag = 'scoped memory for tpu_custom_call.1']
    %20 = vsyncpa [#allocation3], 0
    %21 = vsyncpa [#allocation5], 0
    %22 = vsyncpa [#allocation8], 0
    %23 = vsyncpa [#allocation11], 0
    // Predicated region
    $region2: #{tpu_custom_call.1} parent=1 // pred_check
      _
    $region3: #{tpu_custom_call.1} parent=1 // pred_check_branch
      %25 = sbr.rel (0) target = $region5
    $region4: #{tpu_custom_call.1} parent=1 // pred_region
      _
    $region5: #{tpu_custom_call.1} parent=1 // pred_fallthru
      _
    // Predicated region
    $region6: #{tpu_custom_call.1} parent=1 // pred_check
      _
    $region7: #{tpu_custom_call.1} parent=1 // pred_check_branch
      %27 = sbr.rel (0) target = $region9
    $region8: #{tpu_custom_call.1} parent=1 // pred_region
      %29 = vsyncadd [#allocation3], 0
      %s30 = sshll.u32 %s1, 4
      %s31 = int_to_ptr.hbm [resolvable:$true] %s30
      %s32 = sshll.u32 [#allocation2], 4
      %s33 = int_to_ptr.vmem [resolvable:$true] %s32
      %38 = dma.hbm_to_vmem [thread:$0]  %s31, 3456, %s33, [#allocation3], 1152, 1152, 72
    $region9: #{tpu_custom_call.1} parent=1 // pred_fallthru
      _
    // Predicated region
    $region10: #{tpu_custom_call.1} parent=1 // pred_check
      _
    $region11: #{tpu_custom_call.1} parent=1 // pred_check_branch
      %40 = sbr.rel (0) target = $region13
    $region12: #{tpu_custom_call.1} parent=1 // pred_region
      %42 = vsyncadd [#allocation5], 0
      %s43 = sshll.u32 %s2, 4
      %s44 = int_to_ptr.hbm [resolvable:$true] %s43
      %s45 = sshll.u32 [#allocation4], 4
      %s46 = int_to_ptr.vmem [resolvable:$true] %s45
      %51 = dma.hbm_to_vmem [thread:$0]  %s44, 432, %s46, [#allocation5], 144, 144, 9
    $region13: #{tpu_custom_call.1} parent=1 // pred_fallthru
      _
    // Predicated region
    $region14: #{tpu_custom_call.1} parent=1 // pred_check
      _
    $region15: #{tpu_custom_call.1} parent=1 // pred_check_branch
      %53 = sbr.rel (0) target = $region17
    $region16: #{tpu_custom_call.1} parent=1 // pred_region
      %55 = vsyncadd [#allocation5], 0
      %s56 = sshll.u32 %s3, 4
      %s57 = int_to_ptr.hbm [resolvable:$true] %s56
      %s58 = sshll.u32 [#allocation6], 4
      %s59 = int_to_ptr.vmem [resolvable:$true] %s58
      %64 = dma.hbm_to_vmem [thread:$0]  %s57, 1152, %s59, [#allocation5], 384, 384, 24
    $region17: #{tpu_custom_call.1} parent=1 // pred_fallthru
      _
    // Predicated region
    $region18: #{tpu_custom_call.1} parent=1 // pred_check
      _
    $region19: #{tpu_custom_call.1} parent=1 // pred_check_branch
      %66 = sbr.rel (0) target = $region21
    $region20: #{tpu_custom_call.1} parent=1 // pred_region
      _
    $region21: #{tpu_custom_call.1} parent=1 // pred_fallthru
      _
    // Predicated region
    $region22: #{tpu_custom_call.1} parent=1 // pred_check
      _
    $region23: #{tpu_custom_call.1} parent=1 // pred_check_branch
      %68 = sbr.rel (0) target = $region25
    $region24: #{tpu_custom_call.1} parent=1 // pred_region
      _
    $region25: #{tpu_custom_call.1} parent=1 // pred_fallthru
      _
    // Predicated region
    $region26: #{tpu_custom_call.1} parent=1 // pred_check
      _
    $region27: #{tpu_custom_call.1} parent=1 // pred_check_branch
      %70 = sbr.rel (0) target = $region29
    $region28: #{tpu_custom_call.1} parent=1 // pred_region
      _
    $region29: #{tpu_custom_call.1} parent=1 // pred_fallthru
      _
    // Predicated region
    $region30: #{tpu_custom_call.1} parent=1 // pred_check
      _
    $region31: #{tpu_custom_call.1} parent=1 // pred_check_branch
      %72 = sbr.rel (0) target = $region33
    $region32: #{tpu_custom_call.1} parent=1 // pred_region
      _
    $region33: #{tpu_custom_call.1} parent=1 // pred_fallthru
      _
    // Predicated region
    $region34: #{tpu_custom_call.1} parent=1 // pred_check
      _
    $region35: #{tpu_custom_call.1} parent=1 // pred_check_branch
      %74 = sbr.rel (0) target = $region37
    $region36: #{tpu_custom_call.1} parent=1 // pred_region
      _
    $region37: #{tpu_custom_call.1} parent=1 // pred_fallthru
      _
    // Predicated region
    $region38: #{tpu_custom_call.1} parent=1 // pred_check
      _
    $region39: #{tpu_custom_call.1} parent=1 // pred_check_branch
      %76 = sbr.rel (0) target = $region41
    $region40: #{tpu_custom_call.1} parent=1 // pred_region
      %78 = vsyncadd [#allocation8], 0
      %s79 = sshll.u32 %s9, 4
      %s80 = int_to_ptr.hbm [resolvable:$true] %s79
      %s81 = sshll.u32 [#allocation7], 4
      %s82 = int_to_ptr.vmem [resolvable:$true] %s81
      %87 = dma.hbm_to_vmem [thread:$0]  %s80, 6144, %s82, [#allocation8], 2048, 2048, 128
    $region41: #{tpu_custom_call.1} parent=1 // pred_fallthru
      _
    // Predicated region
    $region42: #{tpu_custom_call.1} parent=1 // pred_check
      _
    $region43: #{tpu_custom_call.1} parent=1 // pred_check_branch
      %89 = sbr.rel (0) target = $region45
    $region44: #{tpu_custom_call.1} parent=1 // pred_region
      %91 = vsyncadd [#allocation8], 0
      %s92 = sshll.u32 %s10, 4
      %s93 = int_to_ptr.hbm [resolvable:$true] %s92
      %s94 = sshll.u32 [#allocation9], 4
      %s95 = int_to_ptr.vmem [resolvable:$true] %s94
      %100 = dma.hbm_to_vmem [thread:$0]  %s93, 768, %s95, [#allocation8], 256, 256, 16
    $region45: #{tpu_custom_call.1} parent=1 // pred_fallthru
      _
    // Predicated region
    $region46: #{tpu_custom_call.1} parent=1 // pred_check
      _
    $region47: #{tpu_custom_call.1} parent=1 // pred_check_branch
      %102 = sbr.rel (0) target = $region49
    $region48: #{tpu_custom_call.1} parent=1 // pred_region
      %104 = vsyncadd [#allocation11], 0
      %s105 = sshll.u32 %s11, 4
      %s106 = int_to_ptr.hbm [resolvable:$true] %s105
      %s107 = sshll.u32 [#allocation10], 4
      %s108 = int_to_ptr.vmem [resolvable:$true] %s107
      %113 = dma.hbm_to_vmem [thread:$0]  %s106, 6144, %s108, [#allocation11], 2048, 2048, 128
    $region49: #{tpu_custom_call.1} parent=1 // pred_fallthru
      _
    // Predicated region
    $region50: #{tpu_custom_call.1} parent=1 // pred_check
      _
    $region51: #{tpu_custom_call.1} parent=1 // pred_check_branch
      %115 = sbr.rel (0) target = $region53
    $region52: #{tpu_custom_call.1} parent=1 // pred_region
      _
    $region53: #{tpu_custom_call.1} parent=1 // pred_fallthru
      _
    // Predicated region
    $region54: #{tpu_custom_call.1} parent=1 // pred_check
      _
    $region55: #{tpu_custom_call.1} parent=1 // pred_check_branch
      %117 = sbr.rel (0) target = $region57
    $region56: #{tpu_custom_call.1} parent=1 // pred_region
      _
    $region57: #{tpu_custom_call.1} parent=1 // pred_fallthru
      _
    // Predicated region
    $region58: #{tpu_custom_call.1} parent=1 // pred_check
      _
    $region59: #{tpu_custom_call.1} parent=1 // pred_check_branch
      %119 = sbr.rel (0) target = $region61
    $region60: #{tpu_custom_call.1} parent=1 // pred_region
      _
    $region61: #{tpu_custom_call.1} parent=1 // pred_fallthru
      _
    // Predicated region
    $region62: #{tpu_custom_call.1} parent=1 // pred_check
      _
    $region63: #{tpu_custom_call.1} parent=1 // pred_check_branch
      %121 = sbr.rel (0) target = $region65
    $region64: #{tpu_custom_call.1} parent=1 // pred_region
      %123 = dma.done [#allocation3], 3456
    $region65: #{tpu_custom_call.1} parent=1 // pred_fallthru
      _
    // Predicated region
    $region66: #{tpu_custom_call.1} parent=1 // pred_check
      _
    $region67: #{tpu_custom_call.1} parent=1 // pred_check_branch
      %125 = sbr.rel (0) target = $region69
    $region68: #{tpu_custom_call.1} parent=1 // pred_region
      %127 = dma.done [#allocation5], 432
    $region69: #{tpu_custom_call.1} parent=1 // pred_fallthru
      _
    // Predicated region
    $region70: #{tpu_custom_call.1} parent=1 // pred_check
      _
    $region71: #{tpu_custom_call.1} parent=1 // pred_check_branch
      %129 = sbr.rel (0) target = $region73
    $region72: #{tpu_custom_call.1} parent=1 // pred_region
      %131 = dma.done [#allocation5], 1152
    $region73: #{tpu_custom_call.1} parent=1 // pred_fallthru
      _
    // Predicated region
    $region74: #{tpu_custom_call.1} parent=1 // pred_check
      _
    $region75: #{tpu_custom_call.1} parent=1 // pred_check_branch
      %133 = sbr.rel (0) target = $region77
    $region76: #{tpu_custom_call.1} parent=1 // pred_region
      %135 = dma.done [#allocation8], 6144
    $region77: #{tpu_custom_call.1} parent=1 // pred_fallthru
      _
    // Predicated region
    $region78: #{tpu_custom_call.1} parent=1 // pred_check
      _
    $region79: #{tpu_custom_call.1} parent=1 // pred_check_branch
      %137 = sbr.rel (0) target = $region81
    $region80: #{tpu_custom_call.1} parent=1 // pred_region
      %139 = dma.done [#allocation8], 768
    $region81: #{tpu_custom_call.1} parent=1 // pred_fallthru
      _
    // Predicated region
    $region82: #{tpu_custom_call.1} parent=1 // pred_check
      _
    $region83: #{tpu_custom_call.1} parent=1 // pred_check_branch
      %141 = sbr.rel (0) target = $region85
    $region84: #{tpu_custom_call.1} parent=1 // pred_region
      %143 = dma.done [#allocation11], 6144
    $region85: #{tpu_custom_call.1} parent=1 // pred_fallthru
      _
    %v144 = vld [vmem:[%s0] sm:$0xff]
    %v145 = vld [vmem:[%s0 + $0x8] sm:$0xff]
    %v146 = vlaneseq
    %v147 = vshrl.u32 %v146, 7
    %v148 = vlaneseq
    %v149 = vand.u32 %v148, 127
    %vm150 = vcmp.le.s32.totalorder %v149, %v147
    %v151 = vsel %vm150, 0.0, -1e+30
    %v152 = vld [vmem:[#allocation2] sm:$0x3f]
    %v153 = vld [vmem:[#allocation2 + $0x8] sm:$0x3f]
    %v154 = vld [vmem:[#allocation2 + $0x10] sm:$0x3f]
    %v155 = vld [vmem:[#allocation2 + $0x18] sm:$0x3f]
    %v156 = vld [vmem:[#allocation2 + $0x20] sm:$0x3f]
    %v157 = vld [vmem:[#allocation2 + $0x28] sm:$0x3f]
    %v158 = vld [vmem:[#allocation2 + $0x30] sm:$0x3f]
    %v159 = vld [vmem:[#allocation2 + $0x38] sm:$0x3f]
    %v160 = vld [vmem:[#allocation2 + $0x40] sm:$0x3f]
    %v161 = vld [vmem:[#allocation4] sm:$0xff]
    %v162 = vld [vmem:[#allocation4 + $0x8] sm:$0x1]
    %v165 = vperm.slane %v161, 0
    %v166 = vperm.slane %v161, 1
    %v167 = vperm.slane %v161, 2
    %v168 = vperm.slane %v161, 3
    %v169 = vperm.slane %v161, 4
    %v170 = vperm.slane %v161, 5
    %v171 = vperm.slane %v161, 6
    %v172 = vperm.slane %v161, 7
    %v173 = vperm.slane %v162, 0
    %vm183 = vcmask 48128
    %v185 = vsel %vm183, %v144, 0
    %v188 = vsel %vm183, %v145, 0
    %vm190 = vcmask 1045504
    %v192 = vsel %vm190, %v152, 0
    %v195 = vsel %vm190, %v153, 0
    %v198 = vsel %vm190, %v154, 0
    %v201 = vsel %vm190, %v155, 0
    %v204 = vsel %vm190, %v156, 0
    %v207 = vsel %vm190, %v157, 0
    %v210 = vsel %vm190, %v158, 0
    %v213 = vsel %vm190, %v159, 0
    %v216 = vsel %vm190, %v160, 0
    %218 = vmatpush.msra.mxu0 0.0
    %219 = vmatpush.msra.mxu0 0.0
    %220 = vmatpush.msra.mxu0 0.0
    %221 = vmatpush.msra.mxu0 0.0
    %222 = vmatpush.msra.mxu0 0.0
    %223 = vmatpush.msra.mxu0 0.0
    %224 = vmatpush.msra.mxu0 0.0
    %225 = vmatpush.msra.mxu0 0.0
    %226 = vmatpush.msra.mxu0 0.0
    %227 = vmatpush.msra.mxu0 0.0
    %228 = vmatpush.msra.mxu0 0.0
    %229 = vmatpush.msra.mxu0 0.0
    %230 = vmatpush.msra.mxu0 0.0
    %231 = vmatpush.msra.mxu0 0.0
    %232 = vmatpush.msra.mxu0 0.0
    %233 = vmatpush.msra.mxu0 %v192
    %234 = vmatmul.f32.gmra.mxu0 %v185
    %v235 = vpop.f32.mrf.mxu0
    %v236 = vadd.f32 %v165, %v235
    %237 = vmatmul.f32.gmra.mxu0 %v188
    %v238 = vpop.f32.mrf.mxu0
    %v239 = vadd.f32 %v165, %v238
    %240 = vdwg.mxu0
    %241 = vmatpush.msra.mxu0 0.0
    %242 = vmatpush.msra.mxu0 0.0
    %243 = vmatpush.msra.mxu0 0.0
    %244 = vmatpush.msra.mxu0 0.0
    %245 = vmatpush.msra.mxu0 0.0
    %246 = vmatpush.msra.mxu0 0.0
    %247 = vmatpush.msra.mxu0 0.0
    %248 = vmatpush.msra.mxu0 0.0
    %249 = vmatpush.msra.mxu0 0.0
    %250 = vmatpush.msra.mxu0 0.0
    %251 = vmatpush.msra.mxu0 0.0
    %252 = vmatpush.msra.mxu0 0.0
    %253 = vmatpush.msra.mxu0 0.0
    %254 = vmatpush.msra.mxu0 0.0
    %255 = vmatpush.msra.mxu0 0.0
    %256 = vmatpush.msra.mxu0 %v195
    %257 = vmatmul.f32.gmra.mxu0 %v185
    %v258 = vpop.f32.mrf.mxu0
    %v259 = vadd.f32 %v166, %v258
    %260 = vmatmul.f32.gmra.mxu0 %v188
    %v261 = vpop.f32.mrf.mxu0
    %v262 = vadd.f32 %v166, %v261
    %263 = vdwg.mxu0
    %264 = vmatpush.msra.mxu0 0.0
    %265 = vmatpush.msra.mxu0 0.0
    %266 = vmatpush.msra.mxu0 0.0
    %267 = vmatpush.msra.mxu0 0.0
    %268 = vmatpush.msra.mxu0 0.0
    %269 = vmatpush.msra.mxu0 0.0
    %270 = vmatpush.msra.mxu0 0.0
    %271 = vmatpush.msra.mxu0 0.0
    %272 = vmatpush.msra.mxu0 0.0
    %273 = vmatpush.msra.mxu0 0.0
    %274 = vmatpush.msra.mxu0 0.0
    %275 = vmatpush.msra.mxu0 0.0
    %276 = vmatpush.msra.mxu0 0.0
    %277 = vmatpush.msra.mxu0 0.0
    %278 = vmatpush.msra.mxu0 0.0
    %279 = vmatpush.msra.mxu0 %v198
    %280 = vmatmul.f32.gmra.mxu0 %v185
    %v281 = vpop.f32.mrf.mxu0
    %v282 = vadd.f32 %v167, %v281
    %283 = vmatmul.f32.gmra.mxu0 %v188
    %v284 = vpop.f32.mrf.mxu0
    %v285 = vadd.f32 %v167, %v284
    %286 = vdwg.mxu0
    %287 = vmatpush.msra.mxu0 0.0
    %288 = vmatpush.msra.mxu0 0.0
    %289 = vmatpush.msra.mxu0 0.0
    %290 = vmatpush.msra.mxu0 0.0
    %291 = vmatpush.msra.mxu0 0.0
    %292 = vmatpush.msra.mxu0 0.0
    %293 = vmatpush.msra.mxu0 0.0
    %294 = vmatpush.msra.mxu0 0.0
    %295 = vmatpush.msra.mxu0 0.0
    %296 = vmatpush.msra.mxu0 0.0
    %297 = vmatpush.msra.mxu0 0.0
    %298 = vmatpush.msra.mxu0 0.0
    %299 = vmatpush.msra.mxu0 0.0
    %300 = vmatpush.msra.mxu0 0.0
    %301 = vmatpush.msra.mxu0 0.0
    %302 = vmatpush.msra.mxu0 %v201
    %303 = vmatmul.f32.gmra.mxu0 %v185
    %v304 = vpop.f32.mrf.mxu0
    %v305 = vadd.f32 %v168, %v304
    %306 = vmatmul.f32.gmra.mxu0 %v188
    %v307 = vpop.f32.mrf.mxu0
    %v308 = vadd.f32 %v168, %v307
    %309 = vdwg.mxu0
    %310 = vmatpush.msra.mxu0 0.0
    %311 = vmatpush.msra.mxu0 0.0
    %312 = vmatpush.msra.mxu0 0.0
    %313 = vmatpush.msra.mxu0 0.0
    %314 = vmatpush.msra.mxu0 0.0
    %315 = vmatpush.msra.mxu0 0.0
    %316 = vmatpush.msra.mxu0 0.0
    %317 = vmatpush.msra.mxu0 0.0
    %318 = vmatpush.msra.mxu0 0.0
    %319 = vmatpush.msra.mxu0 0.0
    %320 = vmatpush.msra.mxu0 0.0
    %321 = vmatpush.msra.mxu0 0.0
    %322 = vmatpush.msra.mxu0 0.0
    %323 = vmatpush.msra.mxu0 0.0
    %324 = vmatpush.msra.mxu0 0.0
    %325 = vmatpush.msra.mxu0 %v204
    %326 = vmatmul.f32.gmra.mxu0 %v185
    %v327 = vpop.f32.mrf.mxu0
    %v328 = vadd.f32 %v169, %v327
    %329 = vmatmul.f32.gmra.mxu0 %v188
    %v330 = vpop.f32.mrf.mxu0
    %v331 = vadd.f32 %v169, %v330
    %332 = vdwg.mxu0
    %333 = vmatpush.msra.mxu0 0.0
    %334 = vmatpush.msra.mxu0 0.0
    %335 = vmatpush.msra.mxu0 0.0
    %336 = vmatpush.msra.mxu0 0.0
    %337 = vmatpush.msra.mxu0 0.0
    %338 = vmatpush.msra.mxu0 0.0
    %339 = vmatpush.msra.mxu0 0.0
    %340 = vmatpush.msra.mxu0 0.0
    %341 = vmatpush.msra.mxu0 0.0
    %342 = vmatpush.msra.mxu0 0.0
    %343 = vmatpush.msra.mxu0 0.0
    %344 = vmatpush.msra.mxu0 0.0
    %345 = vmatpush.msra.mxu0 0.0
    %346 = vmatpush.msra.mxu0 0.0
    %347 = vmatpush.msra.mxu0 0.0
    %348 = vmatpush.msra.mxu0 %v207
    %349 = vmatmul.f32.gmra.mxu0 %v185
    %v350 = vpop.f32.mrf.mxu0
    %v351 = vadd.f32 %v170, %v350
    %352 = vmatmul.f32.gmra.mxu0 %v188
    %v353 = vpop.f32.mrf.mxu0
    %v354 = vadd.f32 %v170, %v353
    %355 = vdwg.mxu0
    %356 = vmatpush.msra.mxu0 0.0
    %357 = vmatpush.msra.mxu0 0.0
    %358 = vmatpush.msra.mxu0 0.0
    %359 = vmatpush.msra.mxu0 0.0
    %360 = vmatpush.msra.mxu0 0.0
    %361 = vmatpush.msra.mxu0 0.0
    %362 = vmatpush.msra.mxu0 0.0
    %363 = vmatpush.msra.mxu0 0.0
    %364 = vmatpush.msra.mxu0 0.0
    %365 = vmatpush.msra.mxu0 0.0
    %366 = vmatpush.msra.mxu0 0.0
    %367 = vmatpush.msra.mxu0 0.0
    %368 = vmatpush.msra.mxu0 0.0
    %369 = vmatpush.msra.mxu0 0.0
    %370 = vmatpush.msra.mxu0 0.0
    %371 = vmatpush.msra.mxu0 %v210
    %372 = vmatmul.f32.gmra.mxu0 %v185
    %v373 = vpop.f32.mrf.mxu0
    %v374 = vadd.f32 %v171, %v373
    %375 = vmatmul.f32.gmra.mxu0 %v188
    %v376 = vpop.f32.mrf.mxu0
    %v377 = vadd.f32 %v171, %v376
    %378 = vdwg.mxu0
    %379 = vmatpush.msra.mxu0 0.0
    %380 = vmatpush.msra.mxu0 0.0
    %381 = vmatpush.msra.mxu0 0.0
    %382 = vmatpush.msra.mxu0 0.0
    %383 = vmatpush.msra.mxu0 0.0
    %384 = vmatpush.msra.mxu0 0.0
    %385 = vmatpush.msra.mxu0 0.0
    %386 = vmatpush.msra.mxu0 0.0
    %387 = vmatpush.msra.mxu0 0.0
    %388 = vmatpush.msra.mxu0 0.0
    %389 = vmatpush.msra.mxu0 0.0
    %390 = vmatpush.msra.mxu0 0.0
    %391 = vmatpush.msra.mxu0 0.0
    %392 = vmatpush.msra.mxu0 0.0
    %393 = vmatpush.msra.mxu0 0.0
    %394 = vmatpush.msra.mxu0 %v213
    %395 = vmatmul.f32.gmra.mxu0 %v185
    %v396 = vpop.f32.mrf.mxu0
    %v397 = vadd.f32 %v172, %v396
    %398 = vmatmul.f32.gmra.mxu0 %v188
    %v399 = vpop.f32.mrf.mxu0
    %v400 = vadd.f32 %v172, %v399
    %401 = vdwg.mxu0
    %402 = vmatpush.msra.mxu0 0.0
    %403 = vmatpush.msra.mxu0 0.0
    %404 = vmatpush.msra.mxu0 0.0
    %405 = vmatpush.msra.mxu0 0.0
    %406 = vmatpush.msra.mxu0 0.0
    %407 = vmatpush.msra.mxu0 0.0
    %408 = vmatpush.msra.mxu0 0.0
    %409 = vmatpush.msra.mxu0 0.0
    %410 = vmatpush.msra.mxu0 0.0
    %411 = vmatpush.msra.mxu0 0.0
    %412 = vmatpush.msra.mxu0 0.0
    %413 = vmatpush.msra.mxu0 0.0
    %414 = vmatpush.msra.mxu0 0.0
    %415 = vmatpush.msra.mxu0 0.0
    %416 = vmatpush.msra.mxu0 0.0
    %417 = vmatpush.msra.mxu0 %v216
    %418 = vmatmul.f32.gmra.mxu0 %v185
    %v419 = vpop.f32.mrf.mxu0
    %v420 = vadd.f32 %v173, %v419
    %421 = vmatmul.f32.gmra.mxu0 %v188
    %v422 = vpop.f32.mrf.mxu0
    %v423 = vadd.f32 %v173, %v422
    %424 = vdwg.mxu0
    %425 = vmatpush.xpose.msra.mxu0 0.0
    %426 = vmatpush.xpose.msra.mxu0 0.0
    %427 = vmatpush.xpose.msra.mxu0 0.0
    %428 = vmatpush.xpose.msra.mxu0 0.0
    %429 = vmatpush.xpose.msra.mxu0 0.0
    %430 = vmatpush.xpose.msra.mxu0 0.0
    %431 = vmatpush.xpose.msra.mxu0 0.0
    %432 = vmatpush.xpose.msra.mxu0 0.0
    %433 = vmatpush.xpose.msra.mxu0 0.0
    %434 = vmatpush.xpose.msra.mxu0 0.0
    %435 = vmatpush.xpose.msra.mxu0 0.0
    %436 = vmatpush.xpose.msra.mxu0 0.0
    %437 = vmatpush.xpose.msra.mxu0 0.0
    %438 = vmatpush.xpose.msra.mxu0 0.0
    %439 = vmatpush.xpose.msra.mxu0 0.0
    %440 = vmatpush.xpose.msra.mxu0 %v305
    %441 = vmatmul.f32.gmra.mxu0 %v236
    %v442 = vpop.f32.mrf.mxu0
    %v443 = vadd.f32 0.0, %v442
    %444 = vdwg.mxu0
    %v445 = vmul.f32 %v443, 0.70710677
    %v446 = vadd.f32 %v445, %v151
    %vm447 = vcmask 64512
    %v448 = vsel %vm447, %v446, -inf
    %449 = vmax.xlane.f32.xlu0 %v448
    %v450 = vpop.xlane.xlu0 %449
    %v451 = vsub.f32 %v446, %v450
    %v452 = vmul.f32 %v451, 1.442695
    %v453 = vpow.pop %v452
    %v454 = vsel %vm447, %v453, 0.0
    %455 = vadd.xlane.f32.xlu0 %v454
    %v456 = vpop.xlane.xlu0 %455
    %v457 = vrcp.pop %v456
    %v458 = vmul.f32 %v456, %v457
    %v459 = vsub.f32 1.0, %v458
    %v460 = vmul.f32 %v457, %v459
    %v461 = vadd.f32 %v457, %v460
    %vm462 = vweird.f32 %v456
    %vm463 = vweird.f32 %v457
    %vm464 = vmor %vm462, %vm463
    %v465 = vsel %vm464, %v457, %v461
    %v466 = vand.u32 2147483647, %v456
    %vm467 = vcmp.eq.f32.partialorder %v466, 8.507059e+37
    %v468 = vand.u32 %v456, 2147483648
    %v469 = vor.u32 1.1754944e-38, %v468
    %v470 = vsel %vm467, %v469, %v465
    %v471 = vmul.f32 %v453, %v470
    %v473 = vsel %vm447, %v471, 0
    %475 = vmatpush.msra.mxu0 0.0
    %476 = vmatpush.msra.mxu0 0.0
    %477 = vmatpush.msra.mxu0 0.0
    %478 = vmatpush.msra.mxu0 0.0
    %479 = vmatpush.msra.mxu0 0.0
    %480 = vmatpush.msra.mxu0 0.0
    %481 = vmatpush.msra.mxu0 0.0
    %482 = vmatpush.msra.mxu0 0.0
    %483 = vmatpush.msra.mxu0 0.0
    %484 = vmatpush.msra.mxu0 0.0
    %485 = vmatpush.msra.mxu0 0.0
    %486 = vmatpush.msra.mxu0 0.0
    %487 = vmatpush.msra.mxu0 0.0
    %488 = vmatpush.msra.mxu0 0.0
    %489 = vmatpush.msra.mxu0 0.0
    %490 = vmatpush.msra.mxu0 %v374
    %491 = vmatmul.f32.gmra.mxu0 %v473
    %v492 = vpop.f32.mrf.mxu0
    %v493 = vadd.f32 0.0, %v492
    %494 = vdwg.mxu0
    %495 = vmatpush.xpose.msra.mxu0 0.0
    %496 = vmatpush.xpose.msra.mxu0 0.0
    %497 = vmatpush.xpose.msra.mxu0 0.0
    %498 = vmatpush.xpose.msra.mxu0 0.0
    %499 = vmatpush.xpose.msra.mxu0 0.0
    %500 = vmatpush.xpose.msra.mxu0 0.0
    %501 = vmatpush.xpose.msra.mxu0 0.0
    %502 = vmatpush.xpose.msra.mxu0 0.0
    %503 = vmatpush.xpose.msra.mxu0 0.0
    %504 = vmatpush.xpose.msra.mxu0 0.0
    %505 = vmatpush.xpose.msra.mxu0 0.0
    %506 = vmatpush.xpose.msra.mxu0 0.0
    %507 = vmatpush.xpose.msra.mxu0 0.0
    %508 = vmatpush.xpose.msra.mxu0 0.0
    %509 = vmatpush.xpose.msra.mxu0 0.0
    %510 = vmatpush.xpose.msra.mxu0 %v328
    %511 = vmatmul.f32.gmra.mxu0 %v259
    %v512 = vpop.f32.mrf.mxu0
    %v513 = vadd.f32 0.0, %v512
    %514 = vdwg.mxu0
    %v515 = vmul.f32 %v513, 0.70710677
    %v516 = vadd.f32 %v515, %v151
    %v517 = vsel %vm447, %v516, -inf
    %518 = vmax.xlane.f32.xlu0 %v517
    %v519 = vpop.xlane.xlu0 %518
    %v520 = vsub.f32 %v516, %v519
    %v521 = vmul.f32 %v520, 1.442695
    %v522 = vpow.pop %v521
    %v523 = vsel %vm447, %v522, 0.0
    %524 = vadd.xlane.f32.xlu0 %v523
    %v525 = vpop.xlane.xlu0 %524
    %v526 = vrcp.pop %v525
    %v527 = vmul.f32 %v525, %v526
    %v528 = vsub.f32 1.0, %v527
    %v529 = vmul.f32 %v526, %v528
    %v530 = vadd.f32 %v526, %v529
    %vm531 = vweird.f32 %v525
    %vm532 = vweird.f32 %v526
    %vm533 = vmor %vm531, %vm532
    %v534 = vsel %vm533, %v526, %v530
    %v535 = vand.u32 2147483647, %v525
    %vm536 = vcmp.eq.f32.partialorder %v535, 8.507059e+37
    %v537 = vand.u32 %v525, 2147483648
    %v538 = vor.u32 1.1754944e-38, %v537
    %v539 = vsel %vm536, %v538, %v534
    %v540 = vmul.f32 %v522, %v539
    %v542 = vsel %vm447, %v540, 0
    %544 = vmatpush.msra.mxu0 0.0
    %545 = vmatpush.msra.mxu0 0.0
    %546 = vmatpush.msra.mxu0 0.0
    %547 = vmatpush.msra.mxu0 0.0
    %548 = vmatpush.msra.mxu0 0.0
    %549 = vmatpush.msra.mxu0 0.0
    %550 = vmatpush.msra.mxu0 0.0
    %551 = vmatpush.msra.mxu0 0.0
    %552 = vmatpush.msra.mxu0 0.0
    %553 = vmatpush.msra.mxu0 0.0
    %554 = vmatpush.msra.mxu0 0.0
    %555 = vmatpush.msra.mxu0 0.0
    %556 = vmatpush.msra.mxu0 0.0
    %557 = vmatpush.msra.mxu0 0.0
    %558 = vmatpush.msra.mxu0 0.0
    %559 = vmatpush.msra.mxu0 %v397
    %560 = vmatmul.f32.gmra.mxu0 %v542
    %v561 = vpop.f32.mrf.mxu0
    %v562 = vadd.f32 0.0, %v561
    %563 = vdwg.mxu0
    %564 = vmatpush.xpose.msra.mxu0 0.0
    %565 = vmatpush.xpose.msra.mxu0 0.0
    %566 = vmatpush.xpose.msra.mxu0 0.0
    %567 = vmatpush.xpose.msra.mxu0 0.0
    %568 = vmatpush.xpose.msra.mxu0 0.0
    %569 = vmatpush.xpose.msra.mxu0 0.0
    %570 = vmatpush.xpose.msra.mxu0 0.0
    %571 = vmatpush.xpose.msra.mxu0 0.0
    %572 = vmatpush.xpose.msra.mxu0 0.0
    %573 = vmatpush.xpose.msra.mxu0 0.0
    %574 = vmatpush.xpose.msra.mxu0 0.0
    %575 = vmatpush.xpose.msra.mxu0 0.0
    %576 = vmatpush.xpose.msra.mxu0 0.0
    %577 = vmatpush.xpose.msra.mxu0 0.0
    %578 = vmatpush.xpose.msra.mxu0 0.0
    %579 = vmatpush.xpose.msra.mxu0 %v351
    %580 = vmatmul.f32.gmra.mxu0 %v282
    %v581 = vpop.f32.mrf.mxu0
    %v582 = vadd.f32 0.0, %v581
    %583 = vdwg.mxu0
    %v584 = vmul.f32 %v582, 0.70710677
    %v585 = vadd.f32 %v584, %v151
    %v586 = vsel %vm447, %v585, -inf
    %587 = vmax.xlane.f32.xlu0 %v586
    %v588 = vpop.xlane.xlu0 %587
    %v589 = vsub.f32 %v585, %v588
    %v590 = vmul.f32 %v589, 1.442695
    %v591 = vpow.pop %v590
    %v592 = vsel %vm447, %v591, 0.0
    %593 = vadd.xlane.f32.xlu0 %v592
    %v594 = vpop.xlane.xlu0 %593
    %v595 = vrcp.pop %v594
    %v596 = vmul.f32 %v594, %v595
    %v597 = vsub.f32 1.0, %v596
    %v598 = vmul.f32 %v595, %v597
    %v599 = vadd.f32 %v595, %v598
    %vm600 = vweird.f32 %v594
    %vm601 = vweird.f32 %v595
    %vm602 = vmor %vm600, %vm601
    %v603 = vsel %vm602, %v595, %v599
    %v604 = vand.u32 2147483647, %v594
    %vm605 = vcmp.eq.f32.partialorder %v604, 8.507059e+37
    %v606 = vand.u32 %v594, 2147483648
    %v607 = vor.u32 1.1754944e-38, %v606
    %v608 = vsel %vm605, %v607, %v603
    %v609 = vmul.f32 %v591, %v608
    %v611 = vsel %vm447, %v609, 0
    %613 = vmatpush.msra.mxu0 0.0
    %614 = vmatpush.msra.mxu0 0.0
    %615 = vmatpush.msra.mxu0 0.0
    %616 = vmatpush.msra.mxu0 0.0
    %617 = vmatpush.msra.mxu0 0.0
    %618 = vmatpush.msra.mxu0 0.0
    %619 = vmatpush.msra.mxu0 0.0
    %620 = vmatpush.msra.mxu0 0.0
    %621 = vmatpush.msra.mxu0 0.0
    %622 = vmatpush.msra.mxu0 0.0
    %623 = vmatpush.msra.mxu0 0.0
    %624 = vmatpush.msra.mxu0 0.0
    %625 = vmatpush.msra.mxu0 0.0
    %626 = vmatpush.msra.mxu0 0.0
    %627 = vmatpush.msra.mxu0 0.0
    %628 = vmatpush.msra.mxu0 %v420
    %629 = vmatmul.f32.gmra.mxu0 %v611
    %v630 = vpop.f32.mrf.mxu0
    %v631 = vadd.f32 0.0, %v630
    %632 = vdwg.mxu0
    %633 = vmatpush.xpose.msra.mxu0 0.0
    %634 = vmatpush.xpose.msra.mxu0 0.0
    %635 = vmatpush.xpose.msra.mxu0 0.0
    %636 = vmatpush.xpose.msra.mxu0 0.0
    %637 = vmatpush.xpose.msra.mxu0 0.0
    %638 = vmatpush.xpose.msra.mxu0 0.0
    %639 = vmatpush.xpose.msra.mxu0 0.0
    %640 = vmatpush.xpose.msra.mxu0 0.0
    %641 = vmatpush.xpose.msra.mxu0 0.0
    %642 = vmatpush.xpose.msra.mxu0 0.0
    %643 = vmatpush.xpose.msra.mxu0 0.0
    %644 = vmatpush.xpose.msra.mxu0 0.0
    %645 = vmatpush.xpose.msra.mxu0 0.0
    %646 = vmatpush.xpose.msra.mxu0 0.0
    %647 = vmatpush.xpose.msra.mxu0 0.0
    %648 = vmatpush.xpose.msra.mxu0 %v308
    %649 = vmatmul.f32.gmra.mxu0 %v239
    %v650 = vpop.f32.mrf.mxu0
    %v651 = vadd.f32 0.0, %v650
    %652 = vdwg.mxu0
    %v653 = vmul.f32 %v651, 0.70710677
    %v654 = vadd.f32 %v653, %v151
    %v655 = vsel %vm447, %v654, -inf
    %656 = vmax.xlane.f32.xlu0 %v655
    %v657 = vpop.xlane.xlu0 %656
    %v658 = vsub.f32 %v654, %v657
    %v659 = vmul.f32 %v658, 1.442695
    %v660 = vpow.pop %v659
    %v661 = vsel %vm447, %v660, 0.0
    %662 = vadd.xlane.f32.xlu0 %v661
    %v663 = vpop.xlane.xlu0 %662
    %v664 = vrcp.pop %v663
    %v665 = vmul.f32 %v663, %v664
    %v666 = vsub.f32 1.0, %v665
    %v667 = vmul.f32 %v664, %v666
    %v668 = vadd.f32 %v664, %v667
    %vm669 = vweird.f32 %v663
    %vm670 = vweird.f32 %v664
    %vm671 = vmor %vm669, %vm670
    %v672 = vsel %vm671, %v664, %v668
    %v673 = vand.u32 2147483647, %v663
    %vm674 = vcmp.eq.f32.partialorder %v673, 8.507059e+37
    %v675 = vand.u32 %v663, 2147483648
    %v676 = vor.u32 1.1754944e-38, %v675
    %v677 = vsel %vm674, %v676, %v672
    %v678 = vmul.f32 %v660, %v677
    %v680 = vsel %vm447, %v678, 0
    %682 = vmatpush.msra.mxu0 0.0
    %683 = vmatpush.msra.mxu0 0.0
    %684 = vmatpush.msra.mxu0 0.0
    %685 = vmatpush.msra.mxu0 0.0
    %686 = vmatpush.msra.mxu0 0.0
    %687 = vmatpush.msra.mxu0 0.0
    %688 = vmatpush.msra.mxu0 0.0
    %689 = vmatpush.msra.mxu0 0.0
    %690 = vmatpush.msra.mxu0 0.0
    %691 = vmatpush.msra.mxu0 0.0
    %692 = vmatpush.msra.mxu0 0.0
    %693 = vmatpush.msra.mxu0 0.0
    %694 = vmatpush.msra.mxu0 0.0
    %695 = vmatpush.msra.mxu0 0.0
    %696 = vmatpush.msra.mxu0 0.0
    %697 = vmatpush.msra.mxu0 %v377
    %698 = vmatmul.f32.gmra.mxu0 %v680
    %v699 = vpop.f32.mrf.mxu0
    %v700 = vadd.f32 0.0, %v699
    %701 = vdwg.mxu0
    %702 = vmatpush.xpose.msra.mxu0 0.0
    %703 = vmatpush.xpose.msra.mxu0 0.0
    %704 = vmatpush.xpose.msra.mxu0 0.0
    %705 = vmatpush.xpose.msra.mxu0 0.0
    %706 = vmatpush.xpose.msra.mxu0 0.0
    %707 = vmatpush.xpose.msra.mxu0 0.0
    %708 = vmatpush.xpose.msra.mxu0 0.0
    %709 = vmatpush.xpose.msra.mxu0 0.0
    %710 = vmatpush.xpose.msra.mxu0 0.0
    %711 = vmatpush.xpose.msra.mxu0 0.0
    %712 = vmatpush.xpose.msra.mxu0 0.0
    %713 = vmatpush.xpose.msra.mxu0 0.0
    %714 = vmatpush.xpose.msra.mxu0 0.0
    %715 = vmatpush.xpose.msra.mxu0 0.0
    %716 = vmatpush.xpose.msra.mxu0 0.0
    %717 = vmatpush.xpose.msra.mxu0 %v331
    %718 = vmatmul.f32.gmra.mxu0 %v262
    %v719 = vpop.f32.mrf.mxu0
    %v720 = vadd.f32 0.0, %v719
    %721 = vdwg.mxu0
    %v722 = vmul.f32 %v720, 0.70710677
    %v723 = vadd.f32 %v722, %v151
    %v724 = vsel %vm447, %v723, -inf
    %725 = vmax.xlane.f32.xlu0 %v724
    %v726 = vpop.xlane.xlu0 %725
    %v727 = vsub.f32 %v723, %v726
    %v728 = vmul.f32 %v727, 1.442695
    %v729 = vpow.pop %v728
    %v730 = vsel %vm447, %v729, 0.0
    %731 = vadd.xlane.f32.xlu0 %v730
    %v732 = vpop.xlane.xlu0 %731
    %v733 = vrcp.pop %v732
    %v734 = vmul.f32 %v732, %v733
    %v735 = vsub.f32 1.0, %v734
    %v736 = vmul.f32 %v733, %v735
    %v737 = vadd.f32 %v733, %v736
    %vm738 = vweird.f32 %v732
    %vm739 = vweird.f32 %v733
    %vm740 = vmor %vm738, %vm739
    %v741 = vsel %vm740, %v733, %v737
    %v742 = vand.u32 2147483647, %v732
    %vm743 = vcmp.eq.f32.partialorder %v742, 8.507059e+37
    %v744 = vand.u32 %v732, 2147483648
    %v745 = vor.u32 1.1754944e-38, %v744
    %v746 = vsel %vm743, %v745, %v741
    %v747 = vmul.f32 %v729, %v746
    %v749 = vsel %vm447, %v747, 0
    %751 = vmatpush.msra.mxu0 0.0
    %752 = vmatpush.msra.mxu0 0.0
    %753 = vmatpush.msra.mxu0 0.0
    %754 = vmatpush.msra.mxu0 0.0
    %755 = vmatpush.msra.mxu0 0.0
    %756 = vmatpush.msra.mxu0 0.0
    %757 = vmatpush.msra.mxu0 0.0
    %758 = vmatpush.msra.mxu0 0.0
    %759 = vmatpush.msra.mxu0 0.0
    %760 = vmatpush.msra.mxu0 0.0
    %761 = vmatpush.msra.mxu0 0.0
    %762 = vmatpush.msra.mxu0 0.0
    %763 = vmatpush.msra.mxu0 0.0
    %764 = vmatpush.msra.mxu0 0.0
    %765 = vmatpush.msra.mxu0 0.0
    %766 = vmatpush.msra.mxu0 %v400
    %767 = vmatmul.f32.gmra.mxu0 %v749
    %v768 = vpop.f32.mrf.mxu0
    %v769 = vadd.f32 0.0, %v768
    %770 = vdwg.mxu0
    %771 = vmatpush.xpose.msra.mxu0 0.0
    %772 = vmatpush.xpose.msra.mxu0 0.0
    %773 = vmatpush.xpose.msra.mxu0 0.0
    %774 = vmatpush.xpose.msra.mxu0 0.0
    %775 = vmatpush.xpose.msra.mxu0 0.0
    %776 = vmatpush.xpose.msra.mxu0 0.0
    %777 = vmatpush.xpose.msra.mxu0 0.0
    %778 = vmatpush.xpose.msra.mxu0 0.0
    %779 = vmatpush.xpose.msra.mxu0 0.0
    %780 = vmatpush.xpose.msra.mxu0 0.0
    %781 = vmatpush.xpose.msra.mxu0 0.0
    %782 = vmatpush.xpose.msra.mxu0 0.0
    %783 = vmatpush.xpose.msra.mxu0 0.0
    %784 = vmatpush.xpose.msra.mxu0 0.0
    %785 = vmatpush.xpose.msra.mxu0 0.0
    %786 = vmatpush.xpose.msra.mxu0 %v354
    %787 = vmatmul.f32.gmra.mxu0 %v285
    %v788 = vpop.f32.mrf.mxu0
    %v789 = vadd.f32 0.0, %v788
    %790 = vdwg.mxu0
    %v791 = vmul.f32 %v789, 0.70710677
    %v792 = vadd.f32 %v791, %v151
    %v793 = vsel %vm447, %v792, -inf
    %794 = vmax.xlane.f32.xlu0 %v793
    %v795 = vpop.xlane.xlu0 %794
    %v796 = vsub.f32 %v792, %v795
    %v797 = vmul.f32 %v796, 1.442695
    %v798 = vpow.pop %v797
    %v799 = vsel %vm447, %v798, 0.0
    %800 = vadd.xlane.f32.xlu0 %v799
    %v801 = vpop.xlane.xlu0 %800
    %v802 = vrcp.pop %v801
    %v803 = vmul.f32 %v801, %v802
    %v804 = vsub.f32 1.0, %v803
    %v805 = vmul.f32 %v802, %v804
    %v806 = vadd.f32 %v802, %v805
    %vm807 = vweird.f32 %v801
    %vm808 = vweird.f32 %v802
    %vm809 = vmor %vm807, %vm808
    %v810 = vsel %vm809, %v802, %v806
    %v811 = vand.u32 2147483647, %v801
    %vm812 = vcmp.eq.f32.partialorder %v811, 8.507059e+37
    %v813 = vand.u32 %v801, 2147483648
    %v814 = vor.u32 1.1754944e-38, %v813
    %v815 = vsel %vm812, %v814, %v810
    %v816 = vmul.f32 %v798, %v815
    %v818 = vsel %vm447, %v816, 0
    %820 = vmatpush.msra.mxu0 0.0
    %821 = vmatpush.msra.mxu0 0.0
    %822 = vmatpush.msra.mxu0 0.0
    %823 = vmatpush.msra.mxu0 0.0
    %824 = vmatpush.msra.mxu0 0.0
    %825 = vmatpush.msra.mxu0 0.0
    %826 = vmatpush.msra.mxu0 0.0
    %827 = vmatpush.msra.mxu0 0.0
    %828 = vmatpush.msra.mxu0 0.0
    %829 = vmatpush.msra.mxu0 0.0
    %830 = vmatpush.msra.mxu0 0.0
    %831 = vmatpush.msra.mxu0 0.0
    %832 = vmatpush.msra.mxu0 0.0
    %833 = vmatpush.msra.mxu0 0.0
    %834 = vmatpush.msra.mxu0 0.0
    %835 = vmatpush.msra.mxu0 %v423
    %836 = vmatmul.f32.gmra.mxu0 %v818
    %v837 = vpop.f32.mrf.mxu0
    %v838 = vadd.f32 0.0, %v837
    %839 = vdwg.mxu0
    %v840 = vld [vmem:[#allocation6] sm:$0x3f]
    %v841 = vld [vmem:[#allocation6 + $0x8] sm:$0x3f]
    %v842 = vld [vmem:[#allocation6 + $0x10] sm:$0x3f]
    %v843 = vld [vmem:[%s4] sm:$0x1]
    %v845 = vperm.slane %v843, 0
    %847 = vmatpush.xpose.msra.mxu0 0.0
    %848 = vmatpush.xpose.msra.mxu0 0.0
    %849 = vmatpush.xpose.msra.mxu0 0.0
    %850 = vmatpush.xpose.msra.mxu0 0.0
    %851 = vmatpush.xpose.msra.mxu0 0.0
    %852 = vmatpush.xpose.msra.mxu0 0.0
    %853 = vmatpush.xpose.msra.mxu0 0.0
    %854 = vmatpush.xpose.msra.mxu0 0.0
    %855 = vmatpush.xpose.msra.mxu0 0.0
    %856 = vmatpush.xpose.msra.mxu0 0.0
    %857 = vmatpush.xpose.msra.mxu0 0.0
    %858 = vmatpush.xpose.msra.mxu0 0.0
    %859 = vmatpush.xpose.msra.mxu0 0.0
    %860 = vmatpush.xpose.msra.mxu0 0.0
    %861 = vmatpush.xpose.msra.mxu0 0.0
    %862 = vmatpush.xpose.msra.mxu0 %v840
    %863 = vmatmul.f32.gmra.mxu0 %v493
    %v864 = vpop.f32.mrf.mxu0
    %v865 = vadd.f32 %v845, %v864
    %866 = vmatmul.f32.gmra.mxu0 %v700
    %v867 = vpop.f32.mrf.mxu0
    %v868 = vadd.f32 %v845, %v867
    %869 = vdwg.mxu0
    %870 = vmatpush.xpose.msra.mxu0 0.0
    %871 = vmatpush.xpose.msra.mxu0 0.0
    %872 = vmatpush.xpose.msra.mxu0 0.0
    %873 = vmatpush.xpose.msra.mxu0 0.0
    %874 = vmatpush.xpose.msra.mxu0 0.0
    %875 = vmatpush.xpose.msra.mxu0 0.0
    %876 = vmatpush.xpose.msra.mxu0 0.0
    %877 = vmatpush.xpose.msra.mxu0 0.0
    %878 = vmatpush.xpose.msra.mxu0 0.0
    %879 = vmatpush.xpose.msra.mxu0 0.0
    %880 = vmatpush.xpose.msra.mxu0 0.0
    %881 = vmatpush.xpose.msra.mxu0 0.0
    %882 = vmatpush.xpose.msra.mxu0 0.0
    %883 = vmatpush.xpose.msra.mxu0 0.0
    %884 = vmatpush.xpose.msra.mxu0 0.0
    %885 = vmatpush.xpose.msra.mxu0 %v841
    %886 = vmatmul.f32.gmra.mxu0 %v562
    %v887 = vpop.f32.mrf.mxu0
    %v888 = vadd.f32 %v865, %v887
    %889 = vmatmul.f32.gmra.mxu0 %v769
    %v890 = vpop.f32.mrf.mxu0
    %v891 = vadd.f32 %v868, %v890
    %892 = vdwg.mxu0
    %893 = vmatpush.xpose.msra.mxu0 0.0
    %894 = vmatpush.xpose.msra.mxu0 0.0
    %895 = vmatpush.xpose.msra.mxu0 0.0
    %896 = vmatpush.xpose.msra.mxu0 0.0
    %897 = vmatpush.xpose.msra.mxu0 0.0
    %898 = vmatpush.xpose.msra.mxu0 0.0
    %899 = vmatpush.xpose.msra.mxu0 0.0
    %900 = vmatpush.xpose.msra.mxu0 0.0
    %901 = vmatpush.xpose.msra.mxu0 0.0
    %902 = vmatpush.xpose.msra.mxu0 0.0
    %903 = vmatpush.xpose.msra.mxu0 0.0
    %904 = vmatpush.xpose.msra.mxu0 0.0
    %905 = vmatpush.xpose.msra.mxu0 0.0
    %906 = vmatpush.xpose.msra.mxu0 0.0
    %907 = vmatpush.xpose.msra.mxu0 0.0
    %908 = vmatpush.xpose.msra.mxu0 %v842
    %909 = vmatmul.f32.gmra.mxu0 %v631
    %v910 = vpop.f32.mrf.mxu0
    %v911 = vadd.f32 %v888, %v910
    %912 = vmatmul.f32.gmra.mxu0 %v838
    %v913 = vpop.f32.mrf.mxu0
    %v914 = vadd.f32 %v891, %v913
    %915 = vdwg.mxu0
    %v916 = vadd.f32 %v144, %v911
    %v917 = vadd.f32 %v145, %v914
    %v918 = vld [vmem:[%s5] sm:$0x1]
    %v919 = vld [vmem:[%s6] sm:$0x1]
    %v920 = vsel %vm183, %v916, 0.0
    %921 = vadd.xlane.f32.xlu0 %v920
    %v922 = vpop.xlane.xlu0 %921
    %v923 = vsel %vm183, %v917, 0.0
    %924 = vadd.xlane.f32.xlu0 %v923
    %v925 = vpop.xlane.xlu0 %924
    %v926 = vrcp.pop 6.0
    %v927 = vmul.f32 6.0, %v926
    %v928 = vsub.f32 1.0, %v927
    %v929 = vmul.f32 %v926, %v928
    %v930 = vadd.f32 %v926, %v929
    %vm931 = vweird.f32 %v926
    %v932 = vsel %vm931, %v926, %v930
    %v933 = vmul.f32 %v922, %v932
    %v934 = vmul.f32 %v925, %v932
    %v935 = vsub.f32 %v916, %v933
    %v936 = vsub.f32 %v917, %v934
    %v937 = vmul.f32 %v935, %v935
    %v938 = vmul.f32 %v936, %v936
    %v939 = vsel %vm183, %v937, 0.0
    %940 = vadd.xlane.f32.xlu0 %v939
    %v941 = vpop.xlane.xlu0 %940
    %v942 = vsel %vm183, %v938, 0.0
    %943 = vadd.xlane.f32.xlu0 %v942
    %v944 = vpop.xlane.xlu0 %943
    %v945 = vmul.f32 %v941, %v932
    %v946 = vmul.f32 %v944, %v932
    %v947 = vadd.f32 %v945, 1e-05
    %v948 = vadd.f32 %v946, 1e-05
    %v949 = vrsqrt.pop %v947
    %v950 = vmul.f32 %v949, %v947
    %v951 = vmul.f32 %v950, %v949
    %v952 = vmul.f32 0.5, %v951
    %v953 = vsub.f32 1.5, %v952
    %v954 = vmul.f32 %v949, %v953
    %vm955 = vweird.f32 %v947
    %vm956 = vweird.f32 %v949
    %vm957 = vmor %vm955, %vm956
    %v958 = vsel %vm957, %v949, %v954
    %v959 = vrsqrt.pop %v948
    %v960 = vmul.f32 %v959, %v948
    %v961 = vmul.f32 %v960, %v959
    %v962 = vmul.f32 0.5, %v961
    %v963 = vsub.f32 1.5, %v962
    %v964 = vmul.f32 %v959, %v963
    %vm965 = vweird.f32 %v948
    %vm966 = vweird.f32 %v959
    %vm967 = vmor %vm965, %vm966
    %v968 = vsel %vm967, %v959, %v964
    %v969 = vmul.f32 %v935, %v958
    %v970 = vmul.f32 %v936, %v968
    %v972 = vperm.slane %v918, 0
    %v974 = vmul.f32 %v969, %v972
    %v975 = vmul.f32 %v970, %v972
    %v977 = vperm.slane %v919, 0
    %v979 = vadd.f32 %v974, %v977
    %v980 = vadd.f32 %v975, %v977
    %v981 = vld [vmem:[#allocation7] sm:$0x3f]
    %v982 = vld [vmem:[#allocation7 + $0x8] sm:$0x3f]
    %v983 = vld [vmem:[#allocation7 + $0x10] sm:$0x3f]
    %v984 = vld [vmem:[#allocation7 + $0x18] sm:$0x3f]
    %v985 = vld [vmem:[#allocation7 + $0x20] sm:$0x3f]
    %v986 = vld [vmem:[#allocation7 + $0x28] sm:$0x3f]
    %v987 = vld [vmem:[#allocation7 + $0x30] sm:$0x3f]
    %v988 = vld [vmem:[#allocation7 + $0x38] sm:$0x3f]
    %v989 = vld [vmem:[#allocation7 + $0x40] sm:$0x3f]
    %v990 = vld [vmem:[#allocation7 + $0x48] sm:$0x3f]
    %v991 = vld [vmem:[#allocation7 + $0x50] sm:$0x3f]
    %v992 = vld [vmem:[#allocation7 + $0x58] sm:$0x3f]
    %v993 = vld [vmem:[#allocation7 + $0x60] sm:$0x3f]
    %v994 = vld [vmem:[#allocation7 + $0x68] sm:$0x3f]
    %v995 = vld [vmem:[#allocation7 + $0x70] sm:$0x3f]
    %v996 = vld [vmem:[#allocation7 + $0x78] sm:$0x3f]
    %v997 = vld [vmem:[#allocation9] sm:$0xff]
    %v998 = vld [vmem:[#allocation9 + $0x8] sm:$0xff]
    %v1001 = vperm.slane %v997, 0
    %v1002 = vperm.slane %v997, 1
    %v1003 = vperm.slane %v997, 2
    %v1004 = vperm.slane %v997, 3
    %v1005 = vperm.slane %v997, 4
    %v1006 = vperm.slane %v997, 5
    %v1007 = vperm.slane %v997, 6
    %v1008 = vperm.slane %v997, 7
    %v1009 = vperm.slane %v998, 0
    %v1010 = vperm.slane %v998, 1
    %v1011 = vperm.slane %v998, 2
    %v1012 = vperm.slane %v998, 3
    %v1013 = vperm.slane %v998, 4
    %v1014 = vperm.slane %v998, 5
    %v1015 = vperm.slane %v998, 6
    %v1016 = vperm.slane %v998, 7
    %v1034 = vsel %vm183, %v979, 0
    %v1037 = vsel %vm183, %v980, 0
    %v1040 = vsel %vm190, %v981, 0
    %v1043 = vsel %vm190, %v982, 0
    %v1046 = vsel %vm190, %v983, 0
    %v1049 = vsel %vm190, %v984, 0
    %v1052 = vsel %vm190, %v985, 0
    %v1055 = vsel %vm190, %v986, 0
    %v1058 = vsel %vm190, %v987, 0
    %v1061 = vsel %vm190, %v988, 0
    %v1064 = vsel %vm190, %v989, 0
    %v1067 = vsel %vm190, %v990, 0
    %v1070 = vsel %vm190, %v991, 0
    %v1073 = vsel %vm190, %v992, 0
    %v1076 = vsel %vm190, %v993, 0
    %v1079 = vsel %vm190, %v994, 0
    %v1082 = vsel %vm190, %v995, 0
    %v1085 = vsel %vm190, %v996, 0
    %1087 = vmatpush.msra.mxu0 0.0
    %1088 = vmatpush.msra.mxu0 0.0
    %1089 = vmatpush.msra.mxu0 0.0
    %1090 = vmatpush.msra.mxu0 0.0
    %1091 = vmatpush.msra.mxu0 0.0
    %1092 = vmatpush.msra.mxu0 0.0
    %1093 = vmatpush.msra.mxu0 0.0
    %1094 = vmatpush.msra.mxu0 0.0
    %1095 = vmatpush.msra.mxu0 0.0
    %1096 = vmatpush.msra.mxu0 0.0
    %1097 = vmatpush.msra.mxu0 0.0
    %1098 = vmatpush.msra.mxu0 0.0
    %1099 = vmatpush.msra.mxu0 0.0
    %1100 = vmatpush.msra.mxu0 0.0
    %1101 = vmatpush.msra.mxu0 0.0
    %1102 = vmatpush.msra.mxu0 %v1040
    %1103 = vmatmul.f32.gmra.mxu0 %v1034
    %v1104 = vpop.f32.mrf.mxu0
    %v1105 = vadd.f32 %v1001, %v1104
    %1106 = vmatmul.f32.gmra.mxu0 %v1037
    %v1107 = vpop.f32.mrf.mxu0
    %v1108 = vadd.f32 %v1001, %v1107
    %1109 = vdwg.mxu0
    %1110 = vmatpush.msra.mxu0 0.0
    %1111 = vmatpush.msra.mxu0 0.0
    %1112 = vmatpush.msra.mxu0 0.0
    %1113 = vmatpush.msra.mxu0 0.0
    %1114 = vmatpush.msra.mxu0 0.0
    %1115 = vmatpush.msra.mxu0 0.0
    %1116 = vmatpush.msra.mxu0 0.0
    %1117 = vmatpush.msra.mxu0 0.0
    %1118 = vmatpush.msra.mxu0 0.0
    %1119 = vmatpush.msra.mxu0 0.0
    %1120 = vmatpush.msra.mxu0 0.0
    %1121 = vmatpush.msra.mxu0 0.0
    %1122 = vmatpush.msra.mxu0 0.0
    %1123 = vmatpush.msra.mxu0 0.0
    %1124 = vmatpush.msra.mxu0 0.0
    %1125 = vmatpush.msra.mxu0 %v1043
    %1126 = vmatmul.f32.gmra.mxu0 %v1034
    %v1127 = vpop.f32.mrf.mxu0
    %v1128 = vadd.f32 %v1002, %v1127
    %1129 = vmatmul.f32.gmra.mxu0 %v1037
    %v1130 = vpop.f32.mrf.mxu0
    %v1131 = vadd.f32 %v1002, %v1130
    %1132 = vdwg.mxu0
    %1133 = vmatpush.msra.mxu0 0.0
    %1134 = vmatpush.msra.mxu0 0.0
    %1135 = vmatpush.msra.mxu0 0.0
    %1136 = vmatpush.msra.mxu0 0.0
    %1137 = vmatpush.msra.mxu0 0.0
    %1138 = vmatpush.msra.mxu0 0.0
    %1139 = vmatpush.msra.mxu0 0.0
    %1140 = vmatpush.msra.mxu0 0.0
    %1141 = vmatpush.msra.mxu0 0.0
    %1142 = vmatpush.msra.mxu0 0.0
    %1143 = vmatpush.msra.mxu0 0.0
    %1144 = vmatpush.msra.mxu0 0.0
    %1145 = vmatpush.msra.mxu0 0.0
    %1146 = vmatpush.msra.mxu0 0.0
    %1147 = vmatpush.msra.mxu0 0.0
    %1148 = vmatpush.msra.mxu0 %v1046
    %1149 = vmatmul.f32.gmra.mxu0 %v1034
    %v1150 = vpop.f32.mrf.mxu0
    %v1151 = vadd.f32 %v1003, %v1150
    %1152 = vmatmul.f32.gmra.mxu0 %v1037
    %v1153 = vpop.f32.mrf.mxu0
    %v1154 = vadd.f32 %v1003, %v1153
    %1155 = vdwg.mxu0
    %1156 = vmatpush.msra.mxu0 0.0
    %1157 = vmatpush.msra.mxu0 0.0
    %1158 = vmatpush.msra.mxu0 0.0
    %1159 = vmatpush.msra.mxu0 0.0
    %1160 = vmatpush.msra.mxu0 0.0
    %1161 = vmatpush.msra.mxu0 0.0
    %1162 = vmatpush.msra.mxu0 0.0
    %1163 = vmatpush.msra.mxu0 0.0
    %1164 = vmatpush.msra.mxu0 0.0
    %1165 = vmatpush.msra.mxu0 0.0
    %1166 = vmatpush.msra.mxu0 0.0
    %1167 = vmatpush.msra.mxu0 0.0
    %1168 = vmatpush.msra.mxu0 0.0
    %1169 = vmatpush.msra.mxu0 0.0
    %1170 = vmatpush.msra.mxu0 0.0
    %1171 = vmatpush.msra.mxu0 %v1049
    %1172 = vmatmul.f32.gmra.mxu0 %v1034
    %v1173 = vpop.f32.mrf.mxu0
    %v1174 = vadd.f32 %v1004, %v1173
    %1175 = vmatmul.f32.gmra.mxu0 %v1037
    %v1176 = vpop.f32.mrf.mxu0
    %v1177 = vadd.f32 %v1004, %v1176
    %1178 = vdwg.mxu0
    %1179 = vmatpush.msra.mxu0 0.0
    %1180 = vmatpush.msra.mxu0 0.0
    %1181 = vmatpush.msra.mxu0 0.0
    %1182 = vmatpush.msra.mxu0 0.0
    %1183 = vmatpush.msra.mxu0 0.0
    %1184 = vmatpush.msra.mxu0 0.0
    %1185 = vmatpush.msra.mxu0 0.0
    %1186 = vmatpush.msra.mxu0 0.0
    %1187 = vmatpush.msra.mxu0 0.0
    %1188 = vmatpush.msra.mxu0 0.0
    %1189 = vmatpush.msra.mxu0 0.0
    %1190 = vmatpush.msra.mxu0 0.0
    %1191 = vmatpush.msra.mxu0 0.0
    %1192 = vmatpush.msra.mxu0 0.0
    %1193 = vmatpush.msra.mxu0 0.0
    %1194 = vmatpush.msra.mxu0 %v1052
    %1195 = vmatmul.f32.gmra.mxu0 %v1034
    %v1196 = vpop.f32.mrf.mxu0
    %v1197 = vadd.f32 %v1005, %v1196
    %1198 = vmatmul.f32.gmra.mxu0 %v1037
    %v1199 = vpop.f32.mrf.mxu0
    %v1200 = vadd.f32 %v1005, %v1199
    %1201 = vdwg.mxu0
    %1202 = vmatpush.msra.mxu0 0.0
    %1203 = vmatpush.msra.mxu0 0.0
    %1204 = vmatpush.msra.mxu0 0.0
    %1205 = vmatpush.msra.mxu0 0.0
    %1206 = vmatpush.msra.mxu0 0.0
    %1207 = vmatpush.msra.mxu0 0.0
    %1208 = vmatpush.msra.mxu0 0.0
    %1209 = vmatpush.msra.mxu0 0.0
    %1210 = vmatpush.msra.mxu0 0.0
    %1211 = vmatpush.msra.mxu0 0.0
    %1212 = vmatpush.msra.mxu0 0.0
    %1213 = vmatpush.msra.mxu0 0.0
    %1214 = vmatpush.msra.mxu0 0.0
    %1215 = vmatpush.msra.mxu0 0.0
    %1216 = vmatpush.msra.mxu0 0.0
    %1217 = vmatpush.msra.mxu0 %v1055
    %1218 = vmatmul.f32.gmra.mxu0 %v1034
    %v1219 = vpop.f32.mrf.mxu0
    %v1220 = vadd.f32 %v1006, %v1219
    %1221 = vmatmul.f32.gmra.mxu0 %v1037
    %v1222 = vpop.f32.mrf.mxu0
    %v1223 = vadd.f32 %v1006, %v1222
    %1224 = vdwg.mxu0
    %1225 = vmatpush.msra.mxu0 0.0
    %1226 = vmatpush.msra.mxu0 0.0
    %1227 = vmatpush.msra.mxu0 0.0
    %1228 = vmatpush.msra.mxu0 0.0
    %1229 = vmatpush.msra.mxu0 0.0
    %1230 = vmatpush.msra.mxu0 0.0
    %1231 = vmatpush.msra.mxu0 0.0
    %1232 = vmatpush.msra.mxu0 0.0
    %1233 = vmatpush.msra.mxu0 0.0
    %1234 = vmatpush.msra.mxu0 0.0
    %1235 = vmatpush.msra.mxu0 0.0
    %1236 = vmatpush.msra.mxu0 0.0
    %1237 = vmatpush.msra.mxu0 0.0
    %1238 = vmatpush.msra.mxu0 0.0
    %1239 = vmatpush.msra.mxu0 0.0
    %1240 = vmatpush.msra.mxu0 %v1058
    %1241 = vmatmul.f32.gmra.mxu0 %v1034
    %v1242 = vpop.f32.mrf.mxu0
    %v1243 = vadd.f32 %v1007, %v1242
    %1244 = vmatmul.f32.gmra.mxu0 %v1037
    %v1245 = vpop.f32.mrf.mxu0
    %v1246 = vadd.f32 %v1007, %v1245
    %1247 = vdwg.mxu0
    %1248 = vmatpush.msra.mxu0 0.0
    %1249 = vmatpush.msra.mxu0 0.0
    %1250 = vmatpush.msra.mxu0 0.0
    %1251 = vmatpush.msra.mxu0 0.0
    %1252 = vmatpush.msra.mxu0 0.0
    %1253 = vmatpush.msra.mxu0 0.0
    %1254 = vmatpush.msra.mxu0 0.0
    %1255 = vmatpush.msra.mxu0 0.0
    %1256 = vmatpush.msra.mxu0 0.0
    %1257 = vmatpush.msra.mxu0 0.0
    %1258 = vmatpush.msra.mxu0 0.0
    %1259 = vmatpush.msra.mxu0 0.0
    %1260 = vmatpush.msra.mxu0 0.0
    %1261 = vmatpush.msra.mxu0 0.0
    %1262 = vmatpush.msra.mxu0 0.0
    %1263 = vmatpush.msra.mxu0 %v1061
    %1264 = vmatmul.f32.gmra.mxu0 %v1034
    %v1265 = vpop.f32.mrf.mxu0
    %v1266 = vadd.f32 %v1008, %v1265
    %1267 = vmatmul.f32.gmra.mxu0 %v1037
    %v1268 = vpop.f32.mrf.mxu0
    %v1269 = vadd.f32 %v1008, %v1268
    %1270 = vdwg.mxu0
    %1271 = vmatpush.msra.mxu0 0.0
    %1272 = vmatpush.msra.mxu0 0.0
    %1273 = vmatpush.msra.mxu0 0.0
    %1274 = vmatpush.msra.mxu0 0.0
    %1275 = vmatpush.msra.mxu0 0.0
    %1276 = vmatpush.msra.mxu0 0.0
    %1277 = vmatpush.msra.mxu0 0.0
    %1278 = vmatpush.msra.mxu0 0.0
    %1279 = vmatpush.msra.mxu0 0.0
    %1280 = vmatpush.msra.mxu0 0.0
    %1281 = vmatpush.msra.mxu0 0.0
    %1282 = vmatpush.msra.mxu0 0.0
    %1283 = vmatpush.msra.mxu0 0.0
    %1284 = vmatpush.msra.mxu0 0.0
    %1285 = vmatpush.msra.mxu0 0.0
    %1286 = vmatpush.msra.mxu0 %v1064
    %1287 = vmatmul.f32.gmra.mxu0 %v1034
    %v1288 = vpop.f32.mrf.mxu0
    %v1289 = vadd.f32 %v1009, %v1288
    %1290 = vmatmul.f32.gmra.mxu0 %v1037
    %v1291 = vpop.f32.mrf.mxu0
    %v1292 = vadd.f32 %v1009, %v1291
    %1293 = vdwg.mxu0
    %1294 = vmatpush.msra.mxu0 0.0
    %1295 = vmatpush.msra.mxu0 0.0
    %1296 = vmatpush.msra.mxu0 0.0
    %1297 = vmatpush.msra.mxu0 0.0
    %1298 = vmatpush.msra.mxu0 0.0
    %1299 = vmatpush.msra.mxu0 0.0
    %1300 = vmatpush.msra.mxu0 0.0
    %1301 = vmatpush.msra.mxu0 0.0
    %1302 = vmatpush.msra.mxu0 0.0
    %1303 = vmatpush.msra.mxu0 0.0
    %1304 = vmatpush.msra.mxu0 0.0
    %1305 = vmatpush.msra.mxu0 0.0
    %1306 = vmatpush.msra.mxu0 0.0
    %1307 = vmatpush.msra.mxu0 0.0
    %1308 = vmatpush.msra.mxu0 0.0
    %1309 = vmatpush.msra.mxu0 %v1067
    %1310 = vmatmul.f32.gmra.mxu0 %v1034
    %v1311 = vpop.f32.mrf.mxu0
    %v1312 = vadd.f32 %v1010, %v1311
    %1313 = vmatmul.f32.gmra.mxu0 %v1037
    %v1314 = vpop.f32.mrf.mxu0
    %v1315 = vadd.f32 %v1010, %v1314
    %1316 = vdwg.mxu0
    %1317 = vmatpush.msra.mxu0 0.0
    %1318 = vmatpush.msra.mxu0 0.0
    %1319 = vmatpush.msra.mxu0 0.0
    %1320 = vmatpush.msra.mxu0 0.0
    %1321 = vmatpush.msra.mxu0 0.0
    %1322 = vmatpush.msra.mxu0 0.0
    %1323 = vmatpush.msra.mxu0 0.0
    %1324 = vmatpush.msra.mxu0 0.0
    %1325 = vmatpush.msra.mxu0 0.0
    %1326 = vmatpush.msra.mxu0 0.0
    %1327 = vmatpush.msra.mxu0 0.0
    %1328 = vmatpush.msra.mxu0 0.0
    %1329 = vmatpush.msra.mxu0 0.0
    %1330 = vmatpush.msra.mxu0 0.0
    %1331 = vmatpush.msra.mxu0 0.0
    %1332 = vmatpush.msra.mxu0 %v1070
    %1333 = vmatmul.f32.gmra.mxu0 %v1034
    %v1334 = vpop.f32.mrf.mxu0
    %v1335 = vadd.f32 %v1011, %v1334
    %1336 = vmatmul.f32.gmra.mxu0 %v1037
    %v1337 = vpop.f32.mrf.mxu0
    %v1338 = vadd.f32 %v1011, %v1337
    %1339 = vdwg.mxu0
    %1340 = vmatpush.msra.mxu0 0.0
    %1341 = vmatpush.msra.mxu0 0.0
    %1342 = vmatpush.msra.mxu0 0.0
    %1343 = vmatpush.msra.mxu0 0.0
    %1344 = vmatpush.msra.mxu0 0.0
    %1345 = vmatpush.msra.mxu0 0.0
    %1346 = vmatpush.msra.mxu0 0.0
    %1347 = vmatpush.msra.mxu0 0.0
    %1348 = vmatpush.msra.mxu0 0.0
    %1349 = vmatpush.msra.mxu0 0.0
    %1350 = vmatpush.msra.mxu0 0.0
    %1351 = vmatpush.msra.mxu0 0.0
    %1352 = vmatpush.msra.mxu0 0.0
    %1353 = vmatpush.msra.mxu0 0.0
    %1354 = vmatpush.msra.mxu0 0.0
    %1355 = vmatpush.msra.mxu0 %v1073
    %1356 = vmatmul.f32.gmra.mxu0 %v1034
    %v1357 = vpop.f32.mrf.mxu0
    %v1358 = vadd.f32 %v1012, %v1357
    %1359 = vmatmul.f32.gmra.mxu0 %v1037
    %v1360 = vpop.f32.mrf.mxu0
    %v1361 = vadd.f32 %v1012, %v1360
    %1362 = vdwg.mxu0
    %1363 = vmatpush.msra.mxu0 0.0
    %1364 = vmatpush.msra.mxu0 0.0
    %1365 = vmatpush.msra.mxu0 0.0
    %1366 = vmatpush.msra.mxu0 0.0
    %1367 = vmatpush.msra.mxu0 0.0
    %1368 = vmatpush.msra.mxu0 0.0
    %1369 = vmatpush.msra.mxu0 0.0
    %1370 = vmatpush.msra.mxu0 0.0
    %1371 = vmatpush.msra.mxu0 0.0
    %1372 = vmatpush.msra.mxu0 0.0
    %1373 = vmatpush.msra.mxu0 0.0
    %1374 = vmatpush.msra.mxu0 0.0
    %1375 = vmatpush.msra.mxu0 0.0
    %1376 = vmatpush.msra.mxu0 0.0
    %1377 = vmatpush.msra.mxu0 0.0
    %1378 = vmatpush.msra.mxu0 %v1076
    %1379 = vmatmul.f32.gmra.mxu0 %v1034
    %v1380 = vpop.f32.mrf.mxu0
    %v1381 = vadd.f32 %v1013, %v1380
    %1382 = vmatmul.f32.gmra.mxu0 %v1037
    %v1383 = vpop.f32.mrf.mxu0
    %v1384 = vadd.f32 %v1013, %v1383
    %1385 = vdwg.mxu0
    %1386 = vmatpush.msra.mxu0 0.0
    %1387 = vmatpush.msra.mxu0 0.0
    %1388 = vmatpush.msra.mxu0 0.0
    %1389 = vmatpush.msra.mxu0 0.0
    %1390 = vmatpush.msra.mxu0 0.0
    %1391 = vmatpush.msra.mxu0 0.0
    %1392 = vmatpush.msra.mxu0 0.0
    %1393 = vmatpush.msra.mxu0 0.0
    %1394 = vmatpush.msra.mxu0 0.0
    %1395 = vmatpush.msra.mxu0 0.0
    %1396 = vmatpush.msra.mxu0 0.0
    %1397 = vmatpush.msra.mxu0 0.0
    %1398 = vmatpush.msra.mxu0 0.0
    %1399 = vmatpush.msra.mxu0 0.0
    %1400 = vmatpush.msra.mxu0 0.0
    %1401 = vmatpush.msra.mxu0 %v1079
    %1402 = vmatmul.f32.gmra.mxu0 %v1034
    %v1403 = vpop.f32.mrf.mxu0
    %v1404 = vadd.f32 %v1014, %v1403
    %1405 = vmatmul.f32.gmra.mxu0 %v1037
    %v1406 = vpop.f32.mrf.mxu0
    %v1407 = vadd.f32 %v1014, %v1406
    %1408 = vdwg.mxu0
    %1409 = vmatpush.msra.mxu0 0.0
    %1410 = vmatpush.msra.mxu0 0.0
    %1411 = vmatpush.msra.mxu0 0.0
    %1412 = vmatpush.msra.mxu0 0.0
    %1413 = vmatpush.msra.mxu0 0.0
    %1414 = vmatpush.msra.mxu0 0.0
    %1415 = vmatpush.msra.mxu0 0.0
    %1416 = vmatpush.msra.mxu0 0.0
    %1417 = vmatpush.msra.mxu0 0.0
    %1418 = vmatpush.msra.mxu0 0.0
    %1419 = vmatpush.msra.mxu0 0.0
    %1420 = vmatpush.msra.mxu0 0.0
    %1421 = vmatpush.msra.mxu0 0.0
    %1422 = vmatpush.msra.mxu0 0.0
    %1423 = vmatpush.msra.mxu0 0.0
    %1424 = vmatpush.msra.mxu0 %v1082
    %1425 = vmatmul.f32.gmra.mxu0 %v1034
    %v1426 = vpop.f32.mrf.mxu0
    %v1427 = vadd.f32 %v1015, %v1426
    %1428 = vmatmul.f32.gmra.mxu0 %v1037
    %v1429 = vpop.f32.mrf.mxu0
    %v1430 = vadd.f32 %v1015, %v1429
    %1431 = vdwg.mxu0
    %1432 = vmatpush.msra.mxu0 0.0
    %1433 = vmatpush.msra.mxu0 0.0
    %1434 = vmatpush.msra.mxu0 0.0
    %1435 = vmatpush.msra.mxu0 0.0
    %1436 = vmatpush.msra.mxu0 0.0
    %1437 = vmatpush.msra.mxu0 0.0
    %1438 = vmatpush.msra.mxu0 0.0
    %1439 = vmatpush.msra.mxu0 0.0
    %1440 = vmatpush.msra.mxu0 0.0
    %1441 = vmatpush.msra.mxu0 0.0
    %1442 = vmatpush.msra.mxu0 0.0
    %1443 = vmatpush.msra.mxu0 0.0
    %1444 = vmatpush.msra.mxu0 0.0
    %1445 = vmatpush.msra.mxu0 0.0
    %1446 = vmatpush.msra.mxu0 0.0
    %1447 = vmatpush.msra.mxu0 %v1085
    %1448 = vmatmul.f32.gmra.mxu0 %v1034
    %v1449 = vpop.f32.mrf.mxu0
    %v1450 = vadd.f32 %v1016, %v1449
    %1451 = vmatmul.f32.gmra.mxu0 %v1037
    %v1452 = vpop.f32.mrf.mxu0
    %v1453 = vadd.f32 %v1016, %v1452
    %1454 = vdwg.mxu0
    %v1455 = vmax.f32 %v1105, 0.0
    %v1456 = vmax.f32 %v1128, 0.0
    %v1457 = vmax.f32 %v1151, 0.0
    %v1458 = vmax.f32 %v1174, 0.0
    %v1459 = vmax.f32 %v1197, 0.0
    %v1460 = vmax.f32 %v1220, 0.0
    %v1461 = vmax.f32 %v1243, 0.0
    %v1462 = vmax.f32 %v1266, 0.0
    %v1463 = vmax.f32 %v1289, 0.0
    %v1464 = vmax.f32 %v1312, 0.0
    %v1465 = vmax.f32 %v1335, 0.0
    %v1466 = vmax.f32 %v1358, 0.0
    %v1467 = vmax.f32 %v1381, 0.0
    %v1468 = vmax.f32 %v1404, 0.0
    %v1469 = vmax.f32 %v1427, 0.0
    %v1470 = vmax.f32 %v1450, 0.0
    %v1471 = vmax.f32 %v1108, 0.0
    %v1472 = vmax.f32 %v1131, 0.0
    %v1473 = vmax.f32 %v1154, 0.0
    %v1474 = vmax.f32 %v1177, 0.0
    %v1475 = vmax.f32 %v1200, 0.0
    %v1476 = vmax.f32 %v1223, 0.0
    %v1477 = vmax.f32 %v1246, 0.0
    %v1478 = vmax.f32 %v1269, 0.0
    %v1479 = vmax.f32 %v1292, 0.0
    %v1480 = vmax.f32 %v1315, 0.0
    %v1481 = vmax.f32 %v1338, 0.0
    %v1482 = vmax.f32 %v1361, 0.0
    %v1483 = vmax.f32 %v1384, 0.0
    %v1484 = vmax.f32 %v1407, 0.0
    %v1485 = vmax.f32 %v1430, 0.0
    %v1486 = vmax.f32 %v1453, 0.0
    %v1487 = vld [vmem:[#allocation10] sm:$0x3f]
    %v1488 = vld [vmem:[#allocation10 + $0x8] sm:$0x3f]
    %v1489 = vld [vmem:[#allocation10 + $0x10] sm:$0x3f]
    %v1490 = vld [vmem:[#allocation10 + $0x18] sm:$0x3f]
    %v1491 = vld [vmem:[#allocation10 + $0x20] sm:$0x3f]
    %v1492 = vld [vmem:[#allocation10 + $0x28] sm:$0x3f]
    %v1493 = vld [vmem:[#allocation10 + $0x30] sm:$0x3f]
    %v1494 = vld [vmem:[#allocation10 + $0x38] sm:$0x3f]
    %v1495 = vld [vmem:[#allocation10 + $0x40] sm:$0x3f]
    %v1496 = vld [vmem:[#allocation10 + $0x48] sm:$0x3f]
    %v1497 = vld [vmem:[#allocation10 + $0x50] sm:$0x3f]
    %v1498 = vld [vmem:[#allocation10 + $0x58] sm:$0x3f]
    %v1499 = vld [vmem:[#allocation10 + $0x60] sm:$0x3f]
    %v1500 = vld [vmem:[#allocation10 + $0x68] sm:$0x3f]
    %v1501 = vld [vmem:[#allocation10 + $0x70] sm:$0x3f]
    %v1502 = vld [vmem:[#allocation10 + $0x78] sm:$0x3f]
    %v1503 = vld [vmem:[%s12] sm:$0x1]
    %v1505 = vperm.slane %v1503, 0
    %1507 = vmatpush.xpose.msra.mxu0 0.0
    %1508 = vmatpush.xpose.msra.mxu0 0.0
    %1509 = vmatpush.xpose.msra.mxu0 0.0
    %1510 = vmatpush.xpose.msra.mxu0 0.0
    %1511 = vmatpush.xpose.msra.mxu0 0.0
    %1512 = vmatpush.xpose.msra.mxu0 0.0
    %1513 = vmatpush.xpose.msra.mxu0 0.0
    %1514 = vmatpush.xpose.msra.mxu0 0.0
    %1515 = vmatpush.xpose.msra.mxu0 0.0
    %1516 = vmatpush.xpose.msra.mxu0 0.0
    %1517 = vmatpush.xpose.msra.mxu0 0.0
    %1518 = vmatpush.xpose.msra.mxu0 0.0
    %1519 = vmatpush.xpose.msra.mxu0 0.0
    %1520 = vmatpush.xpose.msra.mxu0 0.0
    %1521 = vmatpush.xpose.msra.mxu0 0.0
    %1522 = vmatpush.xpose.msra.mxu0 %v1487
    %1523 = vmatmul.f32.gmra.mxu0 %v1455
    %v1524 = vpop.f32.mrf.mxu0
    %v1525 = vadd.f32 %v1505, %v1524
    %1526 = vmatmul.f32.gmra.mxu0 %v1471
    %v1527 = vpop.f32.mrf.mxu0
    %v1528 = vadd.f32 %v1505, %v1527
    %1529 = vdwg.mxu0
    %1530 = vmatpush.xpose.msra.mxu0 0.0
    %1531 = vmatpush.xpose.msra.mxu0 0.0
    %1532 = vmatpush.xpose.msra.mxu0 0.0
    %1533 = vmatpush.xpose.msra.mxu0 0.0
    %1534 = vmatpush.xpose.msra.mxu0 0.0
    %1535 = vmatpush.xpose.msra.mxu0 0.0
    %1536 = vmatpush.xpose.msra.mxu0 0.0
    %1537 = vmatpush.xpose.msra.mxu0 0.0
    %1538 = vmatpush.xpose.msra.mxu0 0.0
    %1539 = vmatpush.xpose.msra.mxu0 0.0
    %1540 = vmatpush.xpose.msra.mxu0 0.0
    %1541 = vmatpush.xpose.msra.mxu0 0.0
    %1542 = vmatpush.xpose.msra.mxu0 0.0
    %1543 = vmatpush.xpose.msra.mxu0 0.0
    %1544 = vmatpush.xpose.msra.mxu0 0.0
    %1545 = vmatpush.xpose.msra.mxu0 %v1488
    %1546 = vmatmul.f32.gmra.mxu0 %v1456
    %v1547 = vpop.f32.mrf.mxu0
    %v1548 = vadd.f32 %v1525, %v1547
    %1549 = vmatmul.f32.gmra.mxu0 %v1472
    %v1550 = vpop.f32.mrf.mxu0
    %v1551 = vadd.f32 %v1528, %v1550
    %1552 = vdwg.mxu0
    %1553 = vmatpush.xpose.msra.mxu0 0.0
    %1554 = vmatpush.xpose.msra.mxu0 0.0
    %1555 = vmatpush.xpose.msra.mxu0 0.0
    %1556 = vmatpush.xpose.msra.mxu0 0.0
    %1557 = vmatpush.xpose.msra.mxu0 0.0
    %1558 = vmatpush.xpose.msra.mxu0 0.0
    %1559 = vmatpush.xpose.msra.mxu0 0.0
    %1560 = vmatpush.xpose.msra.mxu0 0.0
    %1561 = vmatpush.xpose.msra.mxu0 0.0
    %1562 = vmatpush.xpose.msra.mxu0 0.0
    %1563 = vmatpush.xpose.msra.mxu0 0.0
    %1564 = vmatpush.xpose.msra.mxu0 0.0
    %1565 = vmatpush.xpose.msra.mxu0 0.0
    %1566 = vmatpush.xpose.msra.mxu0 0.0
    %1567 = vmatpush.xpose.msra.mxu0 0.0
    %1568 = vmatpush.xpose.msra.mxu0 %v1489
    %1569 = vmatmul.f32.gmra.mxu0 %v1457
    %v1570 = vpop.f32.mrf.mxu0
    %v1571 = vadd.f32 %v1548, %v1570
    %1572 = vmatmul.f32.gmra.mxu0 %v1473
    %v1573 = vpop.f32.mrf.mxu0
    %v1574 = vadd.f32 %v1551, %v1573
    %1575 = vdwg.mxu0
    %1576 = vmatpush.xpose.msra.mxu0 0.0
    %1577 = vmatpush.xpose.msra.mxu0 0.0
    %1578 = vmatpush.xpose.msra.mxu0 0.0
    %1579 = vmatpush.xpose.msra.mxu0 0.0
    %1580 = vmatpush.xpose.msra.mxu0 0.0
    %1581 = vmatpush.xpose.msra.mxu0 0.0
    %1582 = vmatpush.xpose.msra.mxu0 0.0
    %1583 = vmatpush.xpose.msra.mxu0 0.0
    %1584 = vmatpush.xpose.msra.mxu0 0.0
    %1585 = vmatpush.xpose.msra.mxu0 0.0
    %1586 = vmatpush.xpose.msra.mxu0 0.0
    %1587 = vmatpush.xpose.msra.mxu0 0.0
    %1588 = vmatpush.xpose.msra.mxu0 0.0
    %1589 = vmatpush.xpose.msra.mxu0 0.0
    %1590 = vmatpush.xpose.msra.mxu0 0.0
    %1591 = vmatpush.xpose.msra.mxu0 %v1490
    %1592 = vmatmul.f32.gmra.mxu0 %v1458
    %v1593 = vpop.f32.mrf.mxu0
    %v1594 = vadd.f32 %v1571, %v1593
    %1595 = vmatmul.f32.gmra.mxu0 %v1474
    %v1596 = vpop.f32.mrf.mxu0
    %v1597 = vadd.f32 %v1574, %v1596
    %1598 = vdwg.mxu0
    %1599 = vmatpush.xpose.msra.mxu0 0.0
    %1600 = vmatpush.xpose.msra.mxu0 0.0
    %1601 = vmatpush.xpose.msra.mxu0 0.0
    %1602 = vmatpush.xpose.msra.mxu0 0.0
    %1603 = vmatpush.xpose.msra.mxu0 0.0
    %1604 = vmatpush.xpose.msra.mxu0 0.0
    %1605 = vmatpush.xpose.msra.mxu0 0.0
    %1606 = vmatpush.xpose.msra.mxu0 0.0
    %1607 = vmatpush.xpose.msra.mxu0 0.0
    %1608 = vmatpush.xpose.msra.mxu0 0.0
    %1609 = vmatpush.xpose.msra.mxu0 0.0
    %1610 = vmatpush.xpose.msra.mxu0 0.0
    %1611 = vmatpush.xpose.msra.mxu0 0.0
    %1612 = vmatpush.xpose.msra.mxu0 0.0
    %1613 = vmatpush.xpose.msra.mxu0 0.0
    %1614 = vmatpush.xpose.msra.mxu0 %v1491
    %1615 = vmatmul.f32.gmra.mxu0 %v1459
    %v1616 = vpop.f32.mrf.mxu0
    %v1617 = vadd.f32 %v1594, %v1616
    %1618 = vmatmul.f32.gmra.mxu0 %v1475
    %v1619 = vpop.f32.mrf.mxu0
    %v1620 = vadd.f32 %v1597, %v1619
    %1621 = vdwg.mxu0
    %1622 = vmatpush.xpose.msra.mxu0 0.0
    %1623 = vmatpush.xpose.msra.mxu0 0.0
    %1624 = vmatpush.xpose.msra.mxu0 0.0
    %1625 = vmatpush.xpose.msra.mxu0 0.0
    %1626 = vmatpush.xpose.msra.mxu0 0.0
    %1627 = vmatpush.xpose.msra.mxu0 0.0
    %1628 = vmatpush.xpose.msra.mxu0 0.0
    %1629 = vmatpush.xpose.msra.mxu0 0.0
    %1630 = vmatpush.xpose.msra.mxu0 0.0
    %1631 = vmatpush.xpose.msra.mxu0 0.0
    %1632 = vmatpush.xpose.msra.mxu0 0.0
    %1633 = vmatpush.xpose.msra.mxu0 0.0
    %1634 = vmatpush.xpose.msra.mxu0 0.0
    %1635 = vmatpush.xpose.msra.mxu0 0.0
    %1636 = vmatpush.xpose.msra.mxu0 0.0
    %1637 = vmatpush.xpose.msra.mxu0 %v1492
    %1638 = vmatmul.f32.gmra.mxu0 %v1460
    %v1639 = vpop.f32.mrf.mxu0
    %v1640 = vadd.f32 %v1617, %v1639
    %1641 = vmatmul.f32.gmra.mxu0 %v1476
    %v1642 = vpop.f32.mrf.mxu0
    %v1643 = vadd.f32 %v1620, %v1642
    %1644 = vdwg.mxu0
    %1645 = vmatpush.xpose.msra.mxu0 0.0
    %1646 = vmatpush.xpose.msra.mxu0 0.0
    %1647 = vmatpush.xpose.msra.mxu0 0.0
    %1648 = vmatpush.xpose.msra.mxu0 0.0
    %1649 = vmatpush.xpose.msra.mxu0 0.0
    %1650 = vmatpush.xpose.msra.mxu0 0.0
    %1651 = vmatpush.xpose.msra.mxu0 0.0
    %1652 = vmatpush.xpose.msra.mxu0 0.0
    %1653 = vmatpush.xpose.msra.mxu0 0.0
    %1654 = vmatpush.xpose.msra.mxu0 0.0
    %1655 = vmatpush.xpose.msra.mxu0 0.0
    %1656 = vmatpush.xpose.msra.mxu0 0.0
    %1657 = vmatpush.xpose.msra.mxu0 0.0
    %1658 = vmatpush.xpose.msra.mxu0 0.0
    %1659 = vmatpush.xpose.msra.mxu0 0.0
    %1660 = vmatpush.xpose.msra.mxu0 %v1493
    %1661 = vmatmul.f32.gmra.mxu0 %v1461
    %v1662 = vpop.f32.mrf.mxu0
    %v1663 = vadd.f32 %v1640, %v1662
    %1664 = vmatmul.f32.gmra.mxu0 %v1477
    %v1665 = vpop.f32.mrf.mxu0
    %v1666 = vadd.f32 %v1643, %v1665
    %1667 = vdwg.mxu0
    %1668 = vmatpush.xpose.msra.mxu0 0.0
    %1669 = vmatpush.xpose.msra.mxu0 0.0
    %1670 = vmatpush.xpose.msra.mxu0 0.0
    %1671 = vmatpush.xpose.msra.mxu0 0.0
    %1672 = vmatpush.xpose.msra.mxu0 0.0
    %1673 = vmatpush.xpose.msra.mxu0 0.0
    %1674 = vmatpush.xpose.msra.mxu0 0.0
    %1675 = vmatpush.xpose.msra.mxu0 0.0
    %1676 = vmatpush.xpose.msra.mxu0 0.0
    %1677 = vmatpush.xpose.msra.mxu0 0.0
    %1678 = vmatpush.xpose.msra.mxu0 0.0
    %1679 = vmatpush.xpose.msra.mxu0 0.0
    %1680 = vmatpush.xpose.msra.mxu0 0.0
    %1681 = vmatpush.xpose.msra.mxu0 0.0
    %1682 = vmatpush.xpose.msra.mxu0 0.0
    %1683 = vmatpush.xpose.msra.mxu0 %v1494
    %1684 = vmatmul.f32.gmra.mxu0 %v1462
    %v1685 = vpop.f32.mrf.mxu0
    %v1686 = vadd.f32 %v1663, %v1685
    %1687 = vmatmul.f32.gmra.mxu0 %v1478
    %v1688 = vpop.f32.mrf.mxu0
    %v1689 = vadd.f32 %v1666, %v1688
    %1690 = vdwg.mxu0
    %1691 = vmatpush.xpose.msra.mxu0 0.0
    %1692 = vmatpush.xpose.msra.mxu0 0.0
    %1693 = vmatpush.xpose.msra.mxu0 0.0
    %1694 = vmatpush.xpose.msra.mxu0 0.0
    %1695 = vmatpush.xpose.msra.mxu0 0.0
    %1696 = vmatpush.xpose.msra.mxu0 0.0
    %1697 = vmatpush.xpose.msra.mxu0 0.0
    %1698 = vmatpush.xpose.msra.mxu0 0.0
    %1699 = vmatpush.xpose.msra.mxu0 0.0
    %1700 = vmatpush.xpose.msra.mxu0 0.0
    %1701 = vmatpush.xpose.msra.mxu0 0.0
    %1702 = vmatpush.xpose.msra.mxu0 0.0
    %1703 = vmatpush.xpose.msra.mxu0 0.0
    %1704 = vmatpush.xpose.msra.mxu0 0.0
    %1705 = vmatpush.xpose.msra.mxu0 0.0
    %1706 = vmatpush.xpose.msra.mxu0 %v1495
    %1707 = vmatmul.f32.gmra.mxu0 %v1463
    %v1708 = vpop.f32.mrf.mxu0
    %v1709 = vadd.f32 %v1686, %v1708
    %1710 = vmatmul.f32.gmra.mxu0 %v1479
    %v1711 = vpop.f32.mrf.mxu0
    %v1712 = vadd.f32 %v1689, %v1711
    %1713 = vdwg.mxu0
    %1714 = vmatpush.xpose.msra.mxu0 0.0
    %1715 = vmatpush.xpose.msra.mxu0 0.0
    %1716 = vmatpush.xpose.msra.mxu0 0.0
    %1717 = vmatpush.xpose.msra.mxu0 0.0
    %1718 = vmatpush.xpose.msra.mxu0 0.0
    %1719 = vmatpush.xpose.msra.mxu0 0.0
    %1720 = vmatpush.xpose.msra.mxu0 0.0
    %1721 = vmatpush.xpose.msra.mxu0 0.0
    %1722 = vmatpush.xpose.msra.mxu0 0.0
    %1723 = vmatpush.xpose.msra.mxu0 0.0
    %1724 = vmatpush.xpose.msra.mxu0 0.0
    %1725 = vmatpush.xpose.msra.mxu0 0.0
    %1726 = vmatpush.xpose.msra.mxu0 0.0
    %1727 = vmatpush.xpose.msra.mxu0 0.0
    %1728 = vmatpush.xpose.msra.mxu0 0.0
    %1729 = vmatpush.xpose.msra.mxu0 %v1496
    %1730 = vmatmul.f32.gmra.mxu0 %v1464
    %v1731 = vpop.f32.mrf.mxu0
    %v1732 = vadd.f32 %v1709, %v1731
    %1733 = vmatmul.f32.gmra.mxu0 %v1480
    %v1734 = vpop.f32.mrf.mxu0
    %v1735 = vadd.f32 %v1712, %v1734
    %1736 = vdwg.mxu0
    %1737 = vmatpush.xpose.msra.mxu0 0.0
    %1738 = vmatpush.xpose.msra.mxu0 0.0
    %1739 = vmatpush.xpose.msra.mxu0 0.0
    %1740 = vmatpush.xpose.msra.mxu0 0.0
    %1741 = vmatpush.xpose.msra.mxu0 0.0
    %1742 = vmatpush.xpose.msra.mxu0 0.0
    %1743 = vmatpush.xpose.msra.mxu0 0.0
    %1744 = vmatpush.xpose.msra.mxu0 0.0
    %1745 = vmatpush.xpose.msra.mxu0 0.0
    %1746 = vmatpush.xpose.msra.mxu0 0.0
    %1747 = vmatpush.xpose.msra.mxu0 0.0
    %1748 = vmatpush.xpose.msra.mxu0 0.0
    %1749 = vmatpush.xpose.msra.mxu0 0.0
    %1750 = vmatpush.xpose.msra.mxu0 0.0
    %1751 = vmatpush.xpose.msra.mxu0 0.0
    %1752 = vmatpush.xpose.msra.mxu0 %v1497
    %1753 = vmatmul.f32.gmra.mxu0 %v1465
    %v1754 = vpop.f32.mrf.mxu0
    %v1755 = vadd.f32 %v1732, %v1754
    %1756 = vmatmul.f32.gmra.mxu0 %v1481
    %v1757 = vpop.f32.mrf.mxu0
    %v1758 = vadd.f32 %v1735, %v1757
    %1759 = vdwg.mxu0
    %1760 = vmatpush.xpose.msra.mxu0 0.0
    %1761 = vmatpush.xpose.msra.mxu0 0.0
    %1762 = vmatpush.xpose.msra.mxu0 0.0
    %1763 = vmatpush.xpose.msra.mxu0 0.0
    %1764 = vmatpush.xpose.msra.mxu0 0.0
    %1765 = vmatpush.xpose.msra.mxu0 0.0
    %1766 = vmatpush.xpose.msra.mxu0 0.0
    %1767 = vmatpush.xpose.msra.mxu0 0.0
    %1768 = vmatpush.xpose.msra.mxu0 0.0
    %1769 = vmatpush.xpose.msra.mxu0 0.0
    %1770 = vmatpush.xpose.msra.mxu0 0.0
    %1771 = vmatpush.xpose.msra.mxu0 0.0
    %1772 = vmatpush.xpose.msra.mxu0 0.0
    %1773 = vmatpush.xpose.msra.mxu0 0.0
    %1774 = vmatpush.xpose.msra.mxu0 0.0
    %1775 = vmatpush.xpose.msra.mxu0 %v1498
    %1776 = vmatmul.f32.gmra.mxu0 %v1466
    %v1777 = vpop.f32.mrf.mxu0
    %v1778 = vadd.f32 %v1755, %v1777
    %1779 = vmatmul.f32.gmra.mxu0 %v1482
    %v1780 = vpop.f32.mrf.mxu0
    %v1781 = vadd.f32 %v1758, %v1780
    %1782 = vdwg.mxu0
    %1783 = vmatpush.xpose.msra.mxu0 0.0
    %1784 = vmatpush.xpose.msra.mxu0 0.0
    %1785 = vmatpush.xpose.msra.mxu0 0.0
    %1786 = vmatpush.xpose.msra.mxu0 0.0
    %1787 = vmatpush.xpose.msra.mxu0 0.0
    %1788 = vmatpush.xpose.msra.mxu0 0.0
    %1789 = vmatpush.xpose.msra.mxu0 0.0
    %1790 = vmatpush.xpose.msra.mxu0 0.0
    %1791 = vmatpush.xpose.msra.mxu0 0.0
    %1792 = vmatpush.xpose.msra.mxu0 0.0
    %1793 = vmatpush.xpose.msra.mxu0 0.0
    %1794 = vmatpush.xpose.msra.mxu0 0.0
    %1795 = vmatpush.xpose.msra.mxu0 0.0
    %1796 = vmatpush.xpose.msra.mxu0 0.0
    %1797 = vmatpush.xpose.msra.mxu0 0.0
    %1798 = vmatpush.xpose.msra.mxu0 %v1499
    %1799 = vmatmul.f32.gmra.mxu0 %v1467
    %v1800 = vpop.f32.mrf.mxu0
    %v1801 = vadd.f32 %v1778, %v1800
    %1802 = vmatmul.f32.gmra.mxu0 %v1483
    %v1803 = vpop.f32.mrf.mxu0
    %v1804 = vadd.f32 %v1781, %v1803
    %1805 = vdwg.mxu0
    %1806 = vmatpush.xpose.msra.mxu0 0.0
    %1807 = vmatpush.xpose.msra.mxu0 0.0
    %1808 = vmatpush.xpose.msra.mxu0 0.0
    %1809 = vmatpush.xpose.msra.mxu0 0.0
    %1810 = vmatpush.xpose.msra.mxu0 0.0
    %1811 = vmatpush.xpose.msra.mxu0 0.0
    %1812 = vmatpush.xpose.msra.mxu0 0.0
    %1813 = vmatpush.xpose.msra.mxu0 0.0
    %1814 = vmatpush.xpose.msra.mxu0 0.0
    %1815 = vmatpush.xpose.msra.mxu0 0.0
    %1816 = vmatpush.xpose.msra.mxu0 0.0
    %1817 = vmatpush.xpose.msra.mxu0 0.0
    %1818 = vmatpush.xpose.msra.mxu0 0.0
    %1819 = vmatpush.xpose.msra.mxu0 0.0
    %1820 = vmatpush.xpose.msra.mxu0 0.0
    %1821 = vmatpush.xpose.msra.mxu0 %v1500
    %1822 = vmatmul.f32.gmra.mxu0 %v1468
    %v1823 = vpop.f32.mrf.mxu0
    %v1824 = vadd.f32 %v1801, %v1823
    %1825 = vmatmul.f32.gmra.mxu0 %v1484
    %v1826 = vpop.f32.mrf.mxu0
    %v1827 = vadd.f32 %v1804, %v1826
    %1828 = vdwg.mxu0
    %1829 = vmatpush.xpose.msra.mxu0 0.0
    %1830 = vmatpush.xpose.msra.mxu0 0.0
    %1831 = vmatpush.xpose.msra.mxu0 0.0
    %1832 = vmatpush.xpose.msra.mxu0 0.0
    %1833 = vmatpush.xpose.msra.mxu0 0.0
    %1834 = vmatpush.xpose.msra.mxu0 0.0
    %1835 = vmatpush.xpose.msra.mxu0 0.0
    %1836 = vmatpush.xpose.msra.mxu0 0.0
    %1837 = vmatpush.xpose.msra.mxu0 0.0
    %1838 = vmatpush.xpose.msra.mxu0 0.0
    %1839 = vmatpush.xpose.msra.mxu0 0.0
    %1840 = vmatpush.xpose.msra.mxu0 0.0
    %1841 = vmatpush.xpose.msra.mxu0 0.0
    %1842 = vmatpush.xpose.msra.mxu0 0.0
    %1843 = vmatpush.xpose.msra.mxu0 0.0
    %1844 = vmatpush.xpose.msra.mxu0 %v1501
    %1845 = vmatmul.f32.gmra.mxu0 %v1469
    %v1846 = vpop.f32.mrf.mxu0
    %v1847 = vadd.f32 %v1824, %v1846
    %1848 = vmatmul.f32.gmra.mxu0 %v1485
    %v1849 = vpop.f32.mrf.mxu0
    %v1850 = vadd.f32 %v1827, %v1849
    %1851 = vdwg.mxu0
    %1852 = vmatpush.xpose.msra.mxu0 0.0
    %1853 = vmatpush.xpose.msra.mxu0 0.0
    %1854 = vmatpush.xpose.msra.mxu0 0.0
    %1855 = vmatpush.xpose.msra.mxu0 0.0
    %1856 = vmatpush.xpose.msra.mxu0 0.0
    %1857 = vmatpush.xpose.msra.mxu0 0.0
    %1858 = vmatpush.xpose.msra.mxu0 0.0
    %1859 = vmatpush.xpose.msra.mxu0 0.0
    %1860 = vmatpush.xpose.msra.mxu0 0.0
    %1861 = vmatpush.xpose.msra.mxu0 0.0
    %1862 = vmatpush.xpose.msra.mxu0 0.0
    %1863 = vmatpush.xpose.msra.mxu0 0.0
    %1864 = vmatpush.xpose.msra.mxu0 0.0
    %1865 = vmatpush.xpose.msra.mxu0 0.0
    %1866 = vmatpush.xpose.msra.mxu0 0.0
    %1867 = vmatpush.xpose.msra.mxu0 %v1502
    %1868 = vmatmul.f32.gmra.mxu0 %v1470
    %v1869 = vpop.f32.mrf.mxu0
    %v1870 = vadd.f32 %v1847, %v1869
    %1871 = vmatmul.f32.gmra.mxu0 %v1486
    %v1872 = vpop.f32.mrf.mxu0
    %v1873 = vadd.f32 %v1850, %v1872
    %1874 = vdwg.mxu0
    %v1875 = vadd.f32 %v979, %v1870
    %v1876 = vadd.f32 %v980, %v1873
    %v1877 = vld [vmem:[%s7] sm:$0x1]
    %v1878 = vld [vmem:[%s8] sm:$0x1]
    %v1879 = vsel %vm183, %v1875, 0.0
    %1880 = vadd.xlane.f32.xlu0 %v1879
    %v1881 = vpop.xlane.xlu0 %1880
    %v1882 = vsel %vm183, %v1876, 0.0
    %1883 = vadd.xlane.f32.xlu0 %v1882
    %v1884 = vpop.xlane.xlu0 %1883
    %v1885 = vmul.f32 %v1881, %v932
    %v1886 = vmul.f32 %v1884, %v932
    %v1887 = vsub.f32 %v1875, %v1885
    %v1888 = vsub.f32 %v1876, %v1886
    %v1889 = vmul.f32 %v1887, %v1887
    %v1890 = vmul.f32 %v1888, %v1888
    %v1891 = vsel %vm183, %v1889, 0.0
    %1892 = vadd.xlane.f32.xlu0 %v1891
    %v1893 = vpop.xlane.xlu0 %1892
    %v1894 = vsel %vm183, %v1890, 0.0
    %1895 = vadd.xlane.f32.xlu0 %v1894
    %v1896 = vpop.xlane.xlu0 %1895
    %v1897 = vmul.f32 %v1893, %v932
    %v1898 = vmul.f32 %v1896, %v932
    %v1899 = vadd.f32 %v1897, 1e-05
    %v1900 = vadd.f32 %v1898, 1e-05
    %v1901 = vrsqrt.pop %v1899
    %v1902 = vmul.f32 %v1901, %v1899
    %v1903 = vmul.f32 %v1902, %v1901
    %v1904 = vmul.f32 0.5, %v1903
    %v1905 = vsub.f32 1.5, %v1904
    %v1906 = vmul.f32 %v1901, %v1905
    %vm1907 = vweird.f32 %v1899
    %vm1908 = vweird.f32 %v1901
    %vm1909 = vmor %vm1907, %vm1908
    %v1910 = vsel %vm1909, %v1901, %v1906
    %v1911 = vrsqrt.pop %v1900
    %v1912 = vmul.f32 %v1911, %v1900
    %v1913 = vmul.f32 %v1912, %v1911
    %v1914 = vmul.f32 0.5, %v1913
    %v1915 = vsub.f32 1.5, %v1914
    %v1916 = vmul.f32 %v1911, %v1915
    %vm1917 = vweird.f32 %v1900
    %vm1918 = vweird.f32 %v1911
    %vm1919 = vmor %vm1917, %vm1918
    %v1920 = vsel %vm1919, %v1911, %v1916
    %v1921 = vmul.f32 %v1887, %v1910
    %v1922 = vmul.f32 %v1888, %v1920
    %v1924 = vperm.slane %v1877, 0
    %v1926 = vmul.f32 %v1921, %v1924
    %v1927 = vmul.f32 %v1922, %v1924
    %v1929 = vperm.slane %v1878, 0
    %v1931 = vadd.f32 %v1926, %v1929
    %v1932 = vadd.f32 %v1927, %v1929
    %s1933 = scalar_lea.vmem [#allocation2], 72
    %v1934 = vld [vmem:[%s1933] sm:$0x3f]
    %v1935 = vld [vmem:[%s1933 + $0x8] sm:$0x3f]
    %v1936 = vld [vmem:[%s1933 + $0x10] sm:$0x3f]
    %v1937 = vld [vmem:[%s1933 + $0x18] sm:$0x3f]
    %v1938 = vld [vmem:[%s1933 + $0x20] sm:$0x3f]
    %v1939 = vld [vmem:[%s1933 + $0x28] sm:$0x3f]
    %v1940 = vld [vmem:[%s1933 + $0x30] sm:$0x3f]
    %v1941 = vld [vmem:[%s1933 + $0x38] sm:$0x3f]
    %v1942 = vld [vmem:[%s1933 + $0x40] sm:$0x3f]
    %s1943 = scalar_lea.vmem [#allocation4], 9
    %v1944 = vld [vmem:[%s1943] sm:$0xff]
    %v1945 = vld [vmem:[%s1943 + $0x8] sm:$0x1]
    %v1948 = vperm.slane %v1944, 0
    %v1949 = vperm.slane %v1944, 1
    %v1950 = vperm.slane %v1944, 2
    %v1951 = vperm.slane %v1944, 3
    %v1952 = vperm.slane %v1944, 4
    %v1953 = vperm.slane %v1944, 5
    %v1954 = vperm.slane %v1944, 6
    %v1955 = vperm.slane %v1944, 7
    %v1956 = vperm.slane %v1945, 0
    %v1967 = vsel %vm183, %v1931, 0
    %v1970 = vsel %vm183, %v1932, 0
    %v1973 = vsel %vm190, %v1934, 0
    %v1976 = vsel %vm190, %v1935, 0
    %v1979 = vsel %vm190, %v1936, 0
    %v1982 = vsel %vm190, %v1937, 0
    %v1985 = vsel %vm190, %v1938, 0
    %v1988 = vsel %vm190, %v1939, 0
    %v1991 = vsel %vm190, %v1940, 0
    %v1994 = vsel %vm190, %v1941, 0
    %v1997 = vsel %vm190, %v1942, 0
    %1999 = vmatpush.msra.mxu0 0.0
    %2000 = vmatpush.msra.mxu0 0.0
    %2001 = vmatpush.msra.mxu0 0.0
    %2002 = vmatpush.msra.mxu0 0.0
    %2003 = vmatpush.msra.mxu0 0.0
    %2004 = vmatpush.msra.mxu0 0.0
    %2005 = vmatpush.msra.mxu0 0.0
    %2006 = vmatpush.msra.mxu0 0.0
    %2007 = vmatpush.msra.mxu0 0.0
    %2008 = vmatpush.msra.mxu0 0.0
    %2009 = vmatpush.msra.mxu0 0.0
    %2010 = vmatpush.msra.mxu0 0.0
    %2011 = vmatpush.msra.mxu0 0.0
    %2012 = vmatpush.msra.mxu0 0.0
    %2013 = vmatpush.msra.mxu0 0.0
    %2014 = vmatpush.msra.mxu0 %v1973
    %2015 = vmatmul.f32.gmra.mxu0 %v1967
    %v2016 = vpop.f32.mrf.mxu0
    %v2017 = vadd.f32 %v1948, %v2016
    %2018 = vmatmul.f32.gmra.mxu0 %v1970
    %v2019 = vpop.f32.mrf.mxu0
    %v2020 = vadd.f32 %v1948, %v2019
    %2021 = vdwg.mxu0
    %2022 = vmatpush.msra.mxu0 0.0
    %2023 = vmatpush.msra.mxu0 0.0
    %2024 = vmatpush.msra.mxu0 0.0
    %2025 = vmatpush.msra.mxu0 0.0
    %2026 = vmatpush.msra.mxu0 0.0
    %2027 = vmatpush.msra.mxu0 0.0
    %2028 = vmatpush.msra.mxu0 0.0
    %2029 = vmatpush.msra.mxu0 0.0
    %2030 = vmatpush.msra.mxu0 0.0
    %2031 = vmatpush.msra.mxu0 0.0
    %2032 = vmatpush.msra.mxu0 0.0
    %2033 = vmatpush.msra.mxu0 0.0
    %2034 = vmatpush.msra.mxu0 0.0
    %2035 = vmatpush.msra.mxu0 0.0
    %2036 = vmatpush.msra.mxu0 0.0
    %2037 = vmatpush.msra.mxu0 %v1976
    %2038 = vmatmul.f32.gmra.mxu0 %v1967
    %v2039 = vpop.f32.mrf.mxu0
    %v2040 = vadd.f32 %v1949, %v2039
    %2041 = vmatmul.f32.gmra.mxu0 %v1970
    %v2042 = vpop.f32.mrf.mxu0
    %v2043 = vadd.f32 %v1949, %v2042
    %2044 = vdwg.mxu0
    %2045 = vmatpush.msra.mxu0 0.0
    %2046 = vmatpush.msra.mxu0 0.0
    %2047 = vmatpush.msra.mxu0 0.0
    %2048 = vmatpush.msra.mxu0 0.0
    %2049 = vmatpush.msra.mxu0 0.0
    %2050 = vmatpush.msra.mxu0 0.0
    %2051 = vmatpush.msra.mxu0 0.0
    %2052 = vmatpush.msra.mxu0 0.0
    %2053 = vmatpush.msra.mxu0 0.0
    %2054 = vmatpush.msra.mxu0 0.0
    %2055 = vmatpush.msra.mxu0 0.0
    %2056 = vmatpush.msra.mxu0 0.0
    %2057 = vmatpush.msra.mxu0 0.0
    %2058 = vmatpush.msra.mxu0 0.0
    %2059 = vmatpush.msra.mxu0 0.0
    %2060 = vmatpush.msra.mxu0 %v1979
    %2061 = vmatmul.f32.gmra.mxu0 %v1967
    %v2062 = vpop.f32.mrf.mxu0
    %v2063 = vadd.f32 %v1950, %v2062
    %2064 = vmatmul.f32.gmra.mxu0 %v1970
    %v2065 = vpop.f32.mrf.mxu0
    %v2066 = vadd.f32 %v1950, %v2065
    %2067 = vdwg.mxu0
    %2068 = vmatpush.msra.mxu0 0.0
    %2069 = vmatpush.msra.mxu0 0.0
    %2070 = vmatpush.msra.mxu0 0.0
    %2071 = vmatpush.msra.mxu0 0.0
    %2072 = vmatpush.msra.mxu0 0.0
    %2073 = vmatpush.msra.mxu0 0.0
    %2074 = vmatpush.msra.mxu0 0.0
    %2075 = vmatpush.msra.mxu0 0.0
    %2076 = vmatpush.msra.mxu0 0.0
    %2077 = vmatpush.msra.mxu0 0.0
    %2078 = vmatpush.msra.mxu0 0.0
    %2079 = vmatpush.msra.mxu0 0.0
    %2080 = vmatpush.msra.mxu0 0.0
    %2081 = vmatpush.msra.mxu0 0.0
    %2082 = vmatpush.msra.mxu0 0.0
    %2083 = vmatpush.msra.mxu0 %v1982
    %2084 = vmatmul.f32.gmra.mxu0 %v1967
    %v2085 = vpop.f32.mrf.mxu0
    %v2086 = vadd.f32 %v1951, %v2085
    %2087 = vmatmul.f32.gmra.mxu0 %v1970
    %v2088 = vpop.f32.mrf.mxu0
    %v2089 = vadd.f32 %v1951, %v2088
    %2090 = vdwg.mxu0
    %2091 = vmatpush.msra.mxu0 0.0
    %2092 = vmatpush.msra.mxu0 0.0
    %2093 = vmatpush.msra.mxu0 0.0
    %2094 = vmatpush.msra.mxu0 0.0
    %2095 = vmatpush.msra.mxu0 0.0
    %2096 = vmatpush.msra.mxu0 0.0
    %2097 = vmatpush.msra.mxu0 0.0
    %2098 = vmatpush.msra.mxu0 0.0
    %2099 = vmatpush.msra.mxu0 0.0
    %2100 = vmatpush.msra.mxu0 0.0
    %2101 = vmatpush.msra.mxu0 0.0
    %2102 = vmatpush.msra.mxu0 0.0
    %2103 = vmatpush.msra.mxu0 0.0
    %2104 = vmatpush.msra.mxu0 0.0
    %2105 = vmatpush.msra.mxu0 0.0
    %2106 = vmatpush.msra.mxu0 %v1985
    %2107 = vmatmul.f32.gmra.mxu0 %v1967
    %v2108 = vpop.f32.mrf.mxu0
    %v2109 = vadd.f32 %v1952, %v2108
    %2110 = vmatmul.f32.gmra.mxu0 %v1970
    %v2111 = vpop.f32.mrf.mxu0
    %v2112 = vadd.f32 %v1952, %v2111
    %2113 = vdwg.mxu0
    %2114 = vmatpush.msra.mxu0 0.0
    %2115 = vmatpush.msra.mxu0 0.0
    %2116 = vmatpush.msra.mxu0 0.0
    %2117 = vmatpush.msra.mxu0 0.0
    %2118 = vmatpush.msra.mxu0 0.0
    %2119 = vmatpush.msra.mxu0 0.0
    %2120 = vmatpush.msra.mxu0 0.0
    %2121 = vmatpush.msra.mxu0 0.0
    %2122 = vmatpush.msra.mxu0 0.0
    %2123 = vmatpush.msra.mxu0 0.0
    %2124 = vmatpush.msra.mxu0 0.0
    %2125 = vmatpush.msra.mxu0 0.0
    %2126 = vmatpush.msra.mxu0 0.0
    %2127 = vmatpush.msra.mxu0 0.0
    %2128 = vmatpush.msra.mxu0 0.0
    %2129 = vmatpush.msra.mxu0 %v1988
    %2130 = vmatmul.f32.gmra.mxu0 %v1967
    %v2131 = vpop.f32.mrf.mxu0
    %v2132 = vadd.f32 %v1953, %v2131
    %2133 = vmatmul.f32.gmra.mxu0 %v1970
    %v2134 = vpop.f32.mrf.mxu0
    %v2135 = vadd.f32 %v1953, %v2134
    %2136 = vdwg.mxu0
    %2137 = vmatpush.msra.mxu0 0.0
    %2138 = vmatpush.msra.mxu0 0.0
    %2139 = vmatpush.msra.mxu0 0.0
    %2140 = vmatpush.msra.mxu0 0.0
    %2141 = vmatpush.msra.mxu0 0.0
    %2142 = vmatpush.msra.mxu0 0.0
    %2143 = vmatpush.msra.mxu0 0.0
    %2144 = vmatpush.msra.mxu0 0.0
    %2145 = vmatpush.msra.mxu0 0.0
    %2146 = vmatpush.msra.mxu0 0.0
    %2147 = vmatpush.msra.mxu0 0.0
    %2148 = vmatpush.msra.mxu0 0.0
    %2149 = vmatpush.msra.mxu0 0.0
    %2150 = vmatpush.msra.mxu0 0.0
    %2151 = vmatpush.msra.mxu0 0.0
    %2152 = vmatpush.msra.mxu0 %v1991
    %2153 = vmatmul.f32.gmra.mxu0 %v1967
    %v2154 = vpop.f32.mrf.mxu0
    %v2155 = vadd.f32 %v1954, %v2154
    %2156 = vmatmul.f32.gmra.mxu0 %v1970
    %v2157 = vpop.f32.mrf.mxu0
    %v2158 = vadd.f32 %v1954, %v2157
    %2159 = vdwg.mxu0
    %2160 = vmatpush.msra.mxu0 0.0
    %2161 = vmatpush.msra.mxu0 0.0
    %2162 = vmatpush.msra.mxu0 0.0
    %2163 = vmatpush.msra.mxu0 0.0
    %2164 = vmatpush.msra.mxu0 0.0
    %2165 = vmatpush.msra.mxu0 0.0
    %2166 = vmatpush.msra.mxu0 0.0
    %2167 = vmatpush.msra.mxu0 0.0
    %2168 = vmatpush.msra.mxu0 0.0
    %2169 = vmatpush.msra.mxu0 0.0
    %2170 = vmatpush.msra.mxu0 0.0
    %2171 = vmatpush.msra.mxu0 0.0
    %2172 = vmatpush.msra.mxu0 0.0
    %2173 = vmatpush.msra.mxu0 0.0
    %2174 = vmatpush.msra.mxu0 0.0
    %2175 = vmatpush.msra.mxu0 %v1994
    %2176 = vmatmul.f32.gmra.mxu0 %v1967
    %v2177 = vpop.f32.mrf.mxu0
    %v2178 = vadd.f32 %v1955, %v2177
    %2179 = vmatmul.f32.gmra.mxu0 %v1970
    %v2180 = vpop.f32.mrf.mxu0
    %v2181 = vadd.f32 %v1955, %v2180
    %2182 = vdwg.mxu0
    %2183 = vmatpush.msra.mxu0 0.0
    %2184 = vmatpush.msra.mxu0 0.0
    %2185 = vmatpush.msra.mxu0 0.0
    %2186 = vmatpush.msra.mxu0 0.0
    %2187 = vmatpush.msra.mxu0 0.0
    %2188 = vmatpush.msra.mxu0 0.0
    %2189 = vmatpush.msra.mxu0 0.0
    %2190 = vmatpush.msra.mxu0 0.0
    %2191 = vmatpush.msra.mxu0 0.0
    %2192 = vmatpush.msra.mxu0 0.0
    %2193 = vmatpush.msra.mxu0 0.0
    %2194 = vmatpush.msra.mxu0 0.0
    %2195 = vmatpush.msra.mxu0 0.0
    %2196 = vmatpush.msra.mxu0 0.0
    %2197 = vmatpush.msra.mxu0 0.0
    %2198 = vmatpush.msra.mxu0 %v1997
    %2199 = vmatmul.f32.gmra.mxu0 %v1967
    %v2200 = vpop.f32.mrf.mxu0
    %v2201 = vadd.f32 %v1956, %v2200
    %2202 = vmatmul.f32.gmra.mxu0 %v1970
    %v2203 = vpop.f32.mrf.mxu0
    %v2204 = vadd.f32 %v1956, %v2203
    %2205 = vdwg.mxu0
    %2206 = vmatpush.xpose.msra.mxu0 0.0
    %2207 = vmatpush.xpose.msra.mxu0 0.0
    %2208 = vmatpush.xpose.msra.mxu0 0.0
    %2209 = vmatpush.xpose.msra.mxu0 0.0
    %2210 = vmatpush.xpose.msra.mxu0 0.0
    %2211 = vmatpush.xpose.msra.mxu0 0.0
    %2212 = vmatpush.xpose.msra.mxu0 0.0
    %2213 = vmatpush.xpose.msra.mxu0 0.0
    %2214 = vmatpush.xpose.msra.mxu0 0.0
    %2215 = vmatpush.xpose.msra.mxu0 0.0
    %2216 = vmatpush.xpose.msra.mxu0 0.0
    %2217 = vmatpush.xpose.msra.mxu0 0.0
    %2218 = vmatpush.xpose.msra.mxu0 0.0
    %2219 = vmatpush.xpose.msra.mxu0 0.0
    %2220 = vmatpush.xpose.msra.mxu0 0.0
    %2221 = vmatpush.xpose.msra.mxu0 %v2086
    %2222 = vmatmul.f32.gmra.mxu0 %v2017
    %v2223 = vpop.f32.mrf.mxu0
    %v2224 = vadd.f32 0.0, %v2223
    %2225 = vdwg.mxu0
    %v2226 = vmul.f32 %v2224, 0.70710677
    %v2227 = vadd.f32 %v2226, %v151
    %v2228 = vsel %vm447, %v2227, -inf
    %2229 = vmax.xlane.f32.xlu0 %v2228
    %v2230 = vpop.xlane.xlu0 %2229
    %v2231 = vsub.f32 %v2227, %v2230
    %v2232 = vmul.f32 %v2231, 1.442695
    %v2233 = vpow.pop %v2232
    %v2234 = vsel %vm447, %v2233, 0.0
    %2235 = vadd.xlane.f32.xlu0 %v2234
    %v2236 = vpop.xlane.xlu0 %2235
    %v2237 = vrcp.pop %v2236
    %v2238 = vmul.f32 %v2236, %v2237
    %v2239 = vsub.f32 1.0, %v2238
    %v2240 = vmul.f32 %v2237, %v2239
    %v2241 = vadd.f32 %v2237, %v2240
    %vm2242 = vweird.f32 %v2236
    %vm2243 = vweird.f32 %v2237
    %vm2244 = vmor %vm2242, %vm2243
    %v2245 = vsel %vm2244, %v2237, %v2241
    %v2246 = vand.u32 2147483647, %v2236
    %vm2247 = vcmp.eq.f32.partialorder %v2246, 8.507059e+37
    %v2248 = vand.u32 %v2236, 2147483648
    %v2249 = vor.u32 1.1754944e-38, %v2248
    %v2250 = vsel %vm2247, %v2249, %v2245
    %v2251 = vmul.f32 %v2233, %v2250
    %v2253 = vsel %vm447, %v2251, 0
    %2255 = vmatpush.msra.mxu0 0.0
    %2256 = vmatpush.msra.mxu0 0.0
    %2257 = vmatpush.msra.mxu0 0.0
    %2258 = vmatpush.msra.mxu0 0.0
    %2259 = vmatpush.msra.mxu0 0.0
    %2260 = vmatpush.msra.mxu0 0.0
    %2261 = vmatpush.msra.mxu0 0.0
    %2262 = vmatpush.msra.mxu0 0.0
    %2263 = vmatpush.msra.mxu0 0.0
    %2264 = vmatpush.msra.mxu0 0.0
    %2265 = vmatpush.msra.mxu0 0.0
    %2266 = vmatpush.msra.mxu0 0.0
    %2267 = vmatpush.msra.mxu0 0.0
    %2268 = vmatpush.msra.mxu0 0.0
    %2269 = vmatpush.msra.mxu0 0.0
    %2270 = vmatpush.msra.mxu0 %v2155
    %2271 = vmatmul.f32.gmra.mxu0 %v2253
    %v2272 = vpop.f32.mrf.mxu0
    %v2273 = vadd.f32 0.0, %v2272
    %2274 = vdwg.mxu0
    %2275 = vmatpush.xpose.msra.mxu0 0.0
    %2276 = vmatpush.xpose.msra.mxu0 0.0
    %2277 = vmatpush.xpose.msra.mxu0 0.0
    %2278 = vmatpush.xpose.msra.mxu0 0.0
    %2279 = vmatpush.xpose.msra.mxu0 0.0
    %2280 = vmatpush.xpose.msra.mxu0 0.0
    %2281 = vmatpush.xpose.msra.mxu0 0.0
    %2282 = vmatpush.xpose.msra.mxu0 0.0
    %2283 = vmatpush.xpose.msra.mxu0 0.0
    %2284 = vmatpush.xpose.msra.mxu0 0.0
    %2285 = vmatpush.xpose.msra.mxu0 0.0
    %2286 = vmatpush.xpose.msra.mxu0 0.0
    %2287 = vmatpush.xpose.msra.mxu0 0.0
    %2288 = vmatpush.xpose.msra.mxu0 0.0
    %2289 = vmatpush.xpose.msra.mxu0 0.0
    %2290 = vmatpush.xpose.msra.mxu0 %v2109
    %2291 = vmatmul.f32.gmra.mxu0 %v2040
    %v2292 = vpop.f32.mrf.mxu0
    %v2293 = vadd.f32 0.0, %v2292
    %2294 = vdwg.mxu0
    %v2295 = vmul.f32 %v2293, 0.70710677
    %v2296 = vadd.f32 %v2295, %v151
    %v2297 = vsel %vm447, %v2296, -inf
    %2298 = vmax.xlane.f32.xlu0 %v2297
    %v2299 = vpop.xlane.xlu0 %2298
    %v2300 = vsub.f32 %v2296, %v2299
    %v2301 = vmul.f32 %v2300, 1.442695
    %v2302 = vpow.pop %v2301
    %v2303 = vsel %vm447, %v2302, 0.0
    %2304 = vadd.xlane.f32.xlu0 %v2303
    %v2305 = vpop.xlane.xlu0 %2304
    %v2306 = vrcp.pop %v2305
    %v2307 = vmul.f32 %v2305, %v2306
    %v2308 = vsub.f32 1.0, %v2307
    %v2309 = vmul.f32 %v2306, %v2308
    %v2310 = vadd.f32 %v2306, %v2309
    %vm2311 = vweird.f32 %v2305
    %vm2312 = vweird.f32 %v2306
    %vm2313 = vmor %vm2311, %vm2312
    %v2314 = vsel %vm2313, %v2306, %v2310
    %v2315 = vand.u32 2147483647, %v2305
    %vm2316 = vcmp.eq.f32.partialorder %v2315, 8.507059e+37
    %v2317 = vand.u32 %v2305, 2147483648
    %v2318 = vor.u32 1.1754944e-38, %v2317
    %v2319 = vsel %vm2316, %v2318, %v2314
    %v2320 = vmul.f32 %v2302, %v2319
    %v2322 = vsel %vm447, %v2320, 0
    %2324 = vmatpush.msra.mxu0 0.0
    %2325 = vmatpush.msra.mxu0 0.0
    %2326 = vmatpush.msra.mxu0 0.0
    %2327 = vmatpush.msra.mxu0 0.0
    %2328 = vmatpush.msra.mxu0 0.0
    %2329 = vmatpush.msra.mxu0 0.0
    %2330 = vmatpush.msra.mxu0 0.0
    %2331 = vmatpush.msra.mxu0 0.0
    %2332 = vmatpush.msra.mxu0 0.0
    %2333 = vmatpush.msra.mxu0 0.0
    %2334 = vmatpush.msra.mxu0 0.0
    %2335 = vmatpush.msra.mxu0 0.0
    %2336 = vmatpush.msra.mxu0 0.0
    %2337 = vmatpush.msra.mxu0 0.0
    %2338 = vmatpush.msra.mxu0 0.0
    %2339 = vmatpush.msra.mxu0 %v2178
    %2340 = vmatmul.f32.gmra.mxu0 %v2322
    %v2341 = vpop.f32.mrf.mxu0
    %v2342 = vadd.f32 0.0, %v2341
    %2343 = vdwg.mxu0
    %2344 = vmatpush.xpose.msra.mxu0 0.0
    %2345 = vmatpush.xpose.msra.mxu0 0.0
    %2346 = vmatpush.xpose.msra.mxu0 0.0
    %2347 = vmatpush.xpose.msra.mxu0 0.0
    %2348 = vmatpush.xpose.msra.mxu0 0.0
    %2349 = vmatpush.xpose.msra.mxu0 0.0
    %2350 = vmatpush.xpose.msra.mxu0 0.0
    %2351 = vmatpush.xpose.msra.mxu0 0.0
    %2352 = vmatpush.xpose.msra.mxu0 0.0
    %2353 = vmatpush.xpose.msra.mxu0 0.0
    %2354 = vmatpush.xpose.msra.mxu0 0.0
    %2355 = vmatpush.xpose.msra.mxu0 0.0
    %2356 = vmatpush.xpose.msra.mxu0 0.0
    %2357 = vmatpush.xpose.msra.mxu0 0.0
    %2358 = vmatpush.xpose.msra.mxu0 0.0
    %2359 = vmatpush.xpose.msra.mxu0 %v2132
    %2360 = vmatmul.f32.gmra.mxu0 %v2063
    %v2361 = vpop.f32.mrf.mxu0
    %v2362 = vadd.f32 0.0, %v2361
    %2363 = vdwg.mxu0
    %v2364 = vmul.f32 %v2362, 0.70710677
    %v2365 = vadd.f32 %v2364, %v151
    %v2366 = vsel %vm447, %v2365, -inf
    %2367 = vmax.xlane.f32.xlu0 %v2366
    %v2368 = vpop.xlane.xlu0 %2367
    %v2369 = vsub.f32 %v2365, %v2368
    %v2370 = vmul.f32 %v2369, 1.442695
    %v2371 = vpow.pop %v2370
    %v2372 = vsel %vm447, %v2371, 0.0
    %2373 = vadd.xlane.f32.xlu0 %v2372
    %v2374 = vpop.xlane.xlu0 %2373
    %v2375 = vrcp.pop %v2374
    %v2376 = vmul.f32 %v2374, %v2375
    %v2377 = vsub.f32 1.0, %v2376
    %v2378 = vmul.f32 %v2375, %v2377
    %v2379 = vadd.f32 %v2375, %v2378
    %vm2380 = vweird.f32 %v2374
    %vm2381 = vweird.f32 %v2375
    %vm2382 = vmor %vm2380, %vm2381
    %v2383 = vsel %vm2382, %v2375, %v2379
    %v2384 = vand.u32 2147483647, %v2374
    %vm2385 = vcmp.eq.f32.partialorder %v2384, 8.507059e+37
    %v2386 = vand.u32 %v2374, 2147483648
    %v2387 = vor.u32 1.1754944e-38, %v2386
    %v2388 = vsel %vm2385, %v2387, %v2383
    %v2389 = vmul.f32 %v2371, %v2388
    %v2391 = vsel %vm447, %v2389, 0
    %2393 = vmatpush.msra.mxu0 0.0
    %2394 = vmatpush.msra.mxu0 0.0
    %2395 = vmatpush.msra.mxu0 0.0
    %2396 = vmatpush.msra.mxu0 0.0
    %2397 = vmatpush.msra.mxu0 0.0
    %2398 = vmatpush.msra.mxu0 0.0
    %2399 = vmatpush.msra.mxu0 0.0
    %2400 = vmatpush.msra.mxu0 0.0
    %2401 = vmatpush.msra.mxu0 0.0
    %2402 = vmatpush.msra.mxu0 0.0
    %2403 = vmatpush.msra.mxu0 0.0
    %2404 = vmatpush.msra.mxu0 0.0
    %2405 = vmatpush.msra.mxu0 0.0
    %2406 = vmatpush.msra.mxu0 0.0
    %2407 = vmatpush.msra.mxu0 0.0
    %2408 = vmatpush.msra.mxu0 %v2201
    %2409 = vmatmul.f32.gmra.mxu0 %v2391
    %v2410 = vpop.f32.mrf.mxu0
    %v2411 = vadd.f32 0.0, %v2410
    %2412 = vdwg.mxu0
    %2413 = vmatpush.xpose.msra.mxu0 0.0
    %2414 = vmatpush.xpose.msra.mxu0 0.0
    %2415 = vmatpush.xpose.msra.mxu0 0.0
    %2416 = vmatpush.xpose.msra.mxu0 0.0
    %2417 = vmatpush.xpose.msra.mxu0 0.0
    %2418 = vmatpush.xpose.msra.mxu0 0.0
    %2419 = vmatpush.xpose.msra.mxu0 0.0
    %2420 = vmatpush.xpose.msra.mxu0 0.0
    %2421 = vmatpush.xpose.msra.mxu0 0.0
    %2422 = vmatpush.xpose.msra.mxu0 0.0
    %2423 = vmatpush.xpose.msra.mxu0 0.0
    %2424 = vmatpush.xpose.msra.mxu0 0.0
    %2425 = vmatpush.xpose.msra.mxu0 0.0
    %2426 = vmatpush.xpose.msra.mxu0 0.0
    %2427 = vmatpush.xpose.msra.mxu0 0.0
    %2428 = vmatpush.xpose.msra.mxu0 %v2089
    %2429 = vmatmul.f32.gmra.mxu0 %v2020
    %v2430 = vpop.f32.mrf.mxu0
    %v2431 = vadd.f32 0.0, %v2430
    %2432 = vdwg.mxu0
    %v2433 = vmul.f32 %v2431, 0.70710677
    %v2434 = vadd.f32 %v2433, %v151
    %v2435 = vsel %vm447, %v2434, -inf
    %2436 = vmax.xlane.f32.xlu0 %v2435
    %v2437 = vpop.xlane.xlu0 %2436
    %v2438 = vsub.f32 %v2434, %v2437
    %v2439 = vmul.f32 %v2438, 1.442695
    %v2440 = vpow.pop %v2439
    %v2441 = vsel %vm447, %v2440, 0.0
    %2442 = vadd.xlane.f32.xlu0 %v2441
    %v2443 = vpop.xlane.xlu0 %2442
    %v2444 = vrcp.pop %v2443
    %v2445 = vmul.f32 %v2443, %v2444
    %v2446 = vsub.f32 1.0, %v2445
    %v2447 = vmul.f32 %v2444, %v2446
    %v2448 = vadd.f32 %v2444, %v2447
    %vm2449 = vweird.f32 %v2443
    %vm2450 = vweird.f32 %v2444
    %vm2451 = vmor %vm2449, %vm2450
    %v2452 = vsel %vm2451, %v2444, %v2448
    %v2453 = vand.u32 2147483647, %v2443
    %vm2454 = vcmp.eq.f32.partialorder %v2453, 8.507059e+37
    %v2455 = vand.u32 %v2443, 2147483648
    %v2456 = vor.u32 1.1754944e-38, %v2455
    %v2457 = vsel %vm2454, %v2456, %v2452
    %v2458 = vmul.f32 %v2440, %v2457
    %v2460 = vsel %vm447, %v2458, 0
    %2462 = vmatpush.msra.mxu0 0.0
    %2463 = vmatpush.msra.mxu0 0.0
    %2464 = vmatpush.msra.mxu0 0.0
    %2465 = vmatpush.msra.mxu0 0.0
    %2466 = vmatpush.msra.mxu0 0.0
    %2467 = vmatpush.msra.mxu0 0.0
    %2468 = vmatpush.msra.mxu0 0.0
    %2469 = vmatpush.msra.mxu0 0.0
    %2470 = vmatpush.msra.mxu0 0.0
    %2471 = vmatpush.msra.mxu0 0.0
    %2472 = vmatpush.msra.mxu0 0.0
    %2473 = vmatpush.msra.mxu0 0.0
    %2474 = vmatpush.msra.mxu0 0.0
    %2475 = vmatpush.msra.mxu0 0.0
    %2476 = vmatpush.msra.mxu0 0.0
    %2477 = vmatpush.msra.mxu0 %v2158
    %2478 = vmatmul.f32.gmra.mxu0 %v2460
    %v2479 = vpop.f32.mrf.mxu0
    %v2480 = vadd.f32 0.0, %v2479
    %2481 = vdwg.mxu0
    %2482 = vmatpush.xpose.msra.mxu0 0.0
    %2483 = vmatpush.xpose.msra.mxu0 0.0
    %2484 = vmatpush.xpose.msra.mxu0 0.0
    %2485 = vmatpush.xpose.msra.mxu0 0.0
    %2486 = vmatpush.xpose.msra.mxu0 0.0
    %2487 = vmatpush.xpose.msra.mxu0 0.0
    %2488 = vmatpush.xpose.msra.mxu0 0.0
    %2489 = vmatpush.xpose.msra.mxu0 0.0
    %2490 = vmatpush.xpose.msra.mxu0 0.0
    %2491 = vmatpush.xpose.msra.mxu0 0.0
    %2492 = vmatpush.xpose.msra.mxu0 0.0
    %2493 = vmatpush.xpose.msra.mxu0 0.0
    %2494 = vmatpush.xpose.msra.mxu0 0.0
    %2495 = vmatpush.xpose.msra.mxu0 0.0
    %2496 = vmatpush.xpose.msra.mxu0 0.0
    %2497 = vmatpush.xpose.msra.mxu0 %v2112
    %2498 = vmatmul.f32.gmra.mxu0 %v2043
    %v2499 = vpop.f32.mrf.mxu0
    %v2500 = vadd.f32 0.0, %v2499
    %2501 = vdwg.mxu0
    %v2502 = vmul.f32 %v2500, 0.70710677
    %v2503 = vadd.f32 %v2502, %v151
    %v2504 = vsel %vm447, %v2503, -inf
    %2505 = vmax.xlane.f32.xlu0 %v2504
    %v2506 = vpop.xlane.xlu0 %2505
    %v2507 = vsub.f32 %v2503, %v2506
    %v2508 = vmul.f32 %v2507, 1.442695
    %v2509 = vpow.pop %v2508
    %v2510 = vsel %vm447, %v2509, 0.0
    %2511 = vadd.xlane.f32.xlu0 %v2510
    %v2512 = vpop.xlane.xlu0 %2511
    %v2513 = vrcp.pop %v2512
    %v2514 = vmul.f32 %v2512, %v2513
    %v2515 = vsub.f32 1.0, %v2514
    %v2516 = vmul.f32 %v2513, %v2515
    %v2517 = vadd.f32 %v2513, %v2516
    %vm2518 = vweird.f32 %v2512
    %vm2519 = vweird.f32 %v2513
    %vm2520 = vmor %vm2518, %vm2519
    %v2521 = vsel %vm2520, %v2513, %v2517
    %v2522 = vand.u32 2147483647, %v2512
    %vm2523 = vcmp.eq.f32.partialorder %v2522, 8.507059e+37
    %v2524 = vand.u32 %v2512, 2147483648
    %v2525 = vor.u32 1.1754944e-38, %v2524
    %v2526 = vsel %vm2523, %v2525, %v2521
    %v2527 = vmul.f32 %v2509, %v2526
    %v2529 = vsel %vm447, %v2527, 0
    %2531 = vmatpush.msra.mxu0 0.0
    %2532 = vmatpush.msra.mxu0 0.0
    %2533 = vmatpush.msra.mxu0 0.0
    %2534 = vmatpush.msra.mxu0 0.0
    %2535 = vmatpush.msra.mxu0 0.0
    %2536 = vmatpush.msra.mxu0 0.0
    %2537 = vmatpush.msra.mxu0 0.0
    %2538 = vmatpush.msra.mxu0 0.0
    %2539 = vmatpush.msra.mxu0 0.0
    %2540 = vmatpush.msra.mxu0 0.0
    %2541 = vmatpush.msra.mxu0 0.0
    %2542 = vmatpush.msra.mxu0 0.0
    %2543 = vmatpush.msra.mxu0 0.0
    %2544 = vmatpush.msra.mxu0 0.0
    %2545 = vmatpush.msra.mxu0 0.0
    %2546 = vmatpush.msra.mxu0 %v2181
    %2547 = vmatmul.f32.gmra.mxu0 %v2529
    %v2548 = vpop.f32.mrf.mxu0
    %v2549 = vadd.f32 0.0, %v2548
    %2550 = vdwg.mxu0
    %2551 = vmatpush.xpose.msra.mxu0 0.0
    %2552 = vmatpush.xpose.msra.mxu0 0.0
    %2553 = vmatpush.xpose.msra.mxu0 0.0
    %2554 = vmatpush.xpose.msra.mxu0 0.0
    %2555 = vmatpush.xpose.msra.mxu0 0.0
    %2556 = vmatpush.xpose.msra.mxu0 0.0
    %2557 = vmatpush.xpose.msra.mxu0 0.0
    %2558 = vmatpush.xpose.msra.mxu0 0.0
    %2559 = vmatpush.xpose.msra.mxu0 0.0
    %2560 = vmatpush.xpose.msra.mxu0 0.0
    %2561 = vmatpush.xpose.msra.mxu0 0.0
    %2562 = vmatpush.xpose.msra.mxu0 0.0
    %2563 = vmatpush.xpose.msra.mxu0 0.0
    %2564 = vmatpush.xpose.msra.mxu0 0.0
    %2565 = vmatpush.xpose.msra.mxu0 0.0
    %2566 = vmatpush.xpose.msra.mxu0 %v2135
    %2567 = vmatmul.f32.gmra.mxu0 %v2066
    %v2568 = vpop.f32.mrf.mxu0
    %v2569 = vadd.f32 0.0, %v2568
    %2570 = vdwg.mxu0
    %v2571 = vmul.f32 %v2569, 0.70710677
    %v2572 = vadd.f32 %v2571, %v151
    %v2573 = vsel %vm447, %v2572, -inf
    %2574 = vmax.xlane.f32.xlu0 %v2573
    %v2575 = vpop.xlane.xlu0 %2574
    %v2576 = vsub.f32 %v2572, %v2575
    %v2577 = vmul.f32 %v2576, 1.442695
    %v2578 = vpow.pop %v2577
    %v2579 = vsel %vm447, %v2578, 0.0
    %2580 = vadd.xlane.f32.xlu0 %v2579
    %v2581 = vpop.xlane.xlu0 %2580
    %v2582 = vrcp.pop %v2581
    %v2583 = vmul.f32 %v2581, %v2582
    %v2584 = vsub.f32 1.0, %v2583
    %v2585 = vmul.f32 %v2582, %v2584
    %v2586 = vadd.f32 %v2582, %v2585
    %vm2587 = vweird.f32 %v2581
    %vm2588 = vweird.f32 %v2582
    %vm2589 = vmor %vm2587, %vm2588
    %v2590 = vsel %vm2589, %v2582, %v2586
    %v2591 = vand.u32 2147483647, %v2581
    %vm2592 = vcmp.eq.f32.partialorder %v2591, 8.507059e+37
    %v2593 = vand.u32 %v2581, 2147483648
    %v2594 = vor.u32 1.1754944e-38, %v2593
    %v2595 = vsel %vm2592, %v2594, %v2590
    %v2596 = vmul.f32 %v2578, %v2595
    %v2598 = vsel %vm447, %v2596, 0
    %2600 = vmatpush.msra.mxu0 0.0
    %2601 = vmatpush.msra.mxu0 0.0
    %2602 = vmatpush.msra.mxu0 0.0
    %2603 = vmatpush.msra.mxu0 0.0
    %2604 = vmatpush.msra.mxu0 0.0
    %2605 = vmatpush.msra.mxu0 0.0
    %2606 = vmatpush.msra.mxu0 0.0
    %2607 = vmatpush.msra.mxu0 0.0
    %2608 = vmatpush.msra.mxu0 0.0
    %2609 = vmatpush.msra.mxu0 0.0
    %2610 = vmatpush.msra.mxu0 0.0
    %2611 = vmatpush.msra.mxu0 0.0
    %2612 = vmatpush.msra.mxu0 0.0
    %2613 = vmatpush.msra.mxu0 0.0
    %2614 = vmatpush.msra.mxu0 0.0
    %2615 = vmatpush.msra.mxu0 %v2204
    %2616 = vmatmul.f32.gmra.mxu0 %v2598
    %v2617 = vpop.f32.mrf.mxu0
    %v2618 = vadd.f32 0.0, %v2617
    %2619 = vdwg.mxu0
    %s2620 = scalar_lea.vmem [#allocation6], 24
    %v2621 = vld [vmem:[%s2620] sm:$0x3f]
    %v2622 = vld [vmem:[%s2620 + $0x8] sm:$0x3f]
    %v2623 = vld [vmem:[%s2620 + $0x10] sm:$0x3f]
    %s2624 = scalar_lea.vmem %s4, 1
    %v2625 = vld [vmem:[%s2624] sm:$0x1]
    %v2627 = vperm.slane %v2625, 0
    %2629 = vmatpush.xpose.msra.mxu0 0.0
    %2630 = vmatpush.xpose.msra.mxu0 0.0
    %2631 = vmatpush.xpose.msra.mxu0 0.0
    %2632 = vmatpush.xpose.msra.mxu0 0.0
    %2633 = vmatpush.xpose.msra.mxu0 0.0
    %2634 = vmatpush.xpose.msra.mxu0 0.0
    %2635 = vmatpush.xpose.msra.mxu0 0.0
    %2636 = vmatpush.xpose.msra.mxu0 0.0
    %2637 = vmatpush.xpose.msra.mxu0 0.0
    %2638 = vmatpush.xpose.msra.mxu0 0.0
    %2639 = vmatpush.xpose.msra.mxu0 0.0
    %2640 = vmatpush.xpose.msra.mxu0 0.0
    %2641 = vmatpush.xpose.msra.mxu0 0.0
    %2642 = vmatpush.xpose.msra.mxu0 0.0
    %2643 = vmatpush.xpose.msra.mxu0 0.0
    %2644 = vmatpush.xpose.msra.mxu0 %v2621
    %2645 = vmatmul.f32.gmra.mxu0 %v2273
    %v2646 = vpop.f32.mrf.mxu0
    %v2647 = vadd.f32 %v2627, %v2646
    %2648 = vmatmul.f32.gmra.mxu0 %v2480
    %v2649 = vpop.f32.mrf.mxu0
    %v2650 = vadd.f32 %v2627, %v2649
    %2651 = vdwg.mxu0
    %2652 = vmatpush.xpose.msra.mxu0 0.0
    %2653 = vmatpush.xpose.msra.mxu0 0.0
    %2654 = vmatpush.xpose.msra.mxu0 0.0
    %2655 = vmatpush.xpose.msra.mxu0 0.0
    %2656 = vmatpush.xpose.msra.mxu0 0.0
    %2657 = vmatpush.xpose.msra.mxu0 0.0
    %2658 = vmatpush.xpose.msra.mxu0 0.0
    %2659 = vmatpush.xpose.msra.mxu0 0.0
    %2660 = vmatpush.xpose.msra.mxu0 0.0
    %2661 = vmatpush.xpose.msra.mxu0 0.0
    %2662 = vmatpush.xpose.msra.mxu0 0.0
    %2663 = vmatpush.xpose.msra.mxu0 0.0
    %2664 = vmatpush.xpose.msra.mxu0 0.0
    %2665 = vmatpush.xpose.msra.mxu0 0.0
    %2666 = vmatpush.xpose.msra.mxu0 0.0
    %2667 = vmatpush.xpose.msra.mxu0 %v2622
    %2668 = vmatmul.f32.gmra.mxu0 %v2342
    %v2669 = vpop.f32.mrf.mxu0
    %v2670 = vadd.f32 %v2647, %v2669
    %2671 = vmatmul.f32.gmra.mxu0 %v2549
    %v2672 = vpop.f32.mrf.mxu0
    %v2673 = vadd.f32 %v2650, %v2672
    %2674 = vdwg.mxu0
    %2675 = vmatpush.xpose.msra.mxu0 0.0
    %2676 = vmatpush.xpose.msra.mxu0 0.0
    %2677 = vmatpush.xpose.msra.mxu0 0.0
    %2678 = vmatpush.xpose.msra.mxu0 0.0
    %2679 = vmatpush.xpose.msra.mxu0 0.0
    %2680 = vmatpush.xpose.msra.mxu0 0.0
    %2681 = vmatpush.xpose.msra.mxu0 0.0
    %2682 = vmatpush.xpose.msra.mxu0 0.0
    %2683 = vmatpush.xpose.msra.mxu0 0.0
    %2684 = vmatpush.xpose.msra.mxu0 0.0
    %2685 = vmatpush.xpose.msra.mxu0 0.0
    %2686 = vmatpush.xpose.msra.mxu0 0.0
    %2687 = vmatpush.xpose.msra.mxu0 0.0
    %2688 = vmatpush.xpose.msra.mxu0 0.0
    %2689 = vmatpush.xpose.msra.mxu0 0.0
    %2690 = vmatpush.xpose.msra.mxu0 %v2623
    %2691 = vmatmul.f32.gmra.mxu0 %v2411
    %v2692 = vpop.f32.mrf.mxu0
    %v2693 = vadd.f32 %v2670, %v2692
    %2694 = vmatmul.f32.gmra.mxu0 %v2618
    %v2695 = vpop.f32.mrf.mxu0
    %v2696 = vadd.f32 %v2673, %v2695
    %2697 = vdwg.mxu0
    %v2698 = vadd.f32 %v1931, %v2693
    %v2699 = vadd.f32 %v1932, %v2696
    %s2700 = scalar_lea.vmem %s5, 1
    %v2701 = vld [vmem:[%s2700] sm:$0x1]
    %s2702 = scalar_lea.vmem %s6, 1
    %v2703 = vld [vmem:[%s2702] sm:$0x1]
    %v2704 = vsel %vm183, %v2698, 0.0
    %2705 = vadd.xlane.f32.xlu0 %v2704
    %v2706 = vpop.xlane.xlu0 %2705
    %v2707 = vsel %vm183, %v2699, 0.0
    %2708 = vadd.xlane.f32.xlu0 %v2707
    %v2709 = vpop.xlane.xlu0 %2708
    %v2710 = vmul.f32 %v2706, %v932
    %v2711 = vmul.f32 %v2709, %v932
    %v2712 = vsub.f32 %v2698, %v2710
    %v2713 = vsub.f32 %v2699, %v2711
    %v2714 = vmul.f32 %v2712, %v2712
    %v2715 = vmul.f32 %v2713, %v2713
    %v2716 = vsel %vm183, %v2714, 0.0
    %2717 = vadd.xlane.f32.xlu0 %v2716
    %v2718 = vpop.xlane.xlu0 %2717
    %v2719 = vsel %vm183, %v2715, 0.0
    %2720 = vadd.xlane.f32.xlu0 %v2719
    %v2721 = vpop.xlane.xlu0 %2720
    %v2722 = vmul.f32 %v2718, %v932
    %v2723 = vmul.f32 %v2721, %v932
    %v2724 = vadd.f32 %v2722, 1e-05
    %v2725 = vadd.f32 %v2723, 1e-05
    %v2726 = vrsqrt.pop %v2724
    %v2727 = vmul.f32 %v2726, %v2724
    %v2728 = vmul.f32 %v2727, %v2726
    %v2729 = vmul.f32 0.5, %v2728
    %v2730 = vsub.f32 1.5, %v2729
    %v2731 = vmul.f32 %v2726, %v2730
    %vm2732 = vweird.f32 %v2724
    %vm2733 = vweird.f32 %v2726
    %vm2734 = vmor %vm2732, %vm2733
    %v2735 = vsel %vm2734, %v2726, %v2731
    %v2736 = vrsqrt.pop %v2725
    %v2737 = vmul.f32 %v2736, %v2725
    %v2738 = vmul.f32 %v2737, %v2736
    %v2739 = vmul.f32 0.5, %v2738
    %v2740 = vsub.f32 1.5, %v2739
    %v2741 = vmul.f32 %v2736, %v2740
    %vm2742 = vweird.f32 %v2725
    %vm2743 = vweird.f32 %v2736
    %vm2744 = vmor %vm2742, %vm2743
    %v2745 = vsel %vm2744, %v2736, %v2741
    %v2746 = vmul.f32 %v2712, %v2735
    %v2747 = vmul.f32 %v2713, %v2745
    %v2749 = vperm.slane %v2701, 0
    %v2751 = vmul.f32 %v2746, %v2749
    %v2752 = vmul.f32 %v2747, %v2749
    %v2754 = vperm.slane %v2703, 0
    %v2756 = vadd.f32 %v2751, %v2754
    %v2757 = vadd.f32 %v2752, %v2754
    %s2758 = scalar_lea.vmem [#allocation7], 128
    %v2759 = vld [vmem:[%s2758] sm:$0x3f]
    %v2760 = vld [vmem:[%s2758 + $0x8] sm:$0x3f]
    %v2761 = vld [vmem:[%s2758 + $0x10] sm:$0x3f]
    %v2762 = vld [vmem:[%s2758 + $0x18] sm:$0x3f]
    %v2763 = vld [vmem:[%s2758 + $0x20] sm:$0x3f]
    %v2764 = vld [vmem:[%s2758 + $0x28] sm:$0x3f]
    %v2765 = vld [vmem:[%s2758 + $0x30] sm:$0x3f]
    %v2766 = vld [vmem:[%s2758 + $0x38] sm:$0x3f]
    %v2767 = vld [vmem:[%s2758 + $0x40] sm:$0x3f]
    %v2768 = vld [vmem:[%s2758 + $0x48] sm:$0x3f]
    %v2769 = vld [vmem:[%s2758 + $0x50] sm:$0x3f]
    %v2770 = vld [vmem:[%s2758 + $0x58] sm:$0x3f]
    %v2771 = vld [vmem:[%s2758 + $0x60] sm:$0x3f]
    %v2772 = vld [vmem:[%s2758 + $0x68] sm:$0x3f]
    %v2773 = vld [vmem:[%s2758 + $0x70] sm:$0x3f]
    %v2774 = vld [vmem:[%s2758 + $0x78] sm:$0x3f]
    %s2775 = scalar_lea.vmem [#allocation9], 16
    %v2776 = vld [vmem:[%s2775] sm:$0xff]
    %v2777 = vld [vmem:[%s2775 + $0x8] sm:$0xff]
    %v2780 = vperm.slane %v2776, 0
    %v2781 = vperm.slane %v2776, 1
    %v2782 = vperm.slane %v2776, 2
    %v2783 = vperm.slane %v2776, 3
    %v2784 = vperm.slane %v2776, 4
    %v2785 = vperm.slane %v2776, 5
    %v2786 = vperm.slane %v2776, 6
    %v2787 = vperm.slane %v2776, 7
    %v2788 = vperm.slane %v2777, 0
    %v2789 = vperm.slane %v2777, 1
    %v2790 = vperm.slane %v2777, 2
    %v2791 = vperm.slane %v2777, 3
    %v2792 = vperm.slane %v2777, 4
    %v2793 = vperm.slane %v2777, 5
    %v2794 = vperm.slane %v2777, 6
    %v2795 = vperm.slane %v2777, 7
    %v2813 = vsel %vm183, %v2756, 0
    %v2816 = vsel %vm183, %v2757, 0
    %v2819 = vsel %vm190, %v2759, 0
    %v2822 = vsel %vm190, %v2760, 0
    %v2825 = vsel %vm190, %v2761, 0
    %v2828 = vsel %vm190, %v2762, 0
    %v2831 = vsel %vm190, %v2763, 0
    %v2834 = vsel %vm190, %v2764, 0
    %v2837 = vsel %vm190, %v2765, 0
    %v2840 = vsel %vm190, %v2766, 0
    %v2843 = vsel %vm190, %v2767, 0
    %v2846 = vsel %vm190, %v2768, 0
    %v2849 = vsel %vm190, %v2769, 0
    %v2852 = vsel %vm190, %v2770, 0
    %v2855 = vsel %vm190, %v2771, 0
    %v2858 = vsel %vm190, %v2772, 0
    %v2861 = vsel %vm190, %v2773, 0
    %v2864 = vsel %vm190, %v2774, 0
    %2866 = vmatpush.msra.mxu0 0.0
    %2867 = vmatpush.msra.mxu0 0.0
    %2868 = vmatpush.msra.mxu0 0.0
    %2869 = vmatpush.msra.mxu0 0.0
    %2870 = vmatpush.msra.mxu0 0.0
    %2871 = vmatpush.msra.mxu0 0.0
    %2872 = vmatpush.msra.mxu0 0.0
    %2873 = vmatpush.msra.mxu0 0.0
    %2874 = vmatpush.msra.mxu0 0.0
    %2875 = vmatpush.msra.mxu0 0.0
    %2876 = vmatpush.msra.mxu0 0.0
    %2877 = vmatpush.msra.mxu0 0.0
    %2878 = vmatpush.msra.mxu0 0.0
    %2879 = vmatpush.msra.mxu0 0.0
    %2880 = vmatpush.msra.mxu0 0.0
    %2881 = vmatpush.msra.mxu0 %v2819
    %2882 = vmatmul.f32.gmra.mxu0 %v2813
    %v2883 = vpop.f32.mrf.mxu0
    %v2884 = vadd.f32 %v2780, %v2883
    %2885 = vmatmul.f32.gmra.mxu0 %v2816
    %v2886 = vpop.f32.mrf.mxu0
    %v2887 = vadd.f32 %v2780, %v2886
    %2888 = vdwg.mxu0
    %2889 = vmatpush.msra.mxu0 0.0
    %2890 = vmatpush.msra.mxu0 0.0
    %2891 = vmatpush.msra.mxu0 0.0
    %2892 = vmatpush.msra.mxu0 0.0
    %2893 = vmatpush.msra.mxu0 0.0
    %2894 = vmatpush.msra.mxu0 0.0
    %2895 = vmatpush.msra.mxu0 0.0
    %2896 = vmatpush.msra.mxu0 0.0
    %2897 = vmatpush.msra.mxu0 0.0
    %2898 = vmatpush.msra.mxu0 0.0
    %2899 = vmatpush.msra.mxu0 0.0
    %2900 = vmatpush.msra.mxu0 0.0
    %2901 = vmatpush.msra.mxu0 0.0
    %2902 = vmatpush.msra.mxu0 0.0
    %2903 = vmatpush.msra.mxu0 0.0
    %2904 = vmatpush.msra.mxu0 %v2822
    %2905 = vmatmul.f32.gmra.mxu0 %v2813
    %v2906 = vpop.f32.mrf.mxu0
    %v2907 = vadd.f32 %v2781, %v2906
    %2908 = vmatmul.f32.gmra.mxu0 %v2816
    %v2909 = vpop.f32.mrf.mxu0
    %v2910 = vadd.f32 %v2781, %v2909
    %2911 = vdwg.mxu0
    %2912 = vmatpush.msra.mxu0 0.0
    %2913 = vmatpush.msra.mxu0 0.0
    %2914 = vmatpush.msra.mxu0 0.0
    %2915 = vmatpush.msra.mxu0 0.0
    %2916 = vmatpush.msra.mxu0 0.0
    %2917 = vmatpush.msra.mxu0 0.0
    %2918 = vmatpush.msra.mxu0 0.0
    %2919 = vmatpush.msra.mxu0 0.0
    %2920 = vmatpush.msra.mxu0 0.0
    %2921 = vmatpush.msra.mxu0 0.0
    %2922 = vmatpush.msra.mxu0 0.0
    %2923 = vmatpush.msra.mxu0 0.0
    %2924 = vmatpush.msra.mxu0 0.0
    %2925 = vmatpush.msra.mxu0 0.0
    %2926 = vmatpush.msra.mxu0 0.0
    %2927 = vmatpush.msra.mxu0 %v2825
    %2928 = vmatmul.f32.gmra.mxu0 %v2813
    %v2929 = vpop.f32.mrf.mxu0
    %v2930 = vadd.f32 %v2782, %v2929
    %2931 = vmatmul.f32.gmra.mxu0 %v2816
    %v2932 = vpop.f32.mrf.mxu0
    %v2933 = vadd.f32 %v2782, %v2932
    %2934 = vdwg.mxu0
    %2935 = vmatpush.msra.mxu0 0.0
    %2936 = vmatpush.msra.mxu0 0.0
    %2937 = vmatpush.msra.mxu0 0.0
    %2938 = vmatpush.msra.mxu0 0.0
    %2939 = vmatpush.msra.mxu0 0.0
    %2940 = vmatpush.msra.mxu0 0.0
    %2941 = vmatpush.msra.mxu0 0.0
    %2942 = vmatpush.msra.mxu0 0.0
    %2943 = vmatpush.msra.mxu0 0.0
    %2944 = vmatpush.msra.mxu0 0.0
    %2945 = vmatpush.msra.mxu0 0.0
    %2946 = vmatpush.msra.mxu0 0.0
    %2947 = vmatpush.msra.mxu0 0.0
    %2948 = vmatpush.msra.mxu0 0.0
    %2949 = vmatpush.msra.mxu0 0.0
    %2950 = vmatpush.msra.mxu0 %v2828
    %2951 = vmatmul.f32.gmra.mxu0 %v2813
    %v2952 = vpop.f32.mrf.mxu0
    %v2953 = vadd.f32 %v2783, %v2952
    %2954 = vmatmul.f32.gmra.mxu0 %v2816
    %v2955 = vpop.f32.mrf.mxu0
    %v2956 = vadd.f32 %v2783, %v2955
    %2957 = vdwg.mxu0
    %2958 = vmatpush.msra.mxu0 0.0
    %2959 = vmatpush.msra.mxu0 0.0
    %2960 = vmatpush.msra.mxu0 0.0
    %2961 = vmatpush.msra.mxu0 0.0
    %2962 = vmatpush.msra.mxu0 0.0
    %2963 = vmatpush.msra.mxu0 0.0
    %2964 = vmatpush.msra.mxu0 0.0
    %2965 = vmatpush.msra.mxu0 0.0
    %2966 = vmatpush.msra.mxu0 0.0
    %2967 = vmatpush.msra.mxu0 0.0
    %2968 = vmatpush.msra.mxu0 0.0
    %2969 = vmatpush.msra.mxu0 0.0
    %2970 = vmatpush.msra.mxu0 0.0
    %2971 = vmatpush.msra.mxu0 0.0
    %2972 = vmatpush.msra.mxu0 0.0
    %2973 = vmatpush.msra.mxu0 %v2831
    %2974 = vmatmul.f32.gmra.mxu0 %v2813
    %v2975 = vpop.f32.mrf.mxu0
    %v2976 = vadd.f32 %v2784, %v2975
    %2977 = vmatmul.f32.gmra.mxu0 %v2816
    %v2978 = vpop.f32.mrf.mxu0
    %v2979 = vadd.f32 %v2784, %v2978
    %2980 = vdwg.mxu0
    %2981 = vmatpush.msra.mxu0 0.0
    %2982 = vmatpush.msra.mxu0 0.0
    %2983 = vmatpush.msra.mxu0 0.0
    %2984 = vmatpush.msra.mxu0 0.0
    %2985 = vmatpush.msra.mxu0 0.0
    %2986 = vmatpush.msra.mxu0 0.0
    %2987 = vmatpush.msra.mxu0 0.0
    %2988 = vmatpush.msra.mxu0 0.0
    %2989 = vmatpush.msra.mxu0 0.0
    %2990 = vmatpush.msra.mxu0 0.0
    %2991 = vmatpush.msra.mxu0 0.0
    %2992 = vmatpush.msra.mxu0 0.0
    %2993 = vmatpush.msra.mxu0 0.0
    %2994 = vmatpush.msra.mxu0 0.0
    %2995 = vmatpush.msra.mxu0 0.0
    %2996 = vmatpush.msra.mxu0 %v2834
    %2997 = vmatmul.f32.gmra.mxu0 %v2813
    %v2998 = vpop.f32.mrf.mxu0
    %v2999 = vadd.f32 %v2785, %v2998
    %3000 = vmatmul.f32.gmra.mxu0 %v2816
    %v3001 = vpop.f32.mrf.mxu0
    %v3002 = vadd.f32 %v2785, %v3001
    %3003 = vdwg.mxu0
    %3004 = vmatpush.msra.mxu0 0.0
    %3005 = vmatpush.msra.mxu0 0.0
    %3006 = vmatpush.msra.mxu0 0.0
    %3007 = vmatpush.msra.mxu0 0.0
    %3008 = vmatpush.msra.mxu0 0.0
    %3009 = vmatpush.msra.mxu0 0.0
    %3010 = vmatpush.msra.mxu0 0.0
    %3011 = vmatpush.msra.mxu0 0.0
    %3012 = vmatpush.msra.mxu0 0.0
    %3013 = vmatpush.msra.mxu0 0.0
    %3014 = vmatpush.msra.mxu0 0.0
    %3015 = vmatpush.msra.mxu0 0.0
    %3016 = vmatpush.msra.mxu0 0.0
    %3017 = vmatpush.msra.mxu0 0.0
    %3018 = vmatpush.msra.mxu0 0.0
    %3019 = vmatpush.msra.mxu0 %v2837
    %3020 = vmatmul.f32.gmra.mxu0 %v2813
    %v3021 = vpop.f32.mrf.mxu0
    %v3022 = vadd.f32 %v2786, %v3021
    %3023 = vmatmul.f32.gmra.mxu0 %v2816
    %v3024 = vpop.f32.mrf.mxu0
    %v3025 = vadd.f32 %v2786, %v3024
    %3026 = vdwg.mxu0
    %3027 = vmatpush.msra.mxu0 0.0
    %3028 = vmatpush.msra.mxu0 0.0
    %3029 = vmatpush.msra.mxu0 0.0
    %3030 = vmatpush.msra.mxu0 0.0
    %3031 = vmatpush.msra.mxu0 0.0
    %3032 = vmatpush.msra.mxu0 0.0
    %3033 = vmatpush.msra.mxu0 0.0
    %3034 = vmatpush.msra.mxu0 0.0
    %3035 = vmatpush.msra.mxu0 0.0
    %3036 = vmatpush.msra.mxu0 0.0
    %3037 = vmatpush.msra.mxu0 0.0
    %3038 = vmatpush.msra.mxu0 0.0
    %3039 = vmatpush.msra.mxu0 0.0
    %3040 = vmatpush.msra.mxu0 0.0
    %3041 = vmatpush.msra.mxu0 0.0
    %3042 = vmatpush.msra.mxu0 %v2840
    %3043 = vmatmul.f32.gmra.mxu0 %v2813
    %v3044 = vpop.f32.mrf.mxu0
    %v3045 = vadd.f32 %v2787, %v3044
    %3046 = vmatmul.f32.gmra.mxu0 %v2816
    %v3047 = vpop.f32.mrf.mxu0
    %v3048 = vadd.f32 %v2787, %v3047
    %3049 = vdwg.mxu0
    %3050 = vmatpush.msra.mxu0 0.0
    %3051 = vmatpush.msra.mxu0 0.0
    %3052 = vmatpush.msra.mxu0 0.0
    %3053 = vmatpush.msra.mxu0 0.0
    %3054 = vmatpush.msra.mxu0 0.0
    %3055 = vmatpush.msra.mxu0 0.0
    %3056 = vmatpush.msra.mxu0 0.0
    %3057 = vmatpush.msra.mxu0 0.0
    %3058 = vmatpush.msra.mxu0 0.0
    %3059 = vmatpush.msra.mxu0 0.0
    %3060 = vmatpush.msra.mxu0 0.0
    %3061 = vmatpush.msra.mxu0 0.0
    %3062 = vmatpush.msra.mxu0 0.0
    %3063 = vmatpush.msra.mxu0 0.0
    %3064 = vmatpush.msra.mxu0 0.0
    %3065 = vmatpush.msra.mxu0 %v2843
    %3066 = vmatmul.f32.gmra.mxu0 %v2813
    %v3067 = vpop.f32.mrf.mxu0
    %v3068 = vadd.f32 %v2788, %v3067
    %3069 = vmatmul.f32.gmra.mxu0 %v2816
    %v3070 = vpop.f32.mrf.mxu0
    %v3071 = vadd.f32 %v2788, %v3070
    %3072 = vdwg.mxu0
    %3073 = vmatpush.msra.mxu0 0.0
    %3074 = vmatpush.msra.mxu0 0.0
    %3075 = vmatpush.msra.mxu0 0.0
    %3076 = vmatpush.msra.mxu0 0.0
    %3077 = vmatpush.msra.mxu0 0.0
    %3078 = vmatpush.msra.mxu0 0.0
    %3079 = vmatpush.msra.mxu0 0.0
    %3080 = vmatpush.msra.mxu0 0.0
    %3081 = vmatpush.msra.mxu0 0.0
    %3082 = vmatpush.msra.mxu0 0.0
    %3083 = vmatpush.msra.mxu0 0.0
    %3084 = vmatpush.msra.mxu0 0.0
    %3085 = vmatpush.msra.mxu0 0.0
    %3086 = vmatpush.msra.mxu0 0.0
    %3087 = vmatpush.msra.mxu0 0.0
    %3088 = vmatpush.msra.mxu0 %v2846
    %3089 = vmatmul.f32.gmra.mxu0 %v2813
    %v3090 = vpop.f32.mrf.mxu0
    %v3091 = vadd.f32 %v2789, %v3090
    %3092 = vmatmul.f32.gmra.mxu0 %v2816
    %v3093 = vpop.f32.mrf.mxu0
    %v3094 = vadd.f32 %v2789, %v3093
    %3095 = vdwg.mxu0
    %3096 = vmatpush.msra.mxu0 0.0
    %3097 = vmatpush.msra.mxu0 0.0
    %3098 = vmatpush.msra.mxu0 0.0
    %3099 = vmatpush.msra.mxu0 0.0
    %3100 = vmatpush.msra.mxu0 0.0
    %3101 = vmatpush.msra.mxu0 0.0
    %3102 = vmatpush.msra.mxu0 0.0
    %3103 = vmatpush.msra.mxu0 0.0
    %3104 = vmatpush.msra.mxu0 0.0
    %3105 = vmatpush.msra.mxu0 0.0
    %3106 = vmatpush.msra.mxu0 0.0
    %3107 = vmatpush.msra.mxu0 0.0
    %3108 = vmatpush.msra.mxu0 0.0
    %3109 = vmatpush.msra.mxu0 0.0
    %3110 = vmatpush.msra.mxu0 0.0
    %3111 = vmatpush.msra.mxu0 %v2849
    %3112 = vmatmul.f32.gmra.mxu0 %v2813
    %v3113 = vpop.f32.mrf.mxu0
    %v3114 = vadd.f32 %v2790, %v3113
    %3115 = vmatmul.f32.gmra.mxu0 %v2816
    %v3116 = vpop.f32.mrf.mxu0
    %v3117 = vadd.f32 %v2790, %v3116
    %3118 = vdwg.mxu0
    %3119 = vmatpush.msra.mxu0 0.0
    %3120 = vmatpush.msra.mxu0 0.0
    %3121 = vmatpush.msra.mxu0 0.0
    %3122 = vmatpush.msra.mxu0 0.0
    %3123 = vmatpush.msra.mxu0 0.0
    %3124 = vmatpush.msra.mxu0 0.0
    %3125 = vmatpush.msra.mxu0 0.0
    %3126 = vmatpush.msra.mxu0 0.0
    %3127 = vmatpush.msra.mxu0 0.0
    %3128 = vmatpush.msra.mxu0 0.0
    %3129 = vmatpush.msra.mxu0 0.0
    %3130 = vmatpush.msra.mxu0 0.0
    %3131 = vmatpush.msra.mxu0 0.0
    %3132 = vmatpush.msra.mxu0 0.0
    %3133 = vmatpush.msra.mxu0 0.0
    %3134 = vmatpush.msra.mxu0 %v2852
    %3135 = vmatmul.f32.gmra.mxu0 %v2813
    %v3136 = vpop.f32.mrf.mxu0
    %v3137 = vadd.f32 %v2791, %v3136
    %3138 = vmatmul.f32.gmra.mxu0 %v2816
    %v3139 = vpop.f32.mrf.mxu0
    %v3140 = vadd.f32 %v2791, %v3139
    %3141 = vdwg.mxu0
    %3142 = vmatpush.msra.mxu0 0.0
    %3143 = vmatpush.msra.mxu0 0.0
    %3144 = vmatpush.msra.mxu0 0.0
    %3145 = vmatpush.msra.mxu0 0.0
    %3146 = vmatpush.msra.mxu0 0.0
    %3147 = vmatpush.msra.mxu0 0.0
    %3148 = vmatpush.msra.mxu0 0.0
    %3149 = vmatpush.msra.mxu0 0.0
    %3150 = vmatpush.msra.mxu0 0.0
    %3151 = vmatpush.msra.mxu0 0.0
    %3152 = vmatpush.msra.mxu0 0.0
    %3153 = vmatpush.msra.mxu0 0.0
    %3154 = vmatpush.msra.mxu0 0.0
    %3155 = vmatpush.msra.mxu0 0.0
    %3156 = vmatpush.msra.mxu0 0.0
    %3157 = vmatpush.msra.mxu0 %v2855
    %3158 = vmatmul.f32.gmra.mxu0 %v2813
    %v3159 = vpop.f32.mrf.mxu0
    %v3160 = vadd.f32 %v2792, %v3159
    %3161 = vmatmul.f32.gmra.mxu0 %v2816
    %v3162 = vpop.f32.mrf.mxu0
    %v3163 = vadd.f32 %v2792, %v3162
    %3164 = vdwg.mxu0
    %3165 = vmatpush.msra.mxu0 0.0
    %3166 = vmatpush.msra.mxu0 0.0
    %3167 = vmatpush.msra.mxu0 0.0
    %3168 = vmatpush.msra.mxu0 0.0
    %3169 = vmatpush.msra.mxu0 0.0
    %3170 = vmatpush.msra.mxu0 0.0
    %3171 = vmatpush.msra.mxu0 0.0
    %3172 = vmatpush.msra.mxu0 0.0
    %3173 = vmatpush.msra.mxu0 0.0
    %3174 = vmatpush.msra.mxu0 0.0
    %3175 = vmatpush.msra.mxu0 0.0
    %3176 = vmatpush.msra.mxu0 0.0
    %3177 = vmatpush.msra.mxu0 0.0
    %3178 = vmatpush.msra.mxu0 0.0
    %3179 = vmatpush.msra.mxu0 0.0
    %3180 = vmatpush.msra.mxu0 %v2858
    %3181 = vmatmul.f32.gmra.mxu0 %v2813
    %v3182 = vpop.f32.mrf.mxu0
    %v3183 = vadd.f32 %v2793, %v3182
    %3184 = vmatmul.f32.gmra.mxu0 %v2816
    %v3185 = vpop.f32.mrf.mxu0
    %v3186 = vadd.f32 %v2793, %v3185
    %3187 = vdwg.mxu0
    %3188 = vmatpush.msra.mxu0 0.0
    %3189 = vmatpush.msra.mxu0 0.0
    %3190 = vmatpush.msra.mxu0 0.0
    %3191 = vmatpush.msra.mxu0 0.0
    %3192 = vmatpush.msra.mxu0 0.0
    %3193 = vmatpush.msra.mxu0 0.0
    %3194 = vmatpush.msra.mxu0 0.0
    %3195 = vmatpush.msra.mxu0 0.0
    %3196 = vmatpush.msra.mxu0 0.0
    %3197 = vmatpush.msra.mxu0 0.0
    %3198 = vmatpush.msra.mxu0 0.0
    %3199 = vmatpush.msra.mxu0 0.0
    %3200 = vmatpush.msra.mxu0 0.0
    %3201 = vmatpush.msra.mxu0 0.0
    %3202 = vmatpush.msra.mxu0 0.0
    %3203 = vmatpush.msra.mxu0 %v2861
    %3204 = vmatmul.f32.gmra.mxu0 %v2813
    %v3205 = vpop.f32.mrf.mxu0
    %v3206 = vadd.f32 %v2794, %v3205
    %3207 = vmatmul.f32.gmra.mxu0 %v2816
    %v3208 = vpop.f32.mrf.mxu0
    %v3209 = vadd.f32 %v2794, %v3208
    %3210 = vdwg.mxu0
    %3211 = vmatpush.msra.mxu0 0.0
    %3212 = vmatpush.msra.mxu0 0.0
    %3213 = vmatpush.msra.mxu0 0.0
    %3214 = vmatpush.msra.mxu0 0.0
    %3215 = vmatpush.msra.mxu0 0.0
    %3216 = vmatpush.msra.mxu0 0.0
    %3217 = vmatpush.msra.mxu0 0.0
    %3218 = vmatpush.msra.mxu0 0.0
    %3219 = vmatpush.msra.mxu0 0.0
    %3220 = vmatpush.msra.mxu0 0.0
    %3221 = vmatpush.msra.mxu0 0.0
    %3222 = vmatpush.msra.mxu0 0.0
    %3223 = vmatpush.msra.mxu0 0.0
    %3224 = vmatpush.msra.mxu0 0.0
    %3225 = vmatpush.msra.mxu0 0.0
    %3226 = vmatpush.msra.mxu0 %v2864
    %3227 = vmatmul.f32.gmra.mxu0 %v2813
    %v3228 = vpop.f32.mrf.mxu0
    %v3229 = vadd.f32 %v2795, %v3228
    %3230 = vmatmul.f32.gmra.mxu0 %v2816
    %v3231 = vpop.f32.mrf.mxu0
    %v3232 = vadd.f32 %v2795, %v3231
    %3233 = vdwg.mxu0
    %v3234 = vmax.f32 %v2884, 0.0
    %v3235 = vmax.f32 %v2907, 0.0
    %v3236 = vmax.f32 %v2930, 0.0
    %v3237 = vmax.f32 %v2953, 0.0
    %v3238 = vmax.f32 %v2976, 0.0
    %v3239 = vmax.f32 %v2999, 0.0
    %v3240 = vmax.f32 %v3022, 0.0
    %v3241 = vmax.f32 %v3045, 0.0
    %v3242 = vmax.f32 %v3068, 0.0
    %v3243 = vmax.f32 %v3091, 0.0
    %v3244 = vmax.f32 %v3114, 0.0
    %v3245 = vmax.f32 %v3137, 0.0
    %v3246 = vmax.f32 %v3160, 0.0
    %v3247 = vmax.f32 %v3183, 0.0
    %v3248 = vmax.f32 %v3206, 0.0
    %v3249 = vmax.f32 %v3229, 0.0
    %v3250 = vmax.f32 %v2887, 0.0
    %v3251 = vmax.f32 %v2910, 0.0
    %v3252 = vmax.f32 %v2933, 0.0
    %v3253 = vmax.f32 %v2956, 0.0
    %v3254 = vmax.f32 %v2979, 0.0
    %v3255 = vmax.f32 %v3002, 0.0
    %v3256 = vmax.f32 %v3025, 0.0
    %v3257 = vmax.f32 %v3048, 0.0
    %v3258 = vmax.f32 %v3071, 0.0
    %v3259 = vmax.f32 %v3094, 0.0
    %v3260 = vmax.f32 %v3117, 0.0
    %v3261 = vmax.f32 %v3140, 0.0
    %v3262 = vmax.f32 %v3163, 0.0
    %v3263 = vmax.f32 %v3186, 0.0
    %v3264 = vmax.f32 %v3209, 0.0
    %v3265 = vmax.f32 %v3232, 0.0
    %s3266 = scalar_lea.vmem [#allocation10], 128
    %v3267 = vld [vmem:[%s3266] sm:$0x3f]
    %v3268 = vld [vmem:[%s3266 + $0x8] sm:$0x3f]
    %v3269 = vld [vmem:[%s3266 + $0x10] sm:$0x3f]
    %v3270 = vld [vmem:[%s3266 + $0x18] sm:$0x3f]
    %v3271 = vld [vmem:[%s3266 + $0x20] sm:$0x3f]
    %v3272 = vld [vmem:[%s3266 + $0x28] sm:$0x3f]
    %v3273 = vld [vmem:[%s3266 + $0x30] sm:$0x3f]
    %v3274 = vld [vmem:[%s3266 + $0x38] sm:$0x3f]
    %v3275 = vld [vmem:[%s3266 + $0x40] sm:$0x3f]
    %v3276 = vld [vmem:[%s3266 + $0x48] sm:$0x3f]
    %v3277 = vld [vmem:[%s3266 + $0x50] sm:$0x3f]
    %v3278 = vld [vmem:[%s3266 + $0x58] sm:$0x3f]
    %v3279 = vld [vmem:[%s3266 + $0x60] sm:$0x3f]
    %v3280 = vld [vmem:[%s3266 + $0x68] sm:$0x3f]
    %v3281 = vld [vmem:[%s3266 + $0x70] sm:$0x3f]
    %v3282 = vld [vmem:[%s3266 + $0x78] sm:$0x3f]
    %s3283 = scalar_lea.vmem %s12, 1
    %v3284 = vld [vmem:[%s3283] sm:$0x1]
    %v3286 = vperm.slane %v3284, 0
    %3288 = vmatpush.xpose.msra.mxu0 0.0
    %3289 = vmatpush.xpose.msra.mxu0 0.0
    %3290 = vmatpush.xpose.msra.mxu0 0.0
    %3291 = vmatpush.xpose.msra.mxu0 0.0
    %3292 = vmatpush.xpose.msra.mxu0 0.0
    %3293 = vmatpush.xpose.msra.mxu0 0.0
    %3294 = vmatpush.xpose.msra.mxu0 0.0
    %3295 = vmatpush.xpose.msra.mxu0 0.0
    %3296 = vmatpush.xpose.msra.mxu0 0.0
    %3297 = vmatpush.xpose.msra.mxu0 0.0
    %3298 = vmatpush.xpose.msra.mxu0 0.0
    %3299 = vmatpush.xpose.msra.mxu0 0.0
    %3300 = vmatpush.xpose.msra.mxu0 0.0
    %3301 = vmatpush.xpose.msra.mxu0 0.0
    %3302 = vmatpush.xpose.msra.mxu0 0.0
    %3303 = vmatpush.xpose.msra.mxu0 %v3267
    %3304 = vmatmul.f32.gmra.mxu0 %v3234
    %v3305 = vpop.f32.mrf.mxu0
    %v3306 = vadd.f32 %v3286, %v3305
    %3307 = vmatmul.f32.gmra.mxu0 %v3250
    %v3308 = vpop.f32.mrf.mxu0
    %v3309 = vadd.f32 %v3286, %v3308
    %3310 = vdwg.mxu0
    %3311 = vmatpush.xpose.msra.mxu0 0.0
    %3312 = vmatpush.xpose.msra.mxu0 0.0
    %3313 = vmatpush.xpose.msra.mxu0 0.0
    %3314 = vmatpush.xpose.msra.mxu0 0.0
    %3315 = vmatpush.xpose.msra.mxu0 0.0
    %3316 = vmatpush.xpose.msra.mxu0 0.0
    %3317 = vmatpush.xpose.msra.mxu0 0.0
    %3318 = vmatpush.xpose.msra.mxu0 0.0
    %3319 = vmatpush.xpose.msra.mxu0 0.0
    %3320 = vmatpush.xpose.msra.mxu0 0.0
    %3321 = vmatpush.xpose.msra.mxu0 0.0
    %3322 = vmatpush.xpose.msra.mxu0 0.0
    %3323 = vmatpush.xpose.msra.mxu0 0.0
    %3324 = vmatpush.xpose.msra.mxu0 0.0
    %3325 = vmatpush.xpose.msra.mxu0 0.0
    %3326 = vmatpush.xpose.msra.mxu0 %v3268
    %3327 = vmatmul.f32.gmra.mxu0 %v3235
    %v3328 = vpop.f32.mrf.mxu0
    %v3329 = vadd.f32 %v3306, %v3328
    %3330 = vmatmul.f32.gmra.mxu0 %v3251
    %v3331 = vpop.f32.mrf.mxu0
    %v3332 = vadd.f32 %v3309, %v3331
    %3333 = vdwg.mxu0
    %3334 = vmatpush.xpose.msra.mxu0 0.0
    %3335 = vmatpush.xpose.msra.mxu0 0.0
    %3336 = vmatpush.xpose.msra.mxu0 0.0
    %3337 = vmatpush.xpose.msra.mxu0 0.0
    %3338 = vmatpush.xpose.msra.mxu0 0.0
    %3339 = vmatpush.xpose.msra.mxu0 0.0
    %3340 = vmatpush.xpose.msra.mxu0 0.0
    %3341 = vmatpush.xpose.msra.mxu0 0.0
    %3342 = vmatpush.xpose.msra.mxu0 0.0
    %3343 = vmatpush.xpose.msra.mxu0 0.0
    %3344 = vmatpush.xpose.msra.mxu0 0.0
    %3345 = vmatpush.xpose.msra.mxu0 0.0
    %3346 = vmatpush.xpose.msra.mxu0 0.0
    %3347 = vmatpush.xpose.msra.mxu0 0.0
    %3348 = vmatpush.xpose.msra.mxu0 0.0
    %3349 = vmatpush.xpose.msra.mxu0 %v3269
    %3350 = vmatmul.f32.gmra.mxu0 %v3236
    %v3351 = vpop.f32.mrf.mxu0
    %v3352 = vadd.f32 %v3329, %v3351
    %3353 = vmatmul.f32.gmra.mxu0 %v3252
    %v3354 = vpop.f32.mrf.mxu0
    %v3355 = vadd.f32 %v3332, %v3354
    %3356 = vdwg.mxu0
    %3357 = vmatpush.xpose.msra.mxu0 0.0
    %3358 = vmatpush.xpose.msra.mxu0 0.0
    %3359 = vmatpush.xpose.msra.mxu0 0.0
    %3360 = vmatpush.xpose.msra.mxu0 0.0
    %3361 = vmatpush.xpose.msra.mxu0 0.0
    %3362 = vmatpush.xpose.msra.mxu0 0.0
    %3363 = vmatpush.xpose.msra.mxu0 0.0
    %3364 = vmatpush.xpose.msra.mxu0 0.0
    %3365 = vmatpush.xpose.msra.mxu0 0.0
    %3366 = vmatpush.xpose.msra.mxu0 0.0
    %3367 = vmatpush.xpose.msra.mxu0 0.0
    %3368 = vmatpush.xpose.msra.mxu0 0.0
    %3369 = vmatpush.xpose.msra.mxu0 0.0
    %3370 = vmatpush.xpose.msra.mxu0 0.0
    %3371 = vmatpush.xpose.msra.mxu0 0.0
    %3372 = vmatpush.xpose.msra.mxu0 %v3270
    %3373 = vmatmul.f32.gmra.mxu0 %v3237
    %v3374 = vpop.f32.mrf.mxu0
    %v3375 = vadd.f32 %v3352, %v3374
    %3376 = vmatmul.f32.gmra.mxu0 %v3253
    %v3377 = vpop.f32.mrf.mxu0
    %v3378 = vadd.f32 %v3355, %v3377
    %3379 = vdwg.mxu0
    %3380 = vmatpush.xpose.msra.mxu0 0.0
    %3381 = vmatpush.xpose.msra.mxu0 0.0
    %3382 = vmatpush.xpose.msra.mxu0 0.0
    %3383 = vmatpush.xpose.msra.mxu0 0.0
    %3384 = vmatpush.xpose.msra.mxu0 0.0
    %3385 = vmatpush.xpose.msra.mxu0 0.0
    %3386 = vmatpush.xpose.msra.mxu0 0.0
    %3387 = vmatpush.xpose.msra.mxu0 0.0
    %3388 = vmatpush.xpose.msra.mxu0 0.0
    %3389 = vmatpush.xpose.msra.mxu0 0.0
    %3390 = vmatpush.xpose.msra.mxu0 0.0
    %3391 = vmatpush.xpose.msra.mxu0 0.0
    %3392 = vmatpush.xpose.msra.mxu0 0.0
    %3393 = vmatpush.xpose.msra.mxu0 0.0
    %3394 = vmatpush.xpose.msra.mxu0 0.0
    %3395 = vmatpush.xpose.msra.mxu0 %v3271
    %3396 = vmatmul.f32.gmra.mxu0 %v3238
    %v3397 = vpop.f32.mrf.mxu0
    %v3398 = vadd.f32 %v3375, %v3397
    %3399 = vmatmul.f32.gmra.mxu0 %v3254
    %v3400 = vpop.f32.mrf.mxu0
    %v3401 = vadd.f32 %v3378, %v3400
    %3402 = vdwg.mxu0
    %3403 = vmatpush.xpose.msra.mxu0 0.0
    %3404 = vmatpush.xpose.msra.mxu0 0.0
    %3405 = vmatpush.xpose.msra.mxu0 0.0
    %3406 = vmatpush.xpose.msra.mxu0 0.0
    %3407 = vmatpush.xpose.msra.mxu0 0.0
    %3408 = vmatpush.xpose.msra.mxu0 0.0
    %3409 = vmatpush.xpose.msra.mxu0 0.0
    %3410 = vmatpush.xpose.msra.mxu0 0.0
    %3411 = vmatpush.xpose.msra.mxu0 0.0
    %3412 = vmatpush.xpose.msra.mxu0 0.0
    %3413 = vmatpush.xpose.msra.mxu0 0.0
    %3414 = vmatpush.xpose.msra.mxu0 0.0
    %3415 = vmatpush.xpose.msra.mxu0 0.0
    %3416 = vmatpush.xpose.msra.mxu0 0.0
    %3417 = vmatpush.xpose.msra.mxu0 0.0
    %3418 = vmatpush.xpose.msra.mxu0 %v3272
    %3419 = vmatmul.f32.gmra.mxu0 %v3239
    %v3420 = vpop.f32.mrf.mxu0
    %v3421 = vadd.f32 %v3398, %v3420
    %3422 = vmatmul.f32.gmra.mxu0 %v3255
    %v3423 = vpop.f32.mrf.mxu0
    %v3424 = vadd.f32 %v3401, %v3423
    %3425 = vdwg.mxu0
    %3426 = vmatpush.xpose.msra.mxu0 0.0
    %3427 = vmatpush.xpose.msra.mxu0 0.0
    %3428 = vmatpush.xpose.msra.mxu0 0.0
    %3429 = vmatpush.xpose.msra.mxu0 0.0
    %3430 = vmatpush.xpose.msra.mxu0 0.0
    %3431 = vmatpush.xpose.msra.mxu0 0.0
    %3432 = vmatpush.xpose.msra.mxu0 0.0
    %3433 = vmatpush.xpose.msra.mxu0 0.0
    %3434 = vmatpush.xpose.msra.mxu0 0.0
    %3435 = vmatpush.xpose.msra.mxu0 0.0
    %3436 = vmatpush.xpose.msra.mxu0 0.0
    %3437 = vmatpush.xpose.msra.mxu0 0.0
    %3438 = vmatpush.xpose.msra.mxu0 0.0
    %3439 = vmatpush.xpose.msra.mxu0 0.0
    %3440 = vmatpush.xpose.msra.mxu0 0.0
    %3441 = vmatpush.xpose.msra.mxu0 %v3273
    %3442 = vmatmul.f32.gmra.mxu0 %v3240
    %v3443 = vpop.f32.mrf.mxu0
    %v3444 = vadd.f32 %v3421, %v3443
    %3445 = vmatmul.f32.gmra.mxu0 %v3256
    %v3446 = vpop.f32.mrf.mxu0
    %v3447 = vadd.f32 %v3424, %v3446
    %3448 = vdwg.mxu0
    %3449 = vmatpush.xpose.msra.mxu0 0.0
    %3450 = vmatpush.xpose.msra.mxu0 0.0
    %3451 = vmatpush.xpose.msra.mxu0 0.0
    %3452 = vmatpush.xpose.msra.mxu0 0.0
    %3453 = vmatpush.xpose.msra.mxu0 0.0
    %3454 = vmatpush.xpose.msra.mxu0 0.0
    %3455 = vmatpush.xpose.msra.mxu0 0.0
    %3456 = vmatpush.xpose.msra.mxu0 0.0
    %3457 = vmatpush.xpose.msra.mxu0 0.0
    %3458 = vmatpush.xpose.msra.mxu0 0.0
    %3459 = vmatpush.xpose.msra.mxu0 0.0
    %3460 = vmatpush.xpose.msra.mxu0 0.0
    %3461 = vmatpush.xpose.msra.mxu0 0.0
    %3462 = vmatpush.xpose.msra.mxu0 0.0
    %3463 = vmatpush.xpose.msra.mxu0 0.0
    %3464 = vmatpush.xpose.msra.mxu0 %v3274
    %3465 = vmatmul.f32.gmra.mxu0 %v3241
    %v3466 = vpop.f32.mrf.mxu0
    %v3467 = vadd.f32 %v3444, %v3466
    %3468 = vmatmul.f32.gmra.mxu0 %v3257
    %v3469 = vpop.f32.mrf.mxu0
    %v3470 = vadd.f32 %v3447, %v3469
    %3471 = vdwg.mxu0
    %3472 = vmatpush.xpose.msra.mxu0 0.0
    %3473 = vmatpush.xpose.msra.mxu0 0.0
    %3474 = vmatpush.xpose.msra.mxu0 0.0
    %3475 = vmatpush.xpose.msra.mxu0 0.0
    %3476 = vmatpush.xpose.msra.mxu0 0.0
    %3477 = vmatpush.xpose.msra.mxu0 0.0
    %3478 = vmatpush.xpose.msra.mxu0 0.0
    %3479 = vmatpush.xpose.msra.mxu0 0.0
    %3480 = vmatpush.xpose.msra.mxu0 0.0
    %3481 = vmatpush.xpose.msra.mxu0 0.0
    %3482 = vmatpush.xpose.msra.mxu0 0.0
    %3483 = vmatpush.xpose.msra.mxu0 0.0
    %3484 = vmatpush.xpose.msra.mxu0 0.0
    %3485 = vmatpush.xpose.msra.mxu0 0.0
    %3486 = vmatpush.xpose.msra.mxu0 0.0
    %3487 = vmatpush.xpose.msra.mxu0 %v3275
    %3488 = vmatmul.f32.gmra.mxu0 %v3242
    %v3489 = vpop.f32.mrf.mxu0
    %v3490 = vadd.f32 %v3467, %v3489
    %3491 = vmatmul.f32.gmra.mxu0 %v3258
    %v3492 = vpop.f32.mrf.mxu0
    %v3493 = vadd.f32 %v3470, %v3492
    %3494 = vdwg.mxu0
    %3495 = vmatpush.xpose.msra.mxu0 0.0
    %3496 = vmatpush.xpose.msra.mxu0 0.0
    %3497 = vmatpush.xpose.msra.mxu0 0.0
    %3498 = vmatpush.xpose.msra.mxu0 0.0
    %3499 = vmatpush.xpose.msra.mxu0 0.0
    %3500 = vmatpush.xpose.msra.mxu0 0.0
    %3501 = vmatpush.xpose.msra.mxu0 0.0
    %3502 = vmatpush.xpose.msra.mxu0 0.0
    %3503 = vmatpush.xpose.msra.mxu0 0.0
    %3504 = vmatpush.xpose.msra.mxu0 0.0
    %3505 = vmatpush.xpose.msra.mxu0 0.0
    %3506 = vmatpush.xpose.msra.mxu0 0.0
    %3507 = vmatpush.xpose.msra.mxu0 0.0
    %3508 = vmatpush.xpose.msra.mxu0 0.0
    %3509 = vmatpush.xpose.msra.mxu0 0.0
    %3510 = vmatpush.xpose.msra.mxu0 %v3276
    %3511 = vmatmul.f32.gmra.mxu0 %v3243
    %v3512 = vpop.f32.mrf.mxu0
    %v3513 = vadd.f32 %v3490, %v3512
    %3514 = vmatmul.f32.gmra.mxu0 %v3259
    %v3515 = vpop.f32.mrf.mxu0
    %v3516 = vadd.f32 %v3493, %v3515
    %3517 = vdwg.mxu0
    %3518 = vmatpush.xpose.msra.mxu0 0.0
    %3519 = vmatpush.xpose.msra.mxu0 0.0
    %3520 = vmatpush.xpose.msra.mxu0 0.0
    %3521 = vmatpush.xpose.msra.mxu0 0.0
    %3522 = vmatpush.xpose.msra.mxu0 0.0
    %3523 = vmatpush.xpose.msra.mxu0 0.0
    %3524 = vmatpush.xpose.msra.mxu0 0.0
    %3525 = vmatpush.xpose.msra.mxu0 0.0
    %3526 = vmatpush.xpose.msra.mxu0 0.0
    %3527 = vmatpush.xpose.msra.mxu0 0.0
    %3528 = vmatpush.xpose.msra.mxu0 0.0
    %3529 = vmatpush.xpose.msra.mxu0 0.0
    %3530 = vmatpush.xpose.msra.mxu0 0.0
    %3531 = vmatpush.xpose.msra.mxu0 0.0
    %3532 = vmatpush.xpose.msra.mxu0 0.0
    %3533 = vmatpush.xpose.msra.mxu0 %v3277
    %3534 = vmatmul.f32.gmra.mxu0 %v3244
    %v3535 = vpop.f32.mrf.mxu0
    %v3536 = vadd.f32 %v3513, %v3535
    %3537 = vmatmul.f32.gmra.mxu0 %v3260
    %v3538 = vpop.f32.mrf.mxu0
    %v3539 = vadd.f32 %v3516, %v3538
    %3540 = vdwg.mxu0
    %3541 = vmatpush.xpose.msra.mxu0 0.0
    %3542 = vmatpush.xpose.msra.mxu0 0.0
    %3543 = vmatpush.xpose.msra.mxu0 0.0
    %3544 = vmatpush.xpose.msra.mxu0 0.0
    %3545 = vmatpush.xpose.msra.mxu0 0.0
    %3546 = vmatpush.xpose.msra.mxu0 0.0
    %3547 = vmatpush.xpose.msra.mxu0 0.0
    %3548 = vmatpush.xpose.msra.mxu0 0.0
    %3549 = vmatpush.xpose.msra.mxu0 0.0
    %3550 = vmatpush.xpose.msra.mxu0 0.0
    %3551 = vmatpush.xpose.msra.mxu0 0.0
    %3552 = vmatpush.xpose.msra.mxu0 0.0
    %3553 = vmatpush.xpose.msra.mxu0 0.0
    %3554 = vmatpush.xpose.msra.mxu0 0.0
    %3555 = vmatpush.xpose.msra.mxu0 0.0
    %3556 = vmatpush.xpose.msra.mxu0 %v3278
    %3557 = vmatmul.f32.gmra.mxu0 %v3245
    %v3558 = vpop.f32.mrf.mxu0
    %v3559 = vadd.f32 %v3536, %v3558
    %3560 = vmatmul.f32.gmra.mxu0 %v3261
    %v3561 = vpop.f32.mrf.mxu0
    %v3562 = vadd.f32 %v3539, %v3561
    %3563 = vdwg.mxu0
    %3564 = vmatpush.xpose.msra.mxu0 0.0
    %3565 = vmatpush.xpose.msra.mxu0 0.0
    %3566 = vmatpush.xpose.msra.mxu0 0.0
    %3567 = vmatpush.xpose.msra.mxu0 0.0
    %3568 = vmatpush.xpose.msra.mxu0 0.0
    %3569 = vmatpush.xpose.msra.mxu0 0.0
    %3570 = vmatpush.xpose.msra.mxu0 0.0
    %3571 = vmatpush.xpose.msra.mxu0 0.0
    %3572 = vmatpush.xpose.msra.mxu0 0.0
    %3573 = vmatpush.xpose.msra.mxu0 0.0
    %3574 = vmatpush.xpose.msra.mxu0 0.0
    %3575 = vmatpush.xpose.msra.mxu0 0.0
    %3576 = vmatpush.xpose.msra.mxu0 0.0
    %3577 = vmatpush.xpose.msra.mxu0 0.0
    %3578 = vmatpush.xpose.msra.mxu0 0.0
    %3579 = vmatpush.xpose.msra.mxu0 %v3279
    %3580 = vmatmul.f32.gmra.mxu0 %v3246
    %v3581 = vpop.f32.mrf.mxu0
    %v3582 = vadd.f32 %v3559, %v3581
    %3583 = vmatmul.f32.gmra.mxu0 %v3262
    %v3584 = vpop.f32.mrf.mxu0
    %v3585 = vadd.f32 %v3562, %v3584
    %3586 = vdwg.mxu0
    %3587 = vmatpush.xpose.msra.mxu0 0.0
    %3588 = vmatpush.xpose.msra.mxu0 0.0
    %3589 = vmatpush.xpose.msra.mxu0 0.0
    %3590 = vmatpush.xpose.msra.mxu0 0.0
    %3591 = vmatpush.xpose.msra.mxu0 0.0
    %3592 = vmatpush.xpose.msra.mxu0 0.0
    %3593 = vmatpush.xpose.msra.mxu0 0.0
    %3594 = vmatpush.xpose.msra.mxu0 0.0
    %3595 = vmatpush.xpose.msra.mxu0 0.0
    %3596 = vmatpush.xpose.msra.mxu0 0.0
    %3597 = vmatpush.xpose.msra.mxu0 0.0
    %3598 = vmatpush.xpose.msra.mxu0 0.0
    %3599 = vmatpush.xpose.msra.mxu0 0.0
    %3600 = vmatpush.xpose.msra.mxu0 0.0
    %3601 = vmatpush.xpose.msra.mxu0 0.0
    %3602 = vmatpush.xpose.msra.mxu0 %v3280
    %3603 = vmatmul.f32.gmra.mxu0 %v3247
    %v3604 = vpop.f32.mrf.mxu0
    %v3605 = vadd.f32 %v3582, %v3604
    %3606 = vmatmul.f32.gmra.mxu0 %v3263
    %v3607 = vpop.f32.mrf.mxu0
    %v3608 = vadd.f32 %v3585, %v3607
    %3609 = vdwg.mxu0
    %3610 = vmatpush.xpose.msra.mxu0 0.0
    %3611 = vmatpush.xpose.msra.mxu0 0.0
    %3612 = vmatpush.xpose.msra.mxu0 0.0
    %3613 = vmatpush.xpose.msra.mxu0 0.0
    %3614 = vmatpush.xpose.msra.mxu0 0.0
    %3615 = vmatpush.xpose.msra.mxu0 0.0
    %3616 = vmatpush.xpose.msra.mxu0 0.0
    %3617 = vmatpush.xpose.msra.mxu0 0.0
    %3618 = vmatpush.xpose.msra.mxu0 0.0
    %3619 = vmatpush.xpose.msra.mxu0 0.0
    %3620 = vmatpush.xpose.msra.mxu0 0.0
    %3621 = vmatpush.xpose.msra.mxu0 0.0
    %3622 = vmatpush.xpose.msra.mxu0 0.0
    %3623 = vmatpush.xpose.msra.mxu0 0.0
    %3624 = vmatpush.xpose.msra.mxu0 0.0
    %3625 = vmatpush.xpose.msra.mxu0 %v3281
    %3626 = vmatmul.f32.gmra.mxu0 %v3248
    %v3627 = vpop.f32.mrf.mxu0
    %v3628 = vadd.f32 %v3605, %v3627
    %3629 = vmatmul.f32.gmra.mxu0 %v3264
    %v3630 = vpop.f32.mrf.mxu0
    %v3631 = vadd.f32 %v3608, %v3630
    %3632 = vdwg.mxu0
    %3633 = vmatpush.xpose.msra.mxu0 0.0
    %3634 = vmatpush.xpose.msra.mxu0 0.0
    %3635 = vmatpush.xpose.msra.mxu0 0.0
    %3636 = vmatpush.xpose.msra.mxu0 0.0
    %3637 = vmatpush.xpose.msra.mxu0 0.0
    %3638 = vmatpush.xpose.msra.mxu0 0.0
    %3639 = vmatpush.xpose.msra.mxu0 0.0
    %3640 = vmatpush.xpose.msra.mxu0 0.0
    %3641 = vmatpush.xpose.msra.mxu0 0.0
    %3642 = vmatpush.xpose.msra.mxu0 0.0
    %3643 = vmatpush.xpose.msra.mxu0 0.0
    %3644 = vmatpush.xpose.msra.mxu0 0.0
    %3645 = vmatpush.xpose.msra.mxu0 0.0
    %3646 = vmatpush.xpose.msra.mxu0 0.0
    %3647 = vmatpush.xpose.msra.mxu0 0.0
    %3648 = vmatpush.xpose.msra.mxu0 %v3282
    %3649 = vmatmul.f32.gmra.mxu0 %v3249
    %v3650 = vpop.f32.mrf.mxu0
    %v3651 = vadd.f32 %v3628, %v3650
    %3652 = vmatmul.f32.gmra.mxu0 %v3265
    %v3653 = vpop.f32.mrf.mxu0
    %v3654 = vadd.f32 %v3631, %v3653
    %3655 = vdwg.mxu0
    %v3656 = vadd.f32 %v2756, %v3651
    %v3657 = vadd.f32 %v2757, %v3654
    %s3658 = scalar_lea.vmem %s7, 1
    %v3659 = vld [vmem:[%s3658] sm:$0x1]
    %s3660 = scalar_lea.vmem %s8, 1
    %v3661 = vld [vmem:[%s3660] sm:$0x1]
    %v3662 = vsel %vm183, %v3656, 0.0
    %3663 = vadd.xlane.f32.xlu0 %v3662
    %v3664 = vpop.xlane.xlu0 %3663
    %v3665 = vsel %vm183, %v3657, 0.0
    %3666 = vadd.xlane.f32.xlu0 %v3665
    %v3667 = vpop.xlane.xlu0 %3666
    %v3668 = vmul.f32 %v3664, %v932
    %v3669 = vmul.f32 %v3667, %v932
    %v3670 = vsub.f32 %v3656, %v3668
    %v3671 = vsub.f32 %v3657, %v3669
    %v3672 = vmul.f32 %v3670, %v3670
    %v3673 = vmul.f32 %v3671, %v3671
    %v3674 = vsel %vm183, %v3672, 0.0
    %3675 = vadd.xlane.f32.xlu0 %v3674
    %v3676 = vpop.xlane.xlu0 %3675
    %v3677 = vsel %vm183, %v3673, 0.0
    %3678 = vadd.xlane.f32.xlu0 %v3677
    %v3679 = vpop.xlane.xlu0 %3678
    %v3680 = vmul.f32 %v3676, %v932
    %v3681 = vmul.f32 %v3679, %v932
    %v3682 = vadd.f32 %v3680, 1e-05
    %v3683 = vadd.f32 %v3681, 1e-05
    %v3684 = vrsqrt.pop %v3682
    %v3685 = vmul.f32 %v3684, %v3682
    %v3686 = vmul.f32 %v3685, %v3684
    %v3687 = vmul.f32 0.5, %v3686
    %v3688 = vsub.f32 1.5, %v3687
    %v3689 = vmul.f32 %v3684, %v3688
    %vm3690 = vweird.f32 %v3682
    %vm3691 = vweird.f32 %v3684
    %vm3692 = vmor %vm3690, %vm3691
    %v3693 = vsel %vm3692, %v3684, %v3689
    %v3694 = vrsqrt.pop %v3683
    %v3695 = vmul.f32 %v3694, %v3683
    %v3696 = vmul.f32 %v3695, %v3694
    %v3697 = vmul.f32 0.5, %v3696
    %v3698 = vsub.f32 1.5, %v3697
    %v3699 = vmul.f32 %v3694, %v3698
    %vm3700 = vweird.f32 %v3683
    %vm3701 = vweird.f32 %v3694
    %vm3702 = vmor %vm3700, %vm3701
    %v3703 = vsel %vm3702, %v3694, %v3699
    %v3704 = vmul.f32 %v3670, %v3693
    %v3705 = vmul.f32 %v3671, %v3703
    %v3707 = vperm.slane %v3659, 0
    %v3709 = vmul.f32 %v3704, %v3707
    %v3710 = vmul.f32 %v3705, %v3707
    %v3712 = vperm.slane %v3661, 0
    %v3714 = vadd.f32 %v3709, %v3712
    %v3715 = vadd.f32 %v3710, %v3712
    %s3716 = scalar_lea.vmem [#allocation2], 144
    %v3717 = vld [vmem:[%s3716] sm:$0x3f]
    %v3718 = vld [vmem:[%s3716 + $0x8] sm:$0x3f]
    %v3719 = vld [vmem:[%s3716 + $0x10] sm:$0x3f]
    %v3720 = vld [vmem:[%s3716 + $0x18] sm:$0x3f]
    %v3721 = vld [vmem:[%s3716 + $0x20] sm:$0x3f]
    %v3722 = vld [vmem:[%s3716 + $0x28] sm:$0x3f]
    %v3723 = vld [vmem:[%s3716 + $0x30] sm:$0x3f]
    %v3724 = vld [vmem:[%s3716 + $0x38] sm:$0x3f]
    %v3725 = vld [vmem:[%s3716 + $0x40] sm:$0x3f]
    %s3726 = scalar_lea.vmem [#allocation4], 18
    %v3727 = vld [vmem:[%s3726] sm:$0xff]
    %v3728 = vld [vmem:[%s3726 + $0x8] sm:$0x1]
    %v3731 = vperm.slane %v3727, 0
    %v3732 = vperm.slane %v3727, 1
    %v3733 = vperm.slane %v3727, 2
    %v3734 = vperm.slane %v3727, 3
    %v3735 = vperm.slane %v3727, 4
    %v3736 = vperm.slane %v3727, 5
    %v3737 = vperm.slane %v3727, 6
    %v3738 = vperm.slane %v3727, 7
    %v3739 = vperm.slane %v3728, 0
    %v3750 = vsel %vm183, %v3714, 0
    %v3753 = vsel %vm183, %v3715, 0
    %v3756 = vsel %vm190, %v3717, 0
    %v3759 = vsel %vm190, %v3718, 0
    %v3762 = vsel %vm190, %v3719, 0
    %v3765 = vsel %vm190, %v3720, 0
    %v3768 = vsel %vm190, %v3721, 0
    %v3771 = vsel %vm190, %v3722, 0
    %v3774 = vsel %vm190, %v3723, 0
    %v3777 = vsel %vm190, %v3724, 0
    %v3780 = vsel %vm190, %v3725, 0
    %3782 = vmatpush.msra.mxu0 0.0
    %3783 = vmatpush.msra.mxu0 0.0
    %3784 = vmatpush.msra.mxu0 0.0
    %3785 = vmatpush.msra.mxu0 0.0
    %3786 = vmatpush.msra.mxu0 0.0
    %3787 = vmatpush.msra.mxu0 0.0
    %3788 = vmatpush.msra.mxu0 0.0
    %3789 = vmatpush.msra.mxu0 0.0
    %3790 = vmatpush.msra.mxu0 0.0
    %3791 = vmatpush.msra.mxu0 0.0
    %3792 = vmatpush.msra.mxu0 0.0
    %3793 = vmatpush.msra.mxu0 0.0
    %3794 = vmatpush.msra.mxu0 0.0
    %3795 = vmatpush.msra.mxu0 0.0
    %3796 = vmatpush.msra.mxu0 0.0
    %3797 = vmatpush.msra.mxu0 %v3756
    %3798 = vmatmul.f32.gmra.mxu0 %v3750
    %v3799 = vpop.f32.mrf.mxu0
    %v3800 = vadd.f32 %v3731, %v3799
    %3801 = vmatmul.f32.gmra.mxu0 %v3753
    %v3802 = vpop.f32.mrf.mxu0
    %v3803 = vadd.f32 %v3731, %v3802
    %3804 = vdwg.mxu0
    %3805 = vmatpush.msra.mxu0 0.0
    %3806 = vmatpush.msra.mxu0 0.0
    %3807 = vmatpush.msra.mxu0 0.0
    %3808 = vmatpush.msra.mxu0 0.0
    %3809 = vmatpush.msra.mxu0 0.0
    %3810 = vmatpush.msra.mxu0 0.0
    %3811 = vmatpush.msra.mxu0 0.0
    %3812 = vmatpush.msra.mxu0 0.0
    %3813 = vmatpush.msra.mxu0 0.0
    %3814 = vmatpush.msra.mxu0 0.0
    %3815 = vmatpush.msra.mxu0 0.0
    %3816 = vmatpush.msra.mxu0 0.0
    %3817 = vmatpush.msra.mxu0 0.0
    %3818 = vmatpush.msra.mxu0 0.0
    %3819 = vmatpush.msra.mxu0 0.0
    %3820 = vmatpush.msra.mxu0 %v3759
    %3821 = vmatmul.f32.gmra.mxu0 %v3750
    %v3822 = vpop.f32.mrf.mxu0
    %v3823 = vadd.f32 %v3732, %v3822
    %3824 = vmatmul.f32.gmra.mxu0 %v3753
    %v3825 = vpop.f32.mrf.mxu0
    %v3826 = vadd.f32 %v3732, %v3825
    %3827 = vdwg.mxu0
    %3828 = vmatpush.msra.mxu0 0.0
    %3829 = vmatpush.msra.mxu0 0.0
    %3830 = vmatpush.msra.mxu0 0.0
    %3831 = vmatpush.msra.mxu0 0.0
    %3832 = vmatpush.msra.mxu0 0.0
    %3833 = vmatpush.msra.mxu0 0.0
    %3834 = vmatpush.msra.mxu0 0.0
    %3835 = vmatpush.msra.mxu0 0.0
    %3836 = vmatpush.msra.mxu0 0.0
    %3837 = vmatpush.msra.mxu0 0.0
    %3838 = vmatpush.msra.mxu0 0.0
    %3839 = vmatpush.msra.mxu0 0.0
    %3840 = vmatpush.msra.mxu0 0.0
    %3841 = vmatpush.msra.mxu0 0.0
    %3842 = vmatpush.msra.mxu0 0.0
    %3843 = vmatpush.msra.mxu0 %v3762
    %3844 = vmatmul.f32.gmra.mxu0 %v3750
    %v3845 = vpop.f32.mrf.mxu0
    %v3846 = vadd.f32 %v3733, %v3845
    %3847 = vmatmul.f32.gmra.mxu0 %v3753
    %v3848 = vpop.f32.mrf.mxu0
    %v3849 = vadd.f32 %v3733, %v3848
    %3850 = vdwg.mxu0
    %3851 = vmatpush.msra.mxu0 0.0
    %3852 = vmatpush.msra.mxu0 0.0
    %3853 = vmatpush.msra.mxu0 0.0
    %3854 = vmatpush.msra.mxu0 0.0
    %3855 = vmatpush.msra.mxu0 0.0
    %3856 = vmatpush.msra.mxu0 0.0
    %3857 = vmatpush.msra.mxu0 0.0
    %3858 = vmatpush.msra.mxu0 0.0
    %3859 = vmatpush.msra.mxu0 0.0
    %3860 = vmatpush.msra.mxu0 0.0
    %3861 = vmatpush.msra.mxu0 0.0
    %3862 = vmatpush.msra.mxu0 0.0
    %3863 = vmatpush.msra.mxu0 0.0
    %3864 = vmatpush.msra.mxu0 0.0
    %3865 = vmatpush.msra.mxu0 0.0
    %3866 = vmatpush.msra.mxu0 %v3765
    %3867 = vmatmul.f32.gmra.mxu0 %v3750
    %v3868 = vpop.f32.mrf.mxu0
    %v3869 = vadd.f32 %v3734, %v3868
    %3870 = vmatmul.f32.gmra.mxu0 %v3753
    %v3871 = vpop.f32.mrf.mxu0
    %v3872 = vadd.f32 %v3734, %v3871
    %3873 = vdwg.mxu0
    %3874 = vmatpush.msra.mxu0 0.0
    %3875 = vmatpush.msra.mxu0 0.0
    %3876 = vmatpush.msra.mxu0 0.0
    %3877 = vmatpush.msra.mxu0 0.0
    %3878 = vmatpush.msra.mxu0 0.0
    %3879 = vmatpush.msra.mxu0 0.0
    %3880 = vmatpush.msra.mxu0 0.0
    %3881 = vmatpush.msra.mxu0 0.0
    %3882 = vmatpush.msra.mxu0 0.0
    %3883 = vmatpush.msra.mxu0 0.0
    %3884 = vmatpush.msra.mxu0 0.0
    %3885 = vmatpush.msra.mxu0 0.0
    %3886 = vmatpush.msra.mxu0 0.0
    %3887 = vmatpush.msra.mxu0 0.0
    %3888 = vmatpush.msra.mxu0 0.0
    %3889 = vmatpush.msra.mxu0 %v3768
    %3890 = vmatmul.f32.gmra.mxu0 %v3750
    %v3891 = vpop.f32.mrf.mxu0
    %v3892 = vadd.f32 %v3735, %v3891
    %3893 = vmatmul.f32.gmra.mxu0 %v3753
    %v3894 = vpop.f32.mrf.mxu0
    %v3895 = vadd.f32 %v3735, %v3894
    %3896 = vdwg.mxu0
    %3897 = vmatpush.msra.mxu0 0.0
    %3898 = vmatpush.msra.mxu0 0.0
    %3899 = vmatpush.msra.mxu0 0.0
    %3900 = vmatpush.msra.mxu0 0.0
    %3901 = vmatpush.msra.mxu0 0.0
    %3902 = vmatpush.msra.mxu0 0.0
    %3903 = vmatpush.msra.mxu0 0.0
    %3904 = vmatpush.msra.mxu0 0.0
    %3905 = vmatpush.msra.mxu0 0.0
    %3906 = vmatpush.msra.mxu0 0.0
    %3907 = vmatpush.msra.mxu0 0.0
    %3908 = vmatpush.msra.mxu0 0.0
    %3909 = vmatpush.msra.mxu0 0.0
    %3910 = vmatpush.msra.mxu0 0.0
    %3911 = vmatpush.msra.mxu0 0.0
    %3912 = vmatpush.msra.mxu0 %v3771
    %3913 = vmatmul.f32.gmra.mxu0 %v3750
    %v3914 = vpop.f32.mrf.mxu0
    %v3915 = vadd.f32 %v3736, %v3914
    %3916 = vmatmul.f32.gmra.mxu0 %v3753
    %v3917 = vpop.f32.mrf.mxu0
    %v3918 = vadd.f32 %v3736, %v3917
    %3919 = vdwg.mxu0
    %3920 = vmatpush.msra.mxu0 0.0
    %3921 = vmatpush.msra.mxu0 0.0
    %3922 = vmatpush.msra.mxu0 0.0
    %3923 = vmatpush.msra.mxu0 0.0
    %3924 = vmatpush.msra.mxu0 0.0
    %3925 = vmatpush.msra.mxu0 0.0
    %3926 = vmatpush.msra.mxu0 0.0
    %3927 = vmatpush.msra.mxu0 0.0
    %3928 = vmatpush.msra.mxu0 0.0
    %3929 = vmatpush.msra.mxu0 0.0
    %3930 = vmatpush.msra.mxu0 0.0
    %3931 = vmatpush.msra.mxu0 0.0
    %3932 = vmatpush.msra.mxu0 0.0
    %3933 = vmatpush.msra.mxu0 0.0
    %3934 = vmatpush.msra.mxu0 0.0
    %3935 = vmatpush.msra.mxu0 %v3774
    %3936 = vmatmul.f32.gmra.mxu0 %v3750
    %v3937 = vpop.f32.mrf.mxu0
    %v3938 = vadd.f32 %v3737, %v3937
    %3939 = vmatmul.f32.gmra.mxu0 %v3753
    %v3940 = vpop.f32.mrf.mxu0
    %v3941 = vadd.f32 %v3737, %v3940
    %3942 = vdwg.mxu0
    %3943 = vmatpush.msra.mxu0 0.0
    %3944 = vmatpush.msra.mxu0 0.0
    %3945 = vmatpush.msra.mxu0 0.0
    %3946 = vmatpush.msra.mxu0 0.0
    %3947 = vmatpush.msra.mxu0 0.0
    %3948 = vmatpush.msra.mxu0 0.0
    %3949 = vmatpush.msra.mxu0 0.0
    %3950 = vmatpush.msra.mxu0 0.0
    %3951 = vmatpush.msra.mxu0 0.0
    %3952 = vmatpush.msra.mxu0 0.0
    %3953 = vmatpush.msra.mxu0 0.0
    %3954 = vmatpush.msra.mxu0 0.0
    %3955 = vmatpush.msra.mxu0 0.0
    %3956 = vmatpush.msra.mxu0 0.0
    %3957 = vmatpush.msra.mxu0 0.0
    %3958 = vmatpush.msra.mxu0 %v3777
    %3959 = vmatmul.f32.gmra.mxu0 %v3750
    %v3960 = vpop.f32.mrf.mxu0
    %v3961 = vadd.f32 %v3738, %v3960
    %3962 = vmatmul.f32.gmra.mxu0 %v3753
    %v3963 = vpop.f32.mrf.mxu0
    %v3964 = vadd.f32 %v3738, %v3963
    %3965 = vdwg.mxu0
    %3966 = vmatpush.msra.mxu0 0.0
    %3967 = vmatpush.msra.mxu0 0.0
    %3968 = vmatpush.msra.mxu0 0.0
    %3969 = vmatpush.msra.mxu0 0.0
    %3970 = vmatpush.msra.mxu0 0.0
    %3971 = vmatpush.msra.mxu0 0.0
    %3972 = vmatpush.msra.mxu0 0.0
    %3973 = vmatpush.msra.mxu0 0.0
    %3974 = vmatpush.msra.mxu0 0.0
    %3975 = vmatpush.msra.mxu0 0.0
    %3976 = vmatpush.msra.mxu0 0.0
    %3977 = vmatpush.msra.mxu0 0.0
    %3978 = vmatpush.msra.mxu0 0.0
    %3979 = vmatpush.msra.mxu0 0.0
    %3980 = vmatpush.msra.mxu0 0.0
    %3981 = vmatpush.msra.mxu0 %v3780
    %3982 = vmatmul.f32.gmra.mxu0 %v3750
    %v3983 = vpop.f32.mrf.mxu0
    %v3984 = vadd.f32 %v3739, %v3983
    %3985 = vmatmul.f32.gmra.mxu0 %v3753
    %v3986 = vpop.f32.mrf.mxu0
    %v3987 = vadd.f32 %v3739, %v3986
    %3988 = vdwg.mxu0
    %3989 = vmatpush.xpose.msra.mxu0 0.0
    %3990 = vmatpush.xpose.msra.mxu0 0.0
    %3991 = vmatpush.xpose.msra.mxu0 0.0
    %3992 = vmatpush.xpose.msra.mxu0 0.0
    %3993 = vmatpush.xpose.msra.mxu0 0.0
    %3994 = vmatpush.xpose.msra.mxu0 0.0
    %3995 = vmatpush.xpose.msra.mxu0 0.0
    %3996 = vmatpush.xpose.msra.mxu0 0.0
    %3997 = vmatpush.xpose.msra.mxu0 0.0
    %3998 = vmatpush.xpose.msra.mxu0 0.0
    %3999 = vmatpush.xpose.msra.mxu0 0.0
    %4000 = vmatpush.xpose.msra.mxu0 0.0
    %4001 = vmatpush.xpose.msra.mxu0 0.0
    %4002 = vmatpush.xpose.msra.mxu0 0.0
    %4003 = vmatpush.xpose.msra.mxu0 0.0
    %4004 = vmatpush.xpose.msra.mxu0 %v3869
    %4005 = vmatmul.f32.gmra.mxu0 %v3800
    %v4006 = vpop.f32.mrf.mxu0
    %v4007 = vadd.f32 0.0, %v4006
    %4008 = vdwg.mxu0
    %v4009 = vmul.f32 %v4007, 0.70710677
    %v4010 = vadd.f32 %v4009, %v151
    %v4011 = vsel %vm447, %v4010, -inf
    %4012 = vmax.xlane.f32.xlu0 %v4011
    %v4013 = vpop.xlane.xlu0 %4012
    %v4014 = vsub.f32 %v4010, %v4013
    %v4015 = vmul.f32 %v4014, 1.442695
    %v4016 = vpow.pop %v4015
    %v4017 = vsel %vm447, %v4016, 0.0
    %4018 = vadd.xlane.f32.xlu0 %v4017
    %v4019 = vpop.xlane.xlu0 %4018
    %v4020 = vrcp.pop %v4019
    %v4021 = vmul.f32 %v4019, %v4020
    %v4022 = vsub.f32 1.0, %v4021
    %v4023 = vmul.f32 %v4020, %v4022
    %v4024 = vadd.f32 %v4020, %v4023
    %vm4025 = vweird.f32 %v4019
    %vm4026 = vweird.f32 %v4020
    %vm4027 = vmor %vm4025, %vm4026
    %v4028 = vsel %vm4027, %v4020, %v4024
    %v4029 = vand.u32 2147483647, %v4019
    %vm4030 = vcmp.eq.f32.partialorder %v4029, 8.507059e+37
    %v4031 = vand.u32 %v4019, 2147483648
    %v4032 = vor.u32 1.1754944e-38, %v4031
    %v4033 = vsel %vm4030, %v4032, %v4028
    %v4034 = vmul.f32 %v4016, %v4033
    %v4036 = vsel %vm447, %v4034, 0
    %4038 = vmatpush.msra.mxu0 0.0
    %4039 = vmatpush.msra.mxu0 0.0
    %4040 = vmatpush.msra.mxu0 0.0
    %4041 = vmatpush.msra.mxu0 0.0
    %4042 = vmatpush.msra.mxu0 0.0
    %4043 = vmatpush.msra.mxu0 0.0
    %4044 = vmatpush.msra.mxu0 0.0
    %4045 = vmatpush.msra.mxu0 0.0
    %4046 = vmatpush.msra.mxu0 0.0
    %4047 = vmatpush.msra.mxu0 0.0
    %4048 = vmatpush.msra.mxu0 0.0
    %4049 = vmatpush.msra.mxu0 0.0
    %4050 = vmatpush.msra.mxu0 0.0
    %4051 = vmatpush.msra.mxu0 0.0
    %4052 = vmatpush.msra.mxu0 0.0
    %4053 = vmatpush.msra.mxu0 %v3938
    %4054 = vmatmul.f32.gmra.mxu0 %v4036
    %v4055 = vpop.f32.mrf.mxu0
    %v4056 = vadd.f32 0.0, %v4055
    %4057 = vdwg.mxu0
    %4058 = vmatpush.xpose.msra.mxu0 0.0
    %4059 = vmatpush.xpose.msra.mxu0 0.0
    %4060 = vmatpush.xpose.msra.mxu0 0.0
    %4061 = vmatpush.xpose.msra.mxu0 0.0
    %4062 = vmatpush.xpose.msra.mxu0 0.0
    %4063 = vmatpush.xpose.msra.mxu0 0.0
    %4064 = vmatpush.xpose.msra.mxu0 0.0
    %4065 = vmatpush.xpose.msra.mxu0 0.0
    %4066 = vmatpush.xpose.msra.mxu0 0.0
    %4067 = vmatpush.xpose.msra.mxu0 0.0
    %4068 = vmatpush.xpose.msra.mxu0 0.0
    %4069 = vmatpush.xpose.msra.mxu0 0.0
    %4070 = vmatpush.xpose.msra.mxu0 0.0
    %4071 = vmatpush.xpose.msra.mxu0 0.0
    %4072 = vmatpush.xpose.msra.mxu0 0.0
    %4073 = vmatpush.xpose.msra.mxu0 %v3892
    %4074 = vmatmul.f32.gmra.mxu0 %v3823
    %v4075 = vpop.f32.mrf.mxu0
    %v4076 = vadd.f32 0.0, %v4075
    %4077 = vdwg.mxu0
    %v4078 = vmul.f32 %v4076, 0.70710677
    %v4079 = vadd.f32 %v4078, %v151
    %v4080 = vsel %vm447, %v4079, -inf
    %4081 = vmax.xlane.f32.xlu0 %v4080
    %v4082 = vpop.xlane.xlu0 %4081
    %v4083 = vsub.f32 %v4079, %v4082
    %v4084 = vmul.f32 %v4083, 1.442695
    %v4085 = vpow.pop %v4084
    %v4086 = vsel %vm447, %v4085, 0.0
    %4087 = vadd.xlane.f32.xlu0 %v4086
    %v4088 = vpop.xlane.xlu0 %4087
    %v4089 = vrcp.pop %v4088
    %v4090 = vmul.f32 %v4088, %v4089
    %v4091 = vsub.f32 1.0, %v4090
    %v4092 = vmul.f32 %v4089, %v4091
    %v4093 = vadd.f32 %v4089, %v4092
    %vm4094 = vweird.f32 %v4088
    %vm4095 = vweird.f32 %v4089
    %vm4096 = vmor %vm4094, %vm4095
    %v4097 = vsel %vm4096, %v4089, %v4093
    %v4098 = vand.u32 2147483647, %v4088
    %vm4099 = vcmp.eq.f32.partialorder %v4098, 8.507059e+37
    %v4100 = vand.u32 %v4088, 2147483648
    %v4101 = vor.u32 1.1754944e-38, %v4100
    %v4102 = vsel %vm4099, %v4101, %v4097
    %v4103 = vmul.f32 %v4085, %v4102
    %v4105 = vsel %vm447, %v4103, 0
    %4107 = vmatpush.msra.mxu0 0.0
    %4108 = vmatpush.msra.mxu0 0.0
    %4109 = vmatpush.msra.mxu0 0.0
    %4110 = vmatpush.msra.mxu0 0.0
    %4111 = vmatpush.msra.mxu0 0.0
    %4112 = vmatpush.msra.mxu0 0.0
    %4113 = vmatpush.msra.mxu0 0.0
    %4114 = vmatpush.msra.mxu0 0.0
    %4115 = vmatpush.msra.mxu0 0.0
    %4116 = vmatpush.msra.mxu0 0.0
    %4117 = vmatpush.msra.mxu0 0.0
    %4118 = vmatpush.msra.mxu0 0.0
    %4119 = vmatpush.msra.mxu0 0.0
    %4120 = vmatpush.msra.mxu0 0.0
    %4121 = vmatpush.msra.mxu0 0.0
    %4122 = vmatpush.msra.mxu0 %v3961
    %4123 = vmatmul.f32.gmra.mxu0 %v4105
    %v4124 = vpop.f32.mrf.mxu0
    %v4125 = vadd.f32 0.0, %v4124
    %4126 = vdwg.mxu0
    %4127 = vmatpush.xpose.msra.mxu0 0.0
    %4128 = vmatpush.xpose.msra.mxu0 0.0
    %4129 = vmatpush.xpose.msra.mxu0 0.0
    %4130 = vmatpush.xpose.msra.mxu0 0.0
    %4131 = vmatpush.xpose.msra.mxu0 0.0
    %4132 = vmatpush.xpose.msra.mxu0 0.0
    %4133 = vmatpush.xpose.msra.mxu0 0.0
    %4134 = vmatpush.xpose.msra.mxu0 0.0
    %4135 = vmatpush.xpose.msra.mxu0 0.0
    %4136 = vmatpush.xpose.msra.mxu0 0.0
    %4137 = vmatpush.xpose.msra.mxu0 0.0
    %4138 = vmatpush.xpose.msra.mxu0 0.0
    %4139 = vmatpush.xpose.msra.mxu0 0.0
    %4140 = vmatpush.xpose.msra.mxu0 0.0
    %4141 = vmatpush.xpose.msra.mxu0 0.0
    %4142 = vmatpush.xpose.msra.mxu0 %v3915
    %4143 = vmatmul.f32.gmra.mxu0 %v3846
    %v4144 = vpop.f32.mrf.mxu0
    %v4145 = vadd.f32 0.0, %v4144
    %4146 = vdwg.mxu0
    %v4147 = vmul.f32 %v4145, 0.70710677
    %v4148 = vadd.f32 %v4147, %v151
    %v4149 = vsel %vm447, %v4148, -inf
    %4150 = vmax.xlane.f32.xlu0 %v4149
    %v4151 = vpop.xlane.xlu0 %4150
    %v4152 = vsub.f32 %v4148, %v4151
    %v4153 = vmul.f32 %v4152, 1.442695
    %v4154 = vpow.pop %v4153
    %v4155 = vsel %vm447, %v4154, 0.0
    %4156 = vadd.xlane.f32.xlu0 %v4155
    %v4157 = vpop.xlane.xlu0 %4156
    %v4158 = vrcp.pop %v4157
    %v4159 = vmul.f32 %v4157, %v4158
    %v4160 = vsub.f32 1.0, %v4159
    %v4161 = vmul.f32 %v4158, %v4160
    %v4162 = vadd.f32 %v4158, %v4161
    %vm4163 = vweird.f32 %v4157
    %vm4164 = vweird.f32 %v4158
    %vm4165 = vmor %vm4163, %vm4164
    %v4166 = vsel %vm4165, %v4158, %v4162
    %v4167 = vand.u32 2147483647, %v4157
    %vm4168 = vcmp.eq.f32.partialorder %v4167, 8.507059e+37
    %v4169 = vand.u32 %v4157, 2147483648
    %v4170 = vor.u32 1.1754944e-38, %v4169
    %v4171 = vsel %vm4168, %v4170, %v4166
    %v4172 = vmul.f32 %v4154, %v4171
    %v4174 = vsel %vm447, %v4172, 0
    %4176 = vmatpush.msra.mxu0 0.0
    %4177 = vmatpush.msra.mxu0 0.0
    %4178 = vmatpush.msra.mxu0 0.0
    %4179 = vmatpush.msra.mxu0 0.0
    %4180 = vmatpush.msra.mxu0 0.0
    %4181 = vmatpush.msra.mxu0 0.0
    %4182 = vmatpush.msra.mxu0 0.0
    %4183 = vmatpush.msra.mxu0 0.0
    %4184 = vmatpush.msra.mxu0 0.0
    %4185 = vmatpush.msra.mxu0 0.0
    %4186 = vmatpush.msra.mxu0 0.0
    %4187 = vmatpush.msra.mxu0 0.0
    %4188 = vmatpush.msra.mxu0 0.0
    %4189 = vmatpush.msra.mxu0 0.0
    %4190 = vmatpush.msra.mxu0 0.0
    %4191 = vmatpush.msra.mxu0 %v3984
    %4192 = vmatmul.f32.gmra.mxu0 %v4174
    %v4193 = vpop.f32.mrf.mxu0
    %v4194 = vadd.f32 0.0, %v4193
    %4195 = vdwg.mxu0
    %4196 = vmatpush.xpose.msra.mxu0 0.0
    %4197 = vmatpush.xpose.msra.mxu0 0.0
    %4198 = vmatpush.xpose.msra.mxu0 0.0
    %4199 = vmatpush.xpose.msra.mxu0 0.0
    %4200 = vmatpush.xpose.msra.mxu0 0.0
    %4201 = vmatpush.xpose.msra.mxu0 0.0
    %4202 = vmatpush.xpose.msra.mxu0 0.0
    %4203 = vmatpush.xpose.msra.mxu0 0.0
    %4204 = vmatpush.xpose.msra.mxu0 0.0
    %4205 = vmatpush.xpose.msra.mxu0 0.0
    %4206 = vmatpush.xpose.msra.mxu0 0.0
    %4207 = vmatpush.xpose.msra.mxu0 0.0
    %4208 = vmatpush.xpose.msra.mxu0 0.0
    %4209 = vmatpush.xpose.msra.mxu0 0.0
    %4210 = vmatpush.xpose.msra.mxu0 0.0
    %4211 = vmatpush.xpose.msra.mxu0 %v3872
    %4212 = vmatmul.f32.gmra.mxu0 %v3803
    %v4213 = vpop.f32.mrf.mxu0
    %v4214 = vadd.f32 0.0, %v4213
    %4215 = vdwg.mxu0
    %v4216 = vmul.f32 %v4214, 0.70710677
    %v4217 = vadd.f32 %v4216, %v151
    %v4218 = vsel %vm447, %v4217, -inf
    %4219 = vmax.xlane.f32.xlu0 %v4218
    %v4220 = vpop.xlane.xlu0 %4219
    %v4221 = vsub.f32 %v4217, %v4220
    %v4222 = vmul.f32 %v4221, 1.442695
    %v4223 = vpow.pop %v4222
    %v4224 = vsel %vm447, %v4223, 0.0
    %4225 = vadd.xlane.f32.xlu0 %v4224
    %v4226 = vpop.xlane.xlu0 %4225
    %v4227 = vrcp.pop %v4226
    %v4228 = vmul.f32 %v4226, %v4227
    %v4229 = vsub.f32 1.0, %v4228
    %v4230 = vmul.f32 %v4227, %v4229
    %v4231 = vadd.f32 %v4227, %v4230
    %vm4232 = vweird.f32 %v4226
    %vm4233 = vweird.f32 %v4227
    %vm4234 = vmor %vm4232, %vm4233
    %v4235 = vsel %vm4234, %v4227, %v4231
    %v4236 = vand.u32 2147483647, %v4226
    %vm4237 = vcmp.eq.f32.partialorder %v4236, 8.507059e+37
    %v4238 = vand.u32 %v4226, 2147483648
    %v4239 = vor.u32 1.1754944e-38, %v4238
    %v4240 = vsel %vm4237, %v4239, %v4235
    %v4241 = vmul.f32 %v4223, %v4240
    %v4243 = vsel %vm447, %v4241, 0
    %4245 = vmatpush.msra.mxu0 0.0
    %4246 = vmatpush.msra.mxu0 0.0
    %4247 = vmatpush.msra.mxu0 0.0
    %4248 = vmatpush.msra.mxu0 0.0
    %4249 = vmatpush.msra.mxu0 0.0
    %4250 = vmatpush.msra.mxu0 0.0
    %4251 = vmatpush.msra.mxu0 0.0
    %4252 = vmatpush.msra.mxu0 0.0
    %4253 = vmatpush.msra.mxu0 0.0
    %4254 = vmatpush.msra.mxu0 0.0
    %4255 = vmatpush.msra.mxu0 0.0
    %4256 = vmatpush.msra.mxu0 0.0
    %4257 = vmatpush.msra.mxu0 0.0
    %4258 = vmatpush.msra.mxu0 0.0
    %4259 = vmatpush.msra.mxu0 0.0
    %4260 = vmatpush.msra.mxu0 %v3941
    %4261 = vmatmul.f32.gmra.mxu0 %v4243
    %v4262 = vpop.f32.mrf.mxu0
    %v4263 = vadd.f32 0.0, %v4262
    %4264 = vdwg.mxu0
    %4265 = vmatpush.xpose.msra.mxu0 0.0
    %4266 = vmatpush.xpose.msra.mxu0 0.0
    %4267 = vmatpush.xpose.msra.mxu0 0.0
    %4268 = vmatpush.xpose.msra.mxu0 0.0
    %4269 = vmatpush.xpose.msra.mxu0 0.0
    %4270 = vmatpush.xpose.msra.mxu0 0.0
    %4271 = vmatpush.xpose.msra.mxu0 0.0
    %4272 = vmatpush.xpose.msra.mxu0 0.0
    %4273 = vmatpush.xpose.msra.mxu0 0.0
    %4274 = vmatpush.xpose.msra.mxu0 0.0
    %4275 = vmatpush.xpose.msra.mxu0 0.0
    %4276 = vmatpush.xpose.msra.mxu0 0.0
    %4277 = vmatpush.xpose.msra.mxu0 0.0
    %4278 = vmatpush.xpose.msra.mxu0 0.0
    %4279 = vmatpush.xpose.msra.mxu0 0.0
    %4280 = vmatpush.xpose.msra.mxu0 %v3895
    %4281 = vmatmul.f32.gmra.mxu0 %v3826
    %v4282 = vpop.f32.mrf.mxu0
    %v4283 = vadd.f32 0.0, %v4282
    %4284 = vdwg.mxu0
    %v4285 = vmul.f32 %v4283, 0.70710677
    %v4286 = vadd.f32 %v4285, %v151
    %v4287 = vsel %vm447, %v4286, -inf
    %4288 = vmax.xlane.f32.xlu0 %v4287
    %v4289 = vpop.xlane.xlu0 %4288
    %v4290 = vsub.f32 %v4286, %v4289
    %v4291 = vmul.f32 %v4290, 1.442695
    %v4292 = vpow.pop %v4291
    %v4293 = vsel %vm447, %v4292, 0.0
    %4294 = vadd.xlane.f32.xlu0 %v4293
    %v4295 = vpop.xlane.xlu0 %4294
    %v4296 = vrcp.pop %v4295
    %v4297 = vmul.f32 %v4295, %v4296
    %v4298 = vsub.f32 1.0, %v4297
    %v4299 = vmul.f32 %v4296, %v4298
    %v4300 = vadd.f32 %v4296, %v4299
    %vm4301 = vweird.f32 %v4295
    %vm4302 = vweird.f32 %v4296
    %vm4303 = vmor %vm4301, %vm4302
    %v4304 = vsel %vm4303, %v4296, %v4300
    %v4305 = vand.u32 2147483647, %v4295
    %vm4306 = vcmp.eq.f32.partialorder %v4305, 8.507059e+37
    %v4307 = vand.u32 %v4295, 2147483648
    %v4308 = vor.u32 1.1754944e-38, %v4307
    %v4309 = vsel %vm4306, %v4308, %v4304
    %v4310 = vmul.f32 %v4292, %v4309
    %v4312 = vsel %vm447, %v4310, 0
    %4314 = vmatpush.msra.mxu0 0.0
    %4315 = vmatpush.msra.mxu0 0.0
    %4316 = vmatpush.msra.mxu0 0.0
    %4317 = vmatpush.msra.mxu0 0.0
    %4318 = vmatpush.msra.mxu0 0.0
    %4319 = vmatpush.msra.mxu0 0.0
    %4320 = vmatpush.msra.mxu0 0.0
    %4321 = vmatpush.msra.mxu0 0.0
    %4322 = vmatpush.msra.mxu0 0.0
    %4323 = vmatpush.msra.mxu0 0.0
    %4324 = vmatpush.msra.mxu0 0.0
    %4325 = vmatpush.msra.mxu0 0.0
    %4326 = vmatpush.msra.mxu0 0.0
    %4327 = vmatpush.msra.mxu0 0.0
    %4328 = vmatpush.msra.mxu0 0.0
    %4329 = vmatpush.msra.mxu0 %v3964
    %4330 = vmatmul.f32.gmra.mxu0 %v4312
    %v4331 = vpop.f32.mrf.mxu0
    %v4332 = vadd.f32 0.0, %v4331
    %4333 = vdwg.mxu0
    %4334 = vmatpush.xpose.msra.mxu0 0.0
    %4335 = vmatpush.xpose.msra.mxu0 0.0
    %4336 = vmatpush.xpose.msra.mxu0 0.0
    %4337 = vmatpush.xpose.msra.mxu0 0.0
    %4338 = vmatpush.xpose.msra.mxu0 0.0
    %4339 = vmatpush.xpose.msra.mxu0 0.0
    %4340 = vmatpush.xpose.msra.mxu0 0.0
    %4341 = vmatpush.xpose.msra.mxu0 0.0
    %4342 = vmatpush.xpose.msra.mxu0 0.0
    %4343 = vmatpush.xpose.msra.mxu0 0.0
    %4344 = vmatpush.xpose.msra.mxu0 0.0
    %4345 = vmatpush.xpose.msra.mxu0 0.0
    %4346 = vmatpush.xpose.msra.mxu0 0.0
    %4347 = vmatpush.xpose.msra.mxu0 0.0
    %4348 = vmatpush.xpose.msra.mxu0 0.0
    %4349 = vmatpush.xpose.msra.mxu0 %v3918
    %4350 = vmatmul.f32.gmra.mxu0 %v3849
    %v4351 = vpop.f32.mrf.mxu0
    %v4352 = vadd.f32 0.0, %v4351
    %4353 = vdwg.mxu0
    %v4354 = vmul.f32 %v4352, 0.70710677
    %v4355 = vadd.f32 %v4354, %v151
    %v4356 = vsel %vm447, %v4355, -inf
    %4357 = vmax.xlane.f32.xlu0 %v4356
    %v4358 = vpop.xlane.xlu0 %4357
    %v4359 = vsub.f32 %v4355, %v4358
    %v4360 = vmul.f32 %v4359, 1.442695
    %v4361 = vpow.pop %v4360
    %v4362 = vsel %vm447, %v4361, 0.0
    %4363 = vadd.xlane.f32.xlu0 %v4362
    %v4364 = vpop.xlane.xlu0 %4363
    %v4365 = vrcp.pop %v4364
    %v4366 = vmul.f32 %v4364, %v4365
    %v4367 = vsub.f32 1.0, %v4366
    %v4368 = vmul.f32 %v4365, %v4367
    %v4369 = vadd.f32 %v4365, %v4368
    %vm4370 = vweird.f32 %v4364
    %vm4371 = vweird.f32 %v4365
    %vm4372 = vmor %vm4370, %vm4371
    %v4373 = vsel %vm4372, %v4365, %v4369
    %v4374 = vand.u32 2147483647, %v4364
    %vm4375 = vcmp.eq.f32.partialorder %v4374, 8.507059e+37
    %v4376 = vand.u32 %v4364, 2147483648
    %v4377 = vor.u32 1.1754944e-38, %v4376
    %v4378 = vsel %vm4375, %v4377, %v4373
    %v4379 = vmul.f32 %v4361, %v4378
    %v4381 = vsel %vm447, %v4379, 0
    %4383 = vmatpush.msra.mxu0 0.0
    %4384 = vmatpush.msra.mxu0 0.0
    %4385 = vmatpush.msra.mxu0 0.0
    %4386 = vmatpush.msra.mxu0 0.0
    %4387 = vmatpush.msra.mxu0 0.0
    %4388 = vmatpush.msra.mxu0 0.0
    %4389 = vmatpush.msra.mxu0 0.0
    %4390 = vmatpush.msra.mxu0 0.0
    %4391 = vmatpush.msra.mxu0 0.0
    %4392 = vmatpush.msra.mxu0 0.0
    %4393 = vmatpush.msra.mxu0 0.0
    %4394 = vmatpush.msra.mxu0 0.0
    %4395 = vmatpush.msra.mxu0 0.0
    %4396 = vmatpush.msra.mxu0 0.0
    %4397 = vmatpush.msra.mxu0 0.0
    %4398 = vmatpush.msra.mxu0 %v3987
    %4399 = vmatmul.f32.gmra.mxu0 %v4381
    %v4400 = vpop.f32.mrf.mxu0
    %v4401 = vadd.f32 0.0, %v4400
    %4402 = vdwg.mxu0
    %s4403 = scalar_lea.vmem [#allocation6], 48
    %v4404 = vld [vmem:[%s4403] sm:$0x3f]
    %v4405 = vld [vmem:[%s4403 + $0x8] sm:$0x3f]
    %v4406 = vld [vmem:[%s4403 + $0x10] sm:$0x3f]
    %s4407 = scalar_lea.vmem %s4, 2
    %v4408 = vld [vmem:[%s4407] sm:$0x1]
    %v4410 = vperm.slane %v4408, 0
    %4412 = vmatpush.xpose.msra.mxu0 0.0
    %4413 = vmatpush.xpose.msra.mxu0 0.0
    %4414 = vmatpush.xpose.msra.mxu0 0.0
    %4415 = vmatpush.xpose.msra.mxu0 0.0
    %4416 = vmatpush.xpose.msra.mxu0 0.0
    %4417 = vmatpush.xpose.msra.mxu0 0.0
    %4418 = vmatpush.xpose.msra.mxu0 0.0
    %4419 = vmatpush.xpose.msra.mxu0 0.0
    %4420 = vmatpush.xpose.msra.mxu0 0.0
    %4421 = vmatpush.xpose.msra.mxu0 0.0
    %4422 = vmatpush.xpose.msra.mxu0 0.0
    %4423 = vmatpush.xpose.msra.mxu0 0.0
    %4424 = vmatpush.xpose.msra.mxu0 0.0
    %4425 = vmatpush.xpose.msra.mxu0 0.0
    %4426 = vmatpush.xpose.msra.mxu0 0.0
    %4427 = vmatpush.xpose.msra.mxu0 %v4404
    %4428 = vmatmul.f32.gmra.mxu0 %v4056
    %v4429 = vpop.f32.mrf.mxu0
    %v4430 = vadd.f32 %v4410, %v4429
    %4431 = vmatmul.f32.gmra.mxu0 %v4263
    %v4432 = vpop.f32.mrf.mxu0
    %v4433 = vadd.f32 %v4410, %v4432
    %4434 = vdwg.mxu0
    %4435 = vmatpush.xpose.msra.mxu0 0.0
    %4436 = vmatpush.xpose.msra.mxu0 0.0
    %4437 = vmatpush.xpose.msra.mxu0 0.0
    %4438 = vmatpush.xpose.msra.mxu0 0.0
    %4439 = vmatpush.xpose.msra.mxu0 0.0
    %4440 = vmatpush.xpose.msra.mxu0 0.0
    %4441 = vmatpush.xpose.msra.mxu0 0.0
    %4442 = vmatpush.xpose.msra.mxu0 0.0
    %4443 = vmatpush.xpose.msra.mxu0 0.0
    %4444 = vmatpush.xpose.msra.mxu0 0.0
    %4445 = vmatpush.xpose.msra.mxu0 0.0
    %4446 = vmatpush.xpose.msra.mxu0 0.0
    %4447 = vmatpush.xpose.msra.mxu0 0.0
    %4448 = vmatpush.xpose.msra.mxu0 0.0
    %4449 = vmatpush.xpose.msra.mxu0 0.0
    %4450 = vmatpush.xpose.msra.mxu0 %v4405
    %4451 = vmatmul.f32.gmra.mxu0 %v4125
    %v4452 = vpop.f32.mrf.mxu0
    %v4453 = vadd.f32 %v4430, %v4452
    %4454 = vmatmul.f32.gmra.mxu0 %v4332
    %v4455 = vpop.f32.mrf.mxu0
    %v4456 = vadd.f32 %v4433, %v4455
    %4457 = vdwg.mxu0
    %4458 = vmatpush.xpose.msra.mxu0 0.0
    %4459 = vmatpush.xpose.msra.mxu0 0.0
    %4460 = vmatpush.xpose.msra.mxu0 0.0
    %4461 = vmatpush.xpose.msra.mxu0 0.0
    %4462 = vmatpush.xpose.msra.mxu0 0.0
    %4463 = vmatpush.xpose.msra.mxu0 0.0
    %4464 = vmatpush.xpose.msra.mxu0 0.0
    %4465 = vmatpush.xpose.msra.mxu0 0.0
    %4466 = vmatpush.xpose.msra.mxu0 0.0
    %4467 = vmatpush.xpose.msra.mxu0 0.0
    %4468 = vmatpush.xpose.msra.mxu0 0.0
    %4469 = vmatpush.xpose.msra.mxu0 0.0
    %4470 = vmatpush.xpose.msra.mxu0 0.0
    %4471 = vmatpush.xpose.msra.mxu0 0.0
    %4472 = vmatpush.xpose.msra.mxu0 0.0
    %4473 = vmatpush.xpose.msra.mxu0 %v4406
    %4474 = vmatmul.f32.gmra.mxu0 %v4194
    %v4475 = vpop.f32.mrf.mxu0
    %v4476 = vadd.f32 %v4453, %v4475
    %4477 = vmatmul.f32.gmra.mxu0 %v4401
    %v4478 = vpop.f32.mrf.mxu0
    %v4479 = vadd.f32 %v4456, %v4478
    %4480 = vdwg.mxu0
    %v4481 = vadd.f32 %v3714, %v4476
    %v4482 = vadd.f32 %v3715, %v4479
    %s4483 = scalar_lea.vmem %s5, 2
    %v4484 = vld [vmem:[%s4483] sm:$0x1]
    %s4485 = scalar_lea.vmem %s6, 2
    %v4486 = vld [vmem:[%s4485] sm:$0x1]
    %v4487 = vsel %vm183, %v4481, 0.0
    %4488 = vadd.xlane.f32.xlu0 %v4487
    %v4489 = vpop.xlane.xlu0 %4488
    %v4490 = vsel %vm183, %v4482, 0.0
    %4491 = vadd.xlane.f32.xlu0 %v4490
    %v4492 = vpop.xlane.xlu0 %4491
    %v4493 = vmul.f32 %v4489, %v932
    %v4494 = vmul.f32 %v4492, %v932
    %v4495 = vsub.f32 %v4481, %v4493
    %v4496 = vsub.f32 %v4482, %v4494
    %v4497 = vmul.f32 %v4495, %v4495
    %v4498 = vmul.f32 %v4496, %v4496
    %v4499 = vsel %vm183, %v4497, 0.0
    %4500 = vadd.xlane.f32.xlu0 %v4499
    %v4501 = vpop.xlane.xlu0 %4500
    %v4502 = vsel %vm183, %v4498, 0.0
    %4503 = vadd.xlane.f32.xlu0 %v4502
    %v4504 = vpop.xlane.xlu0 %4503
    %v4505 = vmul.f32 %v4501, %v932
    %v4506 = vmul.f32 %v4504, %v932
    %v4507 = vadd.f32 %v4505, 1e-05
    %v4508 = vadd.f32 %v4506, 1e-05
    %v4509 = vrsqrt.pop %v4507
    %v4510 = vmul.f32 %v4509, %v4507
    %v4511 = vmul.f32 %v4510, %v4509
    %v4512 = vmul.f32 0.5, %v4511
    %v4513 = vsub.f32 1.5, %v4512
    %v4514 = vmul.f32 %v4509, %v4513
    %vm4515 = vweird.f32 %v4507
    %vm4516 = vweird.f32 %v4509
    %vm4517 = vmor %vm4515, %vm4516
    %v4518 = vsel %vm4517, %v4509, %v4514
    %v4519 = vrsqrt.pop %v4508
    %v4520 = vmul.f32 %v4519, %v4508
    %v4521 = vmul.f32 %v4520, %v4519
    %v4522 = vmul.f32 0.5, %v4521
    %v4523 = vsub.f32 1.5, %v4522
    %v4524 = vmul.f32 %v4519, %v4523
    %vm4525 = vweird.f32 %v4508
    %vm4526 = vweird.f32 %v4519
    %vm4527 = vmor %vm4525, %vm4526
    %v4528 = vsel %vm4527, %v4519, %v4524
    %v4529 = vmul.f32 %v4495, %v4518
    %v4530 = vmul.f32 %v4496, %v4528
    %v4532 = vperm.slane %v4484, 0
    %v4534 = vmul.f32 %v4529, %v4532
    %v4535 = vmul.f32 %v4530, %v4532
    %v4537 = vperm.slane %v4486, 0
    %v4539 = vadd.f32 %v4534, %v4537
    %v4540 = vadd.f32 %v4535, %v4537
    %s4541 = scalar_lea.vmem [#allocation7], 256
    %v4542 = vld [vmem:[%s4541] sm:$0x3f]
    %v4543 = vld [vmem:[%s4541 + $0x8] sm:$0x3f]
    %v4544 = vld [vmem:[%s4541 + $0x10] sm:$0x3f]
    %v4545 = vld [vmem:[%s4541 + $0x18] sm:$0x3f]
    %v4546 = vld [vmem:[%s4541 + $0x20] sm:$0x3f]
    %v4547 = vld [vmem:[%s4541 + $0x28] sm:$0x3f]
    %v4548 = vld [vmem:[%s4541 + $0x30] sm:$0x3f]
    %v4549 = vld [vmem:[%s4541 + $0x38] sm:$0x3f]
    %v4550 = vld [vmem:[%s4541 + $0x40] sm:$0x3f]
    %v4551 = vld [vmem:[%s4541 + $0x48] sm:$0x3f]
    %v4552 = vld [vmem:[%s4541 + $0x50] sm:$0x3f]
    %v4553 = vld [vmem:[%s4541 + $0x58] sm:$0x3f]
    %v4554 = vld [vmem:[%s4541 + $0x60] sm:$0x3f]
    %v4555 = vld [vmem:[%s4541 + $0x68] sm:$0x3f]
    %v4556 = vld [vmem:[%s4541 + $0x70] sm:$0x3f]
    %v4557 = vld [vmem:[%s4541 + $0x78] sm:$0x3f]
    %s4558 = scalar_lea.vmem [#allocation9], 32
    %v4559 = vld [vmem:[%s4558] sm:$0xff]
    %v4560 = vld [vmem:[%s4558 + $0x8] sm:$0xff]
    %v4563 = vperm.slane %v4559, 0
    %v4564 = vperm.slane %v4559, 1
    %v4565 = vperm.slane %v4559, 2
    %v4566 = vperm.slane %v4559, 3
    %v4567 = vperm.slane %v4559, 4
    %v4568 = vperm.slane %v4559, 5
    %v4569 = vperm.slane %v4559, 6
    %v4570 = vperm.slane %v4559, 7
    %v4571 = vperm.slane %v4560, 0
    %v4572 = vperm.slane %v4560, 1
    %v4573 = vperm.slane %v4560, 2
    %v4574 = vperm.slane %v4560, 3
    %v4575 = vperm.slane %v4560, 4
    %v4576 = vperm.slane %v4560, 5
    %v4577 = vperm.slane %v4560, 6
    %v4578 = vperm.slane %v4560, 7
    %v4596 = vsel %vm183, %v4539, 0
    %v4599 = vsel %vm183, %v4540, 0
    %v4602 = vsel %vm190, %v4542, 0
    %v4605 = vsel %vm190, %v4543, 0
    %v4608 = vsel %vm190, %v4544, 0
    %v4611 = vsel %vm190, %v4545, 0
    %v4614 = vsel %vm190, %v4546, 0
    %v4617 = vsel %vm190, %v4547, 0
    %v4620 = vsel %vm190, %v4548, 0
    %v4623 = vsel %vm190, %v4549, 0
    %v4626 = vsel %vm190, %v4550, 0
    %v4629 = vsel %vm190, %v4551, 0
    %v4632 = vsel %vm190, %v4552, 0
    %v4635 = vsel %vm190, %v4553, 0
    %v4638 = vsel %vm190, %v4554, 0
    %v4641 = vsel %vm190, %v4555, 0
    %v4644 = vsel %vm190, %v4556, 0
    %v4647 = vsel %vm190, %v4557, 0
    %4649 = vmatpush.msra.mxu0 0.0
    %4650 = vmatpush.msra.mxu0 0.0
    %4651 = vmatpush.msra.mxu0 0.0
    %4652 = vmatpush.msra.mxu0 0.0
    %4653 = vmatpush.msra.mxu0 0.0
    %4654 = vmatpush.msra.mxu0 0.0
    %4655 = vmatpush.msra.mxu0 0.0
    %4656 = vmatpush.msra.mxu0 0.0
    %4657 = vmatpush.msra.mxu0 0.0
    %4658 = vmatpush.msra.mxu0 0.0
    %4659 = vmatpush.msra.mxu0 0.0
    %4660 = vmatpush.msra.mxu0 0.0
    %4661 = vmatpush.msra.mxu0 0.0
    %4662 = vmatpush.msra.mxu0 0.0
    %4663 = vmatpush.msra.mxu0 0.0
    %4664 = vmatpush.msra.mxu0 %v4602
    %4665 = vmatmul.f32.gmra.mxu0 %v4596
    %v4666 = vpop.f32.mrf.mxu0
    %v4667 = vadd.f32 %v4563, %v4666
    %4668 = vmatmul.f32.gmra.mxu0 %v4599
    %v4669 = vpop.f32.mrf.mxu0
    %v4670 = vadd.f32 %v4563, %v4669
    %4671 = vdwg.mxu0
    %4672 = vmatpush.msra.mxu0 0.0
    %4673 = vmatpush.msra.mxu0 0.0
    %4674 = vmatpush.msra.mxu0 0.0
    %4675 = vmatpush.msra.mxu0 0.0
    %4676 = vmatpush.msra.mxu0 0.0
    %4677 = vmatpush.msra.mxu0 0.0
    %4678 = vmatpush.msra.mxu0 0.0
    %4679 = vmatpush.msra.mxu0 0.0
    %4680 = vmatpush.msra.mxu0 0.0
    %4681 = vmatpush.msra.mxu0 0.0
    %4682 = vmatpush.msra.mxu0 0.0
    %4683 = vmatpush.msra.mxu0 0.0
    %4684 = vmatpush.msra.mxu0 0.0
    %4685 = vmatpush.msra.mxu0 0.0
    %4686 = vmatpush.msra.mxu0 0.0
    %4687 = vmatpush.msra.mxu0 %v4605
    %4688 = vmatmul.f32.gmra.mxu0 %v4596
    %v4689 = vpop.f32.mrf.mxu0
    %v4690 = vadd.f32 %v4564, %v4689
    %4691 = vmatmul.f32.gmra.mxu0 %v4599
    %v4692 = vpop.f32.mrf.mxu0
    %v4693 = vadd.f32 %v4564, %v4692
    %4694 = vdwg.mxu0
    %4695 = vmatpush.msra.mxu0 0.0
    %4696 = vmatpush.msra.mxu0 0.0
    %4697 = vmatpush.msra.mxu0 0.0
    %4698 = vmatpush.msra.mxu0 0.0
    %4699 = vmatpush.msra.mxu0 0.0
    %4700 = vmatpush.msra.mxu0 0.0
    %4701 = vmatpush.msra.mxu0 0.0
    %4702 = vmatpush.msra.mxu0 0.0
    %4703 = vmatpush.msra.mxu0 0.0
    %4704 = vmatpush.msra.mxu0 0.0
    %4705 = vmatpush.msra.mxu0 0.0
    %4706 = vmatpush.msra.mxu0 0.0
    %4707 = vmatpush.msra.mxu0 0.0
    %4708 = vmatpush.msra.mxu0 0.0
    %4709 = vmatpush.msra.mxu0 0.0
    %4710 = vmatpush.msra.mxu0 %v4608
    %4711 = vmatmul.f32.gmra.mxu0 %v4596
    %v4712 = vpop.f32.mrf.mxu0
    %v4713 = vadd.f32 %v4565, %v4712
    %4714 = vmatmul.f32.gmra.mxu0 %v4599
    %v4715 = vpop.f32.mrf.mxu0
    %v4716 = vadd.f32 %v4565, %v4715
    %4717 = vdwg.mxu0
    %4718 = vmatpush.msra.mxu0 0.0
    %4719 = vmatpush.msra.mxu0 0.0
    %4720 = vmatpush.msra.mxu0 0.0
    %4721 = vmatpush.msra.mxu0 0.0
    %4722 = vmatpush.msra.mxu0 0.0
    %4723 = vmatpush.msra.mxu0 0.0
    %4724 = vmatpush.msra.mxu0 0.0
    %4725 = vmatpush.msra.mxu0 0.0
    %4726 = vmatpush.msra.mxu0 0.0
    %4727 = vmatpush.msra.mxu0 0.0
    %4728 = vmatpush.msra.mxu0 0.0
    %4729 = vmatpush.msra.mxu0 0.0
    %4730 = vmatpush.msra.mxu0 0.0
    %4731 = vmatpush.msra.mxu0 0.0
    %4732 = vmatpush.msra.mxu0 0.0
    %4733 = vmatpush.msra.mxu0 %v4611
    %4734 = vmatmul.f32.gmra.mxu0 %v4596
    %v4735 = vpop.f32.mrf.mxu0
    %v4736 = vadd.f32 %v4566, %v4735
    %4737 = vmatmul.f32.gmra.mxu0 %v4599
    %v4738 = vpop.f32.mrf.mxu0
    %v4739 = vadd.f32 %v4566, %v4738
    %4740 = vdwg.mxu0
    %4741 = vmatpush.msra.mxu0 0.0
    %4742 = vmatpush.msra.mxu0 0.0
    %4743 = vmatpush.msra.mxu0 0.0
    %4744 = vmatpush.msra.mxu0 0.0
    %4745 = vmatpush.msra.mxu0 0.0
    %4746 = vmatpush.msra.mxu0 0.0
    %4747 = vmatpush.msra.mxu0 0.0
    %4748 = vmatpush.msra.mxu0 0.0
    %4749 = vmatpush.msra.mxu0 0.0
    %4750 = vmatpush.msra.mxu0 0.0
    %4751 = vmatpush.msra.mxu0 0.0
    %4752 = vmatpush.msra.mxu0 0.0
    %4753 = vmatpush.msra.mxu0 0.0
    %4754 = vmatpush.msra.mxu0 0.0
    %4755 = vmatpush.msra.mxu0 0.0
    %4756 = vmatpush.msra.mxu0 %v4614
    %4757 = vmatmul.f32.gmra.mxu0 %v4596
    %v4758 = vpop.f32.mrf.mxu0
    %v4759 = vadd.f32 %v4567, %v4758
    %4760 = vmatmul.f32.gmra.mxu0 %v4599
    %v4761 = vpop.f32.mrf.mxu0
    %v4762 = vadd.f32 %v4567, %v4761
    %4763 = vdwg.mxu0
    %4764 = vmatpush.msra.mxu0 0.0
    %4765 = vmatpush.msra.mxu0 0.0
    %4766 = vmatpush.msra.mxu0 0.0
    %4767 = vmatpush.msra.mxu0 0.0
    %4768 = vmatpush.msra.mxu0 0.0
    %4769 = vmatpush.msra.mxu0 0.0
    %4770 = vmatpush.msra.mxu0 0.0
    %4771 = vmatpush.msra.mxu0 0.0
    %4772 = vmatpush.msra.mxu0 0.0
    %4773 = vmatpush.msra.mxu0 0.0
    %4774 = vmatpush.msra.mxu0 0.0
    %4775 = vmatpush.msra.mxu0 0.0
    %4776 = vmatpush.msra.mxu0 0.0
    %4777 = vmatpush.msra.mxu0 0.0
    %4778 = vmatpush.msra.mxu0 0.0
    %4779 = vmatpush.msra.mxu0 %v4617
    %4780 = vmatmul.f32.gmra.mxu0 %v4596
    %v4781 = vpop.f32.mrf.mxu0
    %v4782 = vadd.f32 %v4568, %v4781
    %4783 = vmatmul.f32.gmra.mxu0 %v4599
    %v4784 = vpop.f32.mrf.mxu0
    %v4785 = vadd.f32 %v4568, %v4784
    %4786 = vdwg.mxu0
    %4787 = vmatpush.msra.mxu0 0.0
    %4788 = vmatpush.msra.mxu0 0.0
    %4789 = vmatpush.msra.mxu0 0.0
    %4790 = vmatpush.msra.mxu0 0.0
    %4791 = vmatpush.msra.mxu0 0.0
    %4792 = vmatpush.msra.mxu0 0.0
    %4793 = vmatpush.msra.mxu0 0.0
    %4794 = vmatpush.msra.mxu0 0.0
    %4795 = vmatpush.msra.mxu0 0.0
    %4796 = vmatpush.msra.mxu0 0.0
    %4797 = vmatpush.msra.mxu0 0.0
    %4798 = vmatpush.msra.mxu0 0.0
    %4799 = vmatpush.msra.mxu0 0.0
    %4800 = vmatpush.msra.mxu0 0.0
    %4801 = vmatpush.msra.mxu0 0.0
    %4802 = vmatpush.msra.mxu0 %v4620
    %4803 = vmatmul.f32.gmra.mxu0 %v4596
    %v4804 = vpop.f32.mrf.mxu0
    %v4805 = vadd.f32 %v4569, %v4804
    %4806 = vmatmul.f32.gmra.mxu0 %v4599
    %v4807 = vpop.f32.mrf.mxu0
    %v4808 = vadd.f32 %v4569, %v4807
    %4809 = vdwg.mxu0
    %4810 = vmatpush.msra.mxu0 0.0
    %4811 = vmatpush.msra.mxu0 0.0
    %4812 = vmatpush.msra.mxu0 0.0
    %4813 = vmatpush.msra.mxu0 0.0
    %4814 = vmatpush.msra.mxu0 0.0
    %4815 = vmatpush.msra.mxu0 0.0
    %4816 = vmatpush.msra.mxu0 0.0
    %4817 = vmatpush.msra.mxu0 0.0
    %4818 = vmatpush.msra.mxu0 0.0
    %4819 = vmatpush.msra.mxu0 0.0
    %4820 = vmatpush.msra.mxu0 0.0
    %4821 = vmatpush.msra.mxu0 0.0
    %4822 = vmatpush.msra.mxu0 0.0
    %4823 = vmatpush.msra.mxu0 0.0
    %4824 = vmatpush.msra.mxu0 0.0
    %4825 = vmatpush.msra.mxu0 %v4623
    %4826 = vmatmul.f32.gmra.mxu0 %v4596
    %v4827 = vpop.f32.mrf.mxu0
    %v4828 = vadd.f32 %v4570, %v4827
    %4829 = vmatmul.f32.gmra.mxu0 %v4599
    %v4830 = vpop.f32.mrf.mxu0
    %v4831 = vadd.f32 %v4570, %v4830
    %4832 = vdwg.mxu0
    %4833 = vmatpush.msra.mxu0 0.0
    %4834 = vmatpush.msra.mxu0 0.0
    %4835 = vmatpush.msra.mxu0 0.0
    %4836 = vmatpush.msra.mxu0 0.0
    %4837 = vmatpush.msra.mxu0 0.0
    %4838 = vmatpush.msra.mxu0 0.0
    %4839 = vmatpush.msra.mxu0 0.0
    %4840 = vmatpush.msra.mxu0 0.0
    %4841 = vmatpush.msra.mxu0 0.0
    %4842 = vmatpush.msra.mxu0 0.0
    %4843 = vmatpush.msra.mxu0 0.0
    %4844 = vmatpush.msra.mxu0 0.0
    %4845 = vmatpush.msra.mxu0 0.0
    %4846 = vmatpush.msra.mxu0 0.0
    %4847 = vmatpush.msra.mxu0 0.0
    %4848 = vmatpush.msra.mxu0 %v4626
    %4849 = vmatmul.f32.gmra.mxu0 %v4596
    %v4850 = vpop.f32.mrf.mxu0
    %v4851 = vadd.f32 %v4571, %v4850
    %4852 = vmatmul.f32.gmra.mxu0 %v4599
    %v4853 = vpop.f32.mrf.mxu0
    %v4854 = vadd.f32 %v4571, %v4853
    %4855 = vdwg.mxu0
    %4856 = vmatpush.msra.mxu0 0.0
    %4857 = vmatpush.msra.mxu0 0.0
    %4858 = vmatpush.msra.mxu0 0.0
    %4859 = vmatpush.msra.mxu0 0.0
    %4860 = vmatpush.msra.mxu0 0.0
    %4861 = vmatpush.msra.mxu0 0.0
    %4862 = vmatpush.msra.mxu0 0.0
    %4863 = vmatpush.msra.mxu0 0.0
    %4864 = vmatpush.msra.mxu0 0.0
    %4865 = vmatpush.msra.mxu0 0.0
    %4866 = vmatpush.msra.mxu0 0.0
    %4867 = vmatpush.msra.mxu0 0.0
    %4868 = vmatpush.msra.mxu0 0.0
    %4869 = vmatpush.msra.mxu0 0.0
    %4870 = vmatpush.msra.mxu0 0.0
    %4871 = vmatpush.msra.mxu0 %v4629
    %4872 = vmatmul.f32.gmra.mxu0 %v4596
    %v4873 = vpop.f32.mrf.mxu0
    %v4874 = vadd.f32 %v4572, %v4873
    %4875 = vmatmul.f32.gmra.mxu0 %v4599
    %v4876 = vpop.f32.mrf.mxu0
    %v4877 = vadd.f32 %v4572, %v4876
    %4878 = vdwg.mxu0
    %4879 = vmatpush.msra.mxu0 0.0
    %4880 = vmatpush.msra.mxu0 0.0
    %4881 = vmatpush.msra.mxu0 0.0
    %4882 = vmatpush.msra.mxu0 0.0
    %4883 = vmatpush.msra.mxu0 0.0
    %4884 = vmatpush.msra.mxu0 0.0
    %4885 = vmatpush.msra.mxu0 0.0
    %4886 = vmatpush.msra.mxu0 0.0
    %4887 = vmatpush.msra.mxu0 0.0
    %4888 = vmatpush.msra.mxu0 0.0
    %4889 = vmatpush.msra.mxu0 0.0
    %4890 = vmatpush.msra.mxu0 0.0
    %4891 = vmatpush.msra.mxu0 0.0
    %4892 = vmatpush.msra.mxu0 0.0
    %4893 = vmatpush.msra.mxu0 0.0
    %4894 = vmatpush.msra.mxu0 %v4632
    %4895 = vmatmul.f32.gmra.mxu0 %v4596
    %v4896 = vpop.f32.mrf.mxu0
    %v4897 = vadd.f32 %v4573, %v4896
    %4898 = vmatmul.f32.gmra.mxu0 %v4599
    %v4899 = vpop.f32.mrf.mxu0
    %v4900 = vadd.f32 %v4573, %v4899
    %4901 = vdwg.mxu0
    %4902 = vmatpush.msra.mxu0 0.0
    %4903 = vmatpush.msra.mxu0 0.0
    %4904 = vmatpush.msra.mxu0 0.0
    %4905 = vmatpush.msra.mxu0 0.0
    %4906 = vmatpush.msra.mxu0 0.0
    %4907 = vmatpush.msra.mxu0 0.0
    %4908 = vmatpush.msra.mxu0 0.0
    %4909 = vmatpush.msra.mxu0 0.0
    %4910 = vmatpush.msra.mxu0 0.0
    %4911 = vmatpush.msra.mxu0 0.0
    %4912 = vmatpush.msra.mxu0 0.0
    %4913 = vmatpush.msra.mxu0 0.0
    %4914 = vmatpush.msra.mxu0 0.0
    %4915 = vmatpush.msra.mxu0 0.0
    %4916 = vmatpush.msra.mxu0 0.0
    %4917 = vmatpush.msra.mxu0 %v4635
    %4918 = vmatmul.f32.gmra.mxu0 %v4596
    %v4919 = vpop.f32.mrf.mxu0
    %v4920 = vadd.f32 %v4574, %v4919
    %4921 = vmatmul.f32.gmra.mxu0 %v4599
    %v4922 = vpop.f32.mrf.mxu0
    %v4923 = vadd.f32 %v4574, %v4922
    %4924 = vdwg.mxu0
    %4925 = vmatpush.msra.mxu0 0.0
    %4926 = vmatpush.msra.mxu0 0.0
    %4927 = vmatpush.msra.mxu0 0.0
    %4928 = vmatpush.msra.mxu0 0.0
    %4929 = vmatpush.msra.mxu0 0.0
    %4930 = vmatpush.msra.mxu0 0.0
    %4931 = vmatpush.msra.mxu0 0.0
    %4932 = vmatpush.msra.mxu0 0.0
    %4933 = vmatpush.msra.mxu0 0.0
    %4934 = vmatpush.msra.mxu0 0.0
    %4935 = vmatpush.msra.mxu0 0.0
    %4936 = vmatpush.msra.mxu0 0.0
    %4937 = vmatpush.msra.mxu0 0.0
    %4938 = vmatpush.msra.mxu0 0.0
    %4939 = vmatpush.msra.mxu0 0.0
    %4940 = vmatpush.msra.mxu0 %v4638
    %4941 = vmatmul.f32.gmra.mxu0 %v4596
    %v4942 = vpop.f32.mrf.mxu0
    %v4943 = vadd.f32 %v4575, %v4942
    %4944 = vmatmul.f32.gmra.mxu0 %v4599
    %v4945 = vpop.f32.mrf.mxu0
    %v4946 = vadd.f32 %v4575, %v4945
    %4947 = vdwg.mxu0
    %4948 = vmatpush.msra.mxu0 0.0
    %4949 = vmatpush.msra.mxu0 0.0
    %4950 = vmatpush.msra.mxu0 0.0
    %4951 = vmatpush.msra.mxu0 0.0
    %4952 = vmatpush.msra.mxu0 0.0
    %4953 = vmatpush.msra.mxu0 0.0
    %4954 = vmatpush.msra.mxu0 0.0
    %4955 = vmatpush.msra.mxu0 0.0
    %4956 = vmatpush.msra.mxu0 0.0
    %4957 = vmatpush.msra.mxu0 0.0
    %4958 = vmatpush.msra.mxu0 0.0
    %4959 = vmatpush.msra.mxu0 0.0
    %4960 = vmatpush.msra.mxu0 0.0
    %4961 = vmatpush.msra.mxu0 0.0
    %4962 = vmatpush.msra.mxu0 0.0
    %4963 = vmatpush.msra.mxu0 %v4641
    %4964 = vmatmul.f32.gmra.mxu0 %v4596
    %v4965 = vpop.f32.mrf.mxu0
    %v4966 = vadd.f32 %v4576, %v4965
    %4967 = vmatmul.f32.gmra.mxu0 %v4599
    %v4968 = vpop.f32.mrf.mxu0
    %v4969 = vadd.f32 %v4576, %v4968
    %4970 = vdwg.mxu0
    %4971 = vmatpush.msra.mxu0 0.0
    %4972 = vmatpush.msra.mxu0 0.0
    %4973 = vmatpush.msra.mxu0 0.0
    %4974 = vmatpush.msra.mxu0 0.0
    %4975 = vmatpush.msra.mxu0 0.0
    %4976 = vmatpush.msra.mxu0 0.0
    %4977 = vmatpush.msra.mxu0 0.0
    %4978 = vmatpush.msra.mxu0 0.0
    %4979 = vmatpush.msra.mxu0 0.0
    %4980 = vmatpush.msra.mxu0 0.0
    %4981 = vmatpush.msra.mxu0 0.0
    %4982 = vmatpush.msra.mxu0 0.0
    %4983 = vmatpush.msra.mxu0 0.0
    %4984 = vmatpush.msra.mxu0 0.0
    %4985 = vmatpush.msra.mxu0 0.0
    %4986 = vmatpush.msra.mxu0 %v4644
    %4987 = vmatmul.f32.gmra.mxu0 %v4596
    %v4988 = vpop.f32.mrf.mxu0
    %v4989 = vadd.f32 %v4577, %v4988
    %4990 = vmatmul.f32.gmra.mxu0 %v4599
    %v4991 = vpop.f32.mrf.mxu0
    %v4992 = vadd.f32 %v4577, %v4991
    %4993 = vdwg.mxu0
    %4994 = vmatpush.msra.mxu0 0.0
    %4995 = vmatpush.msra.mxu0 0.0
    %4996 = vmatpush.msra.mxu0 0.0
    %4997 = vmatpush.msra.mxu0 0.0
    %4998 = vmatpush.msra.mxu0 0.0
    %4999 = vmatpush.msra.mxu0 0.0
    %5000 = vmatpush.msra.mxu0 0.0
    %5001 = vmatpush.msra.mxu0 0.0
    %5002 = vmatpush.msra.mxu0 0.0
    %5003 = vmatpush.msra.mxu0 0.0
    %5004 = vmatpush.msra.mxu0 0.0
    %5005 = vmatpush.msra.mxu0 0.0
    %5006 = vmatpush.msra.mxu0 0.0
    %5007 = vmatpush.msra.mxu0 0.0
    %5008 = vmatpush.msra.mxu0 0.0
    %5009 = vmatpush.msra.mxu0 %v4647
    %5010 = vmatmul.f32.gmra.mxu0 %v4596
    %v5011 = vpop.f32.mrf.mxu0
    %v5012 = vadd.f32 %v4578, %v5011
    %5013 = vmatmul.f32.gmra.mxu0 %v4599
    %v5014 = vpop.f32.mrf.mxu0
    %v5015 = vadd.f32 %v4578, %v5014
    %5016 = vdwg.mxu0
    %v5017 = vmax.f32 %v4667, 0.0
    %v5018 = vmax.f32 %v4690, 0.0
    %v5019 = vmax.f32 %v4713, 0.0
    %v5020 = vmax.f32 %v4736, 0.0
    %v5021 = vmax.f32 %v4759, 0.0
    %v5022 = vmax.f32 %v4782, 0.0
    %v5023 = vmax.f32 %v4805, 0.0
    %v5024 = vmax.f32 %v4828, 0.0
    %v5025 = vmax.f32 %v4851, 0.0
    %v5026 = vmax.f32 %v4874, 0.0
    %v5027 = vmax.f32 %v4897, 0.0
    %v5028 = vmax.f32 %v4920, 0.0
    %v5029 = vmax.f32 %v4943, 0.0
    %v5030 = vmax.f32 %v4966, 0.0
    %v5031 = vmax.f32 %v4989, 0.0
    %v5032 = vmax.f32 %v5012, 0.0
    %v5033 = vmax.f32 %v4670, 0.0
    %v5034 = vmax.f32 %v4693, 0.0
    %v5035 = vmax.f32 %v4716, 0.0
    %v5036 = vmax.f32 %v4739, 0.0
    %v5037 = vmax.f32 %v4762, 0.0
    %v5038 = vmax.f32 %v4785, 0.0
    %v5039 = vmax.f32 %v4808, 0.0
    %v5040 = vmax.f32 %v4831, 0.0
    %v5041 = vmax.f32 %v4854, 0.0
    %v5042 = vmax.f32 %v4877, 0.0
    %v5043 = vmax.f32 %v4900, 0.0
    %v5044 = vmax.f32 %v4923, 0.0
    %v5045 = vmax.f32 %v4946, 0.0
    %v5046 = vmax.f32 %v4969, 0.0
    %v5047 = vmax.f32 %v4992, 0.0
    %v5048 = vmax.f32 %v5015, 0.0
    %s5049 = scalar_lea.vmem [#allocation10], 256
    %v5050 = vld [vmem:[%s5049] sm:$0x3f]
    %v5051 = vld [vmem:[%s5049 + $0x8] sm:$0x3f]
    %v5052 = vld [vmem:[%s5049 + $0x10] sm:$0x3f]
    %v5053 = vld [vmem:[%s5049 + $0x18] sm:$0x3f]
    %v5054 = vld [vmem:[%s5049 + $0x20] sm:$0x3f]
    %v5055 = vld [vmem:[%s5049 + $0x28] sm:$0x3f]
    %v5056 = vld [vmem:[%s5049 + $0x30] sm:$0x3f]
    %v5057 = vld [vmem:[%s5049 + $0x38] sm:$0x3f]
    %v5058 = vld [vmem:[%s5049 + $0x40] sm:$0x3f]
    %v5059 = vld [vmem:[%s5049 + $0x48] sm:$0x3f]
    %v5060 = vld [vmem:[%s5049 + $0x50] sm:$0x3f]
    %v5061 = vld [vmem:[%s5049 + $0x58] sm:$0x3f]
    %v5062 = vld [vmem:[%s5049 + $0x60] sm:$0x3f]
    %v5063 = vld [vmem:[%s5049 + $0x68] sm:$0x3f]
    %v5064 = vld [vmem:[%s5049 + $0x70] sm:$0x3f]
    %v5065 = vld [vmem:[%s5049 + $0x78] sm:$0x3f]
    %s5066 = scalar_lea.vmem %s12, 2
    %v5067 = vld [vmem:[%s5066] sm:$0x1]
    %v5069 = vperm.slane %v5067, 0
    %5071 = vmatpush.xpose.msra.mxu0 0.0
    %5072 = vmatpush.xpose.msra.mxu0 0.0
    %5073 = vmatpush.xpose.msra.mxu0 0.0
    %5074 = vmatpush.xpose.msra.mxu0 0.0
    %5075 = vmatpush.xpose.msra.mxu0 0.0
    %5076 = vmatpush.xpose.msra.mxu0 0.0
    %5077 = vmatpush.xpose.msra.mxu0 0.0
    %5078 = vmatpush.xpose.msra.mxu0 0.0
    %5079 = vmatpush.xpose.msra.mxu0 0.0
    %5080 = vmatpush.xpose.msra.mxu0 0.0
    %5081 = vmatpush.xpose.msra.mxu0 0.0
    %5082 = vmatpush.xpose.msra.mxu0 0.0
    %5083 = vmatpush.xpose.msra.mxu0 0.0
    %5084 = vmatpush.xpose.msra.mxu0 0.0
    %5085 = vmatpush.xpose.msra.mxu0 0.0
    %5086 = vmatpush.xpose.msra.mxu0 %v5050
    %5087 = vmatmul.f32.gmra.mxu0 %v5017
    %v5088 = vpop.f32.mrf.mxu0
    %v5089 = vadd.f32 %v5069, %v5088
    %5090 = vmatmul.f32.gmra.mxu0 %v5033
    %v5091 = vpop.f32.mrf.mxu0
    %v5092 = vadd.f32 %v5069, %v5091
    %5093 = vdwg.mxu0
    %5094 = vmatpush.xpose.msra.mxu0 0.0
    %5095 = vmatpush.xpose.msra.mxu0 0.0
    %5096 = vmatpush.xpose.msra.mxu0 0.0
    %5097 = vmatpush.xpose.msra.mxu0 0.0
    %5098 = vmatpush.xpose.msra.mxu0 0.0
    %5099 = vmatpush.xpose.msra.mxu0 0.0
    %5100 = vmatpush.xpose.msra.mxu0 0.0
    %5101 = vmatpush.xpose.msra.mxu0 0.0
    %5102 = vmatpush.xpose.msra.mxu0 0.0
    %5103 = vmatpush.xpose.msra.mxu0 0.0
    %5104 = vmatpush.xpose.msra.mxu0 0.0
    %5105 = vmatpush.xpose.msra.mxu0 0.0
    %5106 = vmatpush.xpose.msra.mxu0 0.0
    %5107 = vmatpush.xpose.msra.mxu0 0.0
    %5108 = vmatpush.xpose.msra.mxu0 0.0
    %5109 = vmatpush.xpose.msra.mxu0 %v5051
    %5110 = vmatmul.f32.gmra.mxu0 %v5018
    %v5111 = vpop.f32.mrf.mxu0
    %v5112 = vadd.f32 %v5089, %v5111
    %5113 = vmatmul.f32.gmra.mxu0 %v5034
    %v5114 = vpop.f32.mrf.mxu0
    %v5115 = vadd.f32 %v5092, %v5114
    %5116 = vdwg.mxu0
    %5117 = vmatpush.xpose.msra.mxu0 0.0
    %5118 = vmatpush.xpose.msra.mxu0 0.0
    %5119 = vmatpush.xpose.msra.mxu0 0.0
    %5120 = vmatpush.xpose.msra.mxu0 0.0
    %5121 = vmatpush.xpose.msra.mxu0 0.0
    %5122 = vmatpush.xpose.msra.mxu0 0.0
    %5123 = vmatpush.xpose.msra.mxu0 0.0
    %5124 = vmatpush.xpose.msra.mxu0 0.0
    %5125 = vmatpush.xpose.msra.mxu0 0.0
    %5126 = vmatpush.xpose.msra.mxu0 0.0
    %5127 = vmatpush.xpose.msra.mxu0 0.0
    %5128 = vmatpush.xpose.msra.mxu0 0.0
    %5129 = vmatpush.xpose.msra.mxu0 0.0
    %5130 = vmatpush.xpose.msra.mxu0 0.0
    %5131 = vmatpush.xpose.msra.mxu0 0.0
    %5132 = vmatpush.xpose.msra.mxu0 %v5052
    %5133 = vmatmul.f32.gmra.mxu0 %v5019
    %v5134 = vpop.f32.mrf.mxu0
    %v5135 = vadd.f32 %v5112, %v5134
    %5136 = vmatmul.f32.gmra.mxu0 %v5035
    %v5137 = vpop.f32.mrf.mxu0
    %v5138 = vadd.f32 %v5115, %v5137
    %5139 = vdwg.mxu0
    %5140 = vmatpush.xpose.msra.mxu0 0.0
    %5141 = vmatpush.xpose.msra.mxu0 0.0
    %5142 = vmatpush.xpose.msra.mxu0 0.0
    %5143 = vmatpush.xpose.msra.mxu0 0.0
    %5144 = vmatpush.xpose.msra.mxu0 0.0
    %5145 = vmatpush.xpose.msra.mxu0 0.0
    %5146 = vmatpush.xpose.msra.mxu0 0.0
    %5147 = vmatpush.xpose.msra.mxu0 0.0
    %5148 = vmatpush.xpose.msra.mxu0 0.0
    %5149 = vmatpush.xpose.msra.mxu0 0.0
    %5150 = vmatpush.xpose.msra.mxu0 0.0
    %5151 = vmatpush.xpose.msra.mxu0 0.0
    %5152 = vmatpush.xpose.msra.mxu0 0.0
    %5153 = vmatpush.xpose.msra.mxu0 0.0
    %5154 = vmatpush.xpose.msra.mxu0 0.0
    %5155 = vmatpush.xpose.msra.mxu0 %v5053
    %5156 = vmatmul.f32.gmra.mxu0 %v5020
    %v5157 = vpop.f32.mrf.mxu0
    %v5158 = vadd.f32 %v5135, %v5157
    %5159 = vmatmul.f32.gmra.mxu0 %v5036
    %v5160 = vpop.f32.mrf.mxu0
    %v5161 = vadd.f32 %v5138, %v5160
    %5162 = vdwg.mxu0
    %5163 = vmatpush.xpose.msra.mxu0 0.0
    %5164 = vmatpush.xpose.msra.mxu0 0.0
    %5165 = vmatpush.xpose.msra.mxu0 0.0
    %5166 = vmatpush.xpose.msra.mxu0 0.0
    %5167 = vmatpush.xpose.msra.mxu0 0.0
    %5168 = vmatpush.xpose.msra.mxu0 0.0
    %5169 = vmatpush.xpose.msra.mxu0 0.0
    %5170 = vmatpush.xpose.msra.mxu0 0.0
    %5171 = vmatpush.xpose.msra.mxu0 0.0
    %5172 = vmatpush.xpose.msra.mxu0 0.0
    %5173 = vmatpush.xpose.msra.mxu0 0.0
    %5174 = vmatpush.xpose.msra.mxu0 0.0
    %5175 = vmatpush.xpose.msra.mxu0 0.0
    %5176 = vmatpush.xpose.msra.mxu0 0.0
    %5177 = vmatpush.xpose.msra.mxu0 0.0
    %5178 = vmatpush.xpose.msra.mxu0 %v5054
    %5179 = vmatmul.f32.gmra.mxu0 %v5021
    %v5180 = vpop.f32.mrf.mxu0
    %v5181 = vadd.f32 %v5158, %v5180
    %5182 = vmatmul.f32.gmra.mxu0 %v5037
    %v5183 = vpop.f32.mrf.mxu0
    %v5184 = vadd.f32 %v5161, %v5183
    %5185 = vdwg.mxu0
    %5186 = vmatpush.xpose.msra.mxu0 0.0
    %5187 = vmatpush.xpose.msra.mxu0 0.0
    %5188 = vmatpush.xpose.msra.mxu0 0.0
    %5189 = vmatpush.xpose.msra.mxu0 0.0
    %5190 = vmatpush.xpose.msra.mxu0 0.0
    %5191 = vmatpush.xpose.msra.mxu0 0.0
    %5192 = vmatpush.xpose.msra.mxu0 0.0
    %5193 = vmatpush.xpose.msra.mxu0 0.0
    %5194 = vmatpush.xpose.msra.mxu0 0.0
    %5195 = vmatpush.xpose.msra.mxu0 0.0
    %5196 = vmatpush.xpose.msra.mxu0 0.0
    %5197 = vmatpush.xpose.msra.mxu0 0.0
    %5198 = vmatpush.xpose.msra.mxu0 0.0
    %5199 = vmatpush.xpose.msra.mxu0 0.0
    %5200 = vmatpush.xpose.msra.mxu0 0.0
    %5201 = vmatpush.xpose.msra.mxu0 %v5055
    %5202 = vmatmul.f32.gmra.mxu0 %v5022
    %v5203 = vpop.f32.mrf.mxu0
    %v5204 = vadd.f32 %v5181, %v5203
    %5205 = vmatmul.f32.gmra.mxu0 %v5038
    %v5206 = vpop.f32.mrf.mxu0
    %v5207 = vadd.f32 %v5184, %v5206
    %5208 = vdwg.mxu0
    %5209 = vmatpush.xpose.msra.mxu0 0.0
    %5210 = vmatpush.xpose.msra.mxu0 0.0
    %5211 = vmatpush.xpose.msra.mxu0 0.0
    %5212 = vmatpush.xpose.msra.mxu0 0.0
    %5213 = vmatpush.xpose.msra.mxu0 0.0
    %5214 = vmatpush.xpose.msra.mxu0 0.0
    %5215 = vmatpush.xpose.msra.mxu0 0.0
    %5216 = vmatpush.xpose.msra.mxu0 0.0
    %5217 = vmatpush.xpose.msra.mxu0 0.0
    %5218 = vmatpush.xpose.msra.mxu0 0.0
    %5219 = vmatpush.xpose.msra.mxu0 0.0
    %5220 = vmatpush.xpose.msra.mxu0 0.0
    %5221 = vmatpush.xpose.msra.mxu0 0.0
    %5222 = vmatpush.xpose.msra.mxu0 0.0
    %5223 = vmatpush.xpose.msra.mxu0 0.0
    %5224 = vmatpush.xpose.msra.mxu0 %v5056
    %5225 = vmatmul.f32.gmra.mxu0 %v5023
    %v5226 = vpop.f32.mrf.mxu0
    %v5227 = vadd.f32 %v5204, %v5226
    %5228 = vmatmul.f32.gmra.mxu0 %v5039
    %v5229 = vpop.f32.mrf.mxu0
    %v5230 = vadd.f32 %v5207, %v5229
    %5231 = vdwg.mxu0
    %5232 = vmatpush.xpose.msra.mxu0 0.0
    %5233 = vmatpush.xpose.msra.mxu0 0.0
    %5234 = vmatpush.xpose.msra.mxu0 0.0
    %5235 = vmatpush.xpose.msra.mxu0 0.0
    %5236 = vmatpush.xpose.msra.mxu0 0.0
    %5237 = vmatpush.xpose.msra.mxu0 0.0
    %5238 = vmatpush.xpose.msra.mxu0 0.0
    %5239 = vmatpush.xpose.msra.mxu0 0.0
    %5240 = vmatpush.xpose.msra.mxu0 0.0
    %5241 = vmatpush.xpose.msra.mxu0 0.0
    %5242 = vmatpush.xpose.msra.mxu0 0.0
    %5243 = vmatpush.xpose.msra.mxu0 0.0
    %5244 = vmatpush.xpose.msra.mxu0 0.0
    %5245 = vmatpush.xpose.msra.mxu0 0.0
    %5246 = vmatpush.xpose.msra.mxu0 0.0
    %5247 = vmatpush.xpose.msra.mxu0 %v5057
    %5248 = vmatmul.f32.gmra.mxu0 %v5024
    %v5249 = vpop.f32.mrf.mxu0
    %v5250 = vadd.f32 %v5227, %v5249
    %5251 = vmatmul.f32.gmra.mxu0 %v5040
    %v5252 = vpop.f32.mrf.mxu0
    %v5253 = vadd.f32 %v5230, %v5252
    %5254 = vdwg.mxu0
    %5255 = vmatpush.xpose.msra.mxu0 0.0
    %5256 = vmatpush.xpose.msra.mxu0 0.0
    %5257 = vmatpush.xpose.msra.mxu0 0.0
    %5258 = vmatpush.xpose.msra.mxu0 0.0
    %5259 = vmatpush.xpose.msra.mxu0 0.0
    %5260 = vmatpush.xpose.msra.mxu0 0.0
    %5261 = vmatpush.xpose.msra.mxu0 0.0
    %5262 = vmatpush.xpose.msra.mxu0 0.0
    %5263 = vmatpush.xpose.msra.mxu0 0.0
    %5264 = vmatpush.xpose.msra.mxu0 0.0
    %5265 = vmatpush.xpose.msra.mxu0 0.0
    %5266 = vmatpush.xpose.msra.mxu0 0.0
    %5267 = vmatpush.xpose.msra.mxu0 0.0
    %5268 = vmatpush.xpose.msra.mxu0 0.0
    %5269 = vmatpush.xpose.msra.mxu0 0.0
    %5270 = vmatpush.xpose.msra.mxu0 %v5058
    %5271 = vmatmul.f32.gmra.mxu0 %v5025
    %v5272 = vpop.f32.mrf.mxu0
    %v5273 = vadd.f32 %v5250, %v5272
    %5274 = vmatmul.f32.gmra.mxu0 %v5041
    %v5275 = vpop.f32.mrf.mxu0
    %v5276 = vadd.f32 %v5253, %v5275
    %5277 = vdwg.mxu0
    %5278 = vmatpush.xpose.msra.mxu0 0.0
    %5279 = vmatpush.xpose.msra.mxu0 0.0
    %5280 = vmatpush.xpose.msra.mxu0 0.0
    %5281 = vmatpush.xpose.msra.mxu0 0.0
    %5282 = vmatpush.xpose.msra.mxu0 0.0
    %5283 = vmatpush.xpose.msra.mxu0 0.0
    %5284 = vmatpush.xpose.msra.mxu0 0.0
    %5285 = vmatpush.xpose.msra.mxu0 0.0
    %5286 = vmatpush.xpose.msra.mxu0 0.0
    %5287 = vmatpush.xpose.msra.mxu0 0.0
    %5288 = vmatpush.xpose.msra.mxu0 0.0
    %5289 = vmatpush.xpose.msra.mxu0 0.0
    %5290 = vmatpush.xpose.msra.mxu0 0.0
    %5291 = vmatpush.xpose.msra.mxu0 0.0
    %5292 = vmatpush.xpose.msra.mxu0 0.0
    %5293 = vmatpush.xpose.msra.mxu0 %v5059
    %5294 = vmatmul.f32.gmra.mxu0 %v5026
    %v5295 = vpop.f32.mrf.mxu0
    %v5296 = vadd.f32 %v5273, %v5295
    %5297 = vmatmul.f32.gmra.mxu0 %v5042
    %v5298 = vpop.f32.mrf.mxu0
    %v5299 = vadd.f32 %v5276, %v5298
    %5300 = vdwg.mxu0
    %5301 = vmatpush.xpose.msra.mxu0 0.0
    %5302 = vmatpush.xpose.msra.mxu0 0.0
    %5303 = vmatpush.xpose.msra.mxu0 0.0
    %5304 = vmatpush.xpose.msra.mxu0 0.0
    %5305 = vmatpush.xpose.msra.mxu0 0.0
    %5306 = vmatpush.xpose.msra.mxu0 0.0
    %5307 = vmatpush.xpose.msra.mxu0 0.0
    %5308 = vmatpush.xpose.msra.mxu0 0.0
    %5309 = vmatpush.xpose.msra.mxu0 0.0
    %5310 = vmatpush.xpose.msra.mxu0 0.0
    %5311 = vmatpush.xpose.msra.mxu0 0.0
    %5312 = vmatpush.xpose.msra.mxu0 0.0
    %5313 = vmatpush.xpose.msra.mxu0 0.0
    %5314 = vmatpush.xpose.msra.mxu0 0.0
    %5315 = vmatpush.xpose.msra.mxu0 0.0
    %5316 = vmatpush.xpose.msra.mxu0 %v5060
    %5317 = vmatmul.f32.gmra.mxu0 %v5027
    %v5318 = vpop.f32.mrf.mxu0
    %v5319 = vadd.f32 %v5296, %v5318
    %5320 = vmatmul.f32.gmra.mxu0 %v5043
    %v5321 = vpop.f32.mrf.mxu0
    %v5322 = vadd.f32 %v5299, %v5321
    %5323 = vdwg.mxu0
    %5324 = vmatpush.xpose.msra.mxu0 0.0
    %5325 = vmatpush.xpose.msra.mxu0 0.0
    %5326 = vmatpush.xpose.msra.mxu0 0.0
    %5327 = vmatpush.xpose.msra.mxu0 0.0
    %5328 = vmatpush.xpose.msra.mxu0 0.0
    %5329 = vmatpush.xpose.msra.mxu0 0.0
    %5330 = vmatpush.xpose.msra.mxu0 0.0
    %5331 = vmatpush.xpose.msra.mxu0 0.0
    %5332 = vmatpush.xpose.msra.mxu0 0.0
    %5333 = vmatpush.xpose.msra.mxu0 0.0
    %5334 = vmatpush.xpose.msra.mxu0 0.0
    %5335 = vmatpush.xpose.msra.mxu0 0.0
    %5336 = vmatpush.xpose.msra.mxu0 0.0
    %5337 = vmatpush.xpose.msra.mxu0 0.0
    %5338 = vmatpush.xpose.msra.mxu0 0.0
    %5339 = vmatpush.xpose.msra.mxu0 %v5061
    %5340 = vmatmul.f32.gmra.mxu0 %v5028
    %v5341 = vpop.f32.mrf.mxu0
    %v5342 = vadd.f32 %v5319, %v5341
    %5343 = vmatmul.f32.gmra.mxu0 %v5044
    %v5344 = vpop.f32.mrf.mxu0
    %v5345 = vadd.f32 %v5322, %v5344
    %5346 = vdwg.mxu0
    %5347 = vmatpush.xpose.msra.mxu0 0.0
    %5348 = vmatpush.xpose.msra.mxu0 0.0
    %5349 = vmatpush.xpose.msra.mxu0 0.0
    %5350 = vmatpush.xpose.msra.mxu0 0.0
    %5351 = vmatpush.xpose.msra.mxu0 0.0
    %5352 = vmatpush.xpose.msra.mxu0 0.0
    %5353 = vmatpush.xpose.msra.mxu0 0.0
    %5354 = vmatpush.xpose.msra.mxu0 0.0
    %5355 = vmatpush.xpose.msra.mxu0 0.0
    %5356 = vmatpush.xpose.msra.mxu0 0.0
    %5357 = vmatpush.xpose.msra.mxu0 0.0
    %5358 = vmatpush.xpose.msra.mxu0 0.0
    %5359 = vmatpush.xpose.msra.mxu0 0.0
    %5360 = vmatpush.xpose.msra.mxu0 0.0
    %5361 = vmatpush.xpose.msra.mxu0 0.0
    %5362 = vmatpush.xpose.msra.mxu0 %v5062
    %5363 = vmatmul.f32.gmra.mxu0 %v5029
    %v5364 = vpop.f32.mrf.mxu0
    %v5365 = vadd.f32 %v5342, %v5364
    %5366 = vmatmul.f32.gmra.mxu0 %v5045
    %v5367 = vpop.f32.mrf.mxu0
    %v5368 = vadd.f32 %v5345, %v5367
    %5369 = vdwg.mxu0
    %5370 = vmatpush.xpose.msra.mxu0 0.0
    %5371 = vmatpush.xpose.msra.mxu0 0.0
    %5372 = vmatpush.xpose.msra.mxu0 0.0
    %5373 = vmatpush.xpose.msra.mxu0 0.0
    %5374 = vmatpush.xpose.msra.mxu0 0.0
    %5375 = vmatpush.xpose.msra.mxu0 0.0
    %5376 = vmatpush.xpose.msra.mxu0 0.0
    %5377 = vmatpush.xpose.msra.mxu0 0.0
    %5378 = vmatpush.xpose.msra.mxu0 0.0
    %5379 = vmatpush.xpose.msra.mxu0 0.0
    %5380 = vmatpush.xpose.msra.mxu0 0.0
    %5381 = vmatpush.xpose.msra.mxu0 0.0
    %5382 = vmatpush.xpose.msra.mxu0 0.0
    %5383 = vmatpush.xpose.msra.mxu0 0.0
    %5384 = vmatpush.xpose.msra.mxu0 0.0
    %5385 = vmatpush.xpose.msra.mxu0 %v5063
    %5386 = vmatmul.f32.gmra.mxu0 %v5030
    %v5387 = vpop.f32.mrf.mxu0
    %v5388 = vadd.f32 %v5365, %v5387
    %5389 = vmatmul.f32.gmra.mxu0 %v5046
    %v5390 = vpop.f32.mrf.mxu0
    %v5391 = vadd.f32 %v5368, %v5390
    %5392 = vdwg.mxu0
    %5393 = vmatpush.xpose.msra.mxu0 0.0
    %5394 = vmatpush.xpose.msra.mxu0 0.0
    %5395 = vmatpush.xpose.msra.mxu0 0.0
    %5396 = vmatpush.xpose.msra.mxu0 0.0
    %5397 = vmatpush.xpose.msra.mxu0 0.0
    %5398 = vmatpush.xpose.msra.mxu0 0.0
    %5399 = vmatpush.xpose.msra.mxu0 0.0
    %5400 = vmatpush.xpose.msra.mxu0 0.0
    %5401 = vmatpush.xpose.msra.mxu0 0.0
    %5402 = vmatpush.xpose.msra.mxu0 0.0
    %5403 = vmatpush.xpose.msra.mxu0 0.0
    %5404 = vmatpush.xpose.msra.mxu0 0.0
    %5405 = vmatpush.xpose.msra.mxu0 0.0
    %5406 = vmatpush.xpose.msra.mxu0 0.0
    %5407 = vmatpush.xpose.msra.mxu0 0.0
    %5408 = vmatpush.xpose.msra.mxu0 %v5064
    %5409 = vmatmul.f32.gmra.mxu0 %v5031
    %v5410 = vpop.f32.mrf.mxu0
    %v5411 = vadd.f32 %v5388, %v5410
    %5412 = vmatmul.f32.gmra.mxu0 %v5047
    %v5413 = vpop.f32.mrf.mxu0
    %v5414 = vadd.f32 %v5391, %v5413
    %5415 = vdwg.mxu0
    %5416 = vmatpush.xpose.msra.mxu0 0.0
    %5417 = vmatpush.xpose.msra.mxu0 0.0
    %5418 = vmatpush.xpose.msra.mxu0 0.0
    %5419 = vmatpush.xpose.msra.mxu0 0.0
    %5420 = vmatpush.xpose.msra.mxu0 0.0
    %5421 = vmatpush.xpose.msra.mxu0 0.0
    %5422 = vmatpush.xpose.msra.mxu0 0.0
    %5423 = vmatpush.xpose.msra.mxu0 0.0
    %5424 = vmatpush.xpose.msra.mxu0 0.0
    %5425 = vmatpush.xpose.msra.mxu0 0.0
    %5426 = vmatpush.xpose.msra.mxu0 0.0
    %5427 = vmatpush.xpose.msra.mxu0 0.0
    %5428 = vmatpush.xpose.msra.mxu0 0.0
    %5429 = vmatpush.xpose.msra.mxu0 0.0
    %5430 = vmatpush.xpose.msra.mxu0 0.0
    %5431 = vmatpush.xpose.msra.mxu0 %v5065
    %5432 = vmatmul.f32.gmra.mxu0 %v5032
    %v5433 = vpop.f32.mrf.mxu0
    %v5434 = vadd.f32 %v5411, %v5433
    %5435 = vmatmul.f32.gmra.mxu0 %v5048
    %v5436 = vpop.f32.mrf.mxu0
    %v5437 = vadd.f32 %v5414, %v5436
    %5438 = vdwg.mxu0
    %v5439 = vadd.f32 %v4539, %v5434
    %v5440 = vadd.f32 %v4540, %v5437
    %s5441 = scalar_lea.vmem %s7, 2
    %v5442 = vld [vmem:[%s5441] sm:$0x1]
    %s5443 = scalar_lea.vmem %s8, 2
    %v5444 = vld [vmem:[%s5443] sm:$0x1]
    %v5445 = vsel %vm183, %v5439, 0.0
    %5446 = vadd.xlane.f32.xlu0 %v5445
    %v5447 = vpop.xlane.xlu0 %5446
    %v5448 = vsel %vm183, %v5440, 0.0
    %5449 = vadd.xlane.f32.xlu0 %v5448
    %v5450 = vpop.xlane.xlu0 %5449
    %v5451 = vmul.f32 %v5447, %v932
    %v5452 = vmul.f32 %v5450, %v932
    %v5453 = vsub.f32 %v5439, %v5451
    %v5454 = vsub.f32 %v5440, %v5452
    %v5455 = vmul.f32 %v5453, %v5453
    %v5456 = vmul.f32 %v5454, %v5454
    %v5457 = vsel %vm183, %v5455, 0.0
    %5458 = vadd.xlane.f32.xlu0 %v5457
    %v5459 = vpop.xlane.xlu0 %5458
    %v5460 = vsel %vm183, %v5456, 0.0
    %5461 = vadd.xlane.f32.xlu0 %v5460
    %v5462 = vpop.xlane.xlu0 %5461
    %v5463 = vmul.f32 %v5459, %v932
    %v5464 = vmul.f32 %v5462, %v932
    %v5465 = vadd.f32 %v5463, 1e-05
    %v5466 = vadd.f32 %v5464, 1e-05
    %v5467 = vrsqrt.pop %v5465
    %v5468 = vmul.f32 %v5467, %v5465
    %v5469 = vmul.f32 %v5468, %v5467
    %v5470 = vmul.f32 0.5, %v5469
    %v5471 = vsub.f32 1.5, %v5470
    %v5472 = vmul.f32 %v5467, %v5471
    %vm5473 = vweird.f32 %v5465
    %vm5474 = vweird.f32 %v5467
    %vm5475 = vmor %vm5473, %vm5474
    %v5476 = vsel %vm5475, %v5467, %v5472
    %v5477 = vrsqrt.pop %v5466
    %v5478 = vmul.f32 %v5477, %v5466
    %v5479 = vmul.f32 %v5478, %v5477
    %v5480 = vmul.f32 0.5, %v5479
    %v5481 = vsub.f32 1.5, %v5480
    %v5482 = vmul.f32 %v5477, %v5481
    %vm5483 = vweird.f32 %v5466
    %vm5484 = vweird.f32 %v5477
    %vm5485 = vmor %vm5483, %vm5484
    %v5486 = vsel %vm5485, %v5477, %v5482
    %v5487 = vmul.f32 %v5453, %v5476
    %v5488 = vmul.f32 %v5454, %v5486
    %v5490 = vperm.slane %v5442, 0
    %v5492 = vmul.f32 %v5487, %v5490
    %v5493 = vmul.f32 %v5488, %v5490
    %v5495 = vperm.slane %v5444, 0
    %v5497 = vadd.f32 %v5492, %v5495
    %v5498 = vadd.f32 %v5493, %v5495
    %v5499 = vld [vmem:[%s13] sm:$0x3f]
    %v5500 = vld [vmem:[%s14] sm:$0x1]
    %v5502 = vperm.slane %v5500, 0
    %v5505 = vsel %vm183, %v5497, 0
    %v5508 = vsel %vm183, %v5498, 0
    %v5511 = vsel %vm190, %v5499, 0
    %5513 = vmatpush.msra.mxu0 0.0
    %5514 = vmatpush.msra.mxu0 0.0
    %5515 = vmatpush.msra.mxu0 0.0
    %5516 = vmatpush.msra.mxu0 0.0
    %5517 = vmatpush.msra.mxu0 0.0
    %5518 = vmatpush.msra.mxu0 0.0
    %5519 = vmatpush.msra.mxu0 0.0
    %5520 = vmatpush.msra.mxu0 0.0
    %5521 = vmatpush.msra.mxu0 0.0
    %5522 = vmatpush.msra.mxu0 0.0
    %5523 = vmatpush.msra.mxu0 0.0
    %5524 = vmatpush.msra.mxu0 0.0
    %5525 = vmatpush.msra.mxu0 0.0
    %5526 = vmatpush.msra.mxu0 0.0
    %5527 = vmatpush.msra.mxu0 0.0
    %5528 = vmatpush.msra.mxu0 %v5511
    %5529 = vmatmul.f32.gmra.mxu0 %v5505
    %v5530 = vpop.f32.mrf.mxu0
    %v5531 = vadd.f32 %v5502, %v5530
    %5532 = vmatmul.f32.gmra.mxu0 %v5508
    %v5533 = vpop.f32.mrf.mxu0
    %v5534 = vadd.f32 %v5502, %v5533
    %5535 = vdwg.mxu0
    %5536 = vst.msk [vmem:[%s15] sm:$0xff] %vm183, %v5531
    %5537 = vst.msk [vmem:[%s15 + $0x8] sm:$0xff] %vm183, %v5534
    // Predicated region
    $region86: #{tpu_custom_call.1} parent=1 // pred_check
      _
    $region87: #{tpu_custom_call.1} parent=1 // pred_check_branch
      %5539 = sbr.rel (0) target = $region89
    $region88: #{tpu_custom_call.1} parent=1 // pred_region
      _
    $region89: #{tpu_custom_call.1} parent=1 // pred_fallthru
      _
    // Predicated region
    $region90: #{tpu_custom_call.1} parent=1 // pred_check
      _
    $region91: #{tpu_custom_call.1} parent=1 // pred_check_branch
      %5541 = sbr.rel (0) target = $region93
    $region92: #{tpu_custom_call.1} parent=1 // pred_region
      _
    $region93: #{tpu_custom_call.1} parent=1 // pred_fallthru
      _
    %5542 = vsyncpa [#allocation3], 1
    %5543 = vsyncpa [#allocation5], 1
    %5544 = vsyncpa [#allocation8], 1
    %5545 = vsyncpa [#allocation11], 1

</llo_original>
